<compile_context>
chip_gen: v7x
topology: tpu7x:2x2x1
jax: 0.10.0
libtpu: 0.0.40
codegen_flags: <defaults>
</compile_context>

<pallas_src>
import functools
import math

import jax
import jax.numpy as jnp
from jax.experimental import pallas as pl
from jax.experimental.pallas import tpu as pltpu

LATENT_DIM = 512
N_LAYERS = 4                                        # EqualLinear layers per Mapper
NUM_MAPPERS = 3                                     # coarse / medium / fine
LR_MUL = 0.01
EQ_SCALE = (1.0 / math.sqrt(LATENT_DIM)) * LR_MUL   # EqualLinear weight scale
NEG_SLOPE = 0.2                                     # fused_leaky_relu slope
ACT_SCALE = math.sqrt(2.0)                          # fused_leaky_relu output scale
PIXELNORM_EPS = 1e-8


# ---------------------------------------------------------------------------
# Pallas kernel: one grid step = one batch tile of the full [TB, N, 512] slab.
# ---------------------------------------------------------------------------
def _levels_kernel(x_ref, w_ref, b_ref, o_ref, xt_ref, ot_ref, *, groups):
    # x_ref : [TB, N, D]   input batch tile (f32 or bf16)
    # w_ref : [3, 4, D, D] bf16, pre-transposed [in, out]; EqualLinear scale
    #         (and sqrt(2) of the previous activation for layers 1..3) folded.
    # b_ref : [3, 4, 1, D] f32 (lr_mul folded)
    # o_ref : [TB, N, D]
    # xt_ref/ot_ref : [N, TB, D] VMEM scratch (style-layer-major layout)
    # groups: static tuple of (mapper_idx, start, n, enabled)
    tb = x_ref.shape[0]
    d = x_ref.shape[2]

    # Single relayout of the whole tile: [TB, N, D] -> [N, TB, D].  After this
    # every group is a leading-dim slice and reshapes are layout-preserving.
    xt_ref[...] = pltpu.einshape("bnd->nbd", x_ref[...])

    for g_idx, start, n, enabled in groups:
        if n <= 0:
            continue
        if not enabled:
            # Disabled mapper -> zeros (torch.zeros_like in the reference).
            ot_ref[start:start + n] = jnp.zeros((n, tb, d), ot_ref.dtype)
            continue

        xg = xt_ref[start:start + n].astype(jnp.float32)        # [n, TB, D]

        # PixelNorm over torch dim=1 == the style-layer axis of this slab,
        # which is now the leading axis.
        ms = jnp.mean(xg * xg, axis=0, keepdims=True)            # [1, TB, D]
        h = xg * jax.lax.rsqrt(ms + PIXELNORM_EPS)                # [n, TB, D]

        # Merge style-layer and batch into the MXU M dimension (layout-
        # preserving when TB % 8 == 0).
        h = h.reshape(n * tb, d)                                  # [n*TB, D]

        for l in range(N_LAYERS):
            # F.linear(h, weight*scale): scale pre-folded, weight pre-
            # transposed -> plain [M, K] @ [K, N] on the MXU, f32 accumulate.
            y = jax.lax.dot_general(
                h.astype(jnp.bfloat16), w_ref[g_idx, l],
                dimension_numbers=(((1,), (0,)), ((), ())),
                preferred_element_type=jnp.float32)               # [n*TB, D]
            y = y + b_ref[g_idx, l]                               # bias (lr_mul folded)
            # leaky_relu; the sqrt(2) of layers 0..2 is folded into the next
            # layer's weights, so no per-layer multiply here.
            h = jnp.where(y >= 0.0, y, NEG_SLOPE * y)

        h = h * ACT_SCALE                                         # last layer's sqrt(2)
        ot_ref[start:start + n] = h.reshape(n, tb, d).astype(ot_ref.dtype)

    # Single relayout back: [N, TB, D] -> [TB, N, D]; lane-dense (512) store.
    o_ref[...] = pltpu.einshape("nbd->bnd", ot_ref[...])


# ---------------------------------------------------------------------------
# Wrapper: one pallas_call for the whole LevelsMapper forward.
# ---------------------------------------------------------------------------
def levels_mapper_forward(x, prepared_params,
                          no_coarse_mapper=False,
                          no_medium_mapper=False,
                          no_fine_mapper=False,
                          block_b=128):
    """x: [B, N, 512] -> [B, N, 512] (output dtype == input dtype)."""
    w, b = prepared_params                  # [3,4,D,D] bf16, [3,4,1,D] f32
    B, N, D = x.shape
    assert D == LATENT_DIM and N >= 8

    tb = min(block_b, B)
    # Keep >= 2 grid steps when possible so the "parallel" batch axis can be
    # sharded across both TensorCores on v7x; keep tb a multiple of 8 so the
    # in-kernel (n, TB, D) -> (n*TB, D) merges stay layout-preserving.
    if B >= 16 and pl.cdiv(B, tb) < 2:
        tb = max(8, (((B + 1) // 2) + 7) // 8 * 8)
    grid = (pl.cdiv(B, tb),)

    groups = (
        (0, 0, 4, not no_coarse_mapper),
        (1, 4, 4, not no_medium_mapper),
        (2, 8, N - 8, not no_fine_mapper),
    )
    kernel = functools.partial(_levels_kernel, groups=groups)

    # VMEM limit from physical capacity: ~96 MiB on v5e/v6e (128 MiB phys),
    # ~48 MiB on v7x (64 MiB phys).
    try:
        phys_vmem = pltpu.get_tpu_info().vmem_capacity_bytes
    except Exception:
        phys_vmem = 64 * 1024 * 1024
    vmem_limit = min(96 * 1024 * 1024, (3 * phys_vmem) // 4)

    def _const_spec(shape):
        # Constant operands (weights/bias): same block every grid step -> a
        # second pipeline buffer is pure VMEM waste, so single-buffer them.
        idx = lambda i: (0,) * len(shape)
        try:
            return pl.BlockSpec(shape, idx, pipeline_mode=pl.Buffered(1))
        except (TypeError, AttributeError):
            return pl.BlockSpec(shape, idx)

    return pl.pallas_call(
        kernel,
        out_shape=jax.ShapeDtypeStruct((B, N, D), x.dtype),
        grid=grid,
        in_specs=[
            pl.BlockSpec((tb, N, D), lambda i: (i, 0, 0)),
            _const_spec((NUM_MAPPERS, N_LAYERS, D, D)),
            _const_spec((NUM_MAPPERS, N_LAYERS, 1, D)),
        ],
        out_specs=pl.BlockSpec((tb, N, D), lambda i: (i, 0, 0)),
        scratch_shapes=[
            pltpu.VMEM((N, tb, D), x.dtype),   # transposed input tile
            pltpu.VMEM((N, tb, D), x.dtype),   # transposed output tile
        ],
        compiler_params=pltpu.CompilerParams(
            dimension_semantics=("parallel",),      # batch tiles -> both TCs (v7x)
            vmem_limit_bytes=vmem_limit),
    )(x, w, b)


# ---------------------------------------------------------------------------
# Parameter init (torch-style) and prep (fold / transpose / bf16-cast / stack)
# ---------------------------------------------------------------------------
def init_mapper_params(key):
    """Raw EqualLinear params: weight [4, out, in] ~ N(0,1)/lr_mul, bias = 0."""
    w = jax.random.normal(
        key, (N_LAYERS, LATENT_DIM, LATENT_DIM), jnp.float32) / LR_MUL
    b = jnp.zeros((N_LAYERS, LATENT_DIM), jnp.float32)
    return w, b


def prepare_levels_params(raw_params):
    """Fold EQ_SCALE (and sqrt(2) of the previous layer's fused_lrelu for
    layers 1..3) into the weights, LR_MUL into the biases, transpose weights
    to [in, out], cast weights to bf16, stack the three mappers."""
    fold = jnp.asarray(
        [EQ_SCALE] + [EQ_SCALE * ACT_SCALE] * (N_LAYERS - 1),
        jnp.float32)[:, None, None]
    ws, bs = [], []
    for name in ("coarse", "medium", "fine"):
        w_raw, b_raw = raw_params[name]
        ws.append(jnp.transpose(w_raw * fold, (0, 2, 1)).astype(jnp.bfloat16))
        bs.append((b_raw * LR_MUL)[:, None, :])
    return jnp.stack(ws, 0), jnp.stack(bs, 0).astype(jnp.float32)


# ---------------------------------------------------------------------------
# Pure-JAX references for validation
# ---------------------------------------------------------------------------
def _mapper_ref_f32(x, w_raw, b_raw):
    """Full-f32 reference replicating the torch module math exactly."""
    h = x * jax.lax.rsqrt(jnp.mean(x * x, axis=1, keepdims=True) + PIXELNORM_EPS)
    for l in range(N_LAYERS):
        y = jnp.einsum("bnd,od->bno", h, w_raw[l] * EQ_SCALE,
                       preferred_element_type=jnp.float32)
        y = y + (b_raw[l] * LR_MUL)[None, None, :]
        h = jnp.where(y >= 0, y, NEG_SLOPE * y) * ACT_SCALE
    return h


def _mapper_ref_prepared(x, w_t, b_f):
    """Reference using the same prepared (folded, bf16) params as the kernel."""
    B_, n, D_ = x.shape
    h = x * jax.lax.rsqrt(jnp.mean(x * x, axis=1, keepdims=True) + PIXELNORM_EPS)
    h = h.reshape(B_ * n, D_)
    for l in range(N_LAYERS):
        y = jnp.dot(h.astype(jnp.bfloat16), w_t[l],
                    preferred_element_type=jnp.float32)
        y = y + b_f[l]
        h = jnp.where(y >= 0, y, NEG_SLOPE * y)
    return (h * ACT_SCALE).reshape(B_, n, D_)


if __name__ == "__main__":
    key = jax.random.PRNGKey(0)
    k_x, k_c, k_m, k_f = jax.random.split(key, 4)

    B, N_STYLE = 2, 18   # standard W+ latent: 18 style layers of dim 512
    x = jax.random.normal(k_x, (B, N_STYLE, LATENT_DIM), jnp.float32)

    raw_params = {
        "coarse": init_mapper_params(k_c),
        "medium": init_mapper_params(k_m),
        "fine": init_mapper_params(k_f),
    }
    prepared = prepare_levels_params(raw_params)

    out = jax.block_until_ready(levels_mapper_forward(x, prepared))
    assert out.shape == (B, N_STYLE, LATENT_DIM) and out.dtype == x.dtype

    # Tight check: kernel vs pure-JAX reference using the SAME folded bf16
    # params (validates the Pallas lowering itself).
    w_all, b_all = prepared
    ref_bf16 = jnp.concatenate([
        _mapper_ref_prepared(x[:, :4, :], w_all[0], b_all[0]),
        _mapper_ref_prepared(x[:, 4:8, :], w_all[1], b_all[1]),
        _mapper_ref_prepared(x[:, 8:, :], w_all[2], b_all[2]),
    ], axis=1)
    err_tight = float(jnp.max(jnp.abs(out - ref_bf16)))
    assert jnp.allclose(out, ref_bf16, rtol=5e-3, atol=5e-3), err_tight

    # Loose check: vs full-f32 torch-equivalent math (only bf16 quantization
    # of weights/activations separates the two).
    ref_f32 = jnp.concatenate([
        _mapper_ref_f32(x[:, :4, :], *raw_params["coarse"]),
        _mapper_ref_f32(x[:, 4:8, :], *raw_params["medium"]),
        _mapper_ref_f32(x[:, 8:, :], *raw_params["fine"]),
    ], axis=1)
    err_loose = float(jnp.max(jnp.abs(out - ref_f32)))
    assert jnp.allclose(out, ref_f32, rtol=5e-2, atol=5e-2), err_loose

    # Disabled-mapper branch (torch.zeros_like path).
    out_nf = jax.block_until_ready(
        levels_mapper_forward(x, prepared, no_fine_mapper=True))
    assert float(jnp.max(jnp.abs(out_nf[:, 8:, :]))) == 0.0
    assert jnp.allclose(out_nf[:, :8, :], out[:, :8, :])

    # bf16 activation streaming (producer-supplied bf16 halves HBM traffic on
    # the mem-bound chips); output dtype follows the input.
    out_bf16 = jax.block_until_ready(
        levels_mapper_forward(x.astype(jnp.bfloat16), prepared))
    assert out_bf16.dtype == jnp.bfloat16
    err_bf16 = float(jnp.max(jnp.abs(out_bf16.astype(jnp.float32) - ref_f32)))
    assert err_bf16 < 0.5, err_bf16

    print("KERNEL_OK")
</pallas_src>

<mosaic_0001>
module attributes {stable_mosaic.version = 11 : i64} {
  func.func @_levels_kernel(%arg0: i32, %arg1: memref<2x18x512xf32, #tpu.memory_space<vmem>>, %arg2: memref<3x4x512x512xbf16, #tpu.memory_space<vmem>>, %arg3: memref<3x4x1x512xf32, #tpu.memory_space<vmem>>, %arg4: memref<2x18x512xf32, #tpu.memory_space<vmem>>, %arg5: memref<18x2x512xf32, #tpu.memory_space<vmem>>, %arg6: memref<18x2x512xf32, #tpu.memory_space<vmem>>) attributes {dimension_semantics = [#tpu.dimension_semantics<parallel>], iteration_bounds = array<i64: 1>, scalar_prefetch = 0 : i64, scratch_operands = 2 : i64, tpu.core_type = #tpu.core_type<tc>, window_params = [{transform_indices = @transform_0, window_bounds = array<i64: 2, 18, 512>}, {pipeline_mode = #tpu.pipeline_mode<synchronous>, transform_indices = @transform_1, window_bounds = array<i64: 3, 4, 512, 512>}, {pipeline_mode = #tpu.pipeline_mode<synchronous>, transform_indices = @transform_2, window_bounds = array<i64: 3, 4, 1, 512>}, {transform_indices = @transform_3, window_bounds = array<i64: 2, 18, 512>}]} {
    %c0 = arith.constant 0 : index
    %c0_0 = arith.constant 0 : index
    %c0_1 = arith.constant 0 : index
    %0 = vector.load %arg1[%c0, %c0_0, %c0_1] : memref<2x18x512xf32, #tpu.memory_space<vmem>>, vector<2x18x512xf32>
    %1 = tpu.transpose %0, [1, 0, 2] : vector<2x18x512xf32> -> vector<18x2x512xf32>
    %c0_2 = arith.constant 0 : index
    %c0_3 = arith.constant 0 : index
    %c0_4 = arith.constant 0 : index
    %2 = vector.load %arg5[%c0_2, %c0_3, %c0_4] : memref<18x2x512xf32, #tpu.memory_space<vmem>>, vector<18x2x512xf32>
    tpu.vector_store %arg5[%c0_2, %c0_3, %c0_4], %1 {strides = array<i32>} : memref<18x2x512xf32, #tpu.memory_space<vmem>>, vector<18x2x512xf32>,
    %c0_5 = arith.constant 0 : index
    %c0_6 = arith.constant 0 : index
    %c0_7 = arith.constant 0 : index
    %3 = vector.load %arg5[%c0_5, %c0_6, %c0_7] : memref<18x2x512xf32, #tpu.memory_space<vmem>>, vector<4x2x512xf32>
    %4 = arith.mulf %3, %3 : vector<4x2x512xf32>
    %cst = arith.constant dense<0.000000e+00> : vector<2x512xf32>
    %5 = vector.multi_reduction <add>, %4, %cst [0] : vector<4x2x512xf32> to vector<2x512xf32>
    %6 = vector.shape_cast %5 : vector<2x512xf32> to vector<1x2x512xf32>
    %cst_8 = arith.constant 4.000000e+00 : f32
    %7 = vector.broadcast %cst_8 : f32 to vector<1x2x512xf32>
    %8 = arith.divf %6, %7 : vector<1x2x512xf32>
    %cst_9 = arith.constant 9.99999993E-9 : f32
    %9 = vector.broadcast %cst_9 : f32 to vector<1x2x512xf32>
    %10 = arith.addf %8, %9 : vector<1x2x512xf32>
    %11 = math.rsqrt %10 : vector<1x2x512xf32>
    %12 = vector.broadcast %11 : vector<1x2x512xf32> to vector<4x2x512xf32>
    %13 = arith.mulf %3, %12 : vector<4x2x512xf32>
    %14 = vector.shape_cast %13 : vector<4x2x512xf32> to vector<8x512xf32>
    %15 = arith.truncf %14 : vector<8x512xf32> to vector<8x512xbf16>
    %c0_10 = arith.constant 0 : index
    %c0_11 = arith.constant 0 : index
    %c0_12 = arith.constant 0 : index
    %c0_13 = arith.constant 0 : index
    %16 = vector.load %arg2[%c0_10, %c0_11, %c0_12, %c0_13] : memref<3x4x512x512xbf16, #tpu.memory_space<vmem>>, vector<1x1x512x512xbf16>
    %17 = vector.shape_cast %16 : vector<1x1x512x512xbf16> to vector<512x512xbf16>
    %cst_14 = arith.constant dense<0.000000e+00> : vector<8x512xf32>
    %18 = tpu.matmul %15, %17, %cst_14 {dimension_numbers = #tpu.dot_dimension_numbers<[1], [0], [0], [1], [0, 0, 1, 1], [], []>} : vector<8x512xbf16>, vector<512x512xbf16>, vector<8x512xf32> -> vector<8x512xf32>
    %c0_15 = arith.constant 0 : index
    %c0_16 = arith.constant 0 : index
    %c0_17 = arith.constant 0 : index
    %c0_18 = arith.constant 0 : index
    %19 = vector.load %arg3[%c0_15, %c0_16, %c0_17, %c0_18] : memref<3x4x1x512xf32, #tpu.memory_space<vmem>>, vector<1x1x1x512xf32>
    %20 = vector.shape_cast %19 : vector<1x1x1x512xf32> to vector<1x512xf32>
    %21 = vector.broadcast %20 : vector<1x512xf32> to vector<8x512xf32>
    %22 = arith.addf %18, %21 : vector<8x512xf32>
    %cst_19 = arith.constant 0.000000e+00 : f32
    %23 = vector.broadcast %cst_19 : f32 to vector<8x512xf32>
    %24 = arith.cmpf oge, %22, %23 : vector<8x512xf32>
    %cst_20 = arith.constant 2.000000e-01 : f32
    %25 = vector.broadcast %cst_20 : f32 to vector<8x512xf32>
    %26 = arith.mulf %25, %22 : vector<8x512xf32>
    %27 = arith.select %24, %22, %26 : vector<8x512xi1>, vector<8x512xf32>
    %28 = arith.truncf %27 : vector<8x512xf32> to vector<8x512xbf16>
    %c0_21 = arith.constant 0 : index
    %c1 = arith.constant 1 : index
    %c0_22 = arith.constant 0 : index
    %c0_23 = arith.constant 0 : index
    %29 = vector.load %arg2[%c0_21, %c1, %c0_22, %c0_23] : memref<3x4x512x512xbf16, #tpu.memory_space<vmem>>, vector<1x1x512x512xbf16>
    %30 = vector.shape_cast %29 : vector<1x1x512x512xbf16> to vector<512x512xbf16>
    %cst_24 = arith.constant dense<0.000000e+00> : vector<8x512xf32>
    %31 = tpu.matmul %28, %30, %cst_24 {dimension_numbers = #tpu.dot_dimension_numbers<[1], [0], [0], [1], [0, 0, 1, 1], [], []>} : vector<8x512xbf16>, vector<512x512xbf16>, vector<8x512xf32> -> vector<8x512xf32>
    %c0_25 = arith.constant 0 : index
    %c1_26 = arith.constant 1 : index
    %c0_27 = arith.constant 0 : index
    %c0_28 = arith.constant 0 : index
    %32 = vector.load %arg3[%c0_25, %c1_26, %c0_27, %c0_28] : memref<3x4x1x512xf32, #tpu.memory_space<vmem>>, vector<1x1x1x512xf32>
    %33 = vector.shape_cast %32 : vector<1x1x1x512xf32> to vector<1x512xf32>
    %34 = vector.broadcast %33 : vector<1x512xf32> to vector<8x512xf32>
    %35 = arith.addf %31, %34 : vector<8x512xf32>
    %cst_29 = arith.constant 0.000000e+00 : f32
    %36 = vector.broadcast %cst_29 : f32 to vector<8x512xf32>
    %37 = arith.cmpf oge, %35, %36 : vector<8x512xf32>
    %cst_30 = arith.constant 2.000000e-01 : f32
    %38 = vector.broadcast %cst_30 : f32 to vector<8x512xf32>
    %39 = arith.mulf %38, %35 : vector<8x512xf32>
    %40 = arith.select %37, %35, %39 : vector<8x512xi1>, vector<8x512xf32>
    %41 = arith.truncf %40 : vector<8x512xf32> to vector<8x512xbf16>
    %c0_31 = arith.constant 0 : index
    %c2 = arith.constant 2 : index
    %c0_32 = arith.constant 0 : index
    %c0_33 = arith.constant 0 : index
    %42 = vector.load %arg2[%c0_31, %c2, %c0_32, %c0_33] : memref<3x4x512x512xbf16, #tpu.memory_space<vmem>>, vector<1x1x512x512xbf16>
    %43 = vector.shape_cast %42 : vector<1x1x512x512xbf16> to vector<512x512xbf16>
    %cst_34 = arith.constant dense<0.000000e+00> : vector<8x512xf32>
    %44 = tpu.matmul %41, %43, %cst_34 {dimension_numbers = #tpu.dot_dimension_numbers<[1], [0], [0], [1], [0, 0, 1, 1], [], []>} : vector<8x512xbf16>, vector<512x512xbf16>, vector<8x512xf32> -> vector<8x512xf32>
    %c0_35 = arith.constant 0 : index
    %c2_36 = arith.constant 2 : index
    %c0_37 = arith.constant 0 : index
    %c0_38 = arith.constant 0 : index
    %45 = vector.load %arg3[%c0_35, %c2_36, %c0_37, %c0_38] : memref<3x4x1x512xf32, #tpu.memory_space<vmem>>, vector<1x1x1x512xf32>
    %46 = vector.shape_cast %45 : vector<1x1x1x512xf32> to vector<1x512xf32>
    %47 = vector.broadcast %46 : vector<1x512xf32> to vector<8x512xf32>
    %48 = arith.addf %44, %47 : vector<8x512xf32>
    %cst_39 = arith.constant 0.000000e+00 : f32
    %49 = vector.broadcast %cst_39 : f32 to vector<8x512xf32>
    %50 = arith.cmpf oge, %48, %49 : vector<8x512xf32>
    %cst_40 = arith.constant 2.000000e-01 : f32
    %51 = vector.broadcast %cst_40 : f32 to vector<8x512xf32>
    %52 = arith.mulf %51, %48 : vector<8x512xf32>
    %53 = arith.select %50, %48, %52 : vector<8x512xi1>, vector<8x512xf32>
    %54 = arith.truncf %53 : vector<8x512xf32> to vector<8x512xbf16>
    %c0_41 = arith.constant 0 : index
    %c3 = arith.constant 3 : index
    %c0_42 = arith.constant 0 : index
    %c0_43 = arith.constant 0 : index
    %55 = vector.load %arg2[%c0_41, %c3, %c0_42, %c0_43] : memref<3x4x512x512xbf16, #tpu.memory_space<vmem>>, vector<1x1x512x512xbf16>
    %56 = vector.shape_cast %55 : vector<1x1x512x512xbf16> to vector<512x512xbf16>
    %cst_44 = arith.constant dense<0.000000e+00> : vector<8x512xf32>
    %57 = tpu.matmul %54, %56, %cst_44 {dimension_numbers = #tpu.dot_dimension_numbers<[1], [0], [0], [1], [0, 0, 1, 1], [], []>} : vector<8x512xbf16>, vector<512x512xbf16>, vector<8x512xf32> -> vector<8x512xf32>
    %c0_45 = arith.constant 0 : index
    %c3_46 = arith.constant 3 : index
    %c0_47 = arith.constant 0 : index
    %c0_48 = arith.constant 0 : index
    %58 = vector.load %arg3[%c0_45, %c3_46, %c0_47, %c0_48] : memref<3x4x1x512xf32, #tpu.memory_space<vmem>>, vector<1x1x1x512xf32>
    %59 = vector.shape_cast %58 : vector<1x1x1x512xf32> to vector<1x512xf32>
    %60 = vector.broadcast %59 : vector<1x512xf32> to vector<8x512xf32>
    %61 = arith.addf %57, %60 : vector<8x512xf32>
    %cst_49 = arith.constant 0.000000e+00 : f32
    %62 = vector.broadcast %cst_49 : f32 to vector<8x512xf32>
    %63 = arith.cmpf oge, %61, %62 : vector<8x512xf32>
    %cst_50 = arith.constant 2.000000e-01 : f32
    %64 = vector.broadcast %cst_50 : f32 to vector<8x512xf32>
    %65 = arith.mulf %64, %61 : vector<8x512xf32>
    %66 = arith.select %63, %61, %65 : vector<8x512xi1>, vector<8x512xf32>
    %cst_51 = arith.constant 1.41421354 : f32
    %67 = vector.broadcast %cst_51 : f32 to vector<8x512xf32>
    %68 = arith.mulf %66, %67 : vector<8x512xf32>
    %69 = vector.shape_cast %68 : vector<8x512xf32> to vector<4x2x512xf32>
    %c0_52 = arith.constant 0 : index
    %c0_53 = arith.constant 0 : index
    %c0_54 = arith.constant 0 : index
    %70 = vector.load %arg6[%c0_52, %c0_53, %c0_54] : memref<18x2x512xf32, #tpu.memory_space<vmem>>, vector<4x2x512xf32>
    tpu.vector_store %arg6[%c0_52, %c0_53, %c0_54], %69 {strides = array<i32>} : memref<18x2x512xf32, #tpu.memory_space<vmem>>, vector<4x2x512xf32>,
    %c4 = arith.constant 4 : index
    %c0_55 = arith.constant 0 : index
    %c0_56 = arith.constant 0 : index
    %71 = vector.load %arg5[%c4, %c0_55, %c0_56] : memref<18x2x512xf32, #tpu.memory_space<vmem>>, vector<4x2x512xf32>
    %72 = arith.mulf %71, %71 : vector<4x2x512xf32>
    %cst_57 = arith.constant dense<0.000000e+00> : vector<2x512xf32>
    %73 = vector.multi_reduction <add>, %72, %cst_57 [0] : vector<4x2x512xf32> to vector<2x512xf32>
    %74 = vector.shape_cast %73 : vector<2x512xf32> to vector<1x2x512xf32>
    %cst_58 = arith.constant 4.000000e+00 : f32
    %75 = vector.broadcast %cst_58 : f32 to vector<1x2x512xf32>
    %76 = arith.divf %74, %75 : vector<1x2x512xf32>
    %cst_59 = arith.constant 9.99999993E-9 : f32
    %77 = vector.broadcast %cst_59 : f32 to vector<1x2x512xf32>
    %78 = arith.addf %76, %77 : vector<1x2x512xf32>
    %79 = math.rsqrt %78 : vector<1x2x512xf32>
    %80 = vector.broadcast %79 : vector<1x2x512xf32> to vector<4x2x512xf32>
    %81 = arith.mulf %71, %80 : vector<4x2x512xf32>
    %82 = vector.shape_cast %81 : vector<4x2x512xf32> to vector<8x512xf32>
    %83 = arith.truncf %82 : vector<8x512xf32> to vector<8x512xbf16>
    %c1_60 = arith.constant 1 : index
    %c0_61 = arith.constant 0 : index
    %c0_62 = arith.constant 0 : index
    %c0_63 = arith.constant 0 : index
    %84 = vector.load %arg2[%c1_60, %c0_61, %c0_62, %c0_63] : memref<3x4x512x512xbf16, #tpu.memory_space<vmem>>, vector<1x1x512x512xbf16>
    %85 = vector.shape_cast %84 : vector<1x1x512x512xbf16> to vector<512x512xbf16>
    %cst_64 = arith.constant dense<0.000000e+00> : vector<8x512xf32>
    %86 = tpu.matmul %83, %85, %cst_64 {dimension_numbers = #tpu.dot_dimension_numbers<[1], [0], [0], [1], [0, 0, 1, 1], [], []>} : vector<8x512xbf16>, vector<512x512xbf16>, vector<8x512xf32> -> vector<8x512xf32>
    %c1_65 = arith.constant 1 : index
    %c0_66 = arith.constant 0 : index
    %c0_67 = arith.constant 0 : index
    %c0_68 = arith.constant 0 : index
    %87 = vector.load %arg3[%c1_65, %c0_66, %c0_67, %c0_68] : memref<3x4x1x512xf32, #tpu.memory_space<vmem>>, vector<1x1x1x512xf32>
    %88 = vector.shape_cast %87 : vector<1x1x1x512xf32> to vector<1x512xf32>
    %89 = vector.broadcast %88 : vector<1x512xf32> to vector<8x512xf32>
    %90 = arith.addf %86, %89 : vector<8x512xf32>
    %cst_69 = arith.constant 0.000000e+00 : f32
    %91 = vector.broadcast %cst_69 : f32 to vector<8x512xf32>
    %92 = arith.cmpf oge, %90, %91 : vector<8x512xf32>
    %cst_70 = arith.constant 2.000000e-01 : f32
    %93 = vector.broadcast %cst_70 : f32 to vector<8x512xf32>
    %94 = arith.mulf %93, %90 : vector<8x512xf32>
    %95 = arith.select %92, %90, %94 : vector<8x512xi1>, vector<8x512xf32>
    %96 = arith.truncf %95 : vector<8x512xf32> to vector<8x512xbf16>
    %c1_71 = arith.constant 1 : index
    %c1_72 = arith.constant 1 : index
    %c0_73 = arith.constant 0 : index
    %c0_74 = arith.constant 0 : index
    %97 = vector.load %arg2[%c1_71, %c1_72, %c0_73, %c0_74] : memref<3x4x512x512xbf16, #tpu.memory_space<vmem>>, vector<1x1x512x512xbf16>
    %98 = vector.shape_cast %97 : vector<1x1x512x512xbf16> to vector<512x512xbf16>
    %cst_75 = arith.constant dense<0.000000e+00> : vector<8x512xf32>
    %99 = tpu.matmul %96, %98, %cst_75 {dimension_numbers = #tpu.dot_dimension_numbers<[1], [0], [0], [1], [0, 0, 1, 1], [], []>} : vector<8x512xbf16>, vector<512x512xbf16>, vector<8x512xf32> -> vector<8x512xf32>
    %c1_76 = arith.constant 1 : index
    %c1_77 = arith.constant 1 : index
    %c0_78 = arith.constant 0 : index
    %c0_79 = arith.constant 0 : index
    %100 = vector.load %arg3[%c1_76, %c1_77, %c0_78, %c0_79] : memref<3x4x1x512xf32, #tpu.memory_space<vmem>>, vector<1x1x1x512xf32>
    %101 = vector.shape_cast %100 : vector<1x1x1x512xf32> to vector<1x512xf32>
    %102 = vector.broadcast %101 : vector<1x512xf32> to vector<8x512xf32>
    %103 = arith.addf %99, %102 : vector<8x512xf32>
    %cst_80 = arith.constant 0.000000e+00 : f32
    %104 = vector.broadcast %cst_80 : f32 to vector<8x512xf32>
    %105 = arith.cmpf oge, %103, %104 : vector<8x512xf32>
    %cst_81 = arith.constant 2.000000e-01 : f32
    %106 = vector.broadcast %cst_81 : f32 to vector<8x512xf32>
    %107 = arith.mulf %106, %103 : vector<8x512xf32>
    %108 = arith.select %105, %103, %107 : vector<8x512xi1>, vector<8x512xf32>
    %109 = arith.truncf %108 : vector<8x512xf32> to vector<8x512xbf16>
    %c1_82 = arith.constant 1 : index
    %c2_83 = arith.constant 2 : index
    %c0_84 = arith.constant 0 : index
    %c0_85 = arith.constant 0 : index
    %110 = vector.load %arg2[%c1_82, %c2_83, %c0_84, %c0_85] : memref<3x4x512x512xbf16, #tpu.memory_space<vmem>>, vector<1x1x512x512xbf16>
    %111 = vector.shape_cast %110 : vector<1x1x512x512xbf16> to vector<512x512xbf16>
    %cst_86 = arith.constant dense<0.000000e+00> : vector<8x512xf32>
    %112 = tpu.matmul %109, %111, %cst_86 {dimension_numbers = #tpu.dot_dimension_numbers<[1], [0], [0], [1], [0, 0, 1, 1], [], []>} : vector<8x512xbf16>, vector<512x512xbf16>, vector<8x512xf32> -> vector<8x512xf32>
    %c1_87 = arith.constant 1 : index
    %c2_88 = arith.constant 2 : index
    %c0_89 = arith.constant 0 : index
    %c0_90 = arith.constant 0 : index
    %113 = vector.load %arg3[%c1_87, %c2_88, %c0_89, %c0_90] : memref<3x4x1x512xf32, #tpu.memory_space<vmem>>, vector<1x1x1x512xf32>
    %114 = vector.shape_cast %113 : vector<1x1x1x512xf32> to vector<1x512xf32>
    %115 = vector.broadcast %114 : vector<1x512xf32> to vector<8x512xf32>
    %116 = arith.addf %112, %115 : vector<8x512xf32>
    %cst_91 = arith.constant 0.000000e+00 : f32
    %117 = vector.broadcast %cst_91 : f32 to vector<8x512xf32>
    %118 = arith.cmpf oge, %116, %117 : vector<8x512xf32>
    %cst_92 = arith.constant 2.000000e-01 : f32
    %119 = vector.broadcast %cst_92 : f32 to vector<8x512xf32>
    %120 = arith.mulf %119, %116 : vector<8x512xf32>
    %121 = arith.select %118, %116, %120 : vector<8x512xi1>, vector<8x512xf32>
    %122 = arith.truncf %121 : vector<8x512xf32> to vector<8x512xbf16>
    %c1_93 = arith.constant 1 : index
    %c3_94 = arith.constant 3 : index
    %c0_95 = arith.constant 0 : index
    %c0_96 = arith.constant 0 : index
    %123 = vector.load %arg2[%c1_93, %c3_94, %c0_95, %c0_96] : memref<3x4x512x512xbf16, #tpu.memory_space<vmem>>, vector<1x1x512x512xbf16>
    %124 = vector.shape_cast %123 : vector<1x1x512x512xbf16> to vector<512x512xbf16>
    %cst_97 = arith.constant dense<0.000000e+00> : vector<8x512xf32>
    %125 = tpu.matmul %122, %124, %cst_97 {dimension_numbers = #tpu.dot_dimension_numbers<[1], [0], [0], [1], [0, 0, 1, 1], [], []>} : vector<8x512xbf16>, vector<512x512xbf16>, vector<8x512xf32> -> vector<8x512xf32>
    %c1_98 = arith.constant 1 : index
    %c3_99 = arith.constant 3 : index
    %c0_100 = arith.constant 0 : index
    %c0_101 = arith.constant 0 : index
    %126 = vector.load %arg3[%c1_98, %c3_99, %c0_100, %c0_101] : memref<3x4x1x512xf32, #tpu.memory_space<vmem>>, vector<1x1x1x512xf32>
    %127 = vector.shape_cast %126 : vector<1x1x1x512xf32> to vector<1x512xf32>
    %128 = vector.broadcast %127 : vector<1x512xf32> to vector<8x512xf32>
    %129 = arith.addf %125, %128 : vector<8x512xf32>
    %cst_102 = arith.constant 0.000000e+00 : f32
    %130 = vector.broadcast %cst_102 : f32 to vector<8x512xf32>
    %131 = arith.cmpf oge, %129, %130 : vector<8x512xf32>
    %cst_103 = arith.constant 2.000000e-01 : f32
    %132 = vector.broadcast %cst_103 : f32 to vector<8x512xf32>
    %133 = arith.mulf %132, %129 : vector<8x512xf32>
    %134 = arith.select %131, %129, %133 : vector<8x512xi1>, vector<8x512xf32>
    %cst_104 = arith.constant 1.41421354 : f32
    %135 = vector.broadcast %cst_104 : f32 to vector<8x512xf32>
    %136 = arith.mulf %134, %135 : vector<8x512xf32>
    %137 = vector.shape_cast %136 : vector<8x512xf32> to vector<4x2x512xf32>
    %c4_105 = arith.constant 4 : index
    %c0_106 = arith.constant 0 : index
    %c0_107 = arith.constant 0 : index
    %138 = vector.load %arg6[%c4_105, %c0_106, %c0_107] : memref<18x2x512xf32, #tpu.memory_space<vmem>>, vector<4x2x512xf32>
    tpu.vector_store %arg6[%c4_105, %c0_106, %c0_107], %137 {strides = array<i32>} : memref<18x2x512xf32, #tpu.memory_space<vmem>>, vector<4x2x512xf32>,
    %c8 = arith.constant 8 : index
    %c0_108 = arith.constant 0 : index
    %c0_109 = arith.constant 0 : index
    %139 = vector.load %arg5[%c8, %c0_108, %c0_109] : memref<18x2x512xf32, #tpu.memory_space<vmem>>, vector<10x2x512xf32>
    %140 = arith.mulf %139, %139 : vector<10x2x512xf32>
    %cst_110 = arith.constant dense<0.000000e+00> : vector<2x512xf32>
    %141 = vector.multi_reduction <add>, %140, %cst_110 [0] : vector<10x2x512xf32> to vector<2x512xf32>
    %142 = vector.shape_cast %141 : vector<2x512xf32> to vector<1x2x512xf32>
    %cst_111 = arith.constant 1.000000e+01 : f32
    %143 = vector.broadcast %cst_111 : f32 to vector<1x2x512xf32>
    %144 = arith.divf %142, %143 : vector<1x2x512xf32>
    %cst_112 = arith.constant 9.99999993E-9 : f32
    %145 = vector.broadcast %cst_112 : f32 to vector<1x2x512xf32>
    %146 = arith.addf %144, %145 : vector<1x2x512xf32>
    %147 = math.rsqrt %146 : vector<1x2x512xf32>
    %148 = vector.broadcast %147 : vector<1x2x512xf32> to vector<10x2x512xf32>
    %149 = arith.mulf %139, %148 : vector<10x2x512xf32>
    %150 = vector.shape_cast %149 : vector<10x2x512xf32> to vector<20x512xf32>
    %151 = arith.truncf %150 : vector<20x512xf32> to vector<20x512xbf16>
    %c2_113 = arith.constant 2 : index
    %c0_114 = arith.constant 0 : index
    %c0_115 = arith.constant 0 : index
    %c0_116 = arith.constant 0 : index
    %152 = vector.load %arg2[%c2_113, %c0_114, %c0_115, %c0_116] : memref<3x4x512x512xbf16, #tpu.memory_space<vmem>>, vector<1x1x512x512xbf16>
    %153 = vector.shape_cast %152 : vector<1x1x512x512xbf16> to vector<512x512xbf16>
    %cst_117 = arith.constant dense<0.000000e+00> : vector<20x512xf32>
    %154 = tpu.matmul %151, %153, %cst_117 {dimension_numbers = #tpu.dot_dimension_numbers<[1], [0], [0], [1], [0, 0, 1, 1], [], []>} : vector<20x512xbf16>, vector<512x512xbf16>, vector<20x512xf32> -> vector<20x512xf32>
    %c2_118 = arith.constant 2 : index
    %c0_119 = arith.constant 0 : index
    %c0_120 = arith.constant 0 : index
    %c0_121 = arith.constant 0 : index
    %155 = vector.load %arg3[%c2_118, %c0_119, %c0_120, %c0_121] : memref<3x4x1x512xf32, #tpu.memory_space<vmem>>, vector<1x1x1x512xf32>
    %156 = vector.shape_cast %155 : vector<1x1x1x512xf32> to vector<1x512xf32>
    %157 = vector.broadcast %156 : vector<1x512xf32> to vector<20x512xf32>
    %158 = arith.addf %154, %157 : vector<20x512xf32>
    %cst_122 = arith.constant 0.000000e+00 : f32
    %159 = vector.broadcast %cst_122 : f32 to vector<20x512xf32>
    %160 = arith.cmpf oge, %158, %159 : vector<20x512xf32>
    %cst_123 = arith.constant 2.000000e-01 : f32
    %161 = vector.broadcast %cst_123 : f32 to vector<20x512xf32>
    %162 = arith.mulf %161, %158 : vector<20x512xf32>
    %163 = arith.select %160, %158, %162 : vector<20x512xi1>, vector<20x512xf32>
    %164 = arith.truncf %163 : vector<20x512xf32> to vector<20x512xbf16>
    %c2_124 = arith.constant 2 : index
    %c1_125 = arith.constant 1 : index
    %c0_126 = arith.constant 0 : index
    %c0_127 = arith.constant 0 : index
    %165 = vector.load %arg2[%c2_124, %c1_125, %c0_126, %c0_127] : memref<3x4x512x512xbf16, #tpu.memory_space<vmem>>, vector<1x1x512x512xbf16>
    %166 = vector.shape_cast %165 : vector<1x1x512x512xbf16> to vector<512x512xbf16>
    %cst_128 = arith.constant dense<0.000000e+00> : vector<20x512xf32>
    %167 = tpu.matmul %164, %166, %cst_128 {dimension_numbers = #tpu.dot_dimension_numbers<[1], [0], [0], [1], [0, 0, 1, 1], [], []>} : vector<20x512xbf16>, vector<512x512xbf16>, vector<20x512xf32> -> vector<20x512xf32>
    %c2_129 = arith.constant 2 : index
    %c1_130 = arith.constant 1 : index
    %c0_131 = arith.constant 0 : index
    %c0_132 = arith.constant 0 : index
    %168 = vector.load %arg3[%c2_129, %c1_130, %c0_131, %c0_132] : memref<3x4x1x512xf32, #tpu.memory_space<vmem>>, vector<1x1x1x512xf32>
    %169 = vector.shape_cast %168 : vector<1x1x1x512xf32> to vector<1x512xf32>
    %170 = vector.broadcast %169 : vector<1x512xf32> to vector<20x512xf32>
    %171 = arith.addf %167, %170 : vector<20x512xf32>
    %cst_133 = arith.constant 0.000000e+00 : f32
    %172 = vector.broadcast %cst_133 : f32 to vector<20x512xf32>
    %173 = arith.cmpf oge, %171, %172 : vector<20x512xf32>
    %cst_134 = arith.constant 2.000000e-01 : f32
    %174 = vector.broadcast %cst_134 : f32 to vector<20x512xf32>
    %175 = arith.mulf %174, %171 : vector<20x512xf32>
    %176 = arith.select %173, %171, %175 : vector<20x512xi1>, vector<20x512xf32>
    %177 = arith.truncf %176 : vector<20x512xf32> to vector<20x512xbf16>
    %c2_135 = arith.constant 2 : index
    %c2_136 = arith.constant 2 : index
    %c0_137 = arith.constant 0 : index
    %c0_138 = arith.constant 0 : index
    %178 = vector.load %arg2[%c2_135, %c2_136, %c0_137, %c0_138] : memref<3x4x512x512xbf16, #tpu.memory_space<vmem>>, vector<1x1x512x512xbf16>
    %179 = vector.shape_cast %178 : vector<1x1x512x512xbf16> to vector<512x512xbf16>
    %cst_139 = arith.constant dense<0.000000e+00> : vector<20x512xf32>
    %180 = tpu.matmul %177, %179, %cst_139 {dimension_numbers = #tpu.dot_dimension_numbers<[1], [0], [0], [1], [0, 0, 1, 1], [], []>} : vector<20x512xbf16>, vector<512x512xbf16>, vector<20x512xf32> -> vector<20x512xf32>
    %c2_140 = arith.constant 2 : index
    %c2_141 = arith.constant 2 : index
    %c0_142 = arith.constant 0 : index
    %c0_143 = arith.constant 0 : index
    %181 = vector.load %arg3[%c2_140, %c2_141, %c0_142, %c0_143] : memref<3x4x1x512xf32, #tpu.memory_space<vmem>>, vector<1x1x1x512xf32>
    %182 = vector.shape_cast %181 : vector<1x1x1x512xf32> to vector<1x512xf32>
    %183 = vector.broadcast %182 : vector<1x512xf32> to vector<20x512xf32>
    %184 = arith.addf %180, %183 : vector<20x512xf32>
    %cst_144 = arith.constant 0.000000e+00 : f32
    %185 = vector.broadcast %cst_144 : f32 to vector<20x512xf32>
    %186 = arith.cmpf oge, %184, %185 : vector<20x512xf32>
    %cst_145 = arith.constant 2.000000e-01 : f32
    %187 = vector.broadcast %cst_145 : f32 to vector<20x512xf32>
    %188 = arith.mulf %187, %184 : vector<20x512xf32>
    %189 = arith.select %186, %184, %188 : vector<20x512xi1>, vector<20x512xf32>
    %190 = arith.truncf %189 : vector<20x512xf32> to vector<20x512xbf16>
    %c2_146 = arith.constant 2 : index
    %c3_147 = arith.constant 3 : index
    %c0_148 = arith.constant 0 : index
    %c0_149 = arith.constant 0 : index
    %191 = vector.load %arg2[%c2_146, %c3_147, %c0_148, %c0_149] : memref<3x4x512x512xbf16, #tpu.memory_space<vmem>>, vector<1x1x512x512xbf16>
    %192 = vector.shape_cast %191 : vector<1x1x512x512xbf16> to vector<512x512xbf16>
    %cst_150 = arith.constant dense<0.000000e+00> : vector<20x512xf32>
    %193 = tpu.matmul %190, %192, %cst_150 {dimension_numbers = #tpu.dot_dimension_numbers<[1], [0], [0], [1], [0, 0, 1, 1], [], []>} : vector<20x512xbf16>, vector<512x512xbf16>, vector<20x512xf32> -> vector<20x512xf32>
    %c2_151 = arith.constant 2 : index
    %c3_152 = arith.constant 3 : index
    %c0_153 = arith.constant 0 : index
    %c0_154 = arith.constant 0 : index
    %194 = vector.load %arg3[%c2_151, %c3_152, %c0_153, %c0_154] : memref<3x4x1x512xf32, #tpu.memory_space<vmem>>, vector<1x1x1x512xf32>
    %195 = vector.shape_cast %194 : vector<1x1x1x512xf32> to vector<1x512xf32>
    %196 = vector.broadcast %195 : vector<1x512xf32> to vector<20x512xf32>
    %197 = arith.addf %193, %196 : vector<20x512xf32>
    %cst_155 = arith.constant 0.000000e+00 : f32
    %198 = vector.broadcast %cst_155 : f32 to vector<20x512xf32>
    %199 = arith.cmpf oge, %197, %198 : vector<20x512xf32>
    %cst_156 = arith.constant 2.000000e-01 : f32
    %200 = vector.broadcast %cst_156 : f32 to vector<20x512xf32>
    %201 = arith.mulf %200, %197 : vector<20x512xf32>
    %202 = arith.select %199, %197, %201 : vector<20x512xi1>, vector<20x512xf32>
    %cst_157 = arith.constant 1.41421354 : f32
    %203 = vector.broadcast %cst_157 : f32 to vector<20x512xf32>
    %204 = arith.mulf %202, %203 : vector<20x512xf32>
    %205 = vector.shape_cast %204 : vector<20x512xf32> to vector<10x2x512xf32>
    %c8_158 = arith.constant 8 : index
    %c0_159 = arith.constant 0 : index
    %c0_160 = arith.constant 0 : index
    %206 = vector.load %arg6[%c8_158, %c0_159, %c0_160] : memref<18x2x512xf32, #tpu.memory_space<vmem>>, vector<10x2x512xf32>
    tpu.vector_store %arg6[%c8_158, %c0_159, %c0_160], %205 {strides = array<i32>} : memref<18x2x512xf32, #tpu.memory_space<vmem>>, vector<10x2x512xf32>,
    %c0_161 = arith.constant 0 : index
    %c0_162 = arith.constant 0 : index
    %c0_163 = arith.constant 0 : index
    %207 = vector.load %arg6[%c0_161, %c0_162, %c0_163] : memref<18x2x512xf32, #tpu.memory_space<vmem>>, vector<18x2x512xf32>
    %208 = tpu.transpose %207, [1, 0, 2] : vector<18x2x512xf32> -> vector<2x18x512xf32>
    %c0_164 = arith.constant 0 : index
    %c0_165 = arith.constant 0 : index
    %c0_166 = arith.constant 0 : index
    %209 = vector.load %arg4[%c0_164, %c0_165, %c0_166] : memref<2x18x512xf32, #tpu.memory_space<vmem>>, vector<2x18x512xf32>
    tpu.vector_store %arg4[%c0_164, %c0_165, %c0_166], %208 {strides = array<i32>} : memref<2x18x512xf32, #tpu.memory_space<vmem>>, vector<2x18x512xf32>,
    return
  }
  func.func @transform_0(%arg0: i32) -> (i32, i32, i32) {
    %c0_i32 = arith.constant 0 : i32
    %c0_i32_0 = arith.constant 0 : i32
    %c0_i32_1 = arith.constant 0 : i32
    return %arg0, %c0_i32, %c0_i32_0 : i32, i32, i32
  }
  func.func @transform_1(%arg0: i32) -> (i32, i32, i32, i32) {
    %c0_i32 = arith.constant 0 : i32
    %c0_i32_0 = arith.constant 0 : i32
    %c0_i32_1 = arith.constant 0 : i32
    %c0_i32_2 = arith.constant 0 : i32
    %c0_i32_3 = arith.constant 0 : i32
    return %c0_i32, %c0_i32_0, %c0_i32_1, %c0_i32_2 : i32, i32, i32, i32
  }
  func.func @transform_2(%arg0: i32) -> (i32, i32, i32, i32) {
    %c0_i32 = arith.constant 0 : i32
    %c0_i32_0 = arith.constant 0 : i32
    %c0_i32_1 = arith.constant 0 : i32
    %c0_i32_2 = arith.constant 0 : i32
    %c0_i32_3 = arith.constant 0 : i32
    return %c0_i32, %c0_i32_0, %c0_i32_1, %c0_i32_2 : i32, i32, i32, i32
  }
  func.func @transform_3(%arg0: i32) -> (i32, i32, i32) {
    %c0_i32 = arith.constant 0 : i32
    %c0_i32_0 = arith.constant 0 : i32
    %c0_i32_1 = arith.constant 0 : i32
    return %arg0, %c0_i32, %c0_i32_0 : i32, i32, i32
  }
}

</mosaic_0001>

<llo_original>
// kernel: tpu_custom_call.1
$region0: #{tpu_custom_call.1}
  #allocation0 [shape = 'u32[]', space=smem, size = 0x4, offset = 0x4, fixed_abs, tag = 'smem constant byte address 0x4 - core index']
  #allocation1 [shape = 'u32[144,128]{1,0:T(1,128)}', space=vmem, size = 0x12000, scoped, tag = 'internal scratch']
  #allocation2 [shape = 'f32[18,2,512]{2,1,0:T(2,128)}', space=vmem, size = 0x12000, scoped, tag = 'scratch operand']
  #allocation3 [shape = 'f32[18,2,512]{2,1,0:T(2,128)}', space=vmem, size = 0x12000, scoped, tag = 'scratch operand']
  %s0 = inlined_call_operand.vmem [shape: f32[2,18,512], index: 0, kind: input, shape index: {}]
  %s1 = inlined_call_operand.hbm [shape: bf16[3,4,512,512], index: 1, kind: input, shape index: {}]
  %s2 = inlined_call_operand.hbm [shape: f32[3,4,1,512], index: 2, kind: input, shape index: {}]
  %s3 = inlined_call_operand.vmem [shape: f32[2,18,512], index: 3, kind: output, shape index: {}]
  %s4 = sld [smem:[#allocation0]]
  $region30: #{tpu_custom_call.1} parent=0
    _
  %s6 = ssub.s32 1, %s4
  %s7 = scalar_select 0, %s6, %s4
  $region1: #{tpu_custom_call.1} parent=0
    #allocation4 [shape = 'u8[6291456]{0}', space=vmem, size = 0x600000, scoped, tag = 'input window, operand 1, single buffered']
    #allocation5 [shape = 's32[1]{0}', space=sflag, size = 0x4, scoped, tag = 'scoped memory for tpu_custom_call.1']
    #allocation6 [shape = 'u8[24576]{0}', space=vmem, size = 0x6000, scoped, tag = 'input window, operand 2, single buffered']
    #allocation7 [shape = 's32[1]{0}', space=sflag, size = 0x4, scoped, tag = 'scoped memory for tpu_custom_call.1']
    %8 = vsyncpa [#allocation5], 0
    %9 = vsyncpa [#allocation7], 0
    // Predicated region
    $region2: #{tpu_custom_call.1} parent=1 // pred_check
      _
    $region3: #{tpu_custom_call.1} parent=1 // pred_check_branch
      %11 = sbr.rel (0) target = $region5
    $region4: #{tpu_custom_call.1} parent=1 // pred_region
      _
    $region5: #{tpu_custom_call.1} parent=1 // pred_fallthru
      _
    // Predicated region
    $region6: #{tpu_custom_call.1} parent=1 // pred_check
      _
    $region7: #{tpu_custom_call.1} parent=1 // pred_check_branch
      %13 = sbr.rel (0) target = $region9
    $region8: #{tpu_custom_call.1} parent=1 // pred_region
      %s15 = ssub.s32 196608, 196608
      %16 = vsyncadd [#allocation5], %s15
      %s17 = sshll.u32 [#allocation4], 4
      %s18 = int_to_ptr.vmem [resolvable:$true] %s17
      %23 = dma.hbm_to_vmem [thread:$0]  %s1, 196608, %s18, [#allocation5], 256, 256, 16
    $region9: #{tpu_custom_call.1} parent=1 // pred_fallthru
      _
    // Predicated region
    $region10: #{tpu_custom_call.1} parent=1 // pred_check
      _
    $region11: #{tpu_custom_call.1} parent=1 // pred_check_branch
      %25 = sbr.rel (0) target = $region13
    $region12: #{tpu_custom_call.1} parent=1 // pred_region
      %s27 = ssub.s32 768, 768
      %28 = vsyncadd [#allocation7], %s27
      %s29 = sshll.u32 [#allocation6], 4
      %s30 = int_to_ptr.vmem [resolvable:$true] %s29
      %35 = dma.hbm_to_vmem [thread:$0]  %s2, 768, %s30, [#allocation7], 64, 64, 4
    $region13: #{tpu_custom_call.1} parent=1 // pred_fallthru
      _
    // Predicated region
    $region14: #{tpu_custom_call.1} parent=1 // pred_check
      _
    $region15: #{tpu_custom_call.1} parent=1 // pred_check_branch
      %37 = sbr.rel (0) target = $region17
    $region16: #{tpu_custom_call.1} parent=1 // pred_region
      %38 = dma.done [#allocation5], 196608
    $region17: #{tpu_custom_call.1} parent=1 // pred_fallthru
      _
    // Predicated region
    $region18: #{tpu_custom_call.1} parent=1 // pred_check
      _
    $region19: #{tpu_custom_call.1} parent=1 // pred_check_branch
      %40 = sbr.rel (0) target = $region21
    $region20: #{tpu_custom_call.1} parent=1 // pred_region
      %41 = dma.done [#allocation7], 768
    $region21: #{tpu_custom_call.1} parent=1 // pred_fallthru
      _
    %v42 = vld [vmem:[%s0] sm:$0xff]
    %v43 = vld [vmem:[%s0 + $0x8] sm:$0xff]
    %v44 = vld [vmem:[%s0 + $0x10] sm:$0xff]
    %v45 = vld [vmem:[%s0 + $0x18] sm:$0xff]
    %v46 = vld [vmem:[%s0 + $0x20] sm:$0xff]
    %v47 = vld [vmem:[%s0 + $0x28] sm:$0xff]
    %v48 = vld [vmem:[%s0 + $0x30] sm:$0xff]
    %v49 = vld [vmem:[%s0 + $0x38] sm:$0xff]
    %v50 = vld [vmem:[%s0 + $0x40] sm:$0x3]
    %v51 = vld [vmem:[%s0 + $0x48] sm:$0x3]
    %v52 = vld [vmem:[%s0 + $0x50] sm:$0x3]
    %v53 = vld [vmem:[%s0 + $0x58] sm:$0x3]
    %v54 = vld [vmem:[%s0 + $0x60] sm:$0xff]
    %v55 = vld [vmem:[%s0 + $0x68] sm:$0xff]
    %v56 = vld [vmem:[%s0 + $0x70] sm:$0xff]
    %v57 = vld [vmem:[%s0 + $0x78] sm:$0xff]
    %v58 = vld [vmem:[%s0 + $0x80] sm:$0xff]
    %v59 = vld [vmem:[%s0 + $0x88] sm:$0xff]
    %v60 = vld [vmem:[%s0 + $0x90] sm:$0xff]
    %v61 = vld [vmem:[%s0 + $0x98] sm:$0xff]
    %v62 = vld [vmem:[%s0 + $0xa0] sm:$0x3]
    %v63 = vld [vmem:[%s0 + $0xa8] sm:$0x3]
    %v64 = vld [vmem:[%s0 + $0xb0] sm:$0x3]
    %v65 = vld [vmem:[%s0 + $0xb8] sm:$0x3]
    %v90 = vcombine.low %v42, %v43
    %v91 = vcombine.high %v42, %v43
    %v92 = vcombine.low %v44, %v45
    %v93 = vcombine.high %v44, %v45
    %v95 = vunpack.c.l.s4 1983009808
    %v96 = vunpack.c.0.s8 %v95
    %v97 = vlaneseq
    %v98 = vshrl.u32 %v97, 7
    %v99 = vsub.s32 %v96, %v98
    %v100 = vrot.slane %v90, %v99
    %v102 = vunpack.c.l.s4 1983009808
    %v103 = vunpack.c.0.s8 %v102
    %v104 = vlaneseq
    %v105 = vshrl.u32 %v104, 7
    %v106 = vsub.s32 %v103, %v105
    %v107 = vrot.slane %v91, %v106
    %v109 = vunpack.c.l.s4 1983009808
    %v110 = vunpack.c.0.s8 %v109
    %v111 = vlaneseq
    %v112 = vshrl.u32 %v111, 7
    %v113 = vsub.s32 %v110, %v112
    %v114 = vrot.slane %v92, %v113
    %v116 = vunpack.c.l.s4 1983009808
    %v117 = vunpack.c.0.s8 %v116
    %v118 = vlaneseq
    %v119 = vshrl.u32 %v118, 7
    %v120 = vsub.s32 %v117, %v119
    %v121 = vrot.slane %v93, %v120
    %v122 = vcombine.low %v100, %v114
    %v123 = vcombine.high %v100, %v114
    %v124 = vcombine.low %v107, %v121
    %v125 = vcombine.high %v107, %v121
    %v126 = vcombine.low %v46, %v47
    %v127 = vcombine.high %v46, %v47
    %v128 = vcombine.low %v48, %v49
    %v129 = vcombine.high %v48, %v49
    %v131 = vunpack.c.l.s4 1983009808
    %v132 = vunpack.c.0.s8 %v131
    %v133 = vlaneseq
    %v134 = vshrl.u32 %v133, 7
    %v135 = vsub.s32 %v132, %v134
    %v136 = vrot.slane %v126, %v135
    %v138 = vunpack.c.l.s4 1983009808
    %v139 = vunpack.c.0.s8 %v138
    %v140 = vlaneseq
    %v141 = vshrl.u32 %v140, 7
    %v142 = vsub.s32 %v139, %v141
    %v143 = vrot.slane %v127, %v142
    %v145 = vunpack.c.l.s4 1983009808
    %v146 = vunpack.c.0.s8 %v145
    %v147 = vlaneseq
    %v148 = vshrl.u32 %v147, 7
    %v149 = vsub.s32 %v146, %v148
    %v150 = vrot.slane %v128, %v149
    %v152 = vunpack.c.l.s4 1983009808
    %v153 = vunpack.c.0.s8 %v152
    %v154 = vlaneseq
    %v155 = vshrl.u32 %v154, 7
    %v156 = vsub.s32 %v153, %v155
    %v157 = vrot.slane %v129, %v156
    %v158 = vcombine.low %v136, %v150
    %v159 = vcombine.high %v136, %v150
    %v160 = vcombine.low %v143, %v157
    %v161 = vcombine.high %v143, %v157
    %v162 = vcombine.low %v50, %v51
    %v163 = vcombine.low %v52, %v53
    %v165 = vunpack.c.l.s4 1983009808
    %v166 = vunpack.c.0.s8 %v165
    %v167 = vlaneseq
    %v168 = vshrl.u32 %v167, 7
    %v169 = vsub.s32 %v166, %v168
    %v170 = vrot.slane %v162, %v169
    %v172 = vunpack.c.l.s4 1983009808
    %v173 = vunpack.c.0.s8 %v172
    %v174 = vlaneseq
    %v175 = vshrl.u32 %v174, 7
    %v176 = vsub.s32 %v173, %v175
    %v177 = vrot.slane %v163, %v176
    %v178 = vcombine.low %v170, %v177
    %v179 = vcombine.low %v54, %v55
    %v180 = vcombine.high %v54, %v55
    %v181 = vcombine.low %v56, %v57
    %v182 = vcombine.high %v56, %v57
    %v184 = vunpack.c.l.s4 1983009808
    %v185 = vunpack.c.0.s8 %v184
    %v186 = vlaneseq
    %v187 = vshrl.u32 %v186, 7
    %v188 = vsub.s32 %v185, %v187
    %v189 = vrot.slane %v179, %v188
    %v191 = vunpack.c.l.s4 1983009808
    %v192 = vunpack.c.0.s8 %v191
    %v193 = vlaneseq
    %v194 = vshrl.u32 %v193, 7
    %v195 = vsub.s32 %v192, %v194
    %v196 = vrot.slane %v180, %v195
    %v198 = vunpack.c.l.s4 1983009808
    %v199 = vunpack.c.0.s8 %v198
    %v200 = vlaneseq
    %v201 = vshrl.u32 %v200, 7
    %v202 = vsub.s32 %v199, %v201
    %v203 = vrot.slane %v181, %v202
    %v205 = vunpack.c.l.s4 1983009808
    %v206 = vunpack.c.0.s8 %v205
    %v207 = vlaneseq
    %v208 = vshrl.u32 %v207, 7
    %v209 = vsub.s32 %v206, %v208
    %v210 = vrot.slane %v182, %v209
    %v211 = vcombine.low %v189, %v203
    %v212 = vcombine.high %v189, %v203
    %v213 = vcombine.low %v196, %v210
    %v214 = vcombine.high %v196, %v210
    %v215 = vcombine.low %v58, %v59
    %v216 = vcombine.high %v58, %v59
    %v217 = vcombine.low %v60, %v61
    %v218 = vcombine.high %v60, %v61
    %v220 = vunpack.c.l.s4 1983009808
    %v221 = vunpack.c.0.s8 %v220
    %v222 = vlaneseq
    %v223 = vshrl.u32 %v222, 7
    %v224 = vsub.s32 %v221, %v223
    %v225 = vrot.slane %v215, %v224
    %v227 = vunpack.c.l.s4 1983009808
    %v228 = vunpack.c.0.s8 %v227
    %v229 = vlaneseq
    %v230 = vshrl.u32 %v229, 7
    %v231 = vsub.s32 %v228, %v230
    %v232 = vrot.slane %v216, %v231
    %v234 = vunpack.c.l.s4 1983009808
    %v235 = vunpack.c.0.s8 %v234
    %v236 = vlaneseq
    %v237 = vshrl.u32 %v236, 7
    %v238 = vsub.s32 %v235, %v237
    %v239 = vrot.slane %v217, %v238
    %v241 = vunpack.c.l.s4 1983009808
    %v242 = vunpack.c.0.s8 %v241
    %v243 = vlaneseq
    %v244 = vshrl.u32 %v243, 7
    %v245 = vsub.s32 %v242, %v244
    %v246 = vrot.slane %v218, %v245
    %v247 = vcombine.low %v225, %v239
    %v248 = vcombine.high %v225, %v239
    %v249 = vcombine.low %v232, %v246
    %v250 = vcombine.high %v232, %v246
    %v251 = vcombine.low %v62, %v63
    %v252 = vcombine.low %v64, %v65
    %v254 = vunpack.c.l.s4 1983009808
    %v255 = vunpack.c.0.s8 %v254
    %v256 = vlaneseq
    %v257 = vshrl.u32 %v256, 7
    %v258 = vsub.s32 %v255, %v257
    %v259 = vrot.slane %v251, %v258
    %v261 = vunpack.c.l.s4 1983009808
    %v262 = vunpack.c.0.s8 %v261
    %v263 = vlaneseq
    %v264 = vshrl.u32 %v263, 7
    %v265 = vsub.s32 %v262, %v264
    %v266 = vrot.slane %v252, %v265
    %v267 = vcombine.low %v259, %v266
    %v286 = vcombine.low %v122, %v211
    %v287 = vcombine.high %v122, %v211
    %v289 = vunpack.c.l.s4 1934713408
    %v290 = vunpack.c.0.s8 %v289
    %v291 = vlaneseq
    %v292 = vshrl.u32 %v291, 7
    %v293 = vsub.s32 %v290, %v292
    %v294 = vrot.slane %v286, %v293
    %v296 = vunpack.c.l.s4 1934713408
    %v297 = vunpack.c.0.s8 %v296
    %v298 = vlaneseq
    %v299 = vshrl.u32 %v298, 7
    %v300 = vsub.s32 %v297, %v299
    %v301 = vrot.slane %v287, %v300
    %v302 = vcombine.low %v294, %v301
    %v303 = vcombine.high %v294, %v301
    %v304 = vcombine.low %v123, %v212
    %v305 = vcombine.high %v123, %v212
    %v307 = vunpack.c.l.s4 1934713408
    %v308 = vunpack.c.0.s8 %v307
    %v309 = vlaneseq
    %v310 = vshrl.u32 %v309, 7
    %v311 = vsub.s32 %v308, %v310
    %v312 = vrot.slane %v304, %v311
    %v314 = vunpack.c.l.s4 1934713408
    %v315 = vunpack.c.0.s8 %v314
    %v316 = vlaneseq
    %v317 = vshrl.u32 %v316, 7
    %v318 = vsub.s32 %v315, %v317
    %v319 = vrot.slane %v305, %v318
    %v320 = vcombine.low %v312, %v319
    %v321 = vcombine.high %v312, %v319
    %v322 = vcombine.low %v124, %v213
    %v323 = vcombine.high %v124, %v213
    %v325 = vunpack.c.l.s4 1934713408
    %v326 = vunpack.c.0.s8 %v325
    %v327 = vlaneseq
    %v328 = vshrl.u32 %v327, 7
    %v329 = vsub.s32 %v326, %v328
    %v330 = vrot.slane %v322, %v329
    %v332 = vunpack.c.l.s4 1934713408
    %v333 = vunpack.c.0.s8 %v332
    %v334 = vlaneseq
    %v335 = vshrl.u32 %v334, 7
    %v336 = vsub.s32 %v333, %v335
    %v337 = vrot.slane %v323, %v336
    %v338 = vcombine.low %v330, %v337
    %v339 = vcombine.high %v330, %v337
    %v340 = vcombine.low %v125, %v214
    %v341 = vcombine.high %v125, %v214
    %v343 = vunpack.c.l.s4 1934713408
    %v344 = vunpack.c.0.s8 %v343
    %v345 = vlaneseq
    %v346 = vshrl.u32 %v345, 7
    %v347 = vsub.s32 %v344, %v346
    %v348 = vrot.slane %v340, %v347
    %v350 = vunpack.c.l.s4 1934713408
    %v351 = vunpack.c.0.s8 %v350
    %v352 = vlaneseq
    %v353 = vshrl.u32 %v352, 7
    %v354 = vsub.s32 %v351, %v353
    %v355 = vrot.slane %v341, %v354
    %v356 = vcombine.low %v348, %v355
    %v357 = vcombine.high %v348, %v355
    %v358 = vcombine.low %v158, %v247
    %v359 = vcombine.high %v158, %v247
    %v361 = vunpack.c.l.s4 1934713408
    %v362 = vunpack.c.0.s8 %v361
    %v363 = vlaneseq
    %v364 = vshrl.u32 %v363, 7
    %v365 = vsub.s32 %v362, %v364
    %v366 = vrot.slane %v358, %v365
    %v368 = vunpack.c.l.s4 1934713408
    %v369 = vunpack.c.0.s8 %v368
    %v370 = vlaneseq
    %v371 = vshrl.u32 %v370, 7
    %v372 = vsub.s32 %v369, %v371
    %v373 = vrot.slane %v359, %v372
    %v374 = vcombine.low %v366, %v373
    %v375 = vcombine.high %v366, %v373
    %v376 = vcombine.low %v159, %v248
    %v377 = vcombine.high %v159, %v248
    %v379 = vunpack.c.l.s4 1934713408
    %v380 = vunpack.c.0.s8 %v379
    %v381 = vlaneseq
    %v382 = vshrl.u32 %v381, 7
    %v383 = vsub.s32 %v380, %v382
    %v384 = vrot.slane %v376, %v383
    %v386 = vunpack.c.l.s4 1934713408
    %v387 = vunpack.c.0.s8 %v386
    %v388 = vlaneseq
    %v389 = vshrl.u32 %v388, 7
    %v390 = vsub.s32 %v387, %v389
    %v391 = vrot.slane %v377, %v390
    %v392 = vcombine.low %v384, %v391
    %v393 = vcombine.high %v384, %v391
    %v394 = vcombine.low %v160, %v249
    %v395 = vcombine.high %v160, %v249
    %v397 = vunpack.c.l.s4 1934713408
    %v398 = vunpack.c.0.s8 %v397
    %v399 = vlaneseq
    %v400 = vshrl.u32 %v399, 7
    %v401 = vsub.s32 %v398, %v400
    %v402 = vrot.slane %v394, %v401
    %v404 = vunpack.c.l.s4 1934713408
    %v405 = vunpack.c.0.s8 %v404
    %v406 = vlaneseq
    %v407 = vshrl.u32 %v406, 7
    %v408 = vsub.s32 %v405, %v407
    %v409 = vrot.slane %v395, %v408
    %v410 = vcombine.low %v402, %v409
    %v411 = vcombine.high %v402, %v409
    %v412 = vcombine.low %v161, %v250
    %v413 = vcombine.high %v161, %v250
    %v415 = vunpack.c.l.s4 1934713408
    %v416 = vunpack.c.0.s8 %v415
    %v417 = vlaneseq
    %v418 = vshrl.u32 %v417, 7
    %v419 = vsub.s32 %v416, %v418
    %v420 = vrot.slane %v412, %v419
    %v422 = vunpack.c.l.s4 1934713408
    %v423 = vunpack.c.0.s8 %v422
    %v424 = vlaneseq
    %v425 = vshrl.u32 %v424, 7
    %v426 = vsub.s32 %v423, %v425
    %v427 = vrot.slane %v413, %v426
    %v428 = vcombine.low %v420, %v427
    %v429 = vcombine.high %v420, %v427
    %v430 = vcombine.low %v178, %v267
    %v431 = vcombine.high %v178, %v267
    %v433 = vunpack.c.l.s4 1934713408
    %v434 = vunpack.c.0.s8 %v433
    %v435 = vlaneseq
    %v436 = vshrl.u32 %v435, 7
    %v437 = vsub.s32 %v434, %v436
    %v438 = vrot.slane %v430, %v437
    %v440 = vunpack.c.l.s4 1934713408
    %v441 = vunpack.c.0.s8 %v440
    %v442 = vlaneseq
    %v443 = vshrl.u32 %v442, 7
    %v444 = vsub.s32 %v441, %v443
    %v445 = vrot.slane %v431, %v444
    %v446 = vcombine.low %v438, %v445
    %v447 = vcombine.high %v438, %v445
    %448 = vst [vmem:[#allocation2] sm:$0xff] %v302
    %449 = vst [vmem:[#allocation2 + $0x8] sm:$0xff] %v303
    %450 = vst [vmem:[#allocation2 + $0x10] sm:$0xff] %v320
    %451 = vst [vmem:[#allocation2 + $0x18] sm:$0xff] %v321
    %452 = vst [vmem:[#allocation2 + $0x20] sm:$0xff] %v338
    %453 = vst [vmem:[#allocation2 + $0x28] sm:$0xff] %v339
    %454 = vst [vmem:[#allocation2 + $0x30] sm:$0xff] %v356
    %455 = vst [vmem:[#allocation2 + $0x38] sm:$0xff] %v357
    %456 = vst [vmem:[#allocation2 + $0x40] sm:$0xff] %v374
    %457 = vst [vmem:[#allocation2 + $0x48] sm:$0xff] %v375
    %458 = vst [vmem:[#allocation2 + $0x50] sm:$0xff] %v392
    %459 = vst [vmem:[#allocation2 + $0x58] sm:$0xff] %v393
    %460 = vst [vmem:[#allocation2 + $0x60] sm:$0xff] %v410
    %461 = vst [vmem:[#allocation2 + $0x68] sm:$0xff] %v411
    %462 = vst [vmem:[#allocation2 + $0x70] sm:$0xff] %v428
    %463 = vst [vmem:[#allocation2 + $0x78] sm:$0xff] %v429
    %464 = vst [vmem:[#allocation2 + $0x80] sm:$0xff] %v446
    %465 = vst [vmem:[#allocation2 + $0x88] sm:$0xff] %v447
    %v466 = vld [vmem:[#allocation2] sm:$0xff]
    %v467 = vld [vmem:[#allocation2 + $0x8] sm:$0xff]
    %v468 = vld [vmem:[#allocation2 + $0x10] sm:$0xff]
    %v469 = vld [vmem:[#allocation2 + $0x18] sm:$0xff]
    %v470 = vmul.f32 %v466, %v466
    %v471 = vmul.f32 %v467, %v467
    %v472 = vmul.f32 %v468, %v468
    %v473 = vmul.f32 %v469, %v469
    %v478 = vcombine.high %v470, %v470
    %v480 = vunpack.c.l.s4 1983009808
    %v481 = vunpack.c.0.s8 %v480
    %v482 = vlaneseq
    %v483 = vshrl.u32 %v482, 7
    %v484 = vsub.s32 %v481, %v483
    %v485 = vrot.slane %v470, %v484
    %v487 = vunpack.c.l.s4 1983009808
    %v488 = vunpack.c.0.s8 %v487
    %v489 = vlaneseq
    %v490 = vshrl.u32 %v489, 7
    %v491 = vsub.s32 %v488, %v490
    %v492 = vrot.slane %v478, %v491
    %v493 = vcombine.high %v485, %v485
    %v494 = vcombine.high %v492, %v492
    %v495 = vcombine.high %v471, %v471
    %v497 = vunpack.c.l.s4 1983009808
    %v498 = vunpack.c.0.s8 %v497
    %v499 = vlaneseq
    %v500 = vshrl.u32 %v499, 7
    %v501 = vsub.s32 %v498, %v500
    %v502 = vrot.slane %v471, %v501
    %v504 = vunpack.c.l.s4 1983009808
    %v505 = vunpack.c.0.s8 %v504
    %v506 = vlaneseq
    %v507 = vshrl.u32 %v506, 7
    %v508 = vsub.s32 %v505, %v507
    %v509 = vrot.slane %v495, %v508
    %v510 = vcombine.high %v502, %v502
    %v511 = vcombine.high %v509, %v509
    %v512 = vcombine.high %v472, %v472
    %v514 = vunpack.c.l.s4 1983009808
    %v515 = vunpack.c.0.s8 %v514
    %v516 = vlaneseq
    %v517 = vshrl.u32 %v516, 7
    %v518 = vsub.s32 %v515, %v517
    %v519 = vrot.slane %v472, %v518
    %v521 = vunpack.c.l.s4 1983009808
    %v522 = vunpack.c.0.s8 %v521
    %v523 = vlaneseq
    %v524 = vshrl.u32 %v523, 7
    %v525 = vsub.s32 %v522, %v524
    %v526 = vrot.slane %v512, %v525
    %v527 = vcombine.high %v519, %v519
    %v528 = vcombine.high %v526, %v526
    %v529 = vcombine.high %v473, %v473
    %v531 = vunpack.c.l.s4 1983009808
    %v532 = vunpack.c.0.s8 %v531
    %v533 = vlaneseq
    %v534 = vshrl.u32 %v533, 7
    %v535 = vsub.s32 %v532, %v534
    %v536 = vrot.slane %v473, %v535
    %v538 = vunpack.c.l.s4 1983009808
    %v539 = vunpack.c.0.s8 %v538
    %v540 = vlaneseq
    %v541 = vshrl.u32 %v540, 7
    %v542 = vsub.s32 %v539, %v541
    %v543 = vrot.slane %v529, %v542
    %v544 = vcombine.high %v536, %v536
    %v545 = vcombine.high %v543, %v543
    %vm562 = vcmask 1041408
    %v563 = vsel %vm562, %v485, 0.0
    %v564 = vsel %vm562, %v502, 0.0
    %v565 = vadd.f32 %v563, %v564
    %v566 = vsel %vm562, %v519, 0.0
    %v567 = vadd.f32 %v565, %v566
    %v568 = vsel %vm562, %v536, 0.0
    %v569 = vadd.f32 %v567, %v568
    %v570 = vsel %vm562, %v493, 0.0
    %v571 = vsel %vm562, %v510, 0.0
    %v572 = vadd.f32 %v570, %v571
    %v573 = vsel %vm562, %v527, 0.0
    %v574 = vadd.f32 %v572, %v573
    %v575 = vsel %vm562, %v544, 0.0
    %v576 = vadd.f32 %v574, %v575
    %v577 = vsel %vm562, %v492, 0.0
    %v578 = vsel %vm562, %v509, 0.0
    %v579 = vadd.f32 %v577, %v578
    %v580 = vsel %vm562, %v526, 0.0
    %v581 = vadd.f32 %v579, %v580
    %v582 = vsel %vm562, %v543, 0.0
    %v583 = vadd.f32 %v581, %v582
    %v584 = vsel %vm562, %v494, 0.0
    %v585 = vsel %vm562, %v511, 0.0
    %v586 = vadd.f32 %v584, %v585
    %v587 = vsel %vm562, %v528, 0.0
    %v588 = vadd.f32 %v586, %v587
    %v589 = vsel %vm562, %v545, 0.0
    %v590 = vadd.f32 %v588, %v589
    %v591 = vrcp.pop 4.0
    %v592 = vmul.f32 %v569, %v591
    %v593 = vmul.f32 %v576, %v591
    %v594 = vmul.f32 %v583, %v591
    %v595 = vmul.f32 %v590, %v591
    %v596 = vadd.f32 %v592, 1e-08
    %v597 = vadd.f32 %v593, 1e-08
    %v598 = vadd.f32 %v594, 1e-08
    %v599 = vadd.f32 %v595, 1e-08
    %v600 = vrsqrt.pop %v596
    %v601 = vrsqrt.pop %v597
    %v602 = vrsqrt.pop %v598
    %v603 = vrsqrt.pop %v599
    %v608 = vcombine.low %v600, %v601
    %v609 = vcombine.low %v602, %v603
    %v611 = vunpack.c.l.s4 1983009808
    %v612 = vunpack.c.0.s8 %v611
    %v613 = vlaneseq
    %v614 = vshrl.u32 %v613, 7
    %v615 = vsub.s32 %v612, %v614
    %v616 = vrot.slane %v608, %v615
    %v618 = vunpack.c.l.s4 1983009808
    %v619 = vunpack.c.0.s8 %v618
    %v620 = vlaneseq
    %v621 = vshrl.u32 %v620, 7
    %v622 = vsub.s32 %v619, %v621
    %v623 = vrot.slane %v609, %v622
    %v624 = vcombine.low %v616, %v623
    %v626 = vmul.f32 %v466, %v624
    %v627 = vmul.f32 %v467, %v624
    %v628 = vmul.f32 %v468, %v624
    %v629 = vmul.f32 %v469, %v624
    %v634 = vcombine.low %v626, %v627
    %v635 = vcombine.high %v626, %v627
    %v636 = vcombine.low %v628, %v629
    %v637 = vcombine.high %v628, %v629
    %v639 = vunpack.c.l.s4 1983009808
    %v640 = vunpack.c.0.s8 %v639
    %v641 = vlaneseq
    %v642 = vshrl.u32 %v641, 7
    %v643 = vsub.s32 %v640, %v642
    %v644 = vrot.slane %v634, %v643
    %v646 = vunpack.c.l.s4 1983009808
    %v647 = vunpack.c.0.s8 %v646
    %v648 = vlaneseq
    %v649 = vshrl.u32 %v648, 7
    %v650 = vsub.s32 %v647, %v649
    %v651 = vrot.slane %v635, %v650
    %v653 = vunpack.c.l.s4 1983009808
    %v654 = vunpack.c.0.s8 %v653
    %v655 = vlaneseq
    %v656 = vshrl.u32 %v655, 7
    %v657 = vsub.s32 %v654, %v656
    %v658 = vrot.slane %v636, %v657
    %v660 = vunpack.c.l.s4 1983009808
    %v661 = vunpack.c.0.s8 %v660
    %v662 = vlaneseq
    %v663 = vshrl.u32 %v662, 7
    %v664 = vsub.s32 %v661, %v663
    %v665 = vrot.slane %v637, %v664
    %v666 = vcombine.low %v644, %v658
    %v667 = vcombine.high %v644, %v658
    %v668 = vcombine.low %v651, %v665
    %v669 = vcombine.high %v651, %v665
    %v674 = vpack.c.bf16 %v666, %v666
    %v675 = vpack.c.bf16 %v667, %v667
    %v676 = vpack.c.bf16 %v668, %v668
    %v677 = vpack.c.bf16 %v669, %v669
    %v678 = vld [vmem:[#allocation4] sm:$0xff]
    %v679 = vld [vmem:[#allocation4 + $0x8] sm:$0xff]
    %v680 = vld [vmem:[#allocation4 + $0x10] sm:$0xff]
    %v681 = vld [vmem:[#allocation4 + $0x18] sm:$0xff]
    %v682 = vld [vmem:[#allocation4 + $0x20] sm:$0xff]
    %v683 = vld [vmem:[#allocation4 + $0x28] sm:$0xff]
    %v684 = vld [vmem:[#allocation4 + $0x30] sm:$0xff]
    %v685 = vld [vmem:[#allocation4 + $0x38] sm:$0xff]
    %v686 = vld [vmem:[#allocation4 + $0x40] sm:$0xff]
    %v687 = vld [vmem:[#allocation4 + $0x48] sm:$0xff]
    %v688 = vld [vmem:[#allocation4 + $0x50] sm:$0xff]
    %v689 = vld [vmem:[#allocation4 + $0x58] sm:$0xff]
    %v690 = vld [vmem:[#allocation4 + $0x60] sm:$0xff]
    %v691 = vld [vmem:[#allocation4 + $0x68] sm:$0xff]
    %v692 = vld [vmem:[#allocation4 + $0x70] sm:$0xff]
    %v693 = vld [vmem:[#allocation4 + $0x78] sm:$0xff]
    %v694 = vld [vmem:[#allocation4 + $0x80] sm:$0xff]
    %v695 = vld [vmem:[#allocation4 + $0x88] sm:$0xff]
    %v696 = vld [vmem:[#allocation4 + $0x90] sm:$0xff]
    %v697 = vld [vmem:[#allocation4 + $0x98] sm:$0xff]
    %v698 = vld [vmem:[#allocation4 + $0xa0] sm:$0xff]
    %v699 = vld [vmem:[#allocation4 + $0xa8] sm:$0xff]
    %v700 = vld [vmem:[#allocation4 + $0xb0] sm:$0xff]
    %v701 = vld [vmem:[#allocation4 + $0xb8] sm:$0xff]
    %v702 = vld [vmem:[#allocation4 + $0xc0] sm:$0xff]
    %v703 = vld [vmem:[#allocation4 + $0xc8] sm:$0xff]
    %v704 = vld [vmem:[#allocation4 + $0xd0] sm:$0xff]
    %v705 = vld [vmem:[#allocation4 + $0xd8] sm:$0xff]
    %v706 = vld [vmem:[#allocation4 + $0xe0] sm:$0xff]
    %v707 = vld [vmem:[#allocation4 + $0xe8] sm:$0xff]
    %v708 = vld [vmem:[#allocation4 + $0xf0] sm:$0xff]
    %v709 = vld [vmem:[#allocation4 + $0xf8] sm:$0xff]
    %v710 = vld [vmem:[#allocation4 + $0x100] sm:$0xff]
    %v711 = vld [vmem:[#allocation4 + $0x108] sm:$0xff]
    %v712 = vld [vmem:[#allocation4 + $0x110] sm:$0xff]
    %v713 = vld [vmem:[#allocation4 + $0x118] sm:$0xff]
    %v714 = vld [vmem:[#allocation4 + $0x120] sm:$0xff]
    %v715 = vld [vmem:[#allocation4 + $0x128] sm:$0xff]
    %v716 = vld [vmem:[#allocation4 + $0x130] sm:$0xff]
    %v717 = vld [vmem:[#allocation4 + $0x138] sm:$0xff]
    %v718 = vld [vmem:[#allocation4 + $0x140] sm:$0xff]
    %v719 = vld [vmem:[#allocation4 + $0x148] sm:$0xff]
    %v720 = vld [vmem:[#allocation4 + $0x150] sm:$0xff]
    %v721 = vld [vmem:[#allocation4 + $0x158] sm:$0xff]
    %v722 = vld [vmem:[#allocation4 + $0x160] sm:$0xff]
    %v723 = vld [vmem:[#allocation4 + $0x168] sm:$0xff]
    %v724 = vld [vmem:[#allocation4 + $0x170] sm:$0xff]
    %v725 = vld [vmem:[#allocation4 + $0x178] sm:$0xff]
    %v726 = vld [vmem:[#allocation4 + $0x180] sm:$0xff]
    %v727 = vld [vmem:[#allocation4 + $0x188] sm:$0xff]
    %v728 = vld [vmem:[#allocation4 + $0x190] sm:$0xff]
    %v729 = vld [vmem:[#allocation4 + $0x198] sm:$0xff]
    %v730 = vld [vmem:[#allocation4 + $0x1a0] sm:$0xff]
    %v731 = vld [vmem:[#allocation4 + $0x1a8] sm:$0xff]
    %v732 = vld [vmem:[#allocation4 + $0x1b0] sm:$0xff]
    %v733 = vld [vmem:[#allocation4 + $0x1b8] sm:$0xff]
    %v734 = vld [vmem:[#allocation4 + $0x1c0] sm:$0xff]
    %v735 = vld [vmem:[#allocation4 + $0x1c8] sm:$0xff]
    %v736 = vld [vmem:[#allocation4 + $0x1d0] sm:$0xff]
    %v737 = vld [vmem:[#allocation4 + $0x1d8] sm:$0xff]
    %v738 = vld [vmem:[#allocation4 + $0x1e0] sm:$0xff]
    %v739 = vld [vmem:[#allocation4 + $0x1e8] sm:$0xff]
    %v740 = vld [vmem:[#allocation4 + $0x1f0] sm:$0xff]
    %v741 = vld [vmem:[#allocation4 + $0x1f8] sm:$0xff]
    %v742 = vld [vmem:[#allocation4 + $0x200] sm:$0xff]
    %v743 = vld [vmem:[#allocation4 + $0x208] sm:$0xff]
    %v744 = vld [vmem:[#allocation4 + $0x210] sm:$0xff]
    %v745 = vld [vmem:[#allocation4 + $0x218] sm:$0xff]
    %v746 = vld [vmem:[#allocation4 + $0x220] sm:$0xff]
    %v747 = vld [vmem:[#allocation4 + $0x228] sm:$0xff]
    %v748 = vld [vmem:[#allocation4 + $0x230] sm:$0xff]
    %v749 = vld [vmem:[#allocation4 + $0x238] sm:$0xff]
    %v750 = vld [vmem:[#allocation4 + $0x240] sm:$0xff]
    %v751 = vld [vmem:[#allocation4 + $0x248] sm:$0xff]
    %v752 = vld [vmem:[#allocation4 + $0x250] sm:$0xff]
    %v753 = vld [vmem:[#allocation4 + $0x258] sm:$0xff]
    %v754 = vld [vmem:[#allocation4 + $0x260] sm:$0xff]
    %v755 = vld [vmem:[#allocation4 + $0x268] sm:$0xff]
    %v756 = vld [vmem:[#allocation4 + $0x270] sm:$0xff]
    %v757 = vld [vmem:[#allocation4 + $0x278] sm:$0xff]
    %v758 = vld [vmem:[#allocation4 + $0x280] sm:$0xff]
    %v759 = vld [vmem:[#allocation4 + $0x288] sm:$0xff]
    %v760 = vld [vmem:[#allocation4 + $0x290] sm:$0xff]
    %v761 = vld [vmem:[#allocation4 + $0x298] sm:$0xff]
    %v762 = vld [vmem:[#allocation4 + $0x2a0] sm:$0xff]
    %v763 = vld [vmem:[#allocation4 + $0x2a8] sm:$0xff]
    %v764 = vld [vmem:[#allocation4 + $0x2b0] sm:$0xff]
    %v765 = vld [vmem:[#allocation4 + $0x2b8] sm:$0xff]
    %v766 = vld [vmem:[#allocation4 + $0x2c0] sm:$0xff]
    %v767 = vld [vmem:[#allocation4 + $0x2c8] sm:$0xff]
    %v768 = vld [vmem:[#allocation4 + $0x2d0] sm:$0xff]
    %v769 = vld [vmem:[#allocation4 + $0x2d8] sm:$0xff]
    %v770 = vld [vmem:[#allocation4 + $0x2e0] sm:$0xff]
    %v771 = vld [vmem:[#allocation4 + $0x2e8] sm:$0xff]
    %v772 = vld [vmem:[#allocation4 + $0x2f0] sm:$0xff]
    %v773 = vld [vmem:[#allocation4 + $0x2f8] sm:$0xff]
    %v774 = vld [vmem:[#allocation4 + $0x300] sm:$0xff]
    %v775 = vld [vmem:[#allocation4 + $0x308] sm:$0xff]
    %v776 = vld [vmem:[#allocation4 + $0x310] sm:$0xff]
    %v777 = vld [vmem:[#allocation4 + $0x318] sm:$0xff]
    %v778 = vld [vmem:[#allocation4 + $0x320] sm:$0xff]
    %v779 = vld [vmem:[#allocation4 + $0x328] sm:$0xff]
    %v780 = vld [vmem:[#allocation4 + $0x330] sm:$0xff]
    %v781 = vld [vmem:[#allocation4 + $0x338] sm:$0xff]
    %v782 = vld [vmem:[#allocation4 + $0x340] sm:$0xff]
    %v783 = vld [vmem:[#allocation4 + $0x348] sm:$0xff]
    %v784 = vld [vmem:[#allocation4 + $0x350] sm:$0xff]
    %v785 = vld [vmem:[#allocation4 + $0x358] sm:$0xff]
    %v786 = vld [vmem:[#allocation4 + $0x360] sm:$0xff]
    %v787 = vld [vmem:[#allocation4 + $0x368] sm:$0xff]
    %v788 = vld [vmem:[#allocation4 + $0x370] sm:$0xff]
    %v789 = vld [vmem:[#allocation4 + $0x378] sm:$0xff]
    %v790 = vld [vmem:[#allocation4 + $0x380] sm:$0xff]
    %v791 = vld [vmem:[#allocation4 + $0x388] sm:$0xff]
    %v792 = vld [vmem:[#allocation4 + $0x390] sm:$0xff]
    %v793 = vld [vmem:[#allocation4 + $0x398] sm:$0xff]
    %v794 = vld [vmem:[#allocation4 + $0x3a0] sm:$0xff]
    %v795 = vld [vmem:[#allocation4 + $0x3a8] sm:$0xff]
    %v796 = vld [vmem:[#allocation4 + $0x3b0] sm:$0xff]
    %v797 = vld [vmem:[#allocation4 + $0x3b8] sm:$0xff]
    %v798 = vld [vmem:[#allocation4 + $0x3c0] sm:$0xff]
    %v799 = vld [vmem:[#allocation4 + $0x3c8] sm:$0xff]
    %v800 = vld [vmem:[#allocation4 + $0x3d0] sm:$0xff]
    %v801 = vld [vmem:[#allocation4 + $0x3d8] sm:$0xff]
    %v802 = vld [vmem:[#allocation4 + $0x3e0] sm:$0xff]
    %v803 = vld [vmem:[#allocation4 + $0x3e8] sm:$0xff]
    %v804 = vld [vmem:[#allocation4 + $0x3f0] sm:$0xff]
    %v805 = vld [vmem:[#allocation4 + $0x3f8] sm:$0xff]
    %v806 = vld [vmem:[#allocation6] sm:$0xf]
    %v808 = vlaneseq
    %v809 = vshrl.u32 %v808, 7
    %v810 = vsub.s32 0, %v809
    %v811 = vrot.slane %v806, %v810
    %v812 = vlaneseq
    %v813 = vshrl.u32 %v812, 7
    %v814 = vsub.s32 1, %v813
    %v815 = vrot.slane %v806, %v814
    %v816 = vlaneseq
    %v817 = vshrl.u32 %v816, 7
    %v818 = vsub.s32 2, %v817
    %v819 = vrot.slane %v806, %v818
    %v820 = vlaneseq
    %v821 = vshrl.u32 %v820, 7
    %v822 = vsub.s32 3, %v821
    %v823 = vrot.slane %v806, %v822
    %v956 = vunpack.c.l.b16 %v678
    %v957 = vunpack.c.h.b16 %v678
    %v958 = vunpack.c.l.b16 %v679
    %v959 = vunpack.c.h.b16 %v679
    %v960 = vunpack.c.l.b16 %v680
    %v961 = vunpack.c.h.b16 %v680
    %v962 = vunpack.c.l.b16 %v681
    %v963 = vunpack.c.h.b16 %v681
    %v964 = vunpack.c.l.b16 %v682
    %v965 = vunpack.c.h.b16 %v682
    %v966 = vunpack.c.l.b16 %v683
    %v967 = vunpack.c.h.b16 %v683
    %v968 = vunpack.c.l.b16 %v684
    %v969 = vunpack.c.h.b16 %v684
    %v970 = vunpack.c.l.b16 %v685
    %v971 = vunpack.c.h.b16 %v685
    %v972 = vunpack.c.l.b16 %v686
    %v973 = vunpack.c.h.b16 %v686
    %v974 = vunpack.c.l.b16 %v687
    %v975 = vunpack.c.h.b16 %v687
    %v976 = vunpack.c.l.b16 %v688
    %v977 = vunpack.c.h.b16 %v688
    %v978 = vunpack.c.l.b16 %v689
    %v979 = vunpack.c.h.b16 %v689
    %v980 = vunpack.c.l.b16 %v690
    %v981 = vunpack.c.h.b16 %v690
    %v982 = vunpack.c.l.b16 %v691
    %v983 = vunpack.c.h.b16 %v691
    %v984 = vunpack.c.l.b16 %v692
    %v985 = vunpack.c.h.b16 %v692
    %v986 = vunpack.c.l.b16 %v693
    %v987 = vunpack.c.h.b16 %v693
    %v988 = vunpack.c.l.b16 %v694
    %v989 = vunpack.c.h.b16 %v694
    %v990 = vunpack.c.l.b16 %v695
    %v991 = vunpack.c.h.b16 %v695
    %v992 = vunpack.c.l.b16 %v696
    %v993 = vunpack.c.h.b16 %v696
    %v994 = vunpack.c.l.b16 %v697
    %v995 = vunpack.c.h.b16 %v697
    %v996 = vunpack.c.l.b16 %v698
    %v997 = vunpack.c.h.b16 %v698
    %v998 = vunpack.c.l.b16 %v699
    %v999 = vunpack.c.h.b16 %v699
    %v1000 = vunpack.c.l.b16 %v700
    %v1001 = vunpack.c.h.b16 %v700
    %v1002 = vunpack.c.l.b16 %v701
    %v1003 = vunpack.c.h.b16 %v701
    %v1004 = vunpack.c.l.b16 %v702
    %v1005 = vunpack.c.h.b16 %v702
    %v1006 = vunpack.c.l.b16 %v703
    %v1007 = vunpack.c.h.b16 %v703
    %v1008 = vunpack.c.l.b16 %v704
    %v1009 = vunpack.c.h.b16 %v704
    %v1010 = vunpack.c.l.b16 %v705
    %v1011 = vunpack.c.h.b16 %v705
    %v1012 = vunpack.c.l.b16 %v706
    %v1013 = vunpack.c.h.b16 %v706
    %v1014 = vunpack.c.l.b16 %v707
    %v1015 = vunpack.c.h.b16 %v707
    %v1016 = vunpack.c.l.b16 %v708
    %v1017 = vunpack.c.h.b16 %v708
    %v1018 = vunpack.c.l.b16 %v709
    %v1019 = vunpack.c.h.b16 %v709
    %v1020 = vunpack.c.l.b16 %v710
    %v1021 = vunpack.c.h.b16 %v710
    %v1022 = vunpack.c.l.b16 %v711
    %v1023 = vunpack.c.h.b16 %v711
    %v1024 = vunpack.c.l.b16 %v712
    %v1025 = vunpack.c.h.b16 %v712
    %v1026 = vunpack.c.l.b16 %v713
    %v1027 = vunpack.c.h.b16 %v713
    %v1028 = vunpack.c.l.b16 %v714
    %v1029 = vunpack.c.h.b16 %v714
    %v1030 = vunpack.c.l.b16 %v715
    %v1031 = vunpack.c.h.b16 %v715
    %v1032 = vunpack.c.l.b16 %v716
    %v1033 = vunpack.c.h.b16 %v716
    %v1034 = vunpack.c.l.b16 %v717
    %v1035 = vunpack.c.h.b16 %v717
    %v1036 = vunpack.c.l.b16 %v718
    %v1037 = vunpack.c.h.b16 %v718
    %v1038 = vunpack.c.l.b16 %v719
    %v1039 = vunpack.c.h.b16 %v719
    %v1040 = vunpack.c.l.b16 %v720
    %v1041 = vunpack.c.h.b16 %v720
    %v1042 = vunpack.c.l.b16 %v721
    %v1043 = vunpack.c.h.b16 %v721
    %v1044 = vunpack.c.l.b16 %v722
    %v1045 = vunpack.c.h.b16 %v722
    %v1046 = vunpack.c.l.b16 %v723
    %v1047 = vunpack.c.h.b16 %v723
    %v1048 = vunpack.c.l.b16 %v724
    %v1049 = vunpack.c.h.b16 %v724
    %v1050 = vunpack.c.l.b16 %v725
    %v1051 = vunpack.c.h.b16 %v725
    %v1052 = vunpack.c.l.b16 %v726
    %v1053 = vunpack.c.h.b16 %v726
    %v1054 = vunpack.c.l.b16 %v727
    %v1055 = vunpack.c.h.b16 %v727
    %v1056 = vunpack.c.l.b16 %v728
    %v1057 = vunpack.c.h.b16 %v728
    %v1058 = vunpack.c.l.b16 %v729
    %v1059 = vunpack.c.h.b16 %v729
    %v1060 = vunpack.c.l.b16 %v730
    %v1061 = vunpack.c.h.b16 %v730
    %v1062 = vunpack.c.l.b16 %v731
    %v1063 = vunpack.c.h.b16 %v731
    %v1064 = vunpack.c.l.b16 %v732
    %v1065 = vunpack.c.h.b16 %v732
    %v1066 = vunpack.c.l.b16 %v733
    %v1067 = vunpack.c.h.b16 %v733
    %v1068 = vunpack.c.l.b16 %v734
    %v1069 = vunpack.c.h.b16 %v734
    %v1070 = vunpack.c.l.b16 %v735
    %v1071 = vunpack.c.h.b16 %v735
    %v1072 = vunpack.c.l.b16 %v736
    %v1073 = vunpack.c.h.b16 %v736
    %v1074 = vunpack.c.l.b16 %v737
    %v1075 = vunpack.c.h.b16 %v737
    %v1076 = vunpack.c.l.b16 %v738
    %v1077 = vunpack.c.h.b16 %v738
    %v1078 = vunpack.c.l.b16 %v739
    %v1079 = vunpack.c.h.b16 %v739
    %v1080 = vunpack.c.l.b16 %v740
    %v1081 = vunpack.c.h.b16 %v740
    %v1082 = vunpack.c.l.b16 %v741
    %v1083 = vunpack.c.h.b16 %v741
    %v1084 = vunpack.c.l.b16 %v742
    %v1085 = vunpack.c.h.b16 %v742
    %v1086 = vunpack.c.l.b16 %v743
    %v1087 = vunpack.c.h.b16 %v743
    %v1088 = vunpack.c.l.b16 %v744
    %v1089 = vunpack.c.h.b16 %v744
    %v1090 = vunpack.c.l.b16 %v745
    %v1091 = vunpack.c.h.b16 %v745
    %v1092 = vunpack.c.l.b16 %v746
    %v1093 = vunpack.c.h.b16 %v746
    %v1094 = vunpack.c.l.b16 %v747
    %v1095 = vunpack.c.h.b16 %v747
    %v1096 = vunpack.c.l.b16 %v748
    %v1097 = vunpack.c.h.b16 %v748
    %v1098 = vunpack.c.l.b16 %v749
    %v1099 = vunpack.c.h.b16 %v749
    %v1100 = vunpack.c.l.b16 %v750
    %v1101 = vunpack.c.h.b16 %v750
    %v1102 = vunpack.c.l.b16 %v751
    %v1103 = vunpack.c.h.b16 %v751
    %v1104 = vunpack.c.l.b16 %v752
    %v1105 = vunpack.c.h.b16 %v752
    %v1106 = vunpack.c.l.b16 %v753
    %v1107 = vunpack.c.h.b16 %v753
    %v1108 = vunpack.c.l.b16 %v754
    %v1109 = vunpack.c.h.b16 %v754
    %v1110 = vunpack.c.l.b16 %v755
    %v1111 = vunpack.c.h.b16 %v755
    %v1112 = vunpack.c.l.b16 %v756
    %v1113 = vunpack.c.h.b16 %v756
    %v1114 = vunpack.c.l.b16 %v757
    %v1115 = vunpack.c.h.b16 %v757
    %v1116 = vunpack.c.l.b16 %v758
    %v1117 = vunpack.c.h.b16 %v758
    %v1118 = vunpack.c.l.b16 %v759
    %v1119 = vunpack.c.h.b16 %v759
    %v1120 = vunpack.c.l.b16 %v760
    %v1121 = vunpack.c.h.b16 %v760
    %v1122 = vunpack.c.l.b16 %v761
    %v1123 = vunpack.c.h.b16 %v761
    %v1124 = vunpack.c.l.b16 %v762
    %v1125 = vunpack.c.h.b16 %v762
    %v1126 = vunpack.c.l.b16 %v763
    %v1127 = vunpack.c.h.b16 %v763
    %v1128 = vunpack.c.l.b16 %v764
    %v1129 = vunpack.c.h.b16 %v764
    %v1130 = vunpack.c.l.b16 %v765
    %v1131 = vunpack.c.h.b16 %v765
    %v1132 = vunpack.c.l.b16 %v766
    %v1133 = vunpack.c.h.b16 %v766
    %v1134 = vunpack.c.l.b16 %v767
    %v1135 = vunpack.c.h.b16 %v767
    %v1136 = vunpack.c.l.b16 %v768
    %v1137 = vunpack.c.h.b16 %v768
    %v1138 = vunpack.c.l.b16 %v769
    %v1139 = vunpack.c.h.b16 %v769
    %v1140 = vunpack.c.l.b16 %v770
    %v1141 = vunpack.c.h.b16 %v770
    %v1142 = vunpack.c.l.b16 %v771
    %v1143 = vunpack.c.h.b16 %v771
    %v1144 = vunpack.c.l.b16 %v772
    %v1145 = vunpack.c.h.b16 %v772
    %v1146 = vunpack.c.l.b16 %v773
    %v1147 = vunpack.c.h.b16 %v773
    %v1148 = vunpack.c.l.b16 %v774
    %v1149 = vunpack.c.h.b16 %v774
    %v1150 = vunpack.c.l.b16 %v775
    %v1151 = vunpack.c.h.b16 %v775
    %v1152 = vunpack.c.l.b16 %v776
    %v1153 = vunpack.c.h.b16 %v776
    %v1154 = vunpack.c.l.b16 %v777
    %v1155 = vunpack.c.h.b16 %v777
    %v1156 = vunpack.c.l.b16 %v778
    %v1157 = vunpack.c.h.b16 %v778
    %v1158 = vunpack.c.l.b16 %v779
    %v1159 = vunpack.c.h.b16 %v779
    %v1160 = vunpack.c.l.b16 %v780
    %v1161 = vunpack.c.h.b16 %v780
    %v1162 = vunpack.c.l.b16 %v781
    %v1163 = vunpack.c.h.b16 %v781
    %v1164 = vunpack.c.l.b16 %v782
    %v1165 = vunpack.c.h.b16 %v782
    %v1166 = vunpack.c.l.b16 %v783
    %v1167 = vunpack.c.h.b16 %v783
    %v1168 = vunpack.c.l.b16 %v784
    %v1169 = vunpack.c.h.b16 %v784
    %v1170 = vunpack.c.l.b16 %v785
    %v1171 = vunpack.c.h.b16 %v785
    %v1172 = vunpack.c.l.b16 %v786
    %v1173 = vunpack.c.h.b16 %v786
    %v1174 = vunpack.c.l.b16 %v787
    %v1175 = vunpack.c.h.b16 %v787
    %v1176 = vunpack.c.l.b16 %v788
    %v1177 = vunpack.c.h.b16 %v788
    %v1178 = vunpack.c.l.b16 %v789
    %v1179 = vunpack.c.h.b16 %v789
    %v1180 = vunpack.c.l.b16 %v790
    %v1181 = vunpack.c.h.b16 %v790
    %v1182 = vunpack.c.l.b16 %v791
    %v1183 = vunpack.c.h.b16 %v791
    %v1184 = vunpack.c.l.b16 %v792
    %v1185 = vunpack.c.h.b16 %v792
    %v1186 = vunpack.c.l.b16 %v793
    %v1187 = vunpack.c.h.b16 %v793
    %v1188 = vunpack.c.l.b16 %v794
    %v1189 = vunpack.c.h.b16 %v794
    %v1190 = vunpack.c.l.b16 %v795
    %v1191 = vunpack.c.h.b16 %v795
    %v1192 = vunpack.c.l.b16 %v796
    %v1193 = vunpack.c.h.b16 %v796
    %v1194 = vunpack.c.l.b16 %v797
    %v1195 = vunpack.c.h.b16 %v797
    %v1196 = vunpack.c.l.b16 %v798
    %v1197 = vunpack.c.h.b16 %v798
    %v1198 = vunpack.c.l.b16 %v799
    %v1199 = vunpack.c.h.b16 %v799
    %v1200 = vunpack.c.l.b16 %v800
    %v1201 = vunpack.c.h.b16 %v800
    %v1202 = vunpack.c.l.b16 %v801
    %v1203 = vunpack.c.h.b16 %v801
    %v1204 = vunpack.c.l.b16 %v802
    %v1205 = vunpack.c.h.b16 %v802
    %v1206 = vunpack.c.l.b16 %v803
    %v1207 = vunpack.c.h.b16 %v803
    %v1208 = vunpack.c.l.b16 %v804
    %v1209 = vunpack.c.h.b16 %v804
    %v1210 = vunpack.c.l.b16 %v805
    %v1211 = vunpack.c.h.b16 %v805
    %v1212 = vpack.c.b16 %v960, %v956
    %v1213 = vpack.c.b16 %v961, %v957
    %v1214 = vpack.c.b16 %v962, %v958
    %v1215 = vpack.c.b16 %v963, %v959
    %v1216 = vpack.c.b16 %v968, %v964
    %v1217 = vpack.c.b16 %v969, %v965
    %v1218 = vpack.c.b16 %v970, %v966
    %v1219 = vpack.c.b16 %v971, %v967
    %v1220 = vpack.c.b16 %v976, %v972
    %v1221 = vpack.c.b16 %v977, %v973
    %v1222 = vpack.c.b16 %v978, %v974
    %v1223 = vpack.c.b16 %v979, %v975
    %v1224 = vpack.c.b16 %v984, %v980
    %v1225 = vpack.c.b16 %v985, %v981
    %v1226 = vpack.c.b16 %v986, %v982
    %v1227 = vpack.c.b16 %v987, %v983
    %v1228 = vpack.c.b16 %v992, %v988
    %v1229 = vpack.c.b16 %v993, %v989
    %v1230 = vpack.c.b16 %v994, %v990
    %v1231 = vpack.c.b16 %v995, %v991
    %v1232 = vpack.c.b16 %v1000, %v996
    %v1233 = vpack.c.b16 %v1001, %v997
    %v1234 = vpack.c.b16 %v1002, %v998
    %v1235 = vpack.c.b16 %v1003, %v999
    %v1236 = vpack.c.b16 %v1008, %v1004
    %v1237 = vpack.c.b16 %v1009, %v1005
    %v1238 = vpack.c.b16 %v1010, %v1006
    %v1239 = vpack.c.b16 %v1011, %v1007
    %v1240 = vpack.c.b16 %v1016, %v1012
    %v1241 = vpack.c.b16 %v1017, %v1013
    %v1242 = vpack.c.b16 %v1018, %v1014
    %v1243 = vpack.c.b16 %v1019, %v1015
    %v1244 = vpack.c.b16 %v1024, %v1020
    %v1245 = vpack.c.b16 %v1025, %v1021
    %v1246 = vpack.c.b16 %v1026, %v1022
    %v1247 = vpack.c.b16 %v1027, %v1023
    %v1248 = vpack.c.b16 %v1032, %v1028
    %v1249 = vpack.c.b16 %v1033, %v1029
    %v1250 = vpack.c.b16 %v1034, %v1030
    %v1251 = vpack.c.b16 %v1035, %v1031
    %v1252 = vpack.c.b16 %v1040, %v1036
    %v1253 = vpack.c.b16 %v1041, %v1037
    %v1254 = vpack.c.b16 %v1042, %v1038
    %v1255 = vpack.c.b16 %v1043, %v1039
    %v1256 = vpack.c.b16 %v1048, %v1044
    %v1257 = vpack.c.b16 %v1049, %v1045
    %v1258 = vpack.c.b16 %v1050, %v1046
    %v1259 = vpack.c.b16 %v1051, %v1047
    %v1260 = vpack.c.b16 %v1056, %v1052
    %v1261 = vpack.c.b16 %v1057, %v1053
    %v1262 = vpack.c.b16 %v1058, %v1054
    %v1263 = vpack.c.b16 %v1059, %v1055
    %v1264 = vpack.c.b16 %v1064, %v1060
    %v1265 = vpack.c.b16 %v1065, %v1061
    %v1266 = vpack.c.b16 %v1066, %v1062
    %v1267 = vpack.c.b16 %v1067, %v1063
    %v1268 = vpack.c.b16 %v1072, %v1068
    %v1269 = vpack.c.b16 %v1073, %v1069
    %v1270 = vpack.c.b16 %v1074, %v1070
    %v1271 = vpack.c.b16 %v1075, %v1071
    %v1272 = vpack.c.b16 %v1080, %v1076
    %v1273 = vpack.c.b16 %v1081, %v1077
    %v1274 = vpack.c.b16 %v1082, %v1078
    %v1275 = vpack.c.b16 %v1083, %v1079
    %v1276 = vpack.c.b16 %v1088, %v1084
    %v1277 = vpack.c.b16 %v1089, %v1085
    %v1278 = vpack.c.b16 %v1090, %v1086
    %v1279 = vpack.c.b16 %v1091, %v1087
    %v1280 = vpack.c.b16 %v1096, %v1092
    %v1281 = vpack.c.b16 %v1097, %v1093
    %v1282 = vpack.c.b16 %v1098, %v1094
    %v1283 = vpack.c.b16 %v1099, %v1095
    %v1284 = vpack.c.b16 %v1104, %v1100
    %v1285 = vpack.c.b16 %v1105, %v1101
    %v1286 = vpack.c.b16 %v1106, %v1102
    %v1287 = vpack.c.b16 %v1107, %v1103
    %v1288 = vpack.c.b16 %v1112, %v1108
    %v1289 = vpack.c.b16 %v1113, %v1109
    %v1290 = vpack.c.b16 %v1114, %v1110
    %v1291 = vpack.c.b16 %v1115, %v1111
    %v1292 = vpack.c.b16 %v1120, %v1116
    %v1293 = vpack.c.b16 %v1121, %v1117
    %v1294 = vpack.c.b16 %v1122, %v1118
    %v1295 = vpack.c.b16 %v1123, %v1119
    %v1296 = vpack.c.b16 %v1128, %v1124
    %v1297 = vpack.c.b16 %v1129, %v1125
    %v1298 = vpack.c.b16 %v1130, %v1126
    %v1299 = vpack.c.b16 %v1131, %v1127
    %v1300 = vpack.c.b16 %v1136, %v1132
    %v1301 = vpack.c.b16 %v1137, %v1133
    %v1302 = vpack.c.b16 %v1138, %v1134
    %v1303 = vpack.c.b16 %v1139, %v1135
    %v1304 = vpack.c.b16 %v1144, %v1140
    %v1305 = vpack.c.b16 %v1145, %v1141
    %v1306 = vpack.c.b16 %v1146, %v1142
    %v1307 = vpack.c.b16 %v1147, %v1143
    %v1308 = vpack.c.b16 %v1152, %v1148
    %v1309 = vpack.c.b16 %v1153, %v1149
    %v1310 = vpack.c.b16 %v1154, %v1150
    %v1311 = vpack.c.b16 %v1155, %v1151
    %v1312 = vpack.c.b16 %v1160, %v1156
    %v1313 = vpack.c.b16 %v1161, %v1157
    %v1314 = vpack.c.b16 %v1162, %v1158
    %v1315 = vpack.c.b16 %v1163, %v1159
    %v1316 = vpack.c.b16 %v1168, %v1164
    %v1317 = vpack.c.b16 %v1169, %v1165
    %v1318 = vpack.c.b16 %v1170, %v1166
    %v1319 = vpack.c.b16 %v1171, %v1167
    %v1320 = vpack.c.b16 %v1176, %v1172
    %v1321 = vpack.c.b16 %v1177, %v1173
    %v1322 = vpack.c.b16 %v1178, %v1174
    %v1323 = vpack.c.b16 %v1179, %v1175
    %v1324 = vpack.c.b16 %v1184, %v1180
    %v1325 = vpack.c.b16 %v1185, %v1181
    %v1326 = vpack.c.b16 %v1186, %v1182
    %v1327 = vpack.c.b16 %v1187, %v1183
    %v1328 = vpack.c.b16 %v1192, %v1188
    %v1329 = vpack.c.b16 %v1193, %v1189
    %v1330 = vpack.c.b16 %v1194, %v1190
    %v1331 = vpack.c.b16 %v1195, %v1191
    %v1332 = vpack.c.b16 %v1200, %v1196
    %v1333 = vpack.c.b16 %v1201, %v1197
    %v1334 = vpack.c.b16 %v1202, %v1198
    %v1335 = vpack.c.b16 %v1203, %v1199
    %v1336 = vpack.c.b16 %v1208, %v1204
    %v1337 = vpack.c.b16 %v1209, %v1205
    %v1338 = vpack.c.b16 %v1210, %v1206
    %v1339 = vpack.c.b16 %v1211, %v1207
    %1468 = vmatprep.subr.bf16.mxu0 %v1213
    %1469 = vmatpush1.bf16.msra.mxu0 %v1212
    %1470 = vmatprep.subr.bf16.mxu0 %v1217
    %1471 = vmatpush1.bf16.msra.mxu0 %v1216
    %1472 = vmatprep.subr.bf16.mxu0 %v1221
    %1473 = vmatpush1.bf16.msra.mxu0 %v1220
    %1474 = vmatprep.subr.bf16.mxu0 %v1225
    %1475 = vmatpush1.bf16.msra.mxu0 %v1224
    %1476 = vmatprep.subr.bf16.mxu0 %v1229
    %1477 = vmatpush1.bf16.msra.mxu0 %v1228
    %1478 = vmatprep.subr.bf16.mxu0 %v1233
    %1479 = vmatpush1.bf16.msra.mxu0 %v1232
    %1480 = vmatprep.subr.bf16.mxu0 %v1237
    %1481 = vmatpush1.bf16.msra.mxu0 %v1236
    %1482 = vmatprep.subr.bf16.mxu0 %v1241
    %1483 = vmatpush1.bf16.msra.mxu0 %v1240
    %1484 = vmatprep.subr.bf16.mxu0 %v1245
    %1485 = vmatpush1.bf16.msra.mxu0 %v1244
    %1486 = vmatprep.subr.bf16.mxu0 %v1249
    %1487 = vmatpush1.bf16.msra.mxu0 %v1248
    %1488 = vmatprep.subr.bf16.mxu0 %v1253
    %1489 = vmatpush1.bf16.msra.mxu0 %v1252
    %1490 = vmatprep.subr.bf16.mxu0 %v1257
    %1491 = vmatpush1.bf16.msra.mxu0 %v1256
    %1492 = vmatprep.subr.bf16.mxu0 %v1261
    %1493 = vmatpush1.bf16.msra.mxu0 %v1260
    %1494 = vmatprep.subr.bf16.mxu0 %v1265
    %1495 = vmatpush1.bf16.msra.mxu0 %v1264
    %1496 = vmatprep.subr.bf16.mxu0 %v1269
    %1497 = vmatpush1.bf16.msra.mxu0 %v1268
    %1498 = vmatprep.subr.bf16.mxu0 %v1273
    %1499 = vmatpush1.bf16.msra.mxu0 %v1272
    %1500 = vmatprep.mubr.bf16.mxu0 %v675
    %1501 = vmatmul.mubr.bf16.gmra.mrb[0].mxu0 %v674
    %v1502 = vpop.f32.mrb[0].mxu0
    %v1503 = vadd.f32 %v811, %v1502
    %v1504 = vpop.f32.mrb[0].mxu0
    %v1505 = vadd.f32 %v815, %v1504
    %v1506 = vpop.f32.mrb[0].mxu0
    %v1507 = vpop.f32.mrb[0].mxu0
    %1508 = vdwg.mxu0
    %1509 = vmatprep.subr.bf16.mxu0 %v1277
    %1510 = vmatpush1.bf16.msra.mxu0 %v1276
    %1511 = vmatprep.subr.bf16.mxu0 %v1281
    %1512 = vmatpush1.bf16.msra.mxu0 %v1280
    %1513 = vmatprep.subr.bf16.mxu0 %v1285
    %1514 = vmatpush1.bf16.msra.mxu0 %v1284
    %1515 = vmatprep.subr.bf16.mxu0 %v1289
    %1516 = vmatpush1.bf16.msra.mxu0 %v1288
    %1517 = vmatprep.subr.bf16.mxu0 %v1293
    %1518 = vmatpush1.bf16.msra.mxu0 %v1292
    %1519 = vmatprep.subr.bf16.mxu0 %v1297
    %1520 = vmatpush1.bf16.msra.mxu0 %v1296
    %1521 = vmatprep.subr.bf16.mxu0 %v1301
    %1522 = vmatpush1.bf16.msra.mxu0 %v1300
    %1523 = vmatprep.subr.bf16.mxu0 %v1305
    %1524 = vmatpush1.bf16.msra.mxu0 %v1304
    %1525 = vmatprep.subr.bf16.mxu0 %v1309
    %1526 = vmatpush1.bf16.msra.mxu0 %v1308
    %1527 = vmatprep.subr.bf16.mxu0 %v1313
    %1528 = vmatpush1.bf16.msra.mxu0 %v1312
    %1529 = vmatprep.subr.bf16.mxu0 %v1317
    %1530 = vmatpush1.bf16.msra.mxu0 %v1316
    %1531 = vmatprep.subr.bf16.mxu0 %v1321
    %1532 = vmatpush1.bf16.msra.mxu0 %v1320
    %1533 = vmatprep.subr.bf16.mxu0 %v1325
    %1534 = vmatpush1.bf16.msra.mxu0 %v1324
    %1535 = vmatprep.subr.bf16.mxu0 %v1329
    %1536 = vmatpush1.bf16.msra.mxu0 %v1328
    %1537 = vmatprep.subr.bf16.mxu0 %v1333
    %1538 = vmatpush1.bf16.msra.mxu0 %v1332
    %1539 = vmatprep.subr.bf16.mxu0 %v1337
    %1540 = vmatpush1.bf16.msra.mxu0 %v1336
    %1541 = vmatprep.mubr.bf16.mxu0 %v677
    %1542 = vmatmul.mubr.bf16.gmra.mrb[0].mxu0 %v676
    %v1543 = vpop.f32.mrb[0].mxu0
    %v1544 = vadd.f32 %v1503, %v1543
    %v1545 = vpop.f32.mrb[0].mxu0
    %v1546 = vadd.f32 %v1505, %v1545
    %v1547 = vpop.f32.mrb[0].mxu0
    %v1548 = vpop.f32.mrb[0].mxu0
    %1549 = vdwg.mxu0
    %1550 = vmatprep.subr.bf16.mxu0 %v1215
    %1551 = vmatpush1.bf16.msra.mxu0 %v1214
    %1552 = vmatprep.subr.bf16.mxu0 %v1219
    %1553 = vmatpush1.bf16.msra.mxu0 %v1218
    %1554 = vmatprep.subr.bf16.mxu0 %v1223
    %1555 = vmatpush1.bf16.msra.mxu0 %v1222
    %1556 = vmatprep.subr.bf16.mxu0 %v1227
    %1557 = vmatpush1.bf16.msra.mxu0 %v1226
    %1558 = vmatprep.subr.bf16.mxu0 %v1231
    %1559 = vmatpush1.bf16.msra.mxu0 %v1230
    %1560 = vmatprep.subr.bf16.mxu0 %v1235
    %1561 = vmatpush1.bf16.msra.mxu0 %v1234
    %1562 = vmatprep.subr.bf16.mxu0 %v1239
    %1563 = vmatpush1.bf16.msra.mxu0 %v1238
    %1564 = vmatprep.subr.bf16.mxu0 %v1243
    %1565 = vmatpush1.bf16.msra.mxu0 %v1242
    %1566 = vmatprep.subr.bf16.mxu0 %v1247
    %1567 = vmatpush1.bf16.msra.mxu0 %v1246
    %1568 = vmatprep.subr.bf16.mxu0 %v1251
    %1569 = vmatpush1.bf16.msra.mxu0 %v1250
    %1570 = vmatprep.subr.bf16.mxu0 %v1255
    %1571 = vmatpush1.bf16.msra.mxu0 %v1254
    %1572 = vmatprep.subr.bf16.mxu0 %v1259
    %1573 = vmatpush1.bf16.msra.mxu0 %v1258
    %1574 = vmatprep.subr.bf16.mxu0 %v1263
    %1575 = vmatpush1.bf16.msra.mxu0 %v1262
    %1576 = vmatprep.subr.bf16.mxu0 %v1267
    %1577 = vmatpush1.bf16.msra.mxu0 %v1266
    %1578 = vmatprep.subr.bf16.mxu0 %v1271
    %1579 = vmatpush1.bf16.msra.mxu0 %v1270
    %1580 = vmatprep.subr.bf16.mxu0 %v1275
    %1581 = vmatpush1.bf16.msra.mxu0 %v1274
    %1582 = vmatprep.mubr.bf16.mxu0 %v675
    %1583 = vmatmul.mubr.bf16.gmra.mrb[0].mxu0 %v674
    %v1584 = vpop.f32.mrb[0].mxu0
    %v1585 = vadd.f32 %v819, %v1584
    %v1586 = vpop.f32.mrb[0].mxu0
    %v1587 = vadd.f32 %v823, %v1586
    %v1588 = vpop.f32.mrb[0].mxu0
    %v1589 = vpop.f32.mrb[0].mxu0
    %1590 = vdwg.mxu0
    %1591 = vmatprep.subr.bf16.mxu0 %v1279
    %1592 = vmatpush1.bf16.msra.mxu0 %v1278
    %1593 = vmatprep.subr.bf16.mxu0 %v1283
    %1594 = vmatpush1.bf16.msra.mxu0 %v1282
    %1595 = vmatprep.subr.bf16.mxu0 %v1287
    %1596 = vmatpush1.bf16.msra.mxu0 %v1286
    %1597 = vmatprep.subr.bf16.mxu0 %v1291
    %1598 = vmatpush1.bf16.msra.mxu0 %v1290
    %1599 = vmatprep.subr.bf16.mxu0 %v1295
    %1600 = vmatpush1.bf16.msra.mxu0 %v1294
    %1601 = vmatprep.subr.bf16.mxu0 %v1299
    %1602 = vmatpush1.bf16.msra.mxu0 %v1298
    %1603 = vmatprep.subr.bf16.mxu0 %v1303
    %1604 = vmatpush1.bf16.msra.mxu0 %v1302
    %1605 = vmatprep.subr.bf16.mxu0 %v1307
    %1606 = vmatpush1.bf16.msra.mxu0 %v1306
    %1607 = vmatprep.subr.bf16.mxu0 %v1311
    %1608 = vmatpush1.bf16.msra.mxu0 %v1310
    %1609 = vmatprep.subr.bf16.mxu0 %v1315
    %1610 = vmatpush1.bf16.msra.mxu0 %v1314
    %1611 = vmatprep.subr.bf16.mxu0 %v1319
    %1612 = vmatpush1.bf16.msra.mxu0 %v1318
    %1613 = vmatprep.subr.bf16.mxu0 %v1323
    %1614 = vmatpush1.bf16.msra.mxu0 %v1322
    %1615 = vmatprep.subr.bf16.mxu0 %v1327
    %1616 = vmatpush1.bf16.msra.mxu0 %v1326
    %1617 = vmatprep.subr.bf16.mxu0 %v1331
    %1618 = vmatpush1.bf16.msra.mxu0 %v1330
    %1619 = vmatprep.subr.bf16.mxu0 %v1335
    %1620 = vmatpush1.bf16.msra.mxu0 %v1334
    %1621 = vmatprep.subr.bf16.mxu0 %v1339
    %1622 = vmatpush1.bf16.msra.mxu0 %v1338
    %1623 = vmatprep.mubr.bf16.mxu0 %v677
    %1624 = vmatmul.mubr.bf16.gmra.mrb[0].mxu0 %v676
    %v1625 = vpop.f32.mrb[0].mxu0
    %v1626 = vadd.f32 %v1585, %v1625
    %v1627 = vpop.f32.mrb[0].mxu0
    %v1628 = vadd.f32 %v1587, %v1627
    %v1629 = vpop.f32.mrb[0].mxu0
    %v1630 = vpop.f32.mrb[0].mxu0
    %1631 = vdwg.mxu0
    %vm1632 = vcmp.ge.f32.partialorder %v1544, 0.0
    %vm1633 = vcmp.ge.f32.partialorder %v1546, 0.0
    %vm1634 = vcmp.ge.f32.partialorder %v1626, 0.0
    %vm1635 = vcmp.ge.f32.partialorder %v1628, 0.0
    %v1636 = vmul.f32 %v1544, 0.2
    %v1637 = vmul.f32 %v1546, 0.2
    %v1638 = vmul.f32 %v1626, 0.2
    %v1639 = vmul.f32 %v1628, 0.2
    %v1640 = vsel %vm1632, %v1544, %v1636
    %v1641 = vsel %vm1633, %v1546, %v1637
    %v1642 = vsel %vm1634, %v1626, %v1638
    %v1643 = vsel %vm1635, %v1628, %v1639
    %v1644 = vpack.c.bf16 %v1640, %v1640
    %v1645 = vpack.c.bf16 %v1641, %v1641
    %v1646 = vpack.c.bf16 %v1642, %v1642
    %v1647 = vpack.c.bf16 %v1643, %v1643
    %s1648 = scalar_lea.vmem [#allocation4], 1024
    %v1649 = vld [vmem:[%s1648] sm:$0xff]
    %v1650 = vld [vmem:[%s1648 + $0x8] sm:$0xff]
    %v1651 = vld [vmem:[%s1648 + $0x10] sm:$0xff]
    %v1652 = vld [vmem:[%s1648 + $0x18] sm:$0xff]
    %v1653 = vld [vmem:[%s1648 + $0x20] sm:$0xff]
    %v1654 = vld [vmem:[%s1648 + $0x28] sm:$0xff]
    %v1655 = vld [vmem:[%s1648 + $0x30] sm:$0xff]
    %v1656 = vld [vmem:[%s1648 + $0x38] sm:$0xff]
    %v1657 = vld [vmem:[%s1648 + $0x40] sm:$0xff]
    %v1658 = vld [vmem:[%s1648 + $0x48] sm:$0xff]
    %v1659 = vld [vmem:[%s1648 + $0x50] sm:$0xff]
    %v1660 = vld [vmem:[%s1648 + $0x58] sm:$0xff]
    %v1661 = vld [vmem:[%s1648 + $0x60] sm:$0xff]
    %v1662 = vld [vmem:[%s1648 + $0x68] sm:$0xff]
    %v1663 = vld [vmem:[%s1648 + $0x70] sm:$0xff]
    %v1664 = vld [vmem:[%s1648 + $0x78] sm:$0xff]
    %v1665 = vld [vmem:[%s1648 + $0x80] sm:$0xff]
    %v1666 = vld [vmem:[%s1648 + $0x88] sm:$0xff]
    %v1667 = vld [vmem:[%s1648 + $0x90] sm:$0xff]
    %v1668 = vld [vmem:[%s1648 + $0x98] sm:$0xff]
    %v1669 = vld [vmem:[%s1648 + $0xa0] sm:$0xff]
    %v1670 = vld [vmem:[%s1648 + $0xa8] sm:$0xff]
    %v1671 = vld [vmem:[%s1648 + $0xb0] sm:$0xff]
    %v1672 = vld [vmem:[%s1648 + $0xb8] sm:$0xff]
    %v1673 = vld [vmem:[%s1648 + $0xc0] sm:$0xff]
    %v1674 = vld [vmem:[%s1648 + $0xc8] sm:$0xff]
    %v1675 = vld [vmem:[%s1648 + $0xd0] sm:$0xff]
    %v1676 = vld [vmem:[%s1648 + $0xd8] sm:$0xff]
    %v1677 = vld [vmem:[%s1648 + $0xe0] sm:$0xff]
    %v1678 = vld [vmem:[%s1648 + $0xe8] sm:$0xff]
    %v1679 = vld [vmem:[%s1648 + $0xf0] sm:$0xff]
    %v1680 = vld [vmem:[%s1648 + $0xf8] sm:$0xff]
    %v1681 = vld [vmem:[%s1648 + $0x100] sm:$0xff]
    %v1682 = vld [vmem:[%s1648 + $0x108] sm:$0xff]
    %v1683 = vld [vmem:[%s1648 + $0x110] sm:$0xff]
    %v1684 = vld [vmem:[%s1648 + $0x118] sm:$0xff]
    %v1685 = vld [vmem:[%s1648 + $0x120] sm:$0xff]
    %v1686 = vld [vmem:[%s1648 + $0x128] sm:$0xff]
    %v1687 = vld [vmem:[%s1648 + $0x130] sm:$0xff]
    %v1688 = vld [vmem:[%s1648 + $0x138] sm:$0xff]
    %v1689 = vld [vmem:[%s1648 + $0x140] sm:$0xff]
    %v1690 = vld [vmem:[%s1648 + $0x148] sm:$0xff]
    %v1691 = vld [vmem:[%s1648 + $0x150] sm:$0xff]
    %v1692 = vld [vmem:[%s1648 + $0x158] sm:$0xff]
    %v1693 = vld [vmem:[%s1648 + $0x160] sm:$0xff]
    %v1694 = vld [vmem:[%s1648 + $0x168] sm:$0xff]
    %v1695 = vld [vmem:[%s1648 + $0x170] sm:$0xff]
    %v1696 = vld [vmem:[%s1648 + $0x178] sm:$0xff]
    %v1697 = vld [vmem:[%s1648 + $0x180] sm:$0xff]
    %v1698 = vld [vmem:[%s1648 + $0x188] sm:$0xff]
    %v1699 = vld [vmem:[%s1648 + $0x190] sm:$0xff]
    %v1700 = vld [vmem:[%s1648 + $0x198] sm:$0xff]
    %v1701 = vld [vmem:[%s1648 + $0x1a0] sm:$0xff]
    %v1702 = vld [vmem:[%s1648 + $0x1a8] sm:$0xff]
    %v1703 = vld [vmem:[%s1648 + $0x1b0] sm:$0xff]
    %v1704 = vld [vmem:[%s1648 + $0x1b8] sm:$0xff]
    %v1705 = vld [vmem:[%s1648 + $0x1c0] sm:$0xff]
    %v1706 = vld [vmem:[%s1648 + $0x1c8] sm:$0xff]
    %v1707 = vld [vmem:[%s1648 + $0x1d0] sm:$0xff]
    %v1708 = vld [vmem:[%s1648 + $0x1d8] sm:$0xff]
    %v1709 = vld [vmem:[%s1648 + $0x1e0] sm:$0xff]
    %v1710 = vld [vmem:[%s1648 + $0x1e8] sm:$0xff]
    %v1711 = vld [vmem:[%s1648 + $0x1f0] sm:$0xff]
    %v1712 = vld [vmem:[%s1648 + $0x1f8] sm:$0xff]
    %v1713 = vld [vmem:[%s1648 + $0x200] sm:$0xff]
    %v1714 = vld [vmem:[%s1648 + $0x208] sm:$0xff]
    %v1715 = vld [vmem:[%s1648 + $0x210] sm:$0xff]
    %v1716 = vld [vmem:[%s1648 + $0x218] sm:$0xff]
    %v1717 = vld [vmem:[%s1648 + $0x220] sm:$0xff]
    %v1718 = vld [vmem:[%s1648 + $0x228] sm:$0xff]
    %v1719 = vld [vmem:[%s1648 + $0x230] sm:$0xff]
    %v1720 = vld [vmem:[%s1648 + $0x238] sm:$0xff]
    %v1721 = vld [vmem:[%s1648 + $0x240] sm:$0xff]
    %v1722 = vld [vmem:[%s1648 + $0x248] sm:$0xff]
    %v1723 = vld [vmem:[%s1648 + $0x250] sm:$0xff]
    %v1724 = vld [vmem:[%s1648 + $0x258] sm:$0xff]
    %v1725 = vld [vmem:[%s1648 + $0x260] sm:$0xff]
    %v1726 = vld [vmem:[%s1648 + $0x268] sm:$0xff]
    %v1727 = vld [vmem:[%s1648 + $0x270] sm:$0xff]
    %v1728 = vld [vmem:[%s1648 + $0x278] sm:$0xff]
    %v1729 = vld [vmem:[%s1648 + $0x280] sm:$0xff]
    %v1730 = vld [vmem:[%s1648 + $0x288] sm:$0xff]
    %v1731 = vld [vmem:[%s1648 + $0x290] sm:$0xff]
    %v1732 = vld [vmem:[%s1648 + $0x298] sm:$0xff]
    %v1733 = vld [vmem:[%s1648 + $0x2a0] sm:$0xff]
    %v1734 = vld [vmem:[%s1648 + $0x2a8] sm:$0xff]
    %v1735 = vld [vmem:[%s1648 + $0x2b0] sm:$0xff]
    %v1736 = vld [vmem:[%s1648 + $0x2b8] sm:$0xff]
    %v1737 = vld [vmem:[%s1648 + $0x2c0] sm:$0xff]
    %v1738 = vld [vmem:[%s1648 + $0x2c8] sm:$0xff]
    %v1739 = vld [vmem:[%s1648 + $0x2d0] sm:$0xff]
    %v1740 = vld [vmem:[%s1648 + $0x2d8] sm:$0xff]
    %v1741 = vld [vmem:[%s1648 + $0x2e0] sm:$0xff]
    %v1742 = vld [vmem:[%s1648 + $0x2e8] sm:$0xff]
    %v1743 = vld [vmem:[%s1648 + $0x2f0] sm:$0xff]
    %v1744 = vld [vmem:[%s1648 + $0x2f8] sm:$0xff]
    %v1745 = vld [vmem:[%s1648 + $0x300] sm:$0xff]
    %v1746 = vld [vmem:[%s1648 + $0x308] sm:$0xff]
    %v1747 = vld [vmem:[%s1648 + $0x310] sm:$0xff]
    %v1748 = vld [vmem:[%s1648 + $0x318] sm:$0xff]
    %v1749 = vld [vmem:[%s1648 + $0x320] sm:$0xff]
    %v1750 = vld [vmem:[%s1648 + $0x328] sm:$0xff]
    %v1751 = vld [vmem:[%s1648 + $0x330] sm:$0xff]
    %v1752 = vld [vmem:[%s1648 + $0x338] sm:$0xff]
    %v1753 = vld [vmem:[%s1648 + $0x340] sm:$0xff]
    %v1754 = vld [vmem:[%s1648 + $0x348] sm:$0xff]
    %v1755 = vld [vmem:[%s1648 + $0x350] sm:$0xff]
    %v1756 = vld [vmem:[%s1648 + $0x358] sm:$0xff]
    %v1757 = vld [vmem:[%s1648 + $0x360] sm:$0xff]
    %v1758 = vld [vmem:[%s1648 + $0x368] sm:$0xff]
    %v1759 = vld [vmem:[%s1648 + $0x370] sm:$0xff]
    %v1760 = vld [vmem:[%s1648 + $0x378] sm:$0xff]
    %v1761 = vld [vmem:[%s1648 + $0x380] sm:$0xff]
    %v1762 = vld [vmem:[%s1648 + $0x388] sm:$0xff]
    %v1763 = vld [vmem:[%s1648 + $0x390] sm:$0xff]
    %v1764 = vld [vmem:[%s1648 + $0x398] sm:$0xff]
    %v1765 = vld [vmem:[%s1648 + $0x3a0] sm:$0xff]
    %v1766 = vld [vmem:[%s1648 + $0x3a8] sm:$0xff]
    %v1767 = vld [vmem:[%s1648 + $0x3b0] sm:$0xff]
    %v1768 = vld [vmem:[%s1648 + $0x3b8] sm:$0xff]
    %v1769 = vld [vmem:[%s1648 + $0x3c0] sm:$0xff]
    %v1770 = vld [vmem:[%s1648 + $0x3c8] sm:$0xff]
    %v1771 = vld [vmem:[%s1648 + $0x3d0] sm:$0xff]
    %v1772 = vld [vmem:[%s1648 + $0x3d8] sm:$0xff]
    %v1773 = vld [vmem:[%s1648 + $0x3e0] sm:$0xff]
    %v1774 = vld [vmem:[%s1648 + $0x3e8] sm:$0xff]
    %v1775 = vld [vmem:[%s1648 + $0x3f0] sm:$0xff]
    %v1776 = vld [vmem:[%s1648 + $0x3f8] sm:$0xff]
    %s1777 = scalar_lea.vmem [#allocation6], 4
    %v1778 = vld [vmem:[%s1777] sm:$0xf]
    %v1780 = vlaneseq
    %v1781 = vshrl.u32 %v1780, 7
    %v1782 = vsub.s32 0, %v1781
    %v1783 = vrot.slane %v1778, %v1782
    %v1784 = vlaneseq
    %v1785 = vshrl.u32 %v1784, 7
    %v1786 = vsub.s32 1, %v1785
    %v1787 = vrot.slane %v1778, %v1786
    %v1788 = vlaneseq
    %v1789 = vshrl.u32 %v1788, 7
    %v1790 = vsub.s32 2, %v1789
    %v1791 = vrot.slane %v1778, %v1790
    %v1792 = vlaneseq
    %v1793 = vshrl.u32 %v1792, 7
    %v1794 = vsub.s32 3, %v1793
    %v1795 = vrot.slane %v1778, %v1794
    %v1928 = vunpack.c.l.b16 %v1649
    %v1929 = vunpack.c.h.b16 %v1649
    %v1930 = vunpack.c.l.b16 %v1650
    %v1931 = vunpack.c.h.b16 %v1650
    %v1932 = vunpack.c.l.b16 %v1651
    %v1933 = vunpack.c.h.b16 %v1651
    %v1934 = vunpack.c.l.b16 %v1652
    %v1935 = vunpack.c.h.b16 %v1652
    %v1936 = vunpack.c.l.b16 %v1653
    %v1937 = vunpack.c.h.b16 %v1653
    %v1938 = vunpack.c.l.b16 %v1654
    %v1939 = vunpack.c.h.b16 %v1654
    %v1940 = vunpack.c.l.b16 %v1655
    %v1941 = vunpack.c.h.b16 %v1655
    %v1942 = vunpack.c.l.b16 %v1656
    %v1943 = vunpack.c.h.b16 %v1656
    %v1944 = vunpack.c.l.b16 %v1657
    %v1945 = vunpack.c.h.b16 %v1657
    %v1946 = vunpack.c.l.b16 %v1658
    %v1947 = vunpack.c.h.b16 %v1658
    %v1948 = vunpack.c.l.b16 %v1659
    %v1949 = vunpack.c.h.b16 %v1659
    %v1950 = vunpack.c.l.b16 %v1660
    %v1951 = vunpack.c.h.b16 %v1660
    %v1952 = vunpack.c.l.b16 %v1661
    %v1953 = vunpack.c.h.b16 %v1661
    %v1954 = vunpack.c.l.b16 %v1662
    %v1955 = vunpack.c.h.b16 %v1662
    %v1956 = vunpack.c.l.b16 %v1663
    %v1957 = vunpack.c.h.b16 %v1663
    %v1958 = vunpack.c.l.b16 %v1664
    %v1959 = vunpack.c.h.b16 %v1664
    %v1960 = vunpack.c.l.b16 %v1665
    %v1961 = vunpack.c.h.b16 %v1665
    %v1962 = vunpack.c.l.b16 %v1666
    %v1963 = vunpack.c.h.b16 %v1666
    %v1964 = vunpack.c.l.b16 %v1667
    %v1965 = vunpack.c.h.b16 %v1667
    %v1966 = vunpack.c.l.b16 %v1668
    %v1967 = vunpack.c.h.b16 %v1668
    %v1968 = vunpack.c.l.b16 %v1669
    %v1969 = vunpack.c.h.b16 %v1669
    %v1970 = vunpack.c.l.b16 %v1670
    %v1971 = vunpack.c.h.b16 %v1670
    %v1972 = vunpack.c.l.b16 %v1671
    %v1973 = vunpack.c.h.b16 %v1671
    %v1974 = vunpack.c.l.b16 %v1672
    %v1975 = vunpack.c.h.b16 %v1672
    %v1976 = vunpack.c.l.b16 %v1673
    %v1977 = vunpack.c.h.b16 %v1673
    %v1978 = vunpack.c.l.b16 %v1674
    %v1979 = vunpack.c.h.b16 %v1674
    %v1980 = vunpack.c.l.b16 %v1675
    %v1981 = vunpack.c.h.b16 %v1675
    %v1982 = vunpack.c.l.b16 %v1676
    %v1983 = vunpack.c.h.b16 %v1676
    %v1984 = vunpack.c.l.b16 %v1677
    %v1985 = vunpack.c.h.b16 %v1677
    %v1986 = vunpack.c.l.b16 %v1678
    %v1987 = vunpack.c.h.b16 %v1678
    %v1988 = vunpack.c.l.b16 %v1679
    %v1989 = vunpack.c.h.b16 %v1679
    %v1990 = vunpack.c.l.b16 %v1680
    %v1991 = vunpack.c.h.b16 %v1680
    %v1992 = vunpack.c.l.b16 %v1681
    %v1993 = vunpack.c.h.b16 %v1681
    %v1994 = vunpack.c.l.b16 %v1682
    %v1995 = vunpack.c.h.b16 %v1682
    %v1996 = vunpack.c.l.b16 %v1683
    %v1997 = vunpack.c.h.b16 %v1683
    %v1998 = vunpack.c.l.b16 %v1684
    %v1999 = vunpack.c.h.b16 %v1684
    %v2000 = vunpack.c.l.b16 %v1685
    %v2001 = vunpack.c.h.b16 %v1685
    %v2002 = vunpack.c.l.b16 %v1686
    %v2003 = vunpack.c.h.b16 %v1686
    %v2004 = vunpack.c.l.b16 %v1687
    %v2005 = vunpack.c.h.b16 %v1687
    %v2006 = vunpack.c.l.b16 %v1688
    %v2007 = vunpack.c.h.b16 %v1688
    %v2008 = vunpack.c.l.b16 %v1689
    %v2009 = vunpack.c.h.b16 %v1689
    %v2010 = vunpack.c.l.b16 %v1690
    %v2011 = vunpack.c.h.b16 %v1690
    %v2012 = vunpack.c.l.b16 %v1691
    %v2013 = vunpack.c.h.b16 %v1691
    %v2014 = vunpack.c.l.b16 %v1692
    %v2015 = vunpack.c.h.b16 %v1692
    %v2016 = vunpack.c.l.b16 %v1693
    %v2017 = vunpack.c.h.b16 %v1693
    %v2018 = vunpack.c.l.b16 %v1694
    %v2019 = vunpack.c.h.b16 %v1694
    %v2020 = vunpack.c.l.b16 %v1695
    %v2021 = vunpack.c.h.b16 %v1695
    %v2022 = vunpack.c.l.b16 %v1696
    %v2023 = vunpack.c.h.b16 %v1696
    %v2024 = vunpack.c.l.b16 %v1697
    %v2025 = vunpack.c.h.b16 %v1697
    %v2026 = vunpack.c.l.b16 %v1698
    %v2027 = vunpack.c.h.b16 %v1698
    %v2028 = vunpack.c.l.b16 %v1699
    %v2029 = vunpack.c.h.b16 %v1699
    %v2030 = vunpack.c.l.b16 %v1700
    %v2031 = vunpack.c.h.b16 %v1700
    %v2032 = vunpack.c.l.b16 %v1701
    %v2033 = vunpack.c.h.b16 %v1701
    %v2034 = vunpack.c.l.b16 %v1702
    %v2035 = vunpack.c.h.b16 %v1702
    %v2036 = vunpack.c.l.b16 %v1703
    %v2037 = vunpack.c.h.b16 %v1703
    %v2038 = vunpack.c.l.b16 %v1704
    %v2039 = vunpack.c.h.b16 %v1704
    %v2040 = vunpack.c.l.b16 %v1705
    %v2041 = vunpack.c.h.b16 %v1705
    %v2042 = vunpack.c.l.b16 %v1706
    %v2043 = vunpack.c.h.b16 %v1706
    %v2044 = vunpack.c.l.b16 %v1707
    %v2045 = vunpack.c.h.b16 %v1707
    %v2046 = vunpack.c.l.b16 %v1708
    %v2047 = vunpack.c.h.b16 %v1708
    %v2048 = vunpack.c.l.b16 %v1709
    %v2049 = vunpack.c.h.b16 %v1709
    %v2050 = vunpack.c.l.b16 %v1710
    %v2051 = vunpack.c.h.b16 %v1710
    %v2052 = vunpack.c.l.b16 %v1711
    %v2053 = vunpack.c.h.b16 %v1711
    %v2054 = vunpack.c.l.b16 %v1712
    %v2055 = vunpack.c.h.b16 %v1712
    %v2056 = vunpack.c.l.b16 %v1713
    %v2057 = vunpack.c.h.b16 %v1713
    %v2058 = vunpack.c.l.b16 %v1714
    %v2059 = vunpack.c.h.b16 %v1714
    %v2060 = vunpack.c.l.b16 %v1715
    %v2061 = vunpack.c.h.b16 %v1715
    %v2062 = vunpack.c.l.b16 %v1716
    %v2063 = vunpack.c.h.b16 %v1716
    %v2064 = vunpack.c.l.b16 %v1717
    %v2065 = vunpack.c.h.b16 %v1717
    %v2066 = vunpack.c.l.b16 %v1718
    %v2067 = vunpack.c.h.b16 %v1718
    %v2068 = vunpack.c.l.b16 %v1719
    %v2069 = vunpack.c.h.b16 %v1719
    %v2070 = vunpack.c.l.b16 %v1720
    %v2071 = vunpack.c.h.b16 %v1720
    %v2072 = vunpack.c.l.b16 %v1721
    %v2073 = vunpack.c.h.b16 %v1721
    %v2074 = vunpack.c.l.b16 %v1722
    %v2075 = vunpack.c.h.b16 %v1722
    %v2076 = vunpack.c.l.b16 %v1723
    %v2077 = vunpack.c.h.b16 %v1723
    %v2078 = vunpack.c.l.b16 %v1724
    %v2079 = vunpack.c.h.b16 %v1724
    %v2080 = vunpack.c.l.b16 %v1725
    %v2081 = vunpack.c.h.b16 %v1725
    %v2082 = vunpack.c.l.b16 %v1726
    %v2083 = vunpack.c.h.b16 %v1726
    %v2084 = vunpack.c.l.b16 %v1727
    %v2085 = vunpack.c.h.b16 %v1727
    %v2086 = vunpack.c.l.b16 %v1728
    %v2087 = vunpack.c.h.b16 %v1728
    %v2088 = vunpack.c.l.b16 %v1729
    %v2089 = vunpack.c.h.b16 %v1729
    %v2090 = vunpack.c.l.b16 %v1730
    %v2091 = vunpack.c.h.b16 %v1730
    %v2092 = vunpack.c.l.b16 %v1731
    %v2093 = vunpack.c.h.b16 %v1731
    %v2094 = vunpack.c.l.b16 %v1732
    %v2095 = vunpack.c.h.b16 %v1732
    %v2096 = vunpack.c.l.b16 %v1733
    %v2097 = vunpack.c.h.b16 %v1733
    %v2098 = vunpack.c.l.b16 %v1734
    %v2099 = vunpack.c.h.b16 %v1734
    %v2100 = vunpack.c.l.b16 %v1735
    %v2101 = vunpack.c.h.b16 %v1735
    %v2102 = vunpack.c.l.b16 %v1736
    %v2103 = vunpack.c.h.b16 %v1736
    %v2104 = vunpack.c.l.b16 %v1737
    %v2105 = vunpack.c.h.b16 %v1737
    %v2106 = vunpack.c.l.b16 %v1738
    %v2107 = vunpack.c.h.b16 %v1738
    %v2108 = vunpack.c.l.b16 %v1739
    %v2109 = vunpack.c.h.b16 %v1739
    %v2110 = vunpack.c.l.b16 %v1740
    %v2111 = vunpack.c.h.b16 %v1740
    %v2112 = vunpack.c.l.b16 %v1741
    %v2113 = vunpack.c.h.b16 %v1741
    %v2114 = vunpack.c.l.b16 %v1742
    %v2115 = vunpack.c.h.b16 %v1742
    %v2116 = vunpack.c.l.b16 %v1743
    %v2117 = vunpack.c.h.b16 %v1743
    %v2118 = vunpack.c.l.b16 %v1744
    %v2119 = vunpack.c.h.b16 %v1744
    %v2120 = vunpack.c.l.b16 %v1745
    %v2121 = vunpack.c.h.b16 %v1745
    %v2122 = vunpack.c.l.b16 %v1746
    %v2123 = vunpack.c.h.b16 %v1746
    %v2124 = vunpack.c.l.b16 %v1747
    %v2125 = vunpack.c.h.b16 %v1747
    %v2126 = vunpack.c.l.b16 %v1748
    %v2127 = vunpack.c.h.b16 %v1748
    %v2128 = vunpack.c.l.b16 %v1749
    %v2129 = vunpack.c.h.b16 %v1749
    %v2130 = vunpack.c.l.b16 %v1750
    %v2131 = vunpack.c.h.b16 %v1750
    %v2132 = vunpack.c.l.b16 %v1751
    %v2133 = vunpack.c.h.b16 %v1751
    %v2134 = vunpack.c.l.b16 %v1752
    %v2135 = vunpack.c.h.b16 %v1752
    %v2136 = vunpack.c.l.b16 %v1753
    %v2137 = vunpack.c.h.b16 %v1753
    %v2138 = vunpack.c.l.b16 %v1754
    %v2139 = vunpack.c.h.b16 %v1754
    %v2140 = vunpack.c.l.b16 %v1755
    %v2141 = vunpack.c.h.b16 %v1755
    %v2142 = vunpack.c.l.b16 %v1756
    %v2143 = vunpack.c.h.b16 %v1756
    %v2144 = vunpack.c.l.b16 %v1757
    %v2145 = vunpack.c.h.b16 %v1757
    %v2146 = vunpack.c.l.b16 %v1758
    %v2147 = vunpack.c.h.b16 %v1758
    %v2148 = vunpack.c.l.b16 %v1759
    %v2149 = vunpack.c.h.b16 %v1759
    %v2150 = vunpack.c.l.b16 %v1760
    %v2151 = vunpack.c.h.b16 %v1760
    %v2152 = vunpack.c.l.b16 %v1761
    %v2153 = vunpack.c.h.b16 %v1761
    %v2154 = vunpack.c.l.b16 %v1762
    %v2155 = vunpack.c.h.b16 %v1762
    %v2156 = vunpack.c.l.b16 %v1763
    %v2157 = vunpack.c.h.b16 %v1763
    %v2158 = vunpack.c.l.b16 %v1764
    %v2159 = vunpack.c.h.b16 %v1764
    %v2160 = vunpack.c.l.b16 %v1765
    %v2161 = vunpack.c.h.b16 %v1765
    %v2162 = vunpack.c.l.b16 %v1766
    %v2163 = vunpack.c.h.b16 %v1766
    %v2164 = vunpack.c.l.b16 %v1767
    %v2165 = vunpack.c.h.b16 %v1767
    %v2166 = vunpack.c.l.b16 %v1768
    %v2167 = vunpack.c.h.b16 %v1768
    %v2168 = vunpack.c.l.b16 %v1769
    %v2169 = vunpack.c.h.b16 %v1769
    %v2170 = vunpack.c.l.b16 %v1770
    %v2171 = vunpack.c.h.b16 %v1770
    %v2172 = vunpack.c.l.b16 %v1771
    %v2173 = vunpack.c.h.b16 %v1771
    %v2174 = vunpack.c.l.b16 %v1772
    %v2175 = vunpack.c.h.b16 %v1772
    %v2176 = vunpack.c.l.b16 %v1773
    %v2177 = vunpack.c.h.b16 %v1773
    %v2178 = vunpack.c.l.b16 %v1774
    %v2179 = vunpack.c.h.b16 %v1774
    %v2180 = vunpack.c.l.b16 %v1775
    %v2181 = vunpack.c.h.b16 %v1775
    %v2182 = vunpack.c.l.b16 %v1776
    %v2183 = vunpack.c.h.b16 %v1776
    %v2184 = vpack.c.b16 %v1932, %v1928
    %v2185 = vpack.c.b16 %v1933, %v1929
    %v2186 = vpack.c.b16 %v1934, %v1930
    %v2187 = vpack.c.b16 %v1935, %v1931
    %v2188 = vpack.c.b16 %v1940, %v1936
    %v2189 = vpack.c.b16 %v1941, %v1937
    %v2190 = vpack.c.b16 %v1942, %v1938
    %v2191 = vpack.c.b16 %v1943, %v1939
    %v2192 = vpack.c.b16 %v1948, %v1944
    %v2193 = vpack.c.b16 %v1949, %v1945
    %v2194 = vpack.c.b16 %v1950, %v1946
    %v2195 = vpack.c.b16 %v1951, %v1947
    %v2196 = vpack.c.b16 %v1956, %v1952
    %v2197 = vpack.c.b16 %v1957, %v1953
    %v2198 = vpack.c.b16 %v1958, %v1954
    %v2199 = vpack.c.b16 %v1959, %v1955
    %v2200 = vpack.c.b16 %v1964, %v1960
    %v2201 = vpack.c.b16 %v1965, %v1961
    %v2202 = vpack.c.b16 %v1966, %v1962
    %v2203 = vpack.c.b16 %v1967, %v1963
    %v2204 = vpack.c.b16 %v1972, %v1968
    %v2205 = vpack.c.b16 %v1973, %v1969
    %v2206 = vpack.c.b16 %v1974, %v1970
    %v2207 = vpack.c.b16 %v1975, %v1971
    %v2208 = vpack.c.b16 %v1980, %v1976
    %v2209 = vpack.c.b16 %v1981, %v1977
    %v2210 = vpack.c.b16 %v1982, %v1978
    %v2211 = vpack.c.b16 %v1983, %v1979
    %v2212 = vpack.c.b16 %v1988, %v1984
    %v2213 = vpack.c.b16 %v1989, %v1985
    %v2214 = vpack.c.b16 %v1990, %v1986
    %v2215 = vpack.c.b16 %v1991, %v1987
    %v2216 = vpack.c.b16 %v1996, %v1992
    %v2217 = vpack.c.b16 %v1997, %v1993
    %v2218 = vpack.c.b16 %v1998, %v1994
    %v2219 = vpack.c.b16 %v1999, %v1995
    %v2220 = vpack.c.b16 %v2004, %v2000
    %v2221 = vpack.c.b16 %v2005, %v2001
    %v2222 = vpack.c.b16 %v2006, %v2002
    %v2223 = vpack.c.b16 %v2007, %v2003
    %v2224 = vpack.c.b16 %v2012, %v2008
    %v2225 = vpack.c.b16 %v2013, %v2009
    %v2226 = vpack.c.b16 %v2014, %v2010
    %v2227 = vpack.c.b16 %v2015, %v2011
    %v2228 = vpack.c.b16 %v2020, %v2016
    %v2229 = vpack.c.b16 %v2021, %v2017
    %v2230 = vpack.c.b16 %v2022, %v2018
    %v2231 = vpack.c.b16 %v2023, %v2019
    %v2232 = vpack.c.b16 %v2028, %v2024
    %v2233 = vpack.c.b16 %v2029, %v2025
    %v2234 = vpack.c.b16 %v2030, %v2026
    %v2235 = vpack.c.b16 %v2031, %v2027
    %v2236 = vpack.c.b16 %v2036, %v2032
    %v2237 = vpack.c.b16 %v2037, %v2033
    %v2238 = vpack.c.b16 %v2038, %v2034
    %v2239 = vpack.c.b16 %v2039, %v2035
    %v2240 = vpack.c.b16 %v2044, %v2040
    %v2241 = vpack.c.b16 %v2045, %v2041
    %v2242 = vpack.c.b16 %v2046, %v2042
    %v2243 = vpack.c.b16 %v2047, %v2043
    %v2244 = vpack.c.b16 %v2052, %v2048
    %v2245 = vpack.c.b16 %v2053, %v2049
    %v2246 = vpack.c.b16 %v2054, %v2050
    %v2247 = vpack.c.b16 %v2055, %v2051
    %v2248 = vpack.c.b16 %v2060, %v2056
    %v2249 = vpack.c.b16 %v2061, %v2057
    %v2250 = vpack.c.b16 %v2062, %v2058
    %v2251 = vpack.c.b16 %v2063, %v2059
    %v2252 = vpack.c.b16 %v2068, %v2064
    %v2253 = vpack.c.b16 %v2069, %v2065
    %v2254 = vpack.c.b16 %v2070, %v2066
    %v2255 = vpack.c.b16 %v2071, %v2067
    %v2256 = vpack.c.b16 %v2076, %v2072
    %v2257 = vpack.c.b16 %v2077, %v2073
    %v2258 = vpack.c.b16 %v2078, %v2074
    %v2259 = vpack.c.b16 %v2079, %v2075
    %v2260 = vpack.c.b16 %v2084, %v2080
    %v2261 = vpack.c.b16 %v2085, %v2081
    %v2262 = vpack.c.b16 %v2086, %v2082
    %v2263 = vpack.c.b16 %v2087, %v2083
    %v2264 = vpack.c.b16 %v2092, %v2088
    %v2265 = vpack.c.b16 %v2093, %v2089
    %v2266 = vpack.c.b16 %v2094, %v2090
    %v2267 = vpack.c.b16 %v2095, %v2091
    %v2268 = vpack.c.b16 %v2100, %v2096
    %v2269 = vpack.c.b16 %v2101, %v2097
    %v2270 = vpack.c.b16 %v2102, %v2098
    %v2271 = vpack.c.b16 %v2103, %v2099
    %v2272 = vpack.c.b16 %v2108, %v2104
    %v2273 = vpack.c.b16 %v2109, %v2105
    %v2274 = vpack.c.b16 %v2110, %v2106
    %v2275 = vpack.c.b16 %v2111, %v2107
    %v2276 = vpack.c.b16 %v2116, %v2112
    %v2277 = vpack.c.b16 %v2117, %v2113
    %v2278 = vpack.c.b16 %v2118, %v2114
    %v2279 = vpack.c.b16 %v2119, %v2115
    %v2280 = vpack.c.b16 %v2124, %v2120
    %v2281 = vpack.c.b16 %v2125, %v2121
    %v2282 = vpack.c.b16 %v2126, %v2122
    %v2283 = vpack.c.b16 %v2127, %v2123
    %v2284 = vpack.c.b16 %v2132, %v2128
    %v2285 = vpack.c.b16 %v2133, %v2129
    %v2286 = vpack.c.b16 %v2134, %v2130
    %v2287 = vpack.c.b16 %v2135, %v2131
    %v2288 = vpack.c.b16 %v2140, %v2136
    %v2289 = vpack.c.b16 %v2141, %v2137
    %v2290 = vpack.c.b16 %v2142, %v2138
    %v2291 = vpack.c.b16 %v2143, %v2139
    %v2292 = vpack.c.b16 %v2148, %v2144
    %v2293 = vpack.c.b16 %v2149, %v2145
    %v2294 = vpack.c.b16 %v2150, %v2146
    %v2295 = vpack.c.b16 %v2151, %v2147
    %v2296 = vpack.c.b16 %v2156, %v2152
    %v2297 = vpack.c.b16 %v2157, %v2153
    %v2298 = vpack.c.b16 %v2158, %v2154
    %v2299 = vpack.c.b16 %v2159, %v2155
    %v2300 = vpack.c.b16 %v2164, %v2160
    %v2301 = vpack.c.b16 %v2165, %v2161
    %v2302 = vpack.c.b16 %v2166, %v2162
    %v2303 = vpack.c.b16 %v2167, %v2163
    %v2304 = vpack.c.b16 %v2172, %v2168
    %v2305 = vpack.c.b16 %v2173, %v2169
    %v2306 = vpack.c.b16 %v2174, %v2170
    %v2307 = vpack.c.b16 %v2175, %v2171
    %v2308 = vpack.c.b16 %v2180, %v2176
    %v2309 = vpack.c.b16 %v2181, %v2177
    %v2310 = vpack.c.b16 %v2182, %v2178
    %v2311 = vpack.c.b16 %v2183, %v2179
    %2440 = vmatprep.subr.bf16.mxu0 %v2185
    %2441 = vmatpush1.bf16.msra.mxu0 %v2184
    %2442 = vmatprep.subr.bf16.mxu0 %v2189
    %2443 = vmatpush1.bf16.msra.mxu0 %v2188
    %2444 = vmatprep.subr.bf16.mxu0 %v2193
    %2445 = vmatpush1.bf16.msra.mxu0 %v2192
    %2446 = vmatprep.subr.bf16.mxu0 %v2197
    %2447 = vmatpush1.bf16.msra.mxu0 %v2196
    %2448 = vmatprep.subr.bf16.mxu0 %v2201
    %2449 = vmatpush1.bf16.msra.mxu0 %v2200
    %2450 = vmatprep.subr.bf16.mxu0 %v2205
    %2451 = vmatpush1.bf16.msra.mxu0 %v2204
    %2452 = vmatprep.subr.bf16.mxu0 %v2209
    %2453 = vmatpush1.bf16.msra.mxu0 %v2208
    %2454 = vmatprep.subr.bf16.mxu0 %v2213
    %2455 = vmatpush1.bf16.msra.mxu0 %v2212
    %2456 = vmatprep.subr.bf16.mxu0 %v2217
    %2457 = vmatpush1.bf16.msra.mxu0 %v2216
    %2458 = vmatprep.subr.bf16.mxu0 %v2221
    %2459 = vmatpush1.bf16.msra.mxu0 %v2220
    %2460 = vmatprep.subr.bf16.mxu0 %v2225
    %2461 = vmatpush1.bf16.msra.mxu0 %v2224
    %2462 = vmatprep.subr.bf16.mxu0 %v2229
    %2463 = vmatpush1.bf16.msra.mxu0 %v2228
    %2464 = vmatprep.subr.bf16.mxu0 %v2233
    %2465 = vmatpush1.bf16.msra.mxu0 %v2232
    %2466 = vmatprep.subr.bf16.mxu0 %v2237
    %2467 = vmatpush1.bf16.msra.mxu0 %v2236
    %2468 = vmatprep.subr.bf16.mxu0 %v2241
    %2469 = vmatpush1.bf16.msra.mxu0 %v2240
    %2470 = vmatprep.subr.bf16.mxu0 %v2245
    %2471 = vmatpush1.bf16.msra.mxu0 %v2244
    %2472 = vmatprep.mubr.bf16.mxu0 %v1645
    %2473 = vmatmul.mubr.bf16.gmra.mrb[0].mxu0 %v1644
    %v2474 = vpop.f32.mrb[0].mxu0
    %v2475 = vadd.f32 %v1783, %v2474
    %v2476 = vpop.f32.mrb[0].mxu0
    %v2477 = vadd.f32 %v1787, %v2476
    %v2478 = vpop.f32.mrb[0].mxu0
    %v2479 = vpop.f32.mrb[0].mxu0
    %2480 = vdwg.mxu0
    %2481 = vmatprep.subr.bf16.mxu0 %v2249
    %2482 = vmatpush1.bf16.msra.mxu0 %v2248
    %2483 = vmatprep.subr.bf16.mxu0 %v2253
    %2484 = vmatpush1.bf16.msra.mxu0 %v2252
    %2485 = vmatprep.subr.bf16.mxu0 %v2257
    %2486 = vmatpush1.bf16.msra.mxu0 %v2256
    %2487 = vmatprep.subr.bf16.mxu0 %v2261
    %2488 = vmatpush1.bf16.msra.mxu0 %v2260
    %2489 = vmatprep.subr.bf16.mxu0 %v2265
    %2490 = vmatpush1.bf16.msra.mxu0 %v2264
    %2491 = vmatprep.subr.bf16.mxu0 %v2269
    %2492 = vmatpush1.bf16.msra.mxu0 %v2268
    %2493 = vmatprep.subr.bf16.mxu0 %v2273
    %2494 = vmatpush1.bf16.msra.mxu0 %v2272
    %2495 = vmatprep.subr.bf16.mxu0 %v2277
    %2496 = vmatpush1.bf16.msra.mxu0 %v2276
    %2497 = vmatprep.subr.bf16.mxu0 %v2281
    %2498 = vmatpush1.bf16.msra.mxu0 %v2280
    %2499 = vmatprep.subr.bf16.mxu0 %v2285
    %2500 = vmatpush1.bf16.msra.mxu0 %v2284
    %2501 = vmatprep.subr.bf16.mxu0 %v2289
    %2502 = vmatpush1.bf16.msra.mxu0 %v2288
    %2503 = vmatprep.subr.bf16.mxu0 %v2293
    %2504 = vmatpush1.bf16.msra.mxu0 %v2292
    %2505 = vmatprep.subr.bf16.mxu0 %v2297
    %2506 = vmatpush1.bf16.msra.mxu0 %v2296
    %2507 = vmatprep.subr.bf16.mxu0 %v2301
    %2508 = vmatpush1.bf16.msra.mxu0 %v2300
    %2509 = vmatprep.subr.bf16.mxu0 %v2305
    %2510 = vmatpush1.bf16.msra.mxu0 %v2304
    %2511 = vmatprep.subr.bf16.mxu0 %v2309
    %2512 = vmatpush1.bf16.msra.mxu0 %v2308
    %2513 = vmatprep.mubr.bf16.mxu0 %v1647
    %2514 = vmatmul.mubr.bf16.gmra.mrb[0].mxu0 %v1646
    %v2515 = vpop.f32.mrb[0].mxu0
    %v2516 = vadd.f32 %v2475, %v2515
    %v2517 = vpop.f32.mrb[0].mxu0
    %v2518 = vadd.f32 %v2477, %v2517
    %v2519 = vpop.f32.mrb[0].mxu0
    %v2520 = vpop.f32.mrb[0].mxu0
    %2521 = vdwg.mxu0
    %2522 = vmatprep.subr.bf16.mxu0 %v2187
    %2523 = vmatpush1.bf16.msra.mxu0 %v2186
    %2524 = vmatprep.subr.bf16.mxu0 %v2191
    %2525 = vmatpush1.bf16.msra.mxu0 %v2190
    %2526 = vmatprep.subr.bf16.mxu0 %v2195
    %2527 = vmatpush1.bf16.msra.mxu0 %v2194
    %2528 = vmatprep.subr.bf16.mxu0 %v2199
    %2529 = vmatpush1.bf16.msra.mxu0 %v2198
    %2530 = vmatprep.subr.bf16.mxu0 %v2203
    %2531 = vmatpush1.bf16.msra.mxu0 %v2202
    %2532 = vmatprep.subr.bf16.mxu0 %v2207
    %2533 = vmatpush1.bf16.msra.mxu0 %v2206
    %2534 = vmatprep.subr.bf16.mxu0 %v2211
    %2535 = vmatpush1.bf16.msra.mxu0 %v2210
    %2536 = vmatprep.subr.bf16.mxu0 %v2215
    %2537 = vmatpush1.bf16.msra.mxu0 %v2214
    %2538 = vmatprep.subr.bf16.mxu0 %v2219
    %2539 = vmatpush1.bf16.msra.mxu0 %v2218
    %2540 = vmatprep.subr.bf16.mxu0 %v2223
    %2541 = vmatpush1.bf16.msra.mxu0 %v2222
    %2542 = vmatprep.subr.bf16.mxu0 %v2227
    %2543 = vmatpush1.bf16.msra.mxu0 %v2226
    %2544 = vmatprep.subr.bf16.mxu0 %v2231
    %2545 = vmatpush1.bf16.msra.mxu0 %v2230
    %2546 = vmatprep.subr.bf16.mxu0 %v2235
    %2547 = vmatpush1.bf16.msra.mxu0 %v2234
    %2548 = vmatprep.subr.bf16.mxu0 %v2239
    %2549 = vmatpush1.bf16.msra.mxu0 %v2238
    %2550 = vmatprep.subr.bf16.mxu0 %v2243
    %2551 = vmatpush1.bf16.msra.mxu0 %v2242
    %2552 = vmatprep.subr.bf16.mxu0 %v2247
    %2553 = vmatpush1.bf16.msra.mxu0 %v2246
    %2554 = vmatprep.mubr.bf16.mxu0 %v1645
    %2555 = vmatmul.mubr.bf16.gmra.mrb[0].mxu0 %v1644
    %v2556 = vpop.f32.mrb[0].mxu0
    %v2557 = vadd.f32 %v1791, %v2556
    %v2558 = vpop.f32.mrb[0].mxu0
    %v2559 = vadd.f32 %v1795, %v2558
    %v2560 = vpop.f32.mrb[0].mxu0
    %v2561 = vpop.f32.mrb[0].mxu0
    %2562 = vdwg.mxu0
    %2563 = vmatprep.subr.bf16.mxu0 %v2251
    %2564 = vmatpush1.bf16.msra.mxu0 %v2250
    %2565 = vmatprep.subr.bf16.mxu0 %v2255
    %2566 = vmatpush1.bf16.msra.mxu0 %v2254
    %2567 = vmatprep.subr.bf16.mxu0 %v2259
    %2568 = vmatpush1.bf16.msra.mxu0 %v2258
    %2569 = vmatprep.subr.bf16.mxu0 %v2263
    %2570 = vmatpush1.bf16.msra.mxu0 %v2262
    %2571 = vmatprep.subr.bf16.mxu0 %v2267
    %2572 = vmatpush1.bf16.msra.mxu0 %v2266
    %2573 = vmatprep.subr.bf16.mxu0 %v2271
    %2574 = vmatpush1.bf16.msra.mxu0 %v2270
    %2575 = vmatprep.subr.bf16.mxu0 %v2275
    %2576 = vmatpush1.bf16.msra.mxu0 %v2274
    %2577 = vmatprep.subr.bf16.mxu0 %v2279
    %2578 = vmatpush1.bf16.msra.mxu0 %v2278
    %2579 = vmatprep.subr.bf16.mxu0 %v2283
    %2580 = vmatpush1.bf16.msra.mxu0 %v2282
    %2581 = vmatprep.subr.bf16.mxu0 %v2287
    %2582 = vmatpush1.bf16.msra.mxu0 %v2286
    %2583 = vmatprep.subr.bf16.mxu0 %v2291
    %2584 = vmatpush1.bf16.msra.mxu0 %v2290
    %2585 = vmatprep.subr.bf16.mxu0 %v2295
    %2586 = vmatpush1.bf16.msra.mxu0 %v2294
    %2587 = vmatprep.subr.bf16.mxu0 %v2299
    %2588 = vmatpush1.bf16.msra.mxu0 %v2298
    %2589 = vmatprep.subr.bf16.mxu0 %v2303
    %2590 = vmatpush1.bf16.msra.mxu0 %v2302
    %2591 = vmatprep.subr.bf16.mxu0 %v2307
    %2592 = vmatpush1.bf16.msra.mxu0 %v2306
    %2593 = vmatprep.subr.bf16.mxu0 %v2311
    %2594 = vmatpush1.bf16.msra.mxu0 %v2310
    %2595 = vmatprep.mubr.bf16.mxu0 %v1647
    %2596 = vmatmul.mubr.bf16.gmra.mrb[0].mxu0 %v1646
    %v2597 = vpop.f32.mrb[0].mxu0
    %v2598 = vadd.f32 %v2557, %v2597
    %v2599 = vpop.f32.mrb[0].mxu0
    %v2600 = vadd.f32 %v2559, %v2599
    %v2601 = vpop.f32.mrb[0].mxu0
    %v2602 = vpop.f32.mrb[0].mxu0
    %2603 = vdwg.mxu0
    %vm2604 = vcmp.ge.f32.partialorder %v2516, 0.0
    %vm2605 = vcmp.ge.f32.partialorder %v2518, 0.0
    %vm2606 = vcmp.ge.f32.partialorder %v2598, 0.0
    %vm2607 = vcmp.ge.f32.partialorder %v2600, 0.0
    %v2608 = vmul.f32 %v2516, 0.2
    %v2609 = vmul.f32 %v2518, 0.2
    %v2610 = vmul.f32 %v2598, 0.2
    %v2611 = vmul.f32 %v2600, 0.2
    %v2612 = vsel %vm2604, %v2516, %v2608
    %v2613 = vsel %vm2605, %v2518, %v2609
    %v2614 = vsel %vm2606, %v2598, %v2610
    %v2615 = vsel %vm2607, %v2600, %v2611
    %v2616 = vpack.c.bf16 %v2612, %v2612
    %v2617 = vpack.c.bf16 %v2613, %v2613
    %v2618 = vpack.c.bf16 %v2614, %v2614
    %v2619 = vpack.c.bf16 %v2615, %v2615
    %s2620 = scalar_lea.vmem [#allocation4], 2048
    %v2621 = vld [vmem:[%s2620] sm:$0xff]
    %v2622 = vld [vmem:[%s2620 + $0x8] sm:$0xff]
    %v2623 = vld [vmem:[%s2620 + $0x10] sm:$0xff]
    %v2624 = vld [vmem:[%s2620 + $0x18] sm:$0xff]
    %v2625 = vld [vmem:[%s2620 + $0x20] sm:$0xff]
    %v2626 = vld [vmem:[%s2620 + $0x28] sm:$0xff]
    %v2627 = vld [vmem:[%s2620 + $0x30] sm:$0xff]
    %v2628 = vld [vmem:[%s2620 + $0x38] sm:$0xff]
    %v2629 = vld [vmem:[%s2620 + $0x40] sm:$0xff]
    %v2630 = vld [vmem:[%s2620 + $0x48] sm:$0xff]
    %v2631 = vld [vmem:[%s2620 + $0x50] sm:$0xff]
    %v2632 = vld [vmem:[%s2620 + $0x58] sm:$0xff]
    %v2633 = vld [vmem:[%s2620 + $0x60] sm:$0xff]
    %v2634 = vld [vmem:[%s2620 + $0x68] sm:$0xff]
    %v2635 = vld [vmem:[%s2620 + $0x70] sm:$0xff]
    %v2636 = vld [vmem:[%s2620 + $0x78] sm:$0xff]
    %v2637 = vld [vmem:[%s2620 + $0x80] sm:$0xff]
    %v2638 = vld [vmem:[%s2620 + $0x88] sm:$0xff]
    %v2639 = vld [vmem:[%s2620 + $0x90] sm:$0xff]
    %v2640 = vld [vmem:[%s2620 + $0x98] sm:$0xff]
    %v2641 = vld [vmem:[%s2620 + $0xa0] sm:$0xff]
    %v2642 = vld [vmem:[%s2620 + $0xa8] sm:$0xff]
    %v2643 = vld [vmem:[%s2620 + $0xb0] sm:$0xff]
    %v2644 = vld [vmem:[%s2620 + $0xb8] sm:$0xff]
    %v2645 = vld [vmem:[%s2620 + $0xc0] sm:$0xff]
    %v2646 = vld [vmem:[%s2620 + $0xc8] sm:$0xff]
    %v2647 = vld [vmem:[%s2620 + $0xd0] sm:$0xff]
    %v2648 = vld [vmem:[%s2620 + $0xd8] sm:$0xff]
    %v2649 = vld [vmem:[%s2620 + $0xe0] sm:$0xff]
    %v2650 = vld [vmem:[%s2620 + $0xe8] sm:$0xff]
    %v2651 = vld [vmem:[%s2620 + $0xf0] sm:$0xff]
    %v2652 = vld [vmem:[%s2620 + $0xf8] sm:$0xff]
    %v2653 = vld [vmem:[%s2620 + $0x100] sm:$0xff]
    %v2654 = vld [vmem:[%s2620 + $0x108] sm:$0xff]
    %v2655 = vld [vmem:[%s2620 + $0x110] sm:$0xff]
    %v2656 = vld [vmem:[%s2620 + $0x118] sm:$0xff]
    %v2657 = vld [vmem:[%s2620 + $0x120] sm:$0xff]
    %v2658 = vld [vmem:[%s2620 + $0x128] sm:$0xff]
    %v2659 = vld [vmem:[%s2620 + $0x130] sm:$0xff]
    %v2660 = vld [vmem:[%s2620 + $0x138] sm:$0xff]
    %v2661 = vld [vmem:[%s2620 + $0x140] sm:$0xff]
    %v2662 = vld [vmem:[%s2620 + $0x148] sm:$0xff]
    %v2663 = vld [vmem:[%s2620 + $0x150] sm:$0xff]
    %v2664 = vld [vmem:[%s2620 + $0x158] sm:$0xff]
    %v2665 = vld [vmem:[%s2620 + $0x160] sm:$0xff]
    %v2666 = vld [vmem:[%s2620 + $0x168] sm:$0xff]
    %v2667 = vld [vmem:[%s2620 + $0x170] sm:$0xff]
    %v2668 = vld [vmem:[%s2620 + $0x178] sm:$0xff]
    %v2669 = vld [vmem:[%s2620 + $0x180] sm:$0xff]
    %v2670 = vld [vmem:[%s2620 + $0x188] sm:$0xff]
    %v2671 = vld [vmem:[%s2620 + $0x190] sm:$0xff]
    %v2672 = vld [vmem:[%s2620 + $0x198] sm:$0xff]
    %v2673 = vld [vmem:[%s2620 + $0x1a0] sm:$0xff]
    %v2674 = vld [vmem:[%s2620 + $0x1a8] sm:$0xff]
    %v2675 = vld [vmem:[%s2620 + $0x1b0] sm:$0xff]
    %v2676 = vld [vmem:[%s2620 + $0x1b8] sm:$0xff]
    %v2677 = vld [vmem:[%s2620 + $0x1c0] sm:$0xff]
    %v2678 = vld [vmem:[%s2620 + $0x1c8] sm:$0xff]
    %v2679 = vld [vmem:[%s2620 + $0x1d0] sm:$0xff]
    %v2680 = vld [vmem:[%s2620 + $0x1d8] sm:$0xff]
    %v2681 = vld [vmem:[%s2620 + $0x1e0] sm:$0xff]
    %v2682 = vld [vmem:[%s2620 + $0x1e8] sm:$0xff]
    %v2683 = vld [vmem:[%s2620 + $0x1f0] sm:$0xff]
    %v2684 = vld [vmem:[%s2620 + $0x1f8] sm:$0xff]
    %v2685 = vld [vmem:[%s2620 + $0x200] sm:$0xff]
    %v2686 = vld [vmem:[%s2620 + $0x208] sm:$0xff]
    %v2687 = vld [vmem:[%s2620 + $0x210] sm:$0xff]
    %v2688 = vld [vmem:[%s2620 + $0x218] sm:$0xff]
    %v2689 = vld [vmem:[%s2620 + $0x220] sm:$0xff]
    %v2690 = vld [vmem:[%s2620 + $0x228] sm:$0xff]
    %v2691 = vld [vmem:[%s2620 + $0x230] sm:$0xff]
    %v2692 = vld [vmem:[%s2620 + $0x238] sm:$0xff]
    %v2693 = vld [vmem:[%s2620 + $0x240] sm:$0xff]
    %v2694 = vld [vmem:[%s2620 + $0x248] sm:$0xff]
    %v2695 = vld [vmem:[%s2620 + $0x250] sm:$0xff]
    %v2696 = vld [vmem:[%s2620 + $0x258] sm:$0xff]
    %v2697 = vld [vmem:[%s2620 + $0x260] sm:$0xff]
    %v2698 = vld [vmem:[%s2620 + $0x268] sm:$0xff]
    %v2699 = vld [vmem:[%s2620 + $0x270] sm:$0xff]
    %v2700 = vld [vmem:[%s2620 + $0x278] sm:$0xff]
    %v2701 = vld [vmem:[%s2620 + $0x280] sm:$0xff]
    %v2702 = vld [vmem:[%s2620 + $0x288] sm:$0xff]
    %v2703 = vld [vmem:[%s2620 + $0x290] sm:$0xff]
    %v2704 = vld [vmem:[%s2620 + $0x298] sm:$0xff]
    %v2705 = vld [vmem:[%s2620 + $0x2a0] sm:$0xff]
    %v2706 = vld [vmem:[%s2620 + $0x2a8] sm:$0xff]
    %v2707 = vld [vmem:[%s2620 + $0x2b0] sm:$0xff]
    %v2708 = vld [vmem:[%s2620 + $0x2b8] sm:$0xff]
    %v2709 = vld [vmem:[%s2620 + $0x2c0] sm:$0xff]
    %v2710 = vld [vmem:[%s2620 + $0x2c8] sm:$0xff]
    %v2711 = vld [vmem:[%s2620 + $0x2d0] sm:$0xff]
    %v2712 = vld [vmem:[%s2620 + $0x2d8] sm:$0xff]
    %v2713 = vld [vmem:[%s2620 + $0x2e0] sm:$0xff]
    %v2714 = vld [vmem:[%s2620 + $0x2e8] sm:$0xff]
    %v2715 = vld [vmem:[%s2620 + $0x2f0] sm:$0xff]
    %v2716 = vld [vmem:[%s2620 + $0x2f8] sm:$0xff]
    %v2717 = vld [vmem:[%s2620 + $0x300] sm:$0xff]
    %v2718 = vld [vmem:[%s2620 + $0x308] sm:$0xff]
    %v2719 = vld [vmem:[%s2620 + $0x310] sm:$0xff]
    %v2720 = vld [vmem:[%s2620 + $0x318] sm:$0xff]
    %v2721 = vld [vmem:[%s2620 + $0x320] sm:$0xff]
    %v2722 = vld [vmem:[%s2620 + $0x328] sm:$0xff]
    %v2723 = vld [vmem:[%s2620 + $0x330] sm:$0xff]
    %v2724 = vld [vmem:[%s2620 + $0x338] sm:$0xff]
    %v2725 = vld [vmem:[%s2620 + $0x340] sm:$0xff]
    %v2726 = vld [vmem:[%s2620 + $0x348] sm:$0xff]
    %v2727 = vld [vmem:[%s2620 + $0x350] sm:$0xff]
    %v2728 = vld [vmem:[%s2620 + $0x358] sm:$0xff]
    %v2729 = vld [vmem:[%s2620 + $0x360] sm:$0xff]
    %v2730 = vld [vmem:[%s2620 + $0x368] sm:$0xff]
    %v2731 = vld [vmem:[%s2620 + $0x370] sm:$0xff]
    %v2732 = vld [vmem:[%s2620 + $0x378] sm:$0xff]
    %v2733 = vld [vmem:[%s2620 + $0x380] sm:$0xff]
    %v2734 = vld [vmem:[%s2620 + $0x388] sm:$0xff]
    %v2735 = vld [vmem:[%s2620 + $0x390] sm:$0xff]
    %v2736 = vld [vmem:[%s2620 + $0x398] sm:$0xff]
    %v2737 = vld [vmem:[%s2620 + $0x3a0] sm:$0xff]
    %v2738 = vld [vmem:[%s2620 + $0x3a8] sm:$0xff]
    %v2739 = vld [vmem:[%s2620 + $0x3b0] sm:$0xff]
    %v2740 = vld [vmem:[%s2620 + $0x3b8] sm:$0xff]
    %v2741 = vld [vmem:[%s2620 + $0x3c0] sm:$0xff]
    %v2742 = vld [vmem:[%s2620 + $0x3c8] sm:$0xff]
    %v2743 = vld [vmem:[%s2620 + $0x3d0] sm:$0xff]
    %v2744 = vld [vmem:[%s2620 + $0x3d8] sm:$0xff]
    %v2745 = vld [vmem:[%s2620 + $0x3e0] sm:$0xff]
    %v2746 = vld [vmem:[%s2620 + $0x3e8] sm:$0xff]
    %v2747 = vld [vmem:[%s2620 + $0x3f0] sm:$0xff]
    %v2748 = vld [vmem:[%s2620 + $0x3f8] sm:$0xff]
    %s2749 = scalar_lea.vmem [#allocation6], 8
    %v2750 = vld [vmem:[%s2749] sm:$0xf]
    %v2752 = vlaneseq
    %v2753 = vshrl.u32 %v2752, 7
    %v2754 = vsub.s32 0, %v2753
    %v2755 = vrot.slane %v2750, %v2754
    %v2756 = vlaneseq
    %v2757 = vshrl.u32 %v2756, 7
    %v2758 = vsub.s32 1, %v2757
    %v2759 = vrot.slane %v2750, %v2758
    %v2760 = vlaneseq
    %v2761 = vshrl.u32 %v2760, 7
    %v2762 = vsub.s32 2, %v2761
    %v2763 = vrot.slane %v2750, %v2762
    %v2764 = vlaneseq
    %v2765 = vshrl.u32 %v2764, 7
    %v2766 = vsub.s32 3, %v2765
    %v2767 = vrot.slane %v2750, %v2766
    %v2900 = vunpack.c.l.b16 %v2621
    %v2901 = vunpack.c.h.b16 %v2621
    %v2902 = vunpack.c.l.b16 %v2622
    %v2903 = vunpack.c.h.b16 %v2622
    %v2904 = vunpack.c.l.b16 %v2623
    %v2905 = vunpack.c.h.b16 %v2623
    %v2906 = vunpack.c.l.b16 %v2624
    %v2907 = vunpack.c.h.b16 %v2624
    %v2908 = vunpack.c.l.b16 %v2625
    %v2909 = vunpack.c.h.b16 %v2625
    %v2910 = vunpack.c.l.b16 %v2626
    %v2911 = vunpack.c.h.b16 %v2626
    %v2912 = vunpack.c.l.b16 %v2627
    %v2913 = vunpack.c.h.b16 %v2627
    %v2914 = vunpack.c.l.b16 %v2628
    %v2915 = vunpack.c.h.b16 %v2628
    %v2916 = vunpack.c.l.b16 %v2629
    %v2917 = vunpack.c.h.b16 %v2629
    %v2918 = vunpack.c.l.b16 %v2630
    %v2919 = vunpack.c.h.b16 %v2630
    %v2920 = vunpack.c.l.b16 %v2631
    %v2921 = vunpack.c.h.b16 %v2631
    %v2922 = vunpack.c.l.b16 %v2632
    %v2923 = vunpack.c.h.b16 %v2632
    %v2924 = vunpack.c.l.b16 %v2633
    %v2925 = vunpack.c.h.b16 %v2633
    %v2926 = vunpack.c.l.b16 %v2634
    %v2927 = vunpack.c.h.b16 %v2634
    %v2928 = vunpack.c.l.b16 %v2635
    %v2929 = vunpack.c.h.b16 %v2635
    %v2930 = vunpack.c.l.b16 %v2636
    %v2931 = vunpack.c.h.b16 %v2636
    %v2932 = vunpack.c.l.b16 %v2637
    %v2933 = vunpack.c.h.b16 %v2637
    %v2934 = vunpack.c.l.b16 %v2638
    %v2935 = vunpack.c.h.b16 %v2638
    %v2936 = vunpack.c.l.b16 %v2639
    %v2937 = vunpack.c.h.b16 %v2639
    %v2938 = vunpack.c.l.b16 %v2640
    %v2939 = vunpack.c.h.b16 %v2640
    %v2940 = vunpack.c.l.b16 %v2641
    %v2941 = vunpack.c.h.b16 %v2641
    %v2942 = vunpack.c.l.b16 %v2642
    %v2943 = vunpack.c.h.b16 %v2642
    %v2944 = vunpack.c.l.b16 %v2643
    %v2945 = vunpack.c.h.b16 %v2643
    %v2946 = vunpack.c.l.b16 %v2644
    %v2947 = vunpack.c.h.b16 %v2644
    %v2948 = vunpack.c.l.b16 %v2645
    %v2949 = vunpack.c.h.b16 %v2645
    %v2950 = vunpack.c.l.b16 %v2646
    %v2951 = vunpack.c.h.b16 %v2646
    %v2952 = vunpack.c.l.b16 %v2647
    %v2953 = vunpack.c.h.b16 %v2647
    %v2954 = vunpack.c.l.b16 %v2648
    %v2955 = vunpack.c.h.b16 %v2648
    %v2956 = vunpack.c.l.b16 %v2649
    %v2957 = vunpack.c.h.b16 %v2649
    %v2958 = vunpack.c.l.b16 %v2650
    %v2959 = vunpack.c.h.b16 %v2650
    %v2960 = vunpack.c.l.b16 %v2651
    %v2961 = vunpack.c.h.b16 %v2651
    %v2962 = vunpack.c.l.b16 %v2652
    %v2963 = vunpack.c.h.b16 %v2652
    %v2964 = vunpack.c.l.b16 %v2653
    %v2965 = vunpack.c.h.b16 %v2653
    %v2966 = vunpack.c.l.b16 %v2654
    %v2967 = vunpack.c.h.b16 %v2654
    %v2968 = vunpack.c.l.b16 %v2655
    %v2969 = vunpack.c.h.b16 %v2655
    %v2970 = vunpack.c.l.b16 %v2656
    %v2971 = vunpack.c.h.b16 %v2656
    %v2972 = vunpack.c.l.b16 %v2657
    %v2973 = vunpack.c.h.b16 %v2657
    %v2974 = vunpack.c.l.b16 %v2658
    %v2975 = vunpack.c.h.b16 %v2658
    %v2976 = vunpack.c.l.b16 %v2659
    %v2977 = vunpack.c.h.b16 %v2659
    %v2978 = vunpack.c.l.b16 %v2660
    %v2979 = vunpack.c.h.b16 %v2660
    %v2980 = vunpack.c.l.b16 %v2661
    %v2981 = vunpack.c.h.b16 %v2661
    %v2982 = vunpack.c.l.b16 %v2662
    %v2983 = vunpack.c.h.b16 %v2662
    %v2984 = vunpack.c.l.b16 %v2663
    %v2985 = vunpack.c.h.b16 %v2663
    %v2986 = vunpack.c.l.b16 %v2664
    %v2987 = vunpack.c.h.b16 %v2664
    %v2988 = vunpack.c.l.b16 %v2665
    %v2989 = vunpack.c.h.b16 %v2665
    %v2990 = vunpack.c.l.b16 %v2666
    %v2991 = vunpack.c.h.b16 %v2666
    %v2992 = vunpack.c.l.b16 %v2667
    %v2993 = vunpack.c.h.b16 %v2667
    %v2994 = vunpack.c.l.b16 %v2668
    %v2995 = vunpack.c.h.b16 %v2668
    %v2996 = vunpack.c.l.b16 %v2669
    %v2997 = vunpack.c.h.b16 %v2669
    %v2998 = vunpack.c.l.b16 %v2670
    %v2999 = vunpack.c.h.b16 %v2670
    %v3000 = vunpack.c.l.b16 %v2671
    %v3001 = vunpack.c.h.b16 %v2671
    %v3002 = vunpack.c.l.b16 %v2672
    %v3003 = vunpack.c.h.b16 %v2672
    %v3004 = vunpack.c.l.b16 %v2673
    %v3005 = vunpack.c.h.b16 %v2673
    %v3006 = vunpack.c.l.b16 %v2674
    %v3007 = vunpack.c.h.b16 %v2674
    %v3008 = vunpack.c.l.b16 %v2675
    %v3009 = vunpack.c.h.b16 %v2675
    %v3010 = vunpack.c.l.b16 %v2676
    %v3011 = vunpack.c.h.b16 %v2676
    %v3012 = vunpack.c.l.b16 %v2677
    %v3013 = vunpack.c.h.b16 %v2677
    %v3014 = vunpack.c.l.b16 %v2678
    %v3015 = vunpack.c.h.b16 %v2678
    %v3016 = vunpack.c.l.b16 %v2679
    %v3017 = vunpack.c.h.b16 %v2679
    %v3018 = vunpack.c.l.b16 %v2680
    %v3019 = vunpack.c.h.b16 %v2680
    %v3020 = vunpack.c.l.b16 %v2681
    %v3021 = vunpack.c.h.b16 %v2681
    %v3022 = vunpack.c.l.b16 %v2682
    %v3023 = vunpack.c.h.b16 %v2682
    %v3024 = vunpack.c.l.b16 %v2683
    %v3025 = vunpack.c.h.b16 %v2683
    %v3026 = vunpack.c.l.b16 %v2684
    %v3027 = vunpack.c.h.b16 %v2684
    %v3028 = vunpack.c.l.b16 %v2685
    %v3029 = vunpack.c.h.b16 %v2685
    %v3030 = vunpack.c.l.b16 %v2686
    %v3031 = vunpack.c.h.b16 %v2686
    %v3032 = vunpack.c.l.b16 %v2687
    %v3033 = vunpack.c.h.b16 %v2687
    %v3034 = vunpack.c.l.b16 %v2688
    %v3035 = vunpack.c.h.b16 %v2688
    %v3036 = vunpack.c.l.b16 %v2689
    %v3037 = vunpack.c.h.b16 %v2689
    %v3038 = vunpack.c.l.b16 %v2690
    %v3039 = vunpack.c.h.b16 %v2690
    %v3040 = vunpack.c.l.b16 %v2691
    %v3041 = vunpack.c.h.b16 %v2691
    %v3042 = vunpack.c.l.b16 %v2692
    %v3043 = vunpack.c.h.b16 %v2692
    %v3044 = vunpack.c.l.b16 %v2693
    %v3045 = vunpack.c.h.b16 %v2693
    %v3046 = vunpack.c.l.b16 %v2694
    %v3047 = vunpack.c.h.b16 %v2694
    %v3048 = vunpack.c.l.b16 %v2695
    %v3049 = vunpack.c.h.b16 %v2695
    %v3050 = vunpack.c.l.b16 %v2696
    %v3051 = vunpack.c.h.b16 %v2696
    %v3052 = vunpack.c.l.b16 %v2697
    %v3053 = vunpack.c.h.b16 %v2697
    %v3054 = vunpack.c.l.b16 %v2698
    %v3055 = vunpack.c.h.b16 %v2698
    %v3056 = vunpack.c.l.b16 %v2699
    %v3057 = vunpack.c.h.b16 %v2699
    %v3058 = vunpack.c.l.b16 %v2700
    %v3059 = vunpack.c.h.b16 %v2700
    %v3060 = vunpack.c.l.b16 %v2701
    %v3061 = vunpack.c.h.b16 %v2701
    %v3062 = vunpack.c.l.b16 %v2702
    %v3063 = vunpack.c.h.b16 %v2702
    %v3064 = vunpack.c.l.b16 %v2703
    %v3065 = vunpack.c.h.b16 %v2703
    %v3066 = vunpack.c.l.b16 %v2704
    %v3067 = vunpack.c.h.b16 %v2704
    %v3068 = vunpack.c.l.b16 %v2705
    %v3069 = vunpack.c.h.b16 %v2705
    %v3070 = vunpack.c.l.b16 %v2706
    %v3071 = vunpack.c.h.b16 %v2706
    %v3072 = vunpack.c.l.b16 %v2707
    %v3073 = vunpack.c.h.b16 %v2707
    %v3074 = vunpack.c.l.b16 %v2708
    %v3075 = vunpack.c.h.b16 %v2708
    %v3076 = vunpack.c.l.b16 %v2709
    %v3077 = vunpack.c.h.b16 %v2709
    %v3078 = vunpack.c.l.b16 %v2710
    %v3079 = vunpack.c.h.b16 %v2710
    %v3080 = vunpack.c.l.b16 %v2711
    %v3081 = vunpack.c.h.b16 %v2711
    %v3082 = vunpack.c.l.b16 %v2712
    %v3083 = vunpack.c.h.b16 %v2712
    %v3084 = vunpack.c.l.b16 %v2713
    %v3085 = vunpack.c.h.b16 %v2713
    %v3086 = vunpack.c.l.b16 %v2714
    %v3087 = vunpack.c.h.b16 %v2714
    %v3088 = vunpack.c.l.b16 %v2715
    %v3089 = vunpack.c.h.b16 %v2715
    %v3090 = vunpack.c.l.b16 %v2716
    %v3091 = vunpack.c.h.b16 %v2716
    %v3092 = vunpack.c.l.b16 %v2717
    %v3093 = vunpack.c.h.b16 %v2717
    %v3094 = vunpack.c.l.b16 %v2718
    %v3095 = vunpack.c.h.b16 %v2718
    %v3096 = vunpack.c.l.b16 %v2719
    %v3097 = vunpack.c.h.b16 %v2719
    %v3098 = vunpack.c.l.b16 %v2720
    %v3099 = vunpack.c.h.b16 %v2720
    %v3100 = vunpack.c.l.b16 %v2721
    %v3101 = vunpack.c.h.b16 %v2721
    %v3102 = vunpack.c.l.b16 %v2722
    %v3103 = vunpack.c.h.b16 %v2722
    %v3104 = vunpack.c.l.b16 %v2723
    %v3105 = vunpack.c.h.b16 %v2723
    %v3106 = vunpack.c.l.b16 %v2724
    %v3107 = vunpack.c.h.b16 %v2724
    %v3108 = vunpack.c.l.b16 %v2725
    %v3109 = vunpack.c.h.b16 %v2725
    %v3110 = vunpack.c.l.b16 %v2726
    %v3111 = vunpack.c.h.b16 %v2726
    %v3112 = vunpack.c.l.b16 %v2727
    %v3113 = vunpack.c.h.b16 %v2727
    %v3114 = vunpack.c.l.b16 %v2728
    %v3115 = vunpack.c.h.b16 %v2728
    %v3116 = vunpack.c.l.b16 %v2729
    %v3117 = vunpack.c.h.b16 %v2729
    %v3118 = vunpack.c.l.b16 %v2730
    %v3119 = vunpack.c.h.b16 %v2730
    %v3120 = vunpack.c.l.b16 %v2731
    %v3121 = vunpack.c.h.b16 %v2731
    %v3122 = vunpack.c.l.b16 %v2732
    %v3123 = vunpack.c.h.b16 %v2732
    %v3124 = vunpack.c.l.b16 %v2733
    %v3125 = vunpack.c.h.b16 %v2733
    %v3126 = vunpack.c.l.b16 %v2734
    %v3127 = vunpack.c.h.b16 %v2734
    %v3128 = vunpack.c.l.b16 %v2735
    %v3129 = vunpack.c.h.b16 %v2735
    %v3130 = vunpack.c.l.b16 %v2736
    %v3131 = vunpack.c.h.b16 %v2736
    %v3132 = vunpack.c.l.b16 %v2737
    %v3133 = vunpack.c.h.b16 %v2737
    %v3134 = vunpack.c.l.b16 %v2738
    %v3135 = vunpack.c.h.b16 %v2738
    %v3136 = vunpack.c.l.b16 %v2739
    %v3137 = vunpack.c.h.b16 %v2739
    %v3138 = vunpack.c.l.b16 %v2740
    %v3139 = vunpack.c.h.b16 %v2740
    %v3140 = vunpack.c.l.b16 %v2741
    %v3141 = vunpack.c.h.b16 %v2741
    %v3142 = vunpack.c.l.b16 %v2742
    %v3143 = vunpack.c.h.b16 %v2742
    %v3144 = vunpack.c.l.b16 %v2743
    %v3145 = vunpack.c.h.b16 %v2743
    %v3146 = vunpack.c.l.b16 %v2744
    %v3147 = vunpack.c.h.b16 %v2744
    %v3148 = vunpack.c.l.b16 %v2745
    %v3149 = vunpack.c.h.b16 %v2745
    %v3150 = vunpack.c.l.b16 %v2746
    %v3151 = vunpack.c.h.b16 %v2746
    %v3152 = vunpack.c.l.b16 %v2747
    %v3153 = vunpack.c.h.b16 %v2747
    %v3154 = vunpack.c.l.b16 %v2748
    %v3155 = vunpack.c.h.b16 %v2748
    %v3156 = vpack.c.b16 %v2904, %v2900
    %v3157 = vpack.c.b16 %v2905, %v2901
    %v3158 = vpack.c.b16 %v2906, %v2902
    %v3159 = vpack.c.b16 %v2907, %v2903
    %v3160 = vpack.c.b16 %v2912, %v2908
    %v3161 = vpack.c.b16 %v2913, %v2909
    %v3162 = vpack.c.b16 %v2914, %v2910
    %v3163 = vpack.c.b16 %v2915, %v2911
    %v3164 = vpack.c.b16 %v2920, %v2916
    %v3165 = vpack.c.b16 %v2921, %v2917
    %v3166 = vpack.c.b16 %v2922, %v2918
    %v3167 = vpack.c.b16 %v2923, %v2919
    %v3168 = vpack.c.b16 %v2928, %v2924
    %v3169 = vpack.c.b16 %v2929, %v2925
    %v3170 = vpack.c.b16 %v2930, %v2926
    %v3171 = vpack.c.b16 %v2931, %v2927
    %v3172 = vpack.c.b16 %v2936, %v2932
    %v3173 = vpack.c.b16 %v2937, %v2933
    %v3174 = vpack.c.b16 %v2938, %v2934
    %v3175 = vpack.c.b16 %v2939, %v2935
    %v3176 = vpack.c.b16 %v2944, %v2940
    %v3177 = vpack.c.b16 %v2945, %v2941
    %v3178 = vpack.c.b16 %v2946, %v2942
    %v3179 = vpack.c.b16 %v2947, %v2943
    %v3180 = vpack.c.b16 %v2952, %v2948
    %v3181 = vpack.c.b16 %v2953, %v2949
    %v3182 = vpack.c.b16 %v2954, %v2950
    %v3183 = vpack.c.b16 %v2955, %v2951
    %v3184 = vpack.c.b16 %v2960, %v2956
    %v3185 = vpack.c.b16 %v2961, %v2957
    %v3186 = vpack.c.b16 %v2962, %v2958
    %v3187 = vpack.c.b16 %v2963, %v2959
    %v3188 = vpack.c.b16 %v2968, %v2964
    %v3189 = vpack.c.b16 %v2969, %v2965
    %v3190 = vpack.c.b16 %v2970, %v2966
    %v3191 = vpack.c.b16 %v2971, %v2967
    %v3192 = vpack.c.b16 %v2976, %v2972
    %v3193 = vpack.c.b16 %v2977, %v2973
    %v3194 = vpack.c.b16 %v2978, %v2974
    %v3195 = vpack.c.b16 %v2979, %v2975
    %v3196 = vpack.c.b16 %v2984, %v2980
    %v3197 = vpack.c.b16 %v2985, %v2981
    %v3198 = vpack.c.b16 %v2986, %v2982
    %v3199 = vpack.c.b16 %v2987, %v2983
    %v3200 = vpack.c.b16 %v2992, %v2988
    %v3201 = vpack.c.b16 %v2993, %v2989
    %v3202 = vpack.c.b16 %v2994, %v2990
    %v3203 = vpack.c.b16 %v2995, %v2991
    %v3204 = vpack.c.b16 %v3000, %v2996
    %v3205 = vpack.c.b16 %v3001, %v2997
    %v3206 = vpack.c.b16 %v3002, %v2998
    %v3207 = vpack.c.b16 %v3003, %v2999
    %v3208 = vpack.c.b16 %v3008, %v3004
    %v3209 = vpack.c.b16 %v3009, %v3005
    %v3210 = vpack.c.b16 %v3010, %v3006
    %v3211 = vpack.c.b16 %v3011, %v3007
    %v3212 = vpack.c.b16 %v3016, %v3012
    %v3213 = vpack.c.b16 %v3017, %v3013
    %v3214 = vpack.c.b16 %v3018, %v3014
    %v3215 = vpack.c.b16 %v3019, %v3015
    %v3216 = vpack.c.b16 %v3024, %v3020
    %v3217 = vpack.c.b16 %v3025, %v3021
    %v3218 = vpack.c.b16 %v3026, %v3022
    %v3219 = vpack.c.b16 %v3027, %v3023
    %v3220 = vpack.c.b16 %v3032, %v3028
    %v3221 = vpack.c.b16 %v3033, %v3029
    %v3222 = vpack.c.b16 %v3034, %v3030
    %v3223 = vpack.c.b16 %v3035, %v3031
    %v3224 = vpack.c.b16 %v3040, %v3036
    %v3225 = vpack.c.b16 %v3041, %v3037
    %v3226 = vpack.c.b16 %v3042, %v3038
    %v3227 = vpack.c.b16 %v3043, %v3039
    %v3228 = vpack.c.b16 %v3048, %v3044
    %v3229 = vpack.c.b16 %v3049, %v3045
    %v3230 = vpack.c.b16 %v3050, %v3046
    %v3231 = vpack.c.b16 %v3051, %v3047
    %v3232 = vpack.c.b16 %v3056, %v3052
    %v3233 = vpack.c.b16 %v3057, %v3053
    %v3234 = vpack.c.b16 %v3058, %v3054
    %v3235 = vpack.c.b16 %v3059, %v3055
    %v3236 = vpack.c.b16 %v3064, %v3060
    %v3237 = vpack.c.b16 %v3065, %v3061
    %v3238 = vpack.c.b16 %v3066, %v3062
    %v3239 = vpack.c.b16 %v3067, %v3063
    %v3240 = vpack.c.b16 %v3072, %v3068
    %v3241 = vpack.c.b16 %v3073, %v3069
    %v3242 = vpack.c.b16 %v3074, %v3070
    %v3243 = vpack.c.b16 %v3075, %v3071
    %v3244 = vpack.c.b16 %v3080, %v3076
    %v3245 = vpack.c.b16 %v3081, %v3077
    %v3246 = vpack.c.b16 %v3082, %v3078
    %v3247 = vpack.c.b16 %v3083, %v3079
    %v3248 = vpack.c.b16 %v3088, %v3084
    %v3249 = vpack.c.b16 %v3089, %v3085
    %v3250 = vpack.c.b16 %v3090, %v3086
    %v3251 = vpack.c.b16 %v3091, %v3087
    %v3252 = vpack.c.b16 %v3096, %v3092
    %v3253 = vpack.c.b16 %v3097, %v3093
    %v3254 = vpack.c.b16 %v3098, %v3094
    %v3255 = vpack.c.b16 %v3099, %v3095
    %v3256 = vpack.c.b16 %v3104, %v3100
    %v3257 = vpack.c.b16 %v3105, %v3101
    %v3258 = vpack.c.b16 %v3106, %v3102
    %v3259 = vpack.c.b16 %v3107, %v3103
    %v3260 = vpack.c.b16 %v3112, %v3108
    %v3261 = vpack.c.b16 %v3113, %v3109
    %v3262 = vpack.c.b16 %v3114, %v3110
    %v3263 = vpack.c.b16 %v3115, %v3111
    %v3264 = vpack.c.b16 %v3120, %v3116
    %v3265 = vpack.c.b16 %v3121, %v3117
    %v3266 = vpack.c.b16 %v3122, %v3118
    %v3267 = vpack.c.b16 %v3123, %v3119
    %v3268 = vpack.c.b16 %v3128, %v3124
    %v3269 = vpack.c.b16 %v3129, %v3125
    %v3270 = vpack.c.b16 %v3130, %v3126
    %v3271 = vpack.c.b16 %v3131, %v3127
    %v3272 = vpack.c.b16 %v3136, %v3132
    %v3273 = vpack.c.b16 %v3137, %v3133
    %v3274 = vpack.c.b16 %v3138, %v3134
    %v3275 = vpack.c.b16 %v3139, %v3135
    %v3276 = vpack.c.b16 %v3144, %v3140
    %v3277 = vpack.c.b16 %v3145, %v3141
    %v3278 = vpack.c.b16 %v3146, %v3142
    %v3279 = vpack.c.b16 %v3147, %v3143
    %v3280 = vpack.c.b16 %v3152, %v3148
    %v3281 = vpack.c.b16 %v3153, %v3149
    %v3282 = vpack.c.b16 %v3154, %v3150
    %v3283 = vpack.c.b16 %v3155, %v3151
    %3412 = vmatprep.subr.bf16.mxu0 %v3157
    %3413 = vmatpush1.bf16.msra.mxu0 %v3156
    %3414 = vmatprep.subr.bf16.mxu0 %v3161
    %3415 = vmatpush1.bf16.msra.mxu0 %v3160
    %3416 = vmatprep.subr.bf16.mxu0 %v3165
    %3417 = vmatpush1.bf16.msra.mxu0 %v3164
    %3418 = vmatprep.subr.bf16.mxu0 %v3169
    %3419 = vmatpush1.bf16.msra.mxu0 %v3168
    %3420 = vmatprep.subr.bf16.mxu0 %v3173
    %3421 = vmatpush1.bf16.msra.mxu0 %v3172
    %3422 = vmatprep.subr.bf16.mxu0 %v3177
    %3423 = vmatpush1.bf16.msra.mxu0 %v3176
    %3424 = vmatprep.subr.bf16.mxu0 %v3181
    %3425 = vmatpush1.bf16.msra.mxu0 %v3180
    %3426 = vmatprep.subr.bf16.mxu0 %v3185
    %3427 = vmatpush1.bf16.msra.mxu0 %v3184
    %3428 = vmatprep.subr.bf16.mxu0 %v3189
    %3429 = vmatpush1.bf16.msra.mxu0 %v3188
    %3430 = vmatprep.subr.bf16.mxu0 %v3193
    %3431 = vmatpush1.bf16.msra.mxu0 %v3192
    %3432 = vmatprep.subr.bf16.mxu0 %v3197
    %3433 = vmatpush1.bf16.msra.mxu0 %v3196
    %3434 = vmatprep.subr.bf16.mxu0 %v3201
    %3435 = vmatpush1.bf16.msra.mxu0 %v3200
    %3436 = vmatprep.subr.bf16.mxu0 %v3205
    %3437 = vmatpush1.bf16.msra.mxu0 %v3204
    %3438 = vmatprep.subr.bf16.mxu0 %v3209
    %3439 = vmatpush1.bf16.msra.mxu0 %v3208
    %3440 = vmatprep.subr.bf16.mxu0 %v3213
    %3441 = vmatpush1.bf16.msra.mxu0 %v3212
    %3442 = vmatprep.subr.bf16.mxu0 %v3217
    %3443 = vmatpush1.bf16.msra.mxu0 %v3216
    %3444 = vmatprep.mubr.bf16.mxu0 %v2617
    %3445 = vmatmul.mubr.bf16.gmra.mrb[0].mxu0 %v2616
    %v3446 = vpop.f32.mrb[0].mxu0
    %v3447 = vadd.f32 %v2755, %v3446
    %v3448 = vpop.f32.mrb[0].mxu0
    %v3449 = vadd.f32 %v2759, %v3448
    %v3450 = vpop.f32.mrb[0].mxu0
    %v3451 = vpop.f32.mrb[0].mxu0
    %3452 = vdwg.mxu0
    %3453 = vmatprep.subr.bf16.mxu0 %v3221
    %3454 = vmatpush1.bf16.msra.mxu0 %v3220
    %3455 = vmatprep.subr.bf16.mxu0 %v3225
    %3456 = vmatpush1.bf16.msra.mxu0 %v3224
    %3457 = vmatprep.subr.bf16.mxu0 %v3229
    %3458 = vmatpush1.bf16.msra.mxu0 %v3228
    %3459 = vmatprep.subr.bf16.mxu0 %v3233
    %3460 = vmatpush1.bf16.msra.mxu0 %v3232
    %3461 = vmatprep.subr.bf16.mxu0 %v3237
    %3462 = vmatpush1.bf16.msra.mxu0 %v3236
    %3463 = vmatprep.subr.bf16.mxu0 %v3241
    %3464 = vmatpush1.bf16.msra.mxu0 %v3240
    %3465 = vmatprep.subr.bf16.mxu0 %v3245
    %3466 = vmatpush1.bf16.msra.mxu0 %v3244
    %3467 = vmatprep.subr.bf16.mxu0 %v3249
    %3468 = vmatpush1.bf16.msra.mxu0 %v3248
    %3469 = vmatprep.subr.bf16.mxu0 %v3253
    %3470 = vmatpush1.bf16.msra.mxu0 %v3252
    %3471 = vmatprep.subr.bf16.mxu0 %v3257
    %3472 = vmatpush1.bf16.msra.mxu0 %v3256
    %3473 = vmatprep.subr.bf16.mxu0 %v3261
    %3474 = vmatpush1.bf16.msra.mxu0 %v3260
    %3475 = vmatprep.subr.bf16.mxu0 %v3265
    %3476 = vmatpush1.bf16.msra.mxu0 %v3264
    %3477 = vmatprep.subr.bf16.mxu0 %v3269
    %3478 = vmatpush1.bf16.msra.mxu0 %v3268
    %3479 = vmatprep.subr.bf16.mxu0 %v3273
    %3480 = vmatpush1.bf16.msra.mxu0 %v3272
    %3481 = vmatprep.subr.bf16.mxu0 %v3277
    %3482 = vmatpush1.bf16.msra.mxu0 %v3276
    %3483 = vmatprep.subr.bf16.mxu0 %v3281
    %3484 = vmatpush1.bf16.msra.mxu0 %v3280
    %3485 = vmatprep.mubr.bf16.mxu0 %v2619
    %3486 = vmatmul.mubr.bf16.gmra.mrb[0].mxu0 %v2618
    %v3487 = vpop.f32.mrb[0].mxu0
    %v3488 = vadd.f32 %v3447, %v3487
    %v3489 = vpop.f32.mrb[0].mxu0
    %v3490 = vadd.f32 %v3449, %v3489
    %v3491 = vpop.f32.mrb[0].mxu0
    %v3492 = vpop.f32.mrb[0].mxu0
    %3493 = vdwg.mxu0
    %3494 = vmatprep.subr.bf16.mxu0 %v3159
    %3495 = vmatpush1.bf16.msra.mxu0 %v3158
    %3496 = vmatprep.subr.bf16.mxu0 %v3163
    %3497 = vmatpush1.bf16.msra.mxu0 %v3162
    %3498 = vmatprep.subr.bf16.mxu0 %v3167
    %3499 = vmatpush1.bf16.msra.mxu0 %v3166
    %3500 = vmatprep.subr.bf16.mxu0 %v3171
    %3501 = vmatpush1.bf16.msra.mxu0 %v3170
    %3502 = vmatprep.subr.bf16.mxu0 %v3175
    %3503 = vmatpush1.bf16.msra.mxu0 %v3174
    %3504 = vmatprep.subr.bf16.mxu0 %v3179
    %3505 = vmatpush1.bf16.msra.mxu0 %v3178
    %3506 = vmatprep.subr.bf16.mxu0 %v3183
    %3507 = vmatpush1.bf16.msra.mxu0 %v3182
    %3508 = vmatprep.subr.bf16.mxu0 %v3187
    %3509 = vmatpush1.bf16.msra.mxu0 %v3186
    %3510 = vmatprep.subr.bf16.mxu0 %v3191
    %3511 = vmatpush1.bf16.msra.mxu0 %v3190
    %3512 = vmatprep.subr.bf16.mxu0 %v3195
    %3513 = vmatpush1.bf16.msra.mxu0 %v3194
    %3514 = vmatprep.subr.bf16.mxu0 %v3199
    %3515 = vmatpush1.bf16.msra.mxu0 %v3198
    %3516 = vmatprep.subr.bf16.mxu0 %v3203
    %3517 = vmatpush1.bf16.msra.mxu0 %v3202
    %3518 = vmatprep.subr.bf16.mxu0 %v3207
    %3519 = vmatpush1.bf16.msra.mxu0 %v3206
    %3520 = vmatprep.subr.bf16.mxu0 %v3211
    %3521 = vmatpush1.bf16.msra.mxu0 %v3210
    %3522 = vmatprep.subr.bf16.mxu0 %v3215
    %3523 = vmatpush1.bf16.msra.mxu0 %v3214
    %3524 = vmatprep.subr.bf16.mxu0 %v3219
    %3525 = vmatpush1.bf16.msra.mxu0 %v3218
    %3526 = vmatprep.mubr.bf16.mxu0 %v2617
    %3527 = vmatmul.mubr.bf16.gmra.mrb[0].mxu0 %v2616
    %v3528 = vpop.f32.mrb[0].mxu0
    %v3529 = vadd.f32 %v2763, %v3528
    %v3530 = vpop.f32.mrb[0].mxu0
    %v3531 = vadd.f32 %v2767, %v3530
    %v3532 = vpop.f32.mrb[0].mxu0
    %v3533 = vpop.f32.mrb[0].mxu0
    %3534 = vdwg.mxu0
    %3535 = vmatprep.subr.bf16.mxu0 %v3223
    %3536 = vmatpush1.bf16.msra.mxu0 %v3222
    %3537 = vmatprep.subr.bf16.mxu0 %v3227
    %3538 = vmatpush1.bf16.msra.mxu0 %v3226
    %3539 = vmatprep.subr.bf16.mxu0 %v3231
    %3540 = vmatpush1.bf16.msra.mxu0 %v3230
    %3541 = vmatprep.subr.bf16.mxu0 %v3235
    %3542 = vmatpush1.bf16.msra.mxu0 %v3234
    %3543 = vmatprep.subr.bf16.mxu0 %v3239
    %3544 = vmatpush1.bf16.msra.mxu0 %v3238
    %3545 = vmatprep.subr.bf16.mxu0 %v3243
    %3546 = vmatpush1.bf16.msra.mxu0 %v3242
    %3547 = vmatprep.subr.bf16.mxu0 %v3247
    %3548 = vmatpush1.bf16.msra.mxu0 %v3246
    %3549 = vmatprep.subr.bf16.mxu0 %v3251
    %3550 = vmatpush1.bf16.msra.mxu0 %v3250
    %3551 = vmatprep.subr.bf16.mxu0 %v3255
    %3552 = vmatpush1.bf16.msra.mxu0 %v3254
    %3553 = vmatprep.subr.bf16.mxu0 %v3259
    %3554 = vmatpush1.bf16.msra.mxu0 %v3258
    %3555 = vmatprep.subr.bf16.mxu0 %v3263
    %3556 = vmatpush1.bf16.msra.mxu0 %v3262
    %3557 = vmatprep.subr.bf16.mxu0 %v3267
    %3558 = vmatpush1.bf16.msra.mxu0 %v3266
    %3559 = vmatprep.subr.bf16.mxu0 %v3271
    %3560 = vmatpush1.bf16.msra.mxu0 %v3270
    %3561 = vmatprep.subr.bf16.mxu0 %v3275
    %3562 = vmatpush1.bf16.msra.mxu0 %v3274
    %3563 = vmatprep.subr.bf16.mxu0 %v3279
    %3564 = vmatpush1.bf16.msra.mxu0 %v3278
    %3565 = vmatprep.subr.bf16.mxu0 %v3283
    %3566 = vmatpush1.bf16.msra.mxu0 %v3282
    %3567 = vmatprep.mubr.bf16.mxu0 %v2619
    %3568 = vmatmul.mubr.bf16.gmra.mrb[0].mxu0 %v2618
    %v3569 = vpop.f32.mrb[0].mxu0
    %v3570 = vadd.f32 %v3529, %v3569
    %v3571 = vpop.f32.mrb[0].mxu0
    %v3572 = vadd.f32 %v3531, %v3571
    %v3573 = vpop.f32.mrb[0].mxu0
    %v3574 = vpop.f32.mrb[0].mxu0
    %3575 = vdwg.mxu0
    %vm3576 = vcmp.ge.f32.partialorder %v3488, 0.0
    %vm3577 = vcmp.ge.f32.partialorder %v3490, 0.0
    %vm3578 = vcmp.ge.f32.partialorder %v3570, 0.0
    %vm3579 = vcmp.ge.f32.partialorder %v3572, 0.0
    %v3580 = vmul.f32 %v3488, 0.2
    %v3581 = vmul.f32 %v3490, 0.2
    %v3582 = vmul.f32 %v3570, 0.2
    %v3583 = vmul.f32 %v3572, 0.2
    %v3584 = vsel %vm3576, %v3488, %v3580
    %v3585 = vsel %vm3577, %v3490, %v3581
    %v3586 = vsel %vm3578, %v3570, %v3582
    %v3587 = vsel %vm3579, %v3572, %v3583
    %v3588 = vpack.c.bf16 %v3584, %v3584
    %v3589 = vpack.c.bf16 %v3585, %v3585
    %v3590 = vpack.c.bf16 %v3586, %v3586
    %v3591 = vpack.c.bf16 %v3587, %v3587
    %s3592 = scalar_lea.vmem [#allocation4], 3072
    %v3593 = vld [vmem:[%s3592] sm:$0xff]
    %v3594 = vld [vmem:[%s3592 + $0x8] sm:$0xff]
    %v3595 = vld [vmem:[%s3592 + $0x10] sm:$0xff]
    %v3596 = vld [vmem:[%s3592 + $0x18] sm:$0xff]
    %v3597 = vld [vmem:[%s3592 + $0x20] sm:$0xff]
    %v3598 = vld [vmem:[%s3592 + $0x28] sm:$0xff]
    %v3599 = vld [vmem:[%s3592 + $0x30] sm:$0xff]
    %v3600 = vld [vmem:[%s3592 + $0x38] sm:$0xff]
    %v3601 = vld [vmem:[%s3592 + $0x40] sm:$0xff]
    %v3602 = vld [vmem:[%s3592 + $0x48] sm:$0xff]
    %v3603 = vld [vmem:[%s3592 + $0x50] sm:$0xff]
    %v3604 = vld [vmem:[%s3592 + $0x58] sm:$0xff]
    %v3605 = vld [vmem:[%s3592 + $0x60] sm:$0xff]
    %v3606 = vld [vmem:[%s3592 + $0x68] sm:$0xff]
    %v3607 = vld [vmem:[%s3592 + $0x70] sm:$0xff]
    %v3608 = vld [vmem:[%s3592 + $0x78] sm:$0xff]
    %v3609 = vld [vmem:[%s3592 + $0x80] sm:$0xff]
    %v3610 = vld [vmem:[%s3592 + $0x88] sm:$0xff]
    %v3611 = vld [vmem:[%s3592 + $0x90] sm:$0xff]
    %v3612 = vld [vmem:[%s3592 + $0x98] sm:$0xff]
    %v3613 = vld [vmem:[%s3592 + $0xa0] sm:$0xff]
    %v3614 = vld [vmem:[%s3592 + $0xa8] sm:$0xff]
    %v3615 = vld [vmem:[%s3592 + $0xb0] sm:$0xff]
    %v3616 = vld [vmem:[%s3592 + $0xb8] sm:$0xff]
    %v3617 = vld [vmem:[%s3592 + $0xc0] sm:$0xff]
    %v3618 = vld [vmem:[%s3592 + $0xc8] sm:$0xff]
    %v3619 = vld [vmem:[%s3592 + $0xd0] sm:$0xff]
    %v3620 = vld [vmem:[%s3592 + $0xd8] sm:$0xff]
    %v3621 = vld [vmem:[%s3592 + $0xe0] sm:$0xff]
    %v3622 = vld [vmem:[%s3592 + $0xe8] sm:$0xff]
    %v3623 = vld [vmem:[%s3592 + $0xf0] sm:$0xff]
    %v3624 = vld [vmem:[%s3592 + $0xf8] sm:$0xff]
    %v3625 = vld [vmem:[%s3592 + $0x100] sm:$0xff]
    %v3626 = vld [vmem:[%s3592 + $0x108] sm:$0xff]
    %v3627 = vld [vmem:[%s3592 + $0x110] sm:$0xff]
    %v3628 = vld [vmem:[%s3592 + $0x118] sm:$0xff]
    %v3629 = vld [vmem:[%s3592 + $0x120] sm:$0xff]
    %v3630 = vld [vmem:[%s3592 + $0x128] sm:$0xff]
    %v3631 = vld [vmem:[%s3592 + $0x130] sm:$0xff]
    %v3632 = vld [vmem:[%s3592 + $0x138] sm:$0xff]
    %v3633 = vld [vmem:[%s3592 + $0x140] sm:$0xff]
    %v3634 = vld [vmem:[%s3592 + $0x148] sm:$0xff]
    %v3635 = vld [vmem:[%s3592 + $0x150] sm:$0xff]
    %v3636 = vld [vmem:[%s3592 + $0x158] sm:$0xff]
    %v3637 = vld [vmem:[%s3592 + $0x160] sm:$0xff]
    %v3638 = vld [vmem:[%s3592 + $0x168] sm:$0xff]
    %v3639 = vld [vmem:[%s3592 + $0x170] sm:$0xff]
    %v3640 = vld [vmem:[%s3592 + $0x178] sm:$0xff]
    %v3641 = vld [vmem:[%s3592 + $0x180] sm:$0xff]
    %v3642 = vld [vmem:[%s3592 + $0x188] sm:$0xff]
    %v3643 = vld [vmem:[%s3592 + $0x190] sm:$0xff]
    %v3644 = vld [vmem:[%s3592 + $0x198] sm:$0xff]
    %v3645 = vld [vmem:[%s3592 + $0x1a0] sm:$0xff]
    %v3646 = vld [vmem:[%s3592 + $0x1a8] sm:$0xff]
    %v3647 = vld [vmem:[%s3592 + $0x1b0] sm:$0xff]
    %v3648 = vld [vmem:[%s3592 + $0x1b8] sm:$0xff]
    %v3649 = vld [vmem:[%s3592 + $0x1c0] sm:$0xff]
    %v3650 = vld [vmem:[%s3592 + $0x1c8] sm:$0xff]
    %v3651 = vld [vmem:[%s3592 + $0x1d0] sm:$0xff]
    %v3652 = vld [vmem:[%s3592 + $0x1d8] sm:$0xff]
    %v3653 = vld [vmem:[%s3592 + $0x1e0] sm:$0xff]
    %v3654 = vld [vmem:[%s3592 + $0x1e8] sm:$0xff]
    %v3655 = vld [vmem:[%s3592 + $0x1f0] sm:$0xff]
    %v3656 = vld [vmem:[%s3592 + $0x1f8] sm:$0xff]
    %v3657 = vld [vmem:[%s3592 + $0x200] sm:$0xff]
    %v3658 = vld [vmem:[%s3592 + $0x208] sm:$0xff]
    %v3659 = vld [vmem:[%s3592 + $0x210] sm:$0xff]
    %v3660 = vld [vmem:[%s3592 + $0x218] sm:$0xff]
    %v3661 = vld [vmem:[%s3592 + $0x220] sm:$0xff]
    %v3662 = vld [vmem:[%s3592 + $0x228] sm:$0xff]
    %v3663 = vld [vmem:[%s3592 + $0x230] sm:$0xff]
    %v3664 = vld [vmem:[%s3592 + $0x238] sm:$0xff]
    %v3665 = vld [vmem:[%s3592 + $0x240] sm:$0xff]
    %v3666 = vld [vmem:[%s3592 + $0x248] sm:$0xff]
    %v3667 = vld [vmem:[%s3592 + $0x250] sm:$0xff]
    %v3668 = vld [vmem:[%s3592 + $0x258] sm:$0xff]
    %v3669 = vld [vmem:[%s3592 + $0x260] sm:$0xff]
    %v3670 = vld [vmem:[%s3592 + $0x268] sm:$0xff]
    %v3671 = vld [vmem:[%s3592 + $0x270] sm:$0xff]
    %v3672 = vld [vmem:[%s3592 + $0x278] sm:$0xff]
    %v3673 = vld [vmem:[%s3592 + $0x280] sm:$0xff]
    %v3674 = vld [vmem:[%s3592 + $0x288] sm:$0xff]
    %v3675 = vld [vmem:[%s3592 + $0x290] sm:$0xff]
    %v3676 = vld [vmem:[%s3592 + $0x298] sm:$0xff]
    %v3677 = vld [vmem:[%s3592 + $0x2a0] sm:$0xff]
    %v3678 = vld [vmem:[%s3592 + $0x2a8] sm:$0xff]
    %v3679 = vld [vmem:[%s3592 + $0x2b0] sm:$0xff]
    %v3680 = vld [vmem:[%s3592 + $0x2b8] sm:$0xff]
    %v3681 = vld [vmem:[%s3592 + $0x2c0] sm:$0xff]
    %v3682 = vld [vmem:[%s3592 + $0x2c8] sm:$0xff]
    %v3683 = vld [vmem:[%s3592 + $0x2d0] sm:$0xff]
    %v3684 = vld [vmem:[%s3592 + $0x2d8] sm:$0xff]
    %v3685 = vld [vmem:[%s3592 + $0x2e0] sm:$0xff]
    %v3686 = vld [vmem:[%s3592 + $0x2e8] sm:$0xff]
    %v3687 = vld [vmem:[%s3592 + $0x2f0] sm:$0xff]
    %v3688 = vld [vmem:[%s3592 + $0x2f8] sm:$0xff]
    %v3689 = vld [vmem:[%s3592 + $0x300] sm:$0xff]
    %v3690 = vld [vmem:[%s3592 + $0x308] sm:$0xff]
    %v3691 = vld [vmem:[%s3592 + $0x310] sm:$0xff]
    %v3692 = vld [vmem:[%s3592 + $0x318] sm:$0xff]
    %v3693 = vld [vmem:[%s3592 + $0x320] sm:$0xff]
    %v3694 = vld [vmem:[%s3592 + $0x328] sm:$0xff]
    %v3695 = vld [vmem:[%s3592 + $0x330] sm:$0xff]
    %v3696 = vld [vmem:[%s3592 + $0x338] sm:$0xff]
    %v3697 = vld [vmem:[%s3592 + $0x340] sm:$0xff]
    %v3698 = vld [vmem:[%s3592 + $0x348] sm:$0xff]
    %v3699 = vld [vmem:[%s3592 + $0x350] sm:$0xff]
    %v3700 = vld [vmem:[%s3592 + $0x358] sm:$0xff]
    %v3701 = vld [vmem:[%s3592 + $0x360] sm:$0xff]
    %v3702 = vld [vmem:[%s3592 + $0x368] sm:$0xff]
    %v3703 = vld [vmem:[%s3592 + $0x370] sm:$0xff]
    %v3704 = vld [vmem:[%s3592 + $0x378] sm:$0xff]
    %v3705 = vld [vmem:[%s3592 + $0x380] sm:$0xff]
    %v3706 = vld [vmem:[%s3592 + $0x388] sm:$0xff]
    %v3707 = vld [vmem:[%s3592 + $0x390] sm:$0xff]
    %v3708 = vld [vmem:[%s3592 + $0x398] sm:$0xff]
    %v3709 = vld [vmem:[%s3592 + $0x3a0] sm:$0xff]
    %v3710 = vld [vmem:[%s3592 + $0x3a8] sm:$0xff]
    %v3711 = vld [vmem:[%s3592 + $0x3b0] sm:$0xff]
    %v3712 = vld [vmem:[%s3592 + $0x3b8] sm:$0xff]
    %v3713 = vld [vmem:[%s3592 + $0x3c0] sm:$0xff]
    %v3714 = vld [vmem:[%s3592 + $0x3c8] sm:$0xff]
    %v3715 = vld [vmem:[%s3592 + $0x3d0] sm:$0xff]
    %v3716 = vld [vmem:[%s3592 + $0x3d8] sm:$0xff]
    %v3717 = vld [vmem:[%s3592 + $0x3e0] sm:$0xff]
    %v3718 = vld [vmem:[%s3592 + $0x3e8] sm:$0xff]
    %v3719 = vld [vmem:[%s3592 + $0x3f0] sm:$0xff]
    %v3720 = vld [vmem:[%s3592 + $0x3f8] sm:$0xff]
    %s3721 = scalar_lea.vmem [#allocation6], 12
    %v3722 = vld [vmem:[%s3721] sm:$0xf]
    %v3724 = vlaneseq
    %v3725 = vshrl.u32 %v3724, 7
    %v3726 = vsub.s32 0, %v3725
    %v3727 = vrot.slane %v3722, %v3726
    %v3728 = vlaneseq
    %v3729 = vshrl.u32 %v3728, 7
    %v3730 = vsub.s32 1, %v3729
    %v3731 = vrot.slane %v3722, %v3730
    %v3732 = vlaneseq
    %v3733 = vshrl.u32 %v3732, 7
    %v3734 = vsub.s32 2, %v3733
    %v3735 = vrot.slane %v3722, %v3734
    %v3736 = vlaneseq
    %v3737 = vshrl.u32 %v3736, 7
    %v3738 = vsub.s32 3, %v3737
    %v3739 = vrot.slane %v3722, %v3738
    %v3872 = vunpack.c.l.b16 %v3593
    %v3873 = vunpack.c.h.b16 %v3593
    %v3874 = vunpack.c.l.b16 %v3594
    %v3875 = vunpack.c.h.b16 %v3594
    %v3876 = vunpack.c.l.b16 %v3595
    %v3877 = vunpack.c.h.b16 %v3595
    %v3878 = vunpack.c.l.b16 %v3596
    %v3879 = vunpack.c.h.b16 %v3596
    %v3880 = vunpack.c.l.b16 %v3597
    %v3881 = vunpack.c.h.b16 %v3597
    %v3882 = vunpack.c.l.b16 %v3598
    %v3883 = vunpack.c.h.b16 %v3598
    %v3884 = vunpack.c.l.b16 %v3599
    %v3885 = vunpack.c.h.b16 %v3599
    %v3886 = vunpack.c.l.b16 %v3600
    %v3887 = vunpack.c.h.b16 %v3600
    %v3888 = vunpack.c.l.b16 %v3601
    %v3889 = vunpack.c.h.b16 %v3601
    %v3890 = vunpack.c.l.b16 %v3602
    %v3891 = vunpack.c.h.b16 %v3602
    %v3892 = vunpack.c.l.b16 %v3603
    %v3893 = vunpack.c.h.b16 %v3603
    %v3894 = vunpack.c.l.b16 %v3604
    %v3895 = vunpack.c.h.b16 %v3604
    %v3896 = vunpack.c.l.b16 %v3605
    %v3897 = vunpack.c.h.b16 %v3605
    %v3898 = vunpack.c.l.b16 %v3606
    %v3899 = vunpack.c.h.b16 %v3606
    %v3900 = vunpack.c.l.b16 %v3607
    %v3901 = vunpack.c.h.b16 %v3607
    %v3902 = vunpack.c.l.b16 %v3608
    %v3903 = vunpack.c.h.b16 %v3608
    %v3904 = vunpack.c.l.b16 %v3609
    %v3905 = vunpack.c.h.b16 %v3609
    %v3906 = vunpack.c.l.b16 %v3610
    %v3907 = vunpack.c.h.b16 %v3610
    %v3908 = vunpack.c.l.b16 %v3611
    %v3909 = vunpack.c.h.b16 %v3611
    %v3910 = vunpack.c.l.b16 %v3612
    %v3911 = vunpack.c.h.b16 %v3612
    %v3912 = vunpack.c.l.b16 %v3613
    %v3913 = vunpack.c.h.b16 %v3613
    %v3914 = vunpack.c.l.b16 %v3614
    %v3915 = vunpack.c.h.b16 %v3614
    %v3916 = vunpack.c.l.b16 %v3615
    %v3917 = vunpack.c.h.b16 %v3615
    %v3918 = vunpack.c.l.b16 %v3616
    %v3919 = vunpack.c.h.b16 %v3616
    %v3920 = vunpack.c.l.b16 %v3617
    %v3921 = vunpack.c.h.b16 %v3617
    %v3922 = vunpack.c.l.b16 %v3618
    %v3923 = vunpack.c.h.b16 %v3618
    %v3924 = vunpack.c.l.b16 %v3619
    %v3925 = vunpack.c.h.b16 %v3619
    %v3926 = vunpack.c.l.b16 %v3620
    %v3927 = vunpack.c.h.b16 %v3620
    %v3928 = vunpack.c.l.b16 %v3621
    %v3929 = vunpack.c.h.b16 %v3621
    %v3930 = vunpack.c.l.b16 %v3622
    %v3931 = vunpack.c.h.b16 %v3622
    %v3932 = vunpack.c.l.b16 %v3623
    %v3933 = vunpack.c.h.b16 %v3623
    %v3934 = vunpack.c.l.b16 %v3624
    %v3935 = vunpack.c.h.b16 %v3624
    %v3936 = vunpack.c.l.b16 %v3625
    %v3937 = vunpack.c.h.b16 %v3625
    %v3938 = vunpack.c.l.b16 %v3626
    %v3939 = vunpack.c.h.b16 %v3626
    %v3940 = vunpack.c.l.b16 %v3627
    %v3941 = vunpack.c.h.b16 %v3627
    %v3942 = vunpack.c.l.b16 %v3628
    %v3943 = vunpack.c.h.b16 %v3628
    %v3944 = vunpack.c.l.b16 %v3629
    %v3945 = vunpack.c.h.b16 %v3629
    %v3946 = vunpack.c.l.b16 %v3630
    %v3947 = vunpack.c.h.b16 %v3630
    %v3948 = vunpack.c.l.b16 %v3631
    %v3949 = vunpack.c.h.b16 %v3631
    %v3950 = vunpack.c.l.b16 %v3632
    %v3951 = vunpack.c.h.b16 %v3632
    %v3952 = vunpack.c.l.b16 %v3633
    %v3953 = vunpack.c.h.b16 %v3633
    %v3954 = vunpack.c.l.b16 %v3634
    %v3955 = vunpack.c.h.b16 %v3634
    %v3956 = vunpack.c.l.b16 %v3635
    %v3957 = vunpack.c.h.b16 %v3635
    %v3958 = vunpack.c.l.b16 %v3636
    %v3959 = vunpack.c.h.b16 %v3636
    %v3960 = vunpack.c.l.b16 %v3637
    %v3961 = vunpack.c.h.b16 %v3637
    %v3962 = vunpack.c.l.b16 %v3638
    %v3963 = vunpack.c.h.b16 %v3638
    %v3964 = vunpack.c.l.b16 %v3639
    %v3965 = vunpack.c.h.b16 %v3639
    %v3966 = vunpack.c.l.b16 %v3640
    %v3967 = vunpack.c.h.b16 %v3640
    %v3968 = vunpack.c.l.b16 %v3641
    %v3969 = vunpack.c.h.b16 %v3641
    %v3970 = vunpack.c.l.b16 %v3642
    %v3971 = vunpack.c.h.b16 %v3642
    %v3972 = vunpack.c.l.b16 %v3643
    %v3973 = vunpack.c.h.b16 %v3643
    %v3974 = vunpack.c.l.b16 %v3644
    %v3975 = vunpack.c.h.b16 %v3644
    %v3976 = vunpack.c.l.b16 %v3645
    %v3977 = vunpack.c.h.b16 %v3645
    %v3978 = vunpack.c.l.b16 %v3646
    %v3979 = vunpack.c.h.b16 %v3646
    %v3980 = vunpack.c.l.b16 %v3647
    %v3981 = vunpack.c.h.b16 %v3647
    %v3982 = vunpack.c.l.b16 %v3648
    %v3983 = vunpack.c.h.b16 %v3648
    %v3984 = vunpack.c.l.b16 %v3649
    %v3985 = vunpack.c.h.b16 %v3649
    %v3986 = vunpack.c.l.b16 %v3650
    %v3987 = vunpack.c.h.b16 %v3650
    %v3988 = vunpack.c.l.b16 %v3651
    %v3989 = vunpack.c.h.b16 %v3651
    %v3990 = vunpack.c.l.b16 %v3652
    %v3991 = vunpack.c.h.b16 %v3652
    %v3992 = vunpack.c.l.b16 %v3653
    %v3993 = vunpack.c.h.b16 %v3653
    %v3994 = vunpack.c.l.b16 %v3654
    %v3995 = vunpack.c.h.b16 %v3654
    %v3996 = vunpack.c.l.b16 %v3655
    %v3997 = vunpack.c.h.b16 %v3655
    %v3998 = vunpack.c.l.b16 %v3656
    %v3999 = vunpack.c.h.b16 %v3656
    %v4000 = vunpack.c.l.b16 %v3657
    %v4001 = vunpack.c.h.b16 %v3657
    %v4002 = vunpack.c.l.b16 %v3658
    %v4003 = vunpack.c.h.b16 %v3658
    %v4004 = vunpack.c.l.b16 %v3659
    %v4005 = vunpack.c.h.b16 %v3659
    %v4006 = vunpack.c.l.b16 %v3660
    %v4007 = vunpack.c.h.b16 %v3660
    %v4008 = vunpack.c.l.b16 %v3661
    %v4009 = vunpack.c.h.b16 %v3661
    %v4010 = vunpack.c.l.b16 %v3662
    %v4011 = vunpack.c.h.b16 %v3662
    %v4012 = vunpack.c.l.b16 %v3663
    %v4013 = vunpack.c.h.b16 %v3663
    %v4014 = vunpack.c.l.b16 %v3664
    %v4015 = vunpack.c.h.b16 %v3664
    %v4016 = vunpack.c.l.b16 %v3665
    %v4017 = vunpack.c.h.b16 %v3665
    %v4018 = vunpack.c.l.b16 %v3666
    %v4019 = vunpack.c.h.b16 %v3666
    %v4020 = vunpack.c.l.b16 %v3667
    %v4021 = vunpack.c.h.b16 %v3667
    %v4022 = vunpack.c.l.b16 %v3668
    %v4023 = vunpack.c.h.b16 %v3668
    %v4024 = vunpack.c.l.b16 %v3669
    %v4025 = vunpack.c.h.b16 %v3669
    %v4026 = vunpack.c.l.b16 %v3670
    %v4027 = vunpack.c.h.b16 %v3670
    %v4028 = vunpack.c.l.b16 %v3671
    %v4029 = vunpack.c.h.b16 %v3671
    %v4030 = vunpack.c.l.b16 %v3672
    %v4031 = vunpack.c.h.b16 %v3672
    %v4032 = vunpack.c.l.b16 %v3673
    %v4033 = vunpack.c.h.b16 %v3673
    %v4034 = vunpack.c.l.b16 %v3674
    %v4035 = vunpack.c.h.b16 %v3674
    %v4036 = vunpack.c.l.b16 %v3675
    %v4037 = vunpack.c.h.b16 %v3675
    %v4038 = vunpack.c.l.b16 %v3676
    %v4039 = vunpack.c.h.b16 %v3676
    %v4040 = vunpack.c.l.b16 %v3677
    %v4041 = vunpack.c.h.b16 %v3677
    %v4042 = vunpack.c.l.b16 %v3678
    %v4043 = vunpack.c.h.b16 %v3678
    %v4044 = vunpack.c.l.b16 %v3679
    %v4045 = vunpack.c.h.b16 %v3679
    %v4046 = vunpack.c.l.b16 %v3680
    %v4047 = vunpack.c.h.b16 %v3680
    %v4048 = vunpack.c.l.b16 %v3681
    %v4049 = vunpack.c.h.b16 %v3681
    %v4050 = vunpack.c.l.b16 %v3682
    %v4051 = vunpack.c.h.b16 %v3682
    %v4052 = vunpack.c.l.b16 %v3683
    %v4053 = vunpack.c.h.b16 %v3683
    %v4054 = vunpack.c.l.b16 %v3684
    %v4055 = vunpack.c.h.b16 %v3684
    %v4056 = vunpack.c.l.b16 %v3685
    %v4057 = vunpack.c.h.b16 %v3685
    %v4058 = vunpack.c.l.b16 %v3686
    %v4059 = vunpack.c.h.b16 %v3686
    %v4060 = vunpack.c.l.b16 %v3687
    %v4061 = vunpack.c.h.b16 %v3687
    %v4062 = vunpack.c.l.b16 %v3688
    %v4063 = vunpack.c.h.b16 %v3688
    %v4064 = vunpack.c.l.b16 %v3689
    %v4065 = vunpack.c.h.b16 %v3689
    %v4066 = vunpack.c.l.b16 %v3690
    %v4067 = vunpack.c.h.b16 %v3690
    %v4068 = vunpack.c.l.b16 %v3691
    %v4069 = vunpack.c.h.b16 %v3691
    %v4070 = vunpack.c.l.b16 %v3692
    %v4071 = vunpack.c.h.b16 %v3692
    %v4072 = vunpack.c.l.b16 %v3693
    %v4073 = vunpack.c.h.b16 %v3693
    %v4074 = vunpack.c.l.b16 %v3694
    %v4075 = vunpack.c.h.b16 %v3694
    %v4076 = vunpack.c.l.b16 %v3695
    %v4077 = vunpack.c.h.b16 %v3695
    %v4078 = vunpack.c.l.b16 %v3696
    %v4079 = vunpack.c.h.b16 %v3696
    %v4080 = vunpack.c.l.b16 %v3697
    %v4081 = vunpack.c.h.b16 %v3697
    %v4082 = vunpack.c.l.b16 %v3698
    %v4083 = vunpack.c.h.b16 %v3698
    %v4084 = vunpack.c.l.b16 %v3699
    %v4085 = vunpack.c.h.b16 %v3699
    %v4086 = vunpack.c.l.b16 %v3700
    %v4087 = vunpack.c.h.b16 %v3700
    %v4088 = vunpack.c.l.b16 %v3701
    %v4089 = vunpack.c.h.b16 %v3701
    %v4090 = vunpack.c.l.b16 %v3702
    %v4091 = vunpack.c.h.b16 %v3702
    %v4092 = vunpack.c.l.b16 %v3703
    %v4093 = vunpack.c.h.b16 %v3703
    %v4094 = vunpack.c.l.b16 %v3704
    %v4095 = vunpack.c.h.b16 %v3704
    %v4096 = vunpack.c.l.b16 %v3705
    %v4097 = vunpack.c.h.b16 %v3705
    %v4098 = vunpack.c.l.b16 %v3706
    %v4099 = vunpack.c.h.b16 %v3706
    %v4100 = vunpack.c.l.b16 %v3707
    %v4101 = vunpack.c.h.b16 %v3707
    %v4102 = vunpack.c.l.b16 %v3708
    %v4103 = vunpack.c.h.b16 %v3708
    %v4104 = vunpack.c.l.b16 %v3709
    %v4105 = vunpack.c.h.b16 %v3709
    %v4106 = vunpack.c.l.b16 %v3710
    %v4107 = vunpack.c.h.b16 %v3710
    %v4108 = vunpack.c.l.b16 %v3711
    %v4109 = vunpack.c.h.b16 %v3711
    %v4110 = vunpack.c.l.b16 %v3712
    %v4111 = vunpack.c.h.b16 %v3712
    %v4112 = vunpack.c.l.b16 %v3713
    %v4113 = vunpack.c.h.b16 %v3713
    %v4114 = vunpack.c.l.b16 %v3714
    %v4115 = vunpack.c.h.b16 %v3714
    %v4116 = vunpack.c.l.b16 %v3715
    %v4117 = vunpack.c.h.b16 %v3715
    %v4118 = vunpack.c.l.b16 %v3716
    %v4119 = vunpack.c.h.b16 %v3716
    %v4120 = vunpack.c.l.b16 %v3717
    %v4121 = vunpack.c.h.b16 %v3717
    %v4122 = vunpack.c.l.b16 %v3718
    %v4123 = vunpack.c.h.b16 %v3718
    %v4124 = vunpack.c.l.b16 %v3719
    %v4125 = vunpack.c.h.b16 %v3719
    %v4126 = vunpack.c.l.b16 %v3720
    %v4127 = vunpack.c.h.b16 %v3720
    %v4128 = vpack.c.b16 %v3876, %v3872
    %v4129 = vpack.c.b16 %v3877, %v3873
    %v4130 = vpack.c.b16 %v3878, %v3874
    %v4131 = vpack.c.b16 %v3879, %v3875
    %v4132 = vpack.c.b16 %v3884, %v3880
    %v4133 = vpack.c.b16 %v3885, %v3881
    %v4134 = vpack.c.b16 %v3886, %v3882
    %v4135 = vpack.c.b16 %v3887, %v3883
    %v4136 = vpack.c.b16 %v3892, %v3888
    %v4137 = vpack.c.b16 %v3893, %v3889
    %v4138 = vpack.c.b16 %v3894, %v3890
    %v4139 = vpack.c.b16 %v3895, %v3891
    %v4140 = vpack.c.b16 %v3900, %v3896
    %v4141 = vpack.c.b16 %v3901, %v3897
    %v4142 = vpack.c.b16 %v3902, %v3898
    %v4143 = vpack.c.b16 %v3903, %v3899
    %v4144 = vpack.c.b16 %v3908, %v3904
    %v4145 = vpack.c.b16 %v3909, %v3905
    %v4146 = vpack.c.b16 %v3910, %v3906
    %v4147 = vpack.c.b16 %v3911, %v3907
    %v4148 = vpack.c.b16 %v3916, %v3912
    %v4149 = vpack.c.b16 %v3917, %v3913
    %v4150 = vpack.c.b16 %v3918, %v3914
    %v4151 = vpack.c.b16 %v3919, %v3915
    %v4152 = vpack.c.b16 %v3924, %v3920
    %v4153 = vpack.c.b16 %v3925, %v3921
    %v4154 = vpack.c.b16 %v3926, %v3922
    %v4155 = vpack.c.b16 %v3927, %v3923
    %v4156 = vpack.c.b16 %v3932, %v3928
    %v4157 = vpack.c.b16 %v3933, %v3929
    %v4158 = vpack.c.b16 %v3934, %v3930
    %v4159 = vpack.c.b16 %v3935, %v3931
    %v4160 = vpack.c.b16 %v3940, %v3936
    %v4161 = vpack.c.b16 %v3941, %v3937
    %v4162 = vpack.c.b16 %v3942, %v3938
    %v4163 = vpack.c.b16 %v3943, %v3939
    %v4164 = vpack.c.b16 %v3948, %v3944
    %v4165 = vpack.c.b16 %v3949, %v3945
    %v4166 = vpack.c.b16 %v3950, %v3946
    %v4167 = vpack.c.b16 %v3951, %v3947
    %v4168 = vpack.c.b16 %v3956, %v3952
    %v4169 = vpack.c.b16 %v3957, %v3953
    %v4170 = vpack.c.b16 %v3958, %v3954
    %v4171 = vpack.c.b16 %v3959, %v3955
    %v4172 = vpack.c.b16 %v3964, %v3960
    %v4173 = vpack.c.b16 %v3965, %v3961
    %v4174 = vpack.c.b16 %v3966, %v3962
    %v4175 = vpack.c.b16 %v3967, %v3963
    %v4176 = vpack.c.b16 %v3972, %v3968
    %v4177 = vpack.c.b16 %v3973, %v3969
    %v4178 = vpack.c.b16 %v3974, %v3970
    %v4179 = vpack.c.b16 %v3975, %v3971
    %v4180 = vpack.c.b16 %v3980, %v3976
    %v4181 = vpack.c.b16 %v3981, %v3977
    %v4182 = vpack.c.b16 %v3982, %v3978
    %v4183 = vpack.c.b16 %v3983, %v3979
    %v4184 = vpack.c.b16 %v3988, %v3984
    %v4185 = vpack.c.b16 %v3989, %v3985
    %v4186 = vpack.c.b16 %v3990, %v3986
    %v4187 = vpack.c.b16 %v3991, %v3987
    %v4188 = vpack.c.b16 %v3996, %v3992
    %v4189 = vpack.c.b16 %v3997, %v3993
    %v4190 = vpack.c.b16 %v3998, %v3994
    %v4191 = vpack.c.b16 %v3999, %v3995
    %v4192 = vpack.c.b16 %v4004, %v4000
    %v4193 = vpack.c.b16 %v4005, %v4001
    %v4194 = vpack.c.b16 %v4006, %v4002
    %v4195 = vpack.c.b16 %v4007, %v4003
    %v4196 = vpack.c.b16 %v4012, %v4008
    %v4197 = vpack.c.b16 %v4013, %v4009
    %v4198 = vpack.c.b16 %v4014, %v4010
    %v4199 = vpack.c.b16 %v4015, %v4011
    %v4200 = vpack.c.b16 %v4020, %v4016
    %v4201 = vpack.c.b16 %v4021, %v4017
    %v4202 = vpack.c.b16 %v4022, %v4018
    %v4203 = vpack.c.b16 %v4023, %v4019
    %v4204 = vpack.c.b16 %v4028, %v4024
    %v4205 = vpack.c.b16 %v4029, %v4025
    %v4206 = vpack.c.b16 %v4030, %v4026
    %v4207 = vpack.c.b16 %v4031, %v4027
    %v4208 = vpack.c.b16 %v4036, %v4032
    %v4209 = vpack.c.b16 %v4037, %v4033
    %v4210 = vpack.c.b16 %v4038, %v4034
    %v4211 = vpack.c.b16 %v4039, %v4035
    %v4212 = vpack.c.b16 %v4044, %v4040
    %v4213 = vpack.c.b16 %v4045, %v4041
    %v4214 = vpack.c.b16 %v4046, %v4042
    %v4215 = vpack.c.b16 %v4047, %v4043
    %v4216 = vpack.c.b16 %v4052, %v4048
    %v4217 = vpack.c.b16 %v4053, %v4049
    %v4218 = vpack.c.b16 %v4054, %v4050
    %v4219 = vpack.c.b16 %v4055, %v4051
    %v4220 = vpack.c.b16 %v4060, %v4056
    %v4221 = vpack.c.b16 %v4061, %v4057
    %v4222 = vpack.c.b16 %v4062, %v4058
    %v4223 = vpack.c.b16 %v4063, %v4059
    %v4224 = vpack.c.b16 %v4068, %v4064
    %v4225 = vpack.c.b16 %v4069, %v4065
    %v4226 = vpack.c.b16 %v4070, %v4066
    %v4227 = vpack.c.b16 %v4071, %v4067
    %v4228 = vpack.c.b16 %v4076, %v4072
    %v4229 = vpack.c.b16 %v4077, %v4073
    %v4230 = vpack.c.b16 %v4078, %v4074
    %v4231 = vpack.c.b16 %v4079, %v4075
    %v4232 = vpack.c.b16 %v4084, %v4080
    %v4233 = vpack.c.b16 %v4085, %v4081
    %v4234 = vpack.c.b16 %v4086, %v4082
    %v4235 = vpack.c.b16 %v4087, %v4083
    %v4236 = vpack.c.b16 %v4092, %v4088
    %v4237 = vpack.c.b16 %v4093, %v4089
    %v4238 = vpack.c.b16 %v4094, %v4090
    %v4239 = vpack.c.b16 %v4095, %v4091
    %v4240 = vpack.c.b16 %v4100, %v4096
    %v4241 = vpack.c.b16 %v4101, %v4097
    %v4242 = vpack.c.b16 %v4102, %v4098
    %v4243 = vpack.c.b16 %v4103, %v4099
    %v4244 = vpack.c.b16 %v4108, %v4104
    %v4245 = vpack.c.b16 %v4109, %v4105
    %v4246 = vpack.c.b16 %v4110, %v4106
    %v4247 = vpack.c.b16 %v4111, %v4107
    %v4248 = vpack.c.b16 %v4116, %v4112
    %v4249 = vpack.c.b16 %v4117, %v4113
    %v4250 = vpack.c.b16 %v4118, %v4114
    %v4251 = vpack.c.b16 %v4119, %v4115
    %v4252 = vpack.c.b16 %v4124, %v4120
    %v4253 = vpack.c.b16 %v4125, %v4121
    %v4254 = vpack.c.b16 %v4126, %v4122
    %v4255 = vpack.c.b16 %v4127, %v4123
    %4384 = vmatprep.subr.bf16.mxu0 %v4129
    %4385 = vmatpush1.bf16.msra.mxu0 %v4128
    %4386 = vmatprep.subr.bf16.mxu0 %v4133
    %4387 = vmatpush1.bf16.msra.mxu0 %v4132
    %4388 = vmatprep.subr.bf16.mxu0 %v4137
    %4389 = vmatpush1.bf16.msra.mxu0 %v4136
    %4390 = vmatprep.subr.bf16.mxu0 %v4141
    %4391 = vmatpush1.bf16.msra.mxu0 %v4140
    %4392 = vmatprep.subr.bf16.mxu0 %v4145
    %4393 = vmatpush1.bf16.msra.mxu0 %v4144
    %4394 = vmatprep.subr.bf16.mxu0 %v4149
    %4395 = vmatpush1.bf16.msra.mxu0 %v4148
    %4396 = vmatprep.subr.bf16.mxu0 %v4153
    %4397 = vmatpush1.bf16.msra.mxu0 %v4152
    %4398 = vmatprep.subr.bf16.mxu0 %v4157
    %4399 = vmatpush1.bf16.msra.mxu0 %v4156
    %4400 = vmatprep.subr.bf16.mxu0 %v4161
    %4401 = vmatpush1.bf16.msra.mxu0 %v4160
    %4402 = vmatprep.subr.bf16.mxu0 %v4165
    %4403 = vmatpush1.bf16.msra.mxu0 %v4164
    %4404 = vmatprep.subr.bf16.mxu0 %v4169
    %4405 = vmatpush1.bf16.msra.mxu0 %v4168
    %4406 = vmatprep.subr.bf16.mxu0 %v4173
    %4407 = vmatpush1.bf16.msra.mxu0 %v4172
    %4408 = vmatprep.subr.bf16.mxu0 %v4177
    %4409 = vmatpush1.bf16.msra.mxu0 %v4176
    %4410 = vmatprep.subr.bf16.mxu0 %v4181
    %4411 = vmatpush1.bf16.msra.mxu0 %v4180
    %4412 = vmatprep.subr.bf16.mxu0 %v4185
    %4413 = vmatpush1.bf16.msra.mxu0 %v4184
    %4414 = vmatprep.subr.bf16.mxu0 %v4189
    %4415 = vmatpush1.bf16.msra.mxu0 %v4188
    %4416 = vmatprep.mubr.bf16.mxu0 %v3589
    %4417 = vmatmul.mubr.bf16.gmra.mrb[0].mxu0 %v3588
    %v4418 = vpop.f32.mrb[0].mxu0
    %v4419 = vadd.f32 %v3727, %v4418
    %v4420 = vpop.f32.mrb[0].mxu0
    %v4421 = vadd.f32 %v3731, %v4420
    %v4422 = vpop.f32.mrb[0].mxu0
    %v4423 = vpop.f32.mrb[0].mxu0
    %4424 = vdwg.mxu0
    %4425 = vmatprep.subr.bf16.mxu0 %v4193
    %4426 = vmatpush1.bf16.msra.mxu0 %v4192
    %4427 = vmatprep.subr.bf16.mxu0 %v4197
    %4428 = vmatpush1.bf16.msra.mxu0 %v4196
    %4429 = vmatprep.subr.bf16.mxu0 %v4201
    %4430 = vmatpush1.bf16.msra.mxu0 %v4200
    %4431 = vmatprep.subr.bf16.mxu0 %v4205
    %4432 = vmatpush1.bf16.msra.mxu0 %v4204
    %4433 = vmatprep.subr.bf16.mxu0 %v4209
    %4434 = vmatpush1.bf16.msra.mxu0 %v4208
    %4435 = vmatprep.subr.bf16.mxu0 %v4213
    %4436 = vmatpush1.bf16.msra.mxu0 %v4212
    %4437 = vmatprep.subr.bf16.mxu0 %v4217
    %4438 = vmatpush1.bf16.msra.mxu0 %v4216
    %4439 = vmatprep.subr.bf16.mxu0 %v4221
    %4440 = vmatpush1.bf16.msra.mxu0 %v4220
    %4441 = vmatprep.subr.bf16.mxu0 %v4225
    %4442 = vmatpush1.bf16.msra.mxu0 %v4224
    %4443 = vmatprep.subr.bf16.mxu0 %v4229
    %4444 = vmatpush1.bf16.msra.mxu0 %v4228
    %4445 = vmatprep.subr.bf16.mxu0 %v4233
    %4446 = vmatpush1.bf16.msra.mxu0 %v4232
    %4447 = vmatprep.subr.bf16.mxu0 %v4237
    %4448 = vmatpush1.bf16.msra.mxu0 %v4236
    %4449 = vmatprep.subr.bf16.mxu0 %v4241
    %4450 = vmatpush1.bf16.msra.mxu0 %v4240
    %4451 = vmatprep.subr.bf16.mxu0 %v4245
    %4452 = vmatpush1.bf16.msra.mxu0 %v4244
    %4453 = vmatprep.subr.bf16.mxu0 %v4249
    %4454 = vmatpush1.bf16.msra.mxu0 %v4248
    %4455 = vmatprep.subr.bf16.mxu0 %v4253
    %4456 = vmatpush1.bf16.msra.mxu0 %v4252
    %4457 = vmatprep.mubr.bf16.mxu0 %v3591
    %4458 = vmatmul.mubr.bf16.gmra.mrb[0].mxu0 %v3590
    %v4459 = vpop.f32.mrb[0].mxu0
    %v4460 = vadd.f32 %v4419, %v4459
    %v4461 = vpop.f32.mrb[0].mxu0
    %v4462 = vadd.f32 %v4421, %v4461
    %v4463 = vpop.f32.mrb[0].mxu0
    %v4464 = vpop.f32.mrb[0].mxu0
    %4465 = vdwg.mxu0
    %4466 = vmatprep.subr.bf16.mxu0 %v4131
    %4467 = vmatpush1.bf16.msra.mxu0 %v4130
    %4468 = vmatprep.subr.bf16.mxu0 %v4135
    %4469 = vmatpush1.bf16.msra.mxu0 %v4134
    %4470 = vmatprep.subr.bf16.mxu0 %v4139
    %4471 = vmatpush1.bf16.msra.mxu0 %v4138
    %4472 = vmatprep.subr.bf16.mxu0 %v4143
    %4473 = vmatpush1.bf16.msra.mxu0 %v4142
    %4474 = vmatprep.subr.bf16.mxu0 %v4147
    %4475 = vmatpush1.bf16.msra.mxu0 %v4146
    %4476 = vmatprep.subr.bf16.mxu0 %v4151
    %4477 = vmatpush1.bf16.msra.mxu0 %v4150
    %4478 = vmatprep.subr.bf16.mxu0 %v4155
    %4479 = vmatpush1.bf16.msra.mxu0 %v4154
    %4480 = vmatprep.subr.bf16.mxu0 %v4159
    %4481 = vmatpush1.bf16.msra.mxu0 %v4158
    %4482 = vmatprep.subr.bf16.mxu0 %v4163
    %4483 = vmatpush1.bf16.msra.mxu0 %v4162
    %4484 = vmatprep.subr.bf16.mxu0 %v4167
    %4485 = vmatpush1.bf16.msra.mxu0 %v4166
    %4486 = vmatprep.subr.bf16.mxu0 %v4171
    %4487 = vmatpush1.bf16.msra.mxu0 %v4170
    %4488 = vmatprep.subr.bf16.mxu0 %v4175
    %4489 = vmatpush1.bf16.msra.mxu0 %v4174
    %4490 = vmatprep.subr.bf16.mxu0 %v4179
    %4491 = vmatpush1.bf16.msra.mxu0 %v4178
    %4492 = vmatprep.subr.bf16.mxu0 %v4183
    %4493 = vmatpush1.bf16.msra.mxu0 %v4182
    %4494 = vmatprep.subr.bf16.mxu0 %v4187
    %4495 = vmatpush1.bf16.msra.mxu0 %v4186
    %4496 = vmatprep.subr.bf16.mxu0 %v4191
    %4497 = vmatpush1.bf16.msra.mxu0 %v4190
    %4498 = vmatprep.mubr.bf16.mxu0 %v3589
    %4499 = vmatmul.mubr.bf16.gmra.mrb[0].mxu0 %v3588
    %v4500 = vpop.f32.mrb[0].mxu0
    %v4501 = vadd.f32 %v3735, %v4500
    %v4502 = vpop.f32.mrb[0].mxu0
    %v4503 = vadd.f32 %v3739, %v4502
    %v4504 = vpop.f32.mrb[0].mxu0
    %v4505 = vpop.f32.mrb[0].mxu0
    %4506 = vdwg.mxu0
    %4507 = vmatprep.subr.bf16.mxu0 %v4195
    %4508 = vmatpush1.bf16.msra.mxu0 %v4194
    %4509 = vmatprep.subr.bf16.mxu0 %v4199
    %4510 = vmatpush1.bf16.msra.mxu0 %v4198
    %4511 = vmatprep.subr.bf16.mxu0 %v4203
    %4512 = vmatpush1.bf16.msra.mxu0 %v4202
    %4513 = vmatprep.subr.bf16.mxu0 %v4207
    %4514 = vmatpush1.bf16.msra.mxu0 %v4206
    %4515 = vmatprep.subr.bf16.mxu0 %v4211
    %4516 = vmatpush1.bf16.msra.mxu0 %v4210
    %4517 = vmatprep.subr.bf16.mxu0 %v4215
    %4518 = vmatpush1.bf16.msra.mxu0 %v4214
    %4519 = vmatprep.subr.bf16.mxu0 %v4219
    %4520 = vmatpush1.bf16.msra.mxu0 %v4218
    %4521 = vmatprep.subr.bf16.mxu0 %v4223
    %4522 = vmatpush1.bf16.msra.mxu0 %v4222
    %4523 = vmatprep.subr.bf16.mxu0 %v4227
    %4524 = vmatpush1.bf16.msra.mxu0 %v4226
    %4525 = vmatprep.subr.bf16.mxu0 %v4231
    %4526 = vmatpush1.bf16.msra.mxu0 %v4230
    %4527 = vmatprep.subr.bf16.mxu0 %v4235
    %4528 = vmatpush1.bf16.msra.mxu0 %v4234
    %4529 = vmatprep.subr.bf16.mxu0 %v4239
    %4530 = vmatpush1.bf16.msra.mxu0 %v4238
    %4531 = vmatprep.subr.bf16.mxu0 %v4243
    %4532 = vmatpush1.bf16.msra.mxu0 %v4242
    %4533 = vmatprep.subr.bf16.mxu0 %v4247
    %4534 = vmatpush1.bf16.msra.mxu0 %v4246
    %4535 = vmatprep.subr.bf16.mxu0 %v4251
    %4536 = vmatpush1.bf16.msra.mxu0 %v4250
    %4537 = vmatprep.subr.bf16.mxu0 %v4255
    %4538 = vmatpush1.bf16.msra.mxu0 %v4254
    %4539 = vmatprep.mubr.bf16.mxu0 %v3591
    %4540 = vmatmul.mubr.bf16.gmra.mrb[0].mxu0 %v3590
    %v4541 = vpop.f32.mrb[0].mxu0
    %v4542 = vadd.f32 %v4501, %v4541
    %v4543 = vpop.f32.mrb[0].mxu0
    %v4544 = vadd.f32 %v4503, %v4543
    %v4545 = vpop.f32.mrb[0].mxu0
    %v4546 = vpop.f32.mrb[0].mxu0
    %4547 = vdwg.mxu0
    %vm4548 = vcmp.ge.f32.partialorder %v4460, 0.0
    %vm4549 = vcmp.ge.f32.partialorder %v4462, 0.0
    %vm4550 = vcmp.ge.f32.partialorder %v4542, 0.0
    %vm4551 = vcmp.ge.f32.partialorder %v4544, 0.0
    %v4552 = vmul.f32 %v4460, 0.2
    %v4553 = vmul.f32 %v4462, 0.2
    %v4554 = vmul.f32 %v4542, 0.2
    %v4555 = vmul.f32 %v4544, 0.2
    %v4556 = vsel %vm4548, %v4460, %v4552
    %v4557 = vsel %vm4549, %v4462, %v4553
    %v4558 = vsel %vm4550, %v4542, %v4554
    %v4559 = vsel %vm4551, %v4544, %v4555
    %v4560 = vmul.f32 %v4556, 1.4142135
    %v4561 = vmul.f32 %v4557, 1.4142135
    %v4562 = vmul.f32 %v4558, 1.4142135
    %v4563 = vmul.f32 %v4559, 1.4142135
    %v4568 = vcombine.low %v4560, %v4561
    %v4569 = vcombine.high %v4560, %v4561
    %v4570 = vcombine.low %v4562, %v4563
    %v4571 = vcombine.high %v4562, %v4563
    %v4573 = vunpack.c.l.s4 1983009808
    %v4574 = vunpack.c.0.s8 %v4573
    %v4575 = vlaneseq
    %v4576 = vshrl.u32 %v4575, 7
    %v4577 = vsub.s32 %v4574, %v4576
    %v4578 = vrot.slane %v4568, %v4577
    %v4580 = vunpack.c.l.s4 1983009808
    %v4581 = vunpack.c.0.s8 %v4580
    %v4582 = vlaneseq
    %v4583 = vshrl.u32 %v4582, 7
    %v4584 = vsub.s32 %v4581, %v4583
    %v4585 = vrot.slane %v4569, %v4584
    %v4587 = vunpack.c.l.s4 1983009808
    %v4588 = vunpack.c.0.s8 %v4587
    %v4589 = vlaneseq
    %v4590 = vshrl.u32 %v4589, 7
    %v4591 = vsub.s32 %v4588, %v4590
    %v4592 = vrot.slane %v4570, %v4591
    %v4594 = vunpack.c.l.s4 1983009808
    %v4595 = vunpack.c.0.s8 %v4594
    %v4596 = vlaneseq
    %v4597 = vshrl.u32 %v4596, 7
    %v4598 = vsub.s32 %v4595, %v4597
    %v4599 = vrot.slane %v4571, %v4598
    %v4600 = vcombine.low %v4578, %v4592
    %v4601 = vcombine.high %v4578, %v4592
    %v4602 = vcombine.low %v4585, %v4599
    %v4603 = vcombine.high %v4585, %v4599
    %4608 = vst [vmem:[#allocation3] sm:$0xff] %v4600
    %4609 = vst [vmem:[#allocation3 + $0x8] sm:$0xff] %v4601
    %4610 = vst [vmem:[#allocation3 + $0x10] sm:$0xff] %v4602
    %4611 = vst [vmem:[#allocation3 + $0x18] sm:$0xff] %v4603
    %s4612 = scalar_lea.vmem [#allocation2], 32
    %v4613 = vld [vmem:[%s4612] sm:$0xff]
    %v4614 = vld [vmem:[%s4612 + $0x8] sm:$0xff]
    %v4615 = vld [vmem:[%s4612 + $0x10] sm:$0xff]
    %v4616 = vld [vmem:[%s4612 + $0x18] sm:$0xff]
    %v4617 = vmul.f32 %v4613, %v4613
    %v4618 = vmul.f32 %v4614, %v4614
    %v4619 = vmul.f32 %v4615, %v4615
    %v4620 = vmul.f32 %v4616, %v4616
    %v4625 = vcombine.high %v4617, %v4617
    %v4627 = vunpack.c.l.s4 1983009808
    %v4628 = vunpack.c.0.s8 %v4627
    %v4629 = vlaneseq
    %v4630 = vshrl.u32 %v4629, 7
    %v4631 = vsub.s32 %v4628, %v4630
    %v4632 = vrot.slane %v4617, %v4631
    %v4634 = vunpack.c.l.s4 1983009808
    %v4635 = vunpack.c.0.s8 %v4634
    %v4636 = vlaneseq
    %v4637 = vshrl.u32 %v4636, 7
    %v4638 = vsub.s32 %v4635, %v4637
    %v4639 = vrot.slane %v4625, %v4638
    %v4640 = vcombine.high %v4632, %v4632
    %v4641 = vcombine.high %v4639, %v4639
    %v4642 = vcombine.high %v4618, %v4618
    %v4644 = vunpack.c.l.s4 1983009808
    %v4645 = vunpack.c.0.s8 %v4644
    %v4646 = vlaneseq
    %v4647 = vshrl.u32 %v4646, 7
    %v4648 = vsub.s32 %v4645, %v4647
    %v4649 = vrot.slane %v4618, %v4648
    %v4651 = vunpack.c.l.s4 1983009808
    %v4652 = vunpack.c.0.s8 %v4651
    %v4653 = vlaneseq
    %v4654 = vshrl.u32 %v4653, 7
    %v4655 = vsub.s32 %v4652, %v4654
    %v4656 = vrot.slane %v4642, %v4655
    %v4657 = vcombine.high %v4649, %v4649
    %v4658 = vcombine.high %v4656, %v4656
    %v4659 = vcombine.high %v4619, %v4619
    %v4661 = vunpack.c.l.s4 1983009808
    %v4662 = vunpack.c.0.s8 %v4661
    %v4663 = vlaneseq
    %v4664 = vshrl.u32 %v4663, 7
    %v4665 = vsub.s32 %v4662, %v4664
    %v4666 = vrot.slane %v4619, %v4665
    %v4668 = vunpack.c.l.s4 1983009808
    %v4669 = vunpack.c.0.s8 %v4668
    %v4670 = vlaneseq
    %v4671 = vshrl.u32 %v4670, 7
    %v4672 = vsub.s32 %v4669, %v4671
    %v4673 = vrot.slane %v4659, %v4672
    %v4674 = vcombine.high %v4666, %v4666
    %v4675 = vcombine.high %v4673, %v4673
    %v4676 = vcombine.high %v4620, %v4620
    %v4678 = vunpack.c.l.s4 1983009808
    %v4679 = vunpack.c.0.s8 %v4678
    %v4680 = vlaneseq
    %v4681 = vshrl.u32 %v4680, 7
    %v4682 = vsub.s32 %v4679, %v4681
    %v4683 = vrot.slane %v4620, %v4682
    %v4685 = vunpack.c.l.s4 1983009808
    %v4686 = vunpack.c.0.s8 %v4685
    %v4687 = vlaneseq
    %v4688 = vshrl.u32 %v4687, 7
    %v4689 = vsub.s32 %v4686, %v4688
    %v4690 = vrot.slane %v4676, %v4689
    %v4691 = vcombine.high %v4683, %v4683
    %v4692 = vcombine.high %v4690, %v4690
    %v4709 = vsel %vm562, %v4632, 0.0
    %v4710 = vsel %vm562, %v4649, 0.0
    %v4711 = vadd.f32 %v4709, %v4710
    %v4712 = vsel %vm562, %v4666, 0.0
    %v4713 = vadd.f32 %v4711, %v4712
    %v4714 = vsel %vm562, %v4683, 0.0
    %v4715 = vadd.f32 %v4713, %v4714
    %v4716 = vsel %vm562, %v4640, 0.0
    %v4717 = vsel %vm562, %v4657, 0.0
    %v4718 = vadd.f32 %v4716, %v4717
    %v4719 = vsel %vm562, %v4674, 0.0
    %v4720 = vadd.f32 %v4718, %v4719
    %v4721 = vsel %vm562, %v4691, 0.0
    %v4722 = vadd.f32 %v4720, %v4721
    %v4723 = vsel %vm562, %v4639, 0.0
    %v4724 = vsel %vm562, %v4656, 0.0
    %v4725 = vadd.f32 %v4723, %v4724
    %v4726 = vsel %vm562, %v4673, 0.0
    %v4727 = vadd.f32 %v4725, %v4726
    %v4728 = vsel %vm562, %v4690, 0.0
    %v4729 = vadd.f32 %v4727, %v4728
    %v4730 = vsel %vm562, %v4641, 0.0
    %v4731 = vsel %vm562, %v4658, 0.0
    %v4732 = vadd.f32 %v4730, %v4731
    %v4733 = vsel %vm562, %v4675, 0.0
    %v4734 = vadd.f32 %v4732, %v4733
    %v4735 = vsel %vm562, %v4692, 0.0
    %v4736 = vadd.f32 %v4734, %v4735
    %v4737 = vmul.f32 %v4715, %v591
    %v4738 = vmul.f32 %v4722, %v591
    %v4739 = vmul.f32 %v4729, %v591
    %v4740 = vmul.f32 %v4736, %v591
    %v4741 = vadd.f32 %v4737, 1e-08
    %v4742 = vadd.f32 %v4738, 1e-08
    %v4743 = vadd.f32 %v4739, 1e-08
    %v4744 = vadd.f32 %v4740, 1e-08
    %v4745 = vrsqrt.pop %v4741
    %v4746 = vrsqrt.pop %v4742
    %v4747 = vrsqrt.pop %v4743
    %v4748 = vrsqrt.pop %v4744
    %v4753 = vcombine.low %v4745, %v4746
    %v4754 = vcombine.low %v4747, %v4748
    %v4756 = vunpack.c.l.s4 1983009808
    %v4757 = vunpack.c.0.s8 %v4756
    %v4758 = vlaneseq
    %v4759 = vshrl.u32 %v4758, 7
    %v4760 = vsub.s32 %v4757, %v4759
    %v4761 = vrot.slane %v4753, %v4760
    %v4763 = vunpack.c.l.s4 1983009808
    %v4764 = vunpack.c.0.s8 %v4763
    %v4765 = vlaneseq
    %v4766 = vshrl.u32 %v4765, 7
    %v4767 = vsub.s32 %v4764, %v4766
    %v4768 = vrot.slane %v4754, %v4767
    %v4769 = vcombine.low %v4761, %v4768
    %v4771 = vmul.f32 %v4613, %v4769
    %v4772 = vmul.f32 %v4614, %v4769
    %v4773 = vmul.f32 %v4615, %v4769
    %v4774 = vmul.f32 %v4616, %v4769
    %v4779 = vcombine.low %v4771, %v4772
    %v4780 = vcombine.high %v4771, %v4772
    %v4781 = vcombine.low %v4773, %v4774
    %v4782 = vcombine.high %v4773, %v4774
    %v4784 = vunpack.c.l.s4 1983009808
    %v4785 = vunpack.c.0.s8 %v4784
    %v4786 = vlaneseq
    %v4787 = vshrl.u32 %v4786, 7
    %v4788 = vsub.s32 %v4785, %v4787
    %v4789 = vrot.slane %v4779, %v4788
    %v4791 = vunpack.c.l.s4 1983009808
    %v4792 = vunpack.c.0.s8 %v4791
    %v4793 = vlaneseq
    %v4794 = vshrl.u32 %v4793, 7
    %v4795 = vsub.s32 %v4792, %v4794
    %v4796 = vrot.slane %v4780, %v4795
    %v4798 = vunpack.c.l.s4 1983009808
    %v4799 = vunpack.c.0.s8 %v4798
    %v4800 = vlaneseq
    %v4801 = vshrl.u32 %v4800, 7
    %v4802 = vsub.s32 %v4799, %v4801
    %v4803 = vrot.slane %v4781, %v4802
    %v4805 = vunpack.c.l.s4 1983009808
    %v4806 = vunpack.c.0.s8 %v4805
    %v4807 = vlaneseq
    %v4808 = vshrl.u32 %v4807, 7
    %v4809 = vsub.s32 %v4806, %v4808
    %v4810 = vrot.slane %v4782, %v4809
    %v4811 = vcombine.low %v4789, %v4803
    %v4812 = vcombine.high %v4789, %v4803
    %v4813 = vcombine.low %v4796, %v4810
    %v4814 = vcombine.high %v4796, %v4810
    %v4819 = vpack.c.bf16 %v4811, %v4811
    %v4820 = vpack.c.bf16 %v4812, %v4812
    %v4821 = vpack.c.bf16 %v4813, %v4813
    %v4822 = vpack.c.bf16 %v4814, %v4814
    %s4823 = scalar_lea.vmem [#allocation4], 4096
    %v4824 = vld [vmem:[%s4823] sm:$0xff]
    %v4825 = vld [vmem:[%s4823 + $0x8] sm:$0xff]
    %v4826 = vld [vmem:[%s4823 + $0x10] sm:$0xff]
    %v4827 = vld [vmem:[%s4823 + $0x18] sm:$0xff]
    %v4828 = vld [vmem:[%s4823 + $0x20] sm:$0xff]
    %v4829 = vld [vmem:[%s4823 + $0x28] sm:$0xff]
    %v4830 = vld [vmem:[%s4823 + $0x30] sm:$0xff]
    %v4831 = vld [vmem:[%s4823 + $0x38] sm:$0xff]
    %v4832 = vld [vmem:[%s4823 + $0x40] sm:$0xff]
    %v4833 = vld [vmem:[%s4823 + $0x48] sm:$0xff]
    %v4834 = vld [vmem:[%s4823 + $0x50] sm:$0xff]
    %v4835 = vld [vmem:[%s4823 + $0x58] sm:$0xff]
    %v4836 = vld [vmem:[%s4823 + $0x60] sm:$0xff]
    %v4837 = vld [vmem:[%s4823 + $0x68] sm:$0xff]
    %v4838 = vld [vmem:[%s4823 + $0x70] sm:$0xff]
    %v4839 = vld [vmem:[%s4823 + $0x78] sm:$0xff]
    %v4840 = vld [vmem:[%s4823 + $0x80] sm:$0xff]
    %v4841 = vld [vmem:[%s4823 + $0x88] sm:$0xff]
    %v4842 = vld [vmem:[%s4823 + $0x90] sm:$0xff]
    %v4843 = vld [vmem:[%s4823 + $0x98] sm:$0xff]
    %v4844 = vld [vmem:[%s4823 + $0xa0] sm:$0xff]
    %v4845 = vld [vmem:[%s4823 + $0xa8] sm:$0xff]
    %v4846 = vld [vmem:[%s4823 + $0xb0] sm:$0xff]
    %v4847 = vld [vmem:[%s4823 + $0xb8] sm:$0xff]
    %v4848 = vld [vmem:[%s4823 + $0xc0] sm:$0xff]
    %v4849 = vld [vmem:[%s4823 + $0xc8] sm:$0xff]
    %v4850 = vld [vmem:[%s4823 + $0xd0] sm:$0xff]
    %v4851 = vld [vmem:[%s4823 + $0xd8] sm:$0xff]
    %v4852 = vld [vmem:[%s4823 + $0xe0] sm:$0xff]
    %v4853 = vld [vmem:[%s4823 + $0xe8] sm:$0xff]
    %v4854 = vld [vmem:[%s4823 + $0xf0] sm:$0xff]
    %v4855 = vld [vmem:[%s4823 + $0xf8] sm:$0xff]
    %v4856 = vld [vmem:[%s4823 + $0x100] sm:$0xff]
    %v4857 = vld [vmem:[%s4823 + $0x108] sm:$0xff]
    %v4858 = vld [vmem:[%s4823 + $0x110] sm:$0xff]
    %v4859 = vld [vmem:[%s4823 + $0x118] sm:$0xff]
    %v4860 = vld [vmem:[%s4823 + $0x120] sm:$0xff]
    %v4861 = vld [vmem:[%s4823 + $0x128] sm:$0xff]
    %v4862 = vld [vmem:[%s4823 + $0x130] sm:$0xff]
    %v4863 = vld [vmem:[%s4823 + $0x138] sm:$0xff]
    %v4864 = vld [vmem:[%s4823 + $0x140] sm:$0xff]
    %v4865 = vld [vmem:[%s4823 + $0x148] sm:$0xff]
    %v4866 = vld [vmem:[%s4823 + $0x150] sm:$0xff]
    %v4867 = vld [vmem:[%s4823 + $0x158] sm:$0xff]
    %v4868 = vld [vmem:[%s4823 + $0x160] sm:$0xff]
    %v4869 = vld [vmem:[%s4823 + $0x168] sm:$0xff]
    %v4870 = vld [vmem:[%s4823 + $0x170] sm:$0xff]
    %v4871 = vld [vmem:[%s4823 + $0x178] sm:$0xff]
    %v4872 = vld [vmem:[%s4823 + $0x180] sm:$0xff]
    %v4873 = vld [vmem:[%s4823 + $0x188] sm:$0xff]
    %v4874 = vld [vmem:[%s4823 + $0x190] sm:$0xff]
    %v4875 = vld [vmem:[%s4823 + $0x198] sm:$0xff]
    %v4876 = vld [vmem:[%s4823 + $0x1a0] sm:$0xff]
    %v4877 = vld [vmem:[%s4823 + $0x1a8] sm:$0xff]
    %v4878 = vld [vmem:[%s4823 + $0x1b0] sm:$0xff]
    %v4879 = vld [vmem:[%s4823 + $0x1b8] sm:$0xff]
    %v4880 = vld [vmem:[%s4823 + $0x1c0] sm:$0xff]
    %v4881 = vld [vmem:[%s4823 + $0x1c8] sm:$0xff]
    %v4882 = vld [vmem:[%s4823 + $0x1d0] sm:$0xff]
    %v4883 = vld [vmem:[%s4823 + $0x1d8] sm:$0xff]
    %v4884 = vld [vmem:[%s4823 + $0x1e0] sm:$0xff]
    %v4885 = vld [vmem:[%s4823 + $0x1e8] sm:$0xff]
    %v4886 = vld [vmem:[%s4823 + $0x1f0] sm:$0xff]
    %v4887 = vld [vmem:[%s4823 + $0x1f8] sm:$0xff]
    %v4888 = vld [vmem:[%s4823 + $0x200] sm:$0xff]
    %v4889 = vld [vmem:[%s4823 + $0x208] sm:$0xff]
    %v4890 = vld [vmem:[%s4823 + $0x210] sm:$0xff]
    %v4891 = vld [vmem:[%s4823 + $0x218] sm:$0xff]
    %v4892 = vld [vmem:[%s4823 + $0x220] sm:$0xff]
    %v4893 = vld [vmem:[%s4823 + $0x228] sm:$0xff]
    %v4894 = vld [vmem:[%s4823 + $0x230] sm:$0xff]
    %v4895 = vld [vmem:[%s4823 + $0x238] sm:$0xff]
    %v4896 = vld [vmem:[%s4823 + $0x240] sm:$0xff]
    %v4897 = vld [vmem:[%s4823 + $0x248] sm:$0xff]
    %v4898 = vld [vmem:[%s4823 + $0x250] sm:$0xff]
    %v4899 = vld [vmem:[%s4823 + $0x258] sm:$0xff]
    %v4900 = vld [vmem:[%s4823 + $0x260] sm:$0xff]
    %v4901 = vld [vmem:[%s4823 + $0x268] sm:$0xff]
    %v4902 = vld [vmem:[%s4823 + $0x270] sm:$0xff]
    %v4903 = vld [vmem:[%s4823 + $0x278] sm:$0xff]
    %v4904 = vld [vmem:[%s4823 + $0x280] sm:$0xff]
    %v4905 = vld [vmem:[%s4823 + $0x288] sm:$0xff]
    %v4906 = vld [vmem:[%s4823 + $0x290] sm:$0xff]
    %v4907 = vld [vmem:[%s4823 + $0x298] sm:$0xff]
    %v4908 = vld [vmem:[%s4823 + $0x2a0] sm:$0xff]
    %v4909 = vld [vmem:[%s4823 + $0x2a8] sm:$0xff]
    %v4910 = vld [vmem:[%s4823 + $0x2b0] sm:$0xff]
    %v4911 = vld [vmem:[%s4823 + $0x2b8] sm:$0xff]
    %v4912 = vld [vmem:[%s4823 + $0x2c0] sm:$0xff]
    %v4913 = vld [vmem:[%s4823 + $0x2c8] sm:$0xff]
    %v4914 = vld [vmem:[%s4823 + $0x2d0] sm:$0xff]
    %v4915 = vld [vmem:[%s4823 + $0x2d8] sm:$0xff]
    %v4916 = vld [vmem:[%s4823 + $0x2e0] sm:$0xff]
    %v4917 = vld [vmem:[%s4823 + $0x2e8] sm:$0xff]
    %v4918 = vld [vmem:[%s4823 + $0x2f0] sm:$0xff]
    %v4919 = vld [vmem:[%s4823 + $0x2f8] sm:$0xff]
    %v4920 = vld [vmem:[%s4823 + $0x300] sm:$0xff]
    %v4921 = vld [vmem:[%s4823 + $0x308] sm:$0xff]
    %v4922 = vld [vmem:[%s4823 + $0x310] sm:$0xff]
    %v4923 = vld [vmem:[%s4823 + $0x318] sm:$0xff]
    %v4924 = vld [vmem:[%s4823 + $0x320] sm:$0xff]
    %v4925 = vld [vmem:[%s4823 + $0x328] sm:$0xff]
    %v4926 = vld [vmem:[%s4823 + $0x330] sm:$0xff]
    %v4927 = vld [vmem:[%s4823 + $0x338] sm:$0xff]
    %v4928 = vld [vmem:[%s4823 + $0x340] sm:$0xff]
    %v4929 = vld [vmem:[%s4823 + $0x348] sm:$0xff]
    %v4930 = vld [vmem:[%s4823 + $0x350] sm:$0xff]
    %v4931 = vld [vmem:[%s4823 + $0x358] sm:$0xff]
    %v4932 = vld [vmem:[%s4823 + $0x360] sm:$0xff]
    %v4933 = vld [vmem:[%s4823 + $0x368] sm:$0xff]
    %v4934 = vld [vmem:[%s4823 + $0x370] sm:$0xff]
    %v4935 = vld [vmem:[%s4823 + $0x378] sm:$0xff]
    %v4936 = vld [vmem:[%s4823 + $0x380] sm:$0xff]
    %v4937 = vld [vmem:[%s4823 + $0x388] sm:$0xff]
    %v4938 = vld [vmem:[%s4823 + $0x390] sm:$0xff]
    %v4939 = vld [vmem:[%s4823 + $0x398] sm:$0xff]
    %v4940 = vld [vmem:[%s4823 + $0x3a0] sm:$0xff]
    %v4941 = vld [vmem:[%s4823 + $0x3a8] sm:$0xff]
    %v4942 = vld [vmem:[%s4823 + $0x3b0] sm:$0xff]
    %v4943 = vld [vmem:[%s4823 + $0x3b8] sm:$0xff]
    %v4944 = vld [vmem:[%s4823 + $0x3c0] sm:$0xff]
    %v4945 = vld [vmem:[%s4823 + $0x3c8] sm:$0xff]
    %v4946 = vld [vmem:[%s4823 + $0x3d0] sm:$0xff]
    %v4947 = vld [vmem:[%s4823 + $0x3d8] sm:$0xff]
    %v4948 = vld [vmem:[%s4823 + $0x3e0] sm:$0xff]
    %v4949 = vld [vmem:[%s4823 + $0x3e8] sm:$0xff]
    %v4950 = vld [vmem:[%s4823 + $0x3f0] sm:$0xff]
    %v4951 = vld [vmem:[%s4823 + $0x3f8] sm:$0xff]
    %s4952 = scalar_lea.vmem [#allocation6], 16
    %v4953 = vld [vmem:[%s4952] sm:$0xf]
    %v4955 = vlaneseq
    %v4956 = vshrl.u32 %v4955, 7
    %v4957 = vsub.s32 0, %v4956
    %v4958 = vrot.slane %v4953, %v4957
    %v4959 = vlaneseq
    %v4960 = vshrl.u32 %v4959, 7
    %v4961 = vsub.s32 1, %v4960
    %v4962 = vrot.slane %v4953, %v4961
    %v4963 = vlaneseq
    %v4964 = vshrl.u32 %v4963, 7
    %v4965 = vsub.s32 2, %v4964
    %v4966 = vrot.slane %v4953, %v4965
    %v4967 = vlaneseq
    %v4968 = vshrl.u32 %v4967, 7
    %v4969 = vsub.s32 3, %v4968
    %v4970 = vrot.slane %v4953, %v4969
    %v5103 = vunpack.c.l.b16 %v4824
    %v5104 = vunpack.c.h.b16 %v4824
    %v5105 = vunpack.c.l.b16 %v4825
    %v5106 = vunpack.c.h.b16 %v4825
    %v5107 = vunpack.c.l.b16 %v4826
    %v5108 = vunpack.c.h.b16 %v4826
    %v5109 = vunpack.c.l.b16 %v4827
    %v5110 = vunpack.c.h.b16 %v4827
    %v5111 = vunpack.c.l.b16 %v4828
    %v5112 = vunpack.c.h.b16 %v4828
    %v5113 = vunpack.c.l.b16 %v4829
    %v5114 = vunpack.c.h.b16 %v4829
    %v5115 = vunpack.c.l.b16 %v4830
    %v5116 = vunpack.c.h.b16 %v4830
    %v5117 = vunpack.c.l.b16 %v4831
    %v5118 = vunpack.c.h.b16 %v4831
    %v5119 = vunpack.c.l.b16 %v4832
    %v5120 = vunpack.c.h.b16 %v4832
    %v5121 = vunpack.c.l.b16 %v4833
    %v5122 = vunpack.c.h.b16 %v4833
    %v5123 = vunpack.c.l.b16 %v4834
    %v5124 = vunpack.c.h.b16 %v4834
    %v5125 = vunpack.c.l.b16 %v4835
    %v5126 = vunpack.c.h.b16 %v4835
    %v5127 = vunpack.c.l.b16 %v4836
    %v5128 = vunpack.c.h.b16 %v4836
    %v5129 = vunpack.c.l.b16 %v4837
    %v5130 = vunpack.c.h.b16 %v4837
    %v5131 = vunpack.c.l.b16 %v4838
    %v5132 = vunpack.c.h.b16 %v4838
    %v5133 = vunpack.c.l.b16 %v4839
    %v5134 = vunpack.c.h.b16 %v4839
    %v5135 = vunpack.c.l.b16 %v4840
    %v5136 = vunpack.c.h.b16 %v4840
    %v5137 = vunpack.c.l.b16 %v4841
    %v5138 = vunpack.c.h.b16 %v4841
    %v5139 = vunpack.c.l.b16 %v4842
    %v5140 = vunpack.c.h.b16 %v4842
    %v5141 = vunpack.c.l.b16 %v4843
    %v5142 = vunpack.c.h.b16 %v4843
    %v5143 = vunpack.c.l.b16 %v4844
    %v5144 = vunpack.c.h.b16 %v4844
    %v5145 = vunpack.c.l.b16 %v4845
    %v5146 = vunpack.c.h.b16 %v4845
    %v5147 = vunpack.c.l.b16 %v4846
    %v5148 = vunpack.c.h.b16 %v4846
    %v5149 = vunpack.c.l.b16 %v4847
    %v5150 = vunpack.c.h.b16 %v4847
    %v5151 = vunpack.c.l.b16 %v4848
    %v5152 = vunpack.c.h.b16 %v4848
    %v5153 = vunpack.c.l.b16 %v4849
    %v5154 = vunpack.c.h.b16 %v4849
    %v5155 = vunpack.c.l.b16 %v4850
    %v5156 = vunpack.c.h.b16 %v4850
    %v5157 = vunpack.c.l.b16 %v4851
    %v5158 = vunpack.c.h.b16 %v4851
    %v5159 = vunpack.c.l.b16 %v4852
    %v5160 = vunpack.c.h.b16 %v4852
    %v5161 = vunpack.c.l.b16 %v4853
    %v5162 = vunpack.c.h.b16 %v4853
    %v5163 = vunpack.c.l.b16 %v4854
    %v5164 = vunpack.c.h.b16 %v4854
    %v5165 = vunpack.c.l.b16 %v4855
    %v5166 = vunpack.c.h.b16 %v4855
    %v5167 = vunpack.c.l.b16 %v4856
    %v5168 = vunpack.c.h.b16 %v4856
    %v5169 = vunpack.c.l.b16 %v4857
    %v5170 = vunpack.c.h.b16 %v4857
    %v5171 = vunpack.c.l.b16 %v4858
    %v5172 = vunpack.c.h.b16 %v4858
    %v5173 = vunpack.c.l.b16 %v4859
    %v5174 = vunpack.c.h.b16 %v4859
    %v5175 = vunpack.c.l.b16 %v4860
    %v5176 = vunpack.c.h.b16 %v4860
    %v5177 = vunpack.c.l.b16 %v4861
    %v5178 = vunpack.c.h.b16 %v4861
    %v5179 = vunpack.c.l.b16 %v4862
    %v5180 = vunpack.c.h.b16 %v4862
    %v5181 = vunpack.c.l.b16 %v4863
    %v5182 = vunpack.c.h.b16 %v4863
    %v5183 = vunpack.c.l.b16 %v4864
    %v5184 = vunpack.c.h.b16 %v4864
    %v5185 = vunpack.c.l.b16 %v4865
    %v5186 = vunpack.c.h.b16 %v4865
    %v5187 = vunpack.c.l.b16 %v4866
    %v5188 = vunpack.c.h.b16 %v4866
    %v5189 = vunpack.c.l.b16 %v4867
    %v5190 = vunpack.c.h.b16 %v4867
    %v5191 = vunpack.c.l.b16 %v4868
    %v5192 = vunpack.c.h.b16 %v4868
    %v5193 = vunpack.c.l.b16 %v4869
    %v5194 = vunpack.c.h.b16 %v4869
    %v5195 = vunpack.c.l.b16 %v4870
    %v5196 = vunpack.c.h.b16 %v4870
    %v5197 = vunpack.c.l.b16 %v4871
    %v5198 = vunpack.c.h.b16 %v4871
    %v5199 = vunpack.c.l.b16 %v4872
    %v5200 = vunpack.c.h.b16 %v4872
    %v5201 = vunpack.c.l.b16 %v4873
    %v5202 = vunpack.c.h.b16 %v4873
    %v5203 = vunpack.c.l.b16 %v4874
    %v5204 = vunpack.c.h.b16 %v4874
    %v5205 = vunpack.c.l.b16 %v4875
    %v5206 = vunpack.c.h.b16 %v4875
    %v5207 = vunpack.c.l.b16 %v4876
    %v5208 = vunpack.c.h.b16 %v4876
    %v5209 = vunpack.c.l.b16 %v4877
    %v5210 = vunpack.c.h.b16 %v4877
    %v5211 = vunpack.c.l.b16 %v4878
    %v5212 = vunpack.c.h.b16 %v4878
    %v5213 = vunpack.c.l.b16 %v4879
    %v5214 = vunpack.c.h.b16 %v4879
    %v5215 = vunpack.c.l.b16 %v4880
    %v5216 = vunpack.c.h.b16 %v4880
    %v5217 = vunpack.c.l.b16 %v4881
    %v5218 = vunpack.c.h.b16 %v4881
    %v5219 = vunpack.c.l.b16 %v4882
    %v5220 = vunpack.c.h.b16 %v4882
    %v5221 = vunpack.c.l.b16 %v4883
    %v5222 = vunpack.c.h.b16 %v4883
    %v5223 = vunpack.c.l.b16 %v4884
    %v5224 = vunpack.c.h.b16 %v4884
    %v5225 = vunpack.c.l.b16 %v4885
    %v5226 = vunpack.c.h.b16 %v4885
    %v5227 = vunpack.c.l.b16 %v4886
    %v5228 = vunpack.c.h.b16 %v4886
    %v5229 = vunpack.c.l.b16 %v4887
    %v5230 = vunpack.c.h.b16 %v4887
    %v5231 = vunpack.c.l.b16 %v4888
    %v5232 = vunpack.c.h.b16 %v4888
    %v5233 = vunpack.c.l.b16 %v4889
    %v5234 = vunpack.c.h.b16 %v4889
    %v5235 = vunpack.c.l.b16 %v4890
    %v5236 = vunpack.c.h.b16 %v4890
    %v5237 = vunpack.c.l.b16 %v4891
    %v5238 = vunpack.c.h.b16 %v4891
    %v5239 = vunpack.c.l.b16 %v4892
    %v5240 = vunpack.c.h.b16 %v4892
    %v5241 = vunpack.c.l.b16 %v4893
    %v5242 = vunpack.c.h.b16 %v4893
    %v5243 = vunpack.c.l.b16 %v4894
    %v5244 = vunpack.c.h.b16 %v4894
    %v5245 = vunpack.c.l.b16 %v4895
    %v5246 = vunpack.c.h.b16 %v4895
    %v5247 = vunpack.c.l.b16 %v4896
    %v5248 = vunpack.c.h.b16 %v4896
    %v5249 = vunpack.c.l.b16 %v4897
    %v5250 = vunpack.c.h.b16 %v4897
    %v5251 = vunpack.c.l.b16 %v4898
    %v5252 = vunpack.c.h.b16 %v4898
    %v5253 = vunpack.c.l.b16 %v4899
    %v5254 = vunpack.c.h.b16 %v4899
    %v5255 = vunpack.c.l.b16 %v4900
    %v5256 = vunpack.c.h.b16 %v4900
    %v5257 = vunpack.c.l.b16 %v4901
    %v5258 = vunpack.c.h.b16 %v4901
    %v5259 = vunpack.c.l.b16 %v4902
    %v5260 = vunpack.c.h.b16 %v4902
    %v5261 = vunpack.c.l.b16 %v4903
    %v5262 = vunpack.c.h.b16 %v4903
    %v5263 = vunpack.c.l.b16 %v4904
    %v5264 = vunpack.c.h.b16 %v4904
    %v5265 = vunpack.c.l.b16 %v4905
    %v5266 = vunpack.c.h.b16 %v4905
    %v5267 = vunpack.c.l.b16 %v4906
    %v5268 = vunpack.c.h.b16 %v4906
    %v5269 = vunpack.c.l.b16 %v4907
    %v5270 = vunpack.c.h.b16 %v4907
    %v5271 = vunpack.c.l.b16 %v4908
    %v5272 = vunpack.c.h.b16 %v4908
    %v5273 = vunpack.c.l.b16 %v4909
    %v5274 = vunpack.c.h.b16 %v4909
    %v5275 = vunpack.c.l.b16 %v4910
    %v5276 = vunpack.c.h.b16 %v4910
    %v5277 = vunpack.c.l.b16 %v4911
    %v5278 = vunpack.c.h.b16 %v4911
    %v5279 = vunpack.c.l.b16 %v4912
    %v5280 = vunpack.c.h.b16 %v4912
    %v5281 = vunpack.c.l.b16 %v4913
    %v5282 = vunpack.c.h.b16 %v4913
    %v5283 = vunpack.c.l.b16 %v4914
    %v5284 = vunpack.c.h.b16 %v4914
    %v5285 = vunpack.c.l.b16 %v4915
    %v5286 = vunpack.c.h.b16 %v4915
    %v5287 = vunpack.c.l.b16 %v4916
    %v5288 = vunpack.c.h.b16 %v4916
    %v5289 = vunpack.c.l.b16 %v4917
    %v5290 = vunpack.c.h.b16 %v4917
    %v5291 = vunpack.c.l.b16 %v4918
    %v5292 = vunpack.c.h.b16 %v4918
    %v5293 = vunpack.c.l.b16 %v4919
    %v5294 = vunpack.c.h.b16 %v4919
    %v5295 = vunpack.c.l.b16 %v4920
    %v5296 = vunpack.c.h.b16 %v4920
    %v5297 = vunpack.c.l.b16 %v4921
    %v5298 = vunpack.c.h.b16 %v4921
    %v5299 = vunpack.c.l.b16 %v4922
    %v5300 = vunpack.c.h.b16 %v4922
    %v5301 = vunpack.c.l.b16 %v4923
    %v5302 = vunpack.c.h.b16 %v4923
    %v5303 = vunpack.c.l.b16 %v4924
    %v5304 = vunpack.c.h.b16 %v4924
    %v5305 = vunpack.c.l.b16 %v4925
    %v5306 = vunpack.c.h.b16 %v4925
    %v5307 = vunpack.c.l.b16 %v4926
    %v5308 = vunpack.c.h.b16 %v4926
    %v5309 = vunpack.c.l.b16 %v4927
    %v5310 = vunpack.c.h.b16 %v4927
    %v5311 = vunpack.c.l.b16 %v4928
    %v5312 = vunpack.c.h.b16 %v4928
    %v5313 = vunpack.c.l.b16 %v4929
    %v5314 = vunpack.c.h.b16 %v4929
    %v5315 = vunpack.c.l.b16 %v4930
    %v5316 = vunpack.c.h.b16 %v4930
    %v5317 = vunpack.c.l.b16 %v4931
    %v5318 = vunpack.c.h.b16 %v4931
    %v5319 = vunpack.c.l.b16 %v4932
    %v5320 = vunpack.c.h.b16 %v4932
    %v5321 = vunpack.c.l.b16 %v4933
    %v5322 = vunpack.c.h.b16 %v4933
    %v5323 = vunpack.c.l.b16 %v4934
    %v5324 = vunpack.c.h.b16 %v4934
    %v5325 = vunpack.c.l.b16 %v4935
    %v5326 = vunpack.c.h.b16 %v4935
    %v5327 = vunpack.c.l.b16 %v4936
    %v5328 = vunpack.c.h.b16 %v4936
    %v5329 = vunpack.c.l.b16 %v4937
    %v5330 = vunpack.c.h.b16 %v4937
    %v5331 = vunpack.c.l.b16 %v4938
    %v5332 = vunpack.c.h.b16 %v4938
    %v5333 = vunpack.c.l.b16 %v4939
    %v5334 = vunpack.c.h.b16 %v4939
    %v5335 = vunpack.c.l.b16 %v4940
    %v5336 = vunpack.c.h.b16 %v4940
    %v5337 = vunpack.c.l.b16 %v4941
    %v5338 = vunpack.c.h.b16 %v4941
    %v5339 = vunpack.c.l.b16 %v4942
    %v5340 = vunpack.c.h.b16 %v4942
    %v5341 = vunpack.c.l.b16 %v4943
    %v5342 = vunpack.c.h.b16 %v4943
    %v5343 = vunpack.c.l.b16 %v4944
    %v5344 = vunpack.c.h.b16 %v4944
    %v5345 = vunpack.c.l.b16 %v4945
    %v5346 = vunpack.c.h.b16 %v4945
    %v5347 = vunpack.c.l.b16 %v4946
    %v5348 = vunpack.c.h.b16 %v4946
    %v5349 = vunpack.c.l.b16 %v4947
    %v5350 = vunpack.c.h.b16 %v4947
    %v5351 = vunpack.c.l.b16 %v4948
    %v5352 = vunpack.c.h.b16 %v4948
    %v5353 = vunpack.c.l.b16 %v4949
    %v5354 = vunpack.c.h.b16 %v4949
    %v5355 = vunpack.c.l.b16 %v4950
    %v5356 = vunpack.c.h.b16 %v4950
    %v5357 = vunpack.c.l.b16 %v4951
    %v5358 = vunpack.c.h.b16 %v4951
    %v5359 = vpack.c.b16 %v5107, %v5103
    %v5360 = vpack.c.b16 %v5108, %v5104
    %v5361 = vpack.c.b16 %v5109, %v5105
    %v5362 = vpack.c.b16 %v5110, %v5106
    %v5363 = vpack.c.b16 %v5115, %v5111
    %v5364 = vpack.c.b16 %v5116, %v5112
    %v5365 = vpack.c.b16 %v5117, %v5113
    %v5366 = vpack.c.b16 %v5118, %v5114
    %v5367 = vpack.c.b16 %v5123, %v5119
    %v5368 = vpack.c.b16 %v5124, %v5120
    %v5369 = vpack.c.b16 %v5125, %v5121
    %v5370 = vpack.c.b16 %v5126, %v5122
    %v5371 = vpack.c.b16 %v5131, %v5127
    %v5372 = vpack.c.b16 %v5132, %v5128
    %v5373 = vpack.c.b16 %v5133, %v5129
    %v5374 = vpack.c.b16 %v5134, %v5130
    %v5375 = vpack.c.b16 %v5139, %v5135
    %v5376 = vpack.c.b16 %v5140, %v5136
    %v5377 = vpack.c.b16 %v5141, %v5137
    %v5378 = vpack.c.b16 %v5142, %v5138
    %v5379 = vpack.c.b16 %v5147, %v5143
    %v5380 = vpack.c.b16 %v5148, %v5144
    %v5381 = vpack.c.b16 %v5149, %v5145
    %v5382 = vpack.c.b16 %v5150, %v5146
    %v5383 = vpack.c.b16 %v5155, %v5151
    %v5384 = vpack.c.b16 %v5156, %v5152
    %v5385 = vpack.c.b16 %v5157, %v5153
    %v5386 = vpack.c.b16 %v5158, %v5154
    %v5387 = vpack.c.b16 %v5163, %v5159
    %v5388 = vpack.c.b16 %v5164, %v5160
    %v5389 = vpack.c.b16 %v5165, %v5161
    %v5390 = vpack.c.b16 %v5166, %v5162
    %v5391 = vpack.c.b16 %v5171, %v5167
    %v5392 = vpack.c.b16 %v5172, %v5168
    %v5393 = vpack.c.b16 %v5173, %v5169
    %v5394 = vpack.c.b16 %v5174, %v5170
    %v5395 = vpack.c.b16 %v5179, %v5175
    %v5396 = vpack.c.b16 %v5180, %v5176
    %v5397 = vpack.c.b16 %v5181, %v5177
    %v5398 = vpack.c.b16 %v5182, %v5178
    %v5399 = vpack.c.b16 %v5187, %v5183
    %v5400 = vpack.c.b16 %v5188, %v5184
    %v5401 = vpack.c.b16 %v5189, %v5185
    %v5402 = vpack.c.b16 %v5190, %v5186
    %v5403 = vpack.c.b16 %v5195, %v5191
    %v5404 = vpack.c.b16 %v5196, %v5192
    %v5405 = vpack.c.b16 %v5197, %v5193
    %v5406 = vpack.c.b16 %v5198, %v5194
    %v5407 = vpack.c.b16 %v5203, %v5199
    %v5408 = vpack.c.b16 %v5204, %v5200
    %v5409 = vpack.c.b16 %v5205, %v5201
    %v5410 = vpack.c.b16 %v5206, %v5202
    %v5411 = vpack.c.b16 %v5211, %v5207
    %v5412 = vpack.c.b16 %v5212, %v5208
    %v5413 = vpack.c.b16 %v5213, %v5209
    %v5414 = vpack.c.b16 %v5214, %v5210
    %v5415 = vpack.c.b16 %v5219, %v5215
    %v5416 = vpack.c.b16 %v5220, %v5216
    %v5417 = vpack.c.b16 %v5221, %v5217
    %v5418 = vpack.c.b16 %v5222, %v5218
    %v5419 = vpack.c.b16 %v5227, %v5223
    %v5420 = vpack.c.b16 %v5228, %v5224
    %v5421 = vpack.c.b16 %v5229, %v5225
    %v5422 = vpack.c.b16 %v5230, %v5226
    %v5423 = vpack.c.b16 %v5235, %v5231
    %v5424 = vpack.c.b16 %v5236, %v5232
    %v5425 = vpack.c.b16 %v5237, %v5233
    %v5426 = vpack.c.b16 %v5238, %v5234
    %v5427 = vpack.c.b16 %v5243, %v5239
    %v5428 = vpack.c.b16 %v5244, %v5240
    %v5429 = vpack.c.b16 %v5245, %v5241
    %v5430 = vpack.c.b16 %v5246, %v5242
    %v5431 = vpack.c.b16 %v5251, %v5247
    %v5432 = vpack.c.b16 %v5252, %v5248
    %v5433 = vpack.c.b16 %v5253, %v5249
    %v5434 = vpack.c.b16 %v5254, %v5250
    %v5435 = vpack.c.b16 %v5259, %v5255
    %v5436 = vpack.c.b16 %v5260, %v5256
    %v5437 = vpack.c.b16 %v5261, %v5257
    %v5438 = vpack.c.b16 %v5262, %v5258
    %v5439 = vpack.c.b16 %v5267, %v5263
    %v5440 = vpack.c.b16 %v5268, %v5264
    %v5441 = vpack.c.b16 %v5269, %v5265
    %v5442 = vpack.c.b16 %v5270, %v5266
    %v5443 = vpack.c.b16 %v5275, %v5271
    %v5444 = vpack.c.b16 %v5276, %v5272
    %v5445 = vpack.c.b16 %v5277, %v5273
    %v5446 = vpack.c.b16 %v5278, %v5274
    %v5447 = vpack.c.b16 %v5283, %v5279
    %v5448 = vpack.c.b16 %v5284, %v5280
    %v5449 = vpack.c.b16 %v5285, %v5281
    %v5450 = vpack.c.b16 %v5286, %v5282
    %v5451 = vpack.c.b16 %v5291, %v5287
    %v5452 = vpack.c.b16 %v5292, %v5288
    %v5453 = vpack.c.b16 %v5293, %v5289
    %v5454 = vpack.c.b16 %v5294, %v5290
    %v5455 = vpack.c.b16 %v5299, %v5295
    %v5456 = vpack.c.b16 %v5300, %v5296
    %v5457 = vpack.c.b16 %v5301, %v5297
    %v5458 = vpack.c.b16 %v5302, %v5298
    %v5459 = vpack.c.b16 %v5307, %v5303
    %v5460 = vpack.c.b16 %v5308, %v5304
    %v5461 = vpack.c.b16 %v5309, %v5305
    %v5462 = vpack.c.b16 %v5310, %v5306
    %v5463 = vpack.c.b16 %v5315, %v5311
    %v5464 = vpack.c.b16 %v5316, %v5312
    %v5465 = vpack.c.b16 %v5317, %v5313
    %v5466 = vpack.c.b16 %v5318, %v5314
    %v5467 = vpack.c.b16 %v5323, %v5319
    %v5468 = vpack.c.b16 %v5324, %v5320
    %v5469 = vpack.c.b16 %v5325, %v5321
    %v5470 = vpack.c.b16 %v5326, %v5322
    %v5471 = vpack.c.b16 %v5331, %v5327
    %v5472 = vpack.c.b16 %v5332, %v5328
    %v5473 = vpack.c.b16 %v5333, %v5329
    %v5474 = vpack.c.b16 %v5334, %v5330
    %v5475 = vpack.c.b16 %v5339, %v5335
    %v5476 = vpack.c.b16 %v5340, %v5336
    %v5477 = vpack.c.b16 %v5341, %v5337
    %v5478 = vpack.c.b16 %v5342, %v5338
    %v5479 = vpack.c.b16 %v5347, %v5343
    %v5480 = vpack.c.b16 %v5348, %v5344
    %v5481 = vpack.c.b16 %v5349, %v5345
    %v5482 = vpack.c.b16 %v5350, %v5346
    %v5483 = vpack.c.b16 %v5355, %v5351
    %v5484 = vpack.c.b16 %v5356, %v5352
    %v5485 = vpack.c.b16 %v5357, %v5353
    %v5486 = vpack.c.b16 %v5358, %v5354
    %5615 = vmatprep.subr.bf16.mxu0 %v5360
    %5616 = vmatpush1.bf16.msra.mxu0 %v5359
    %5617 = vmatprep.subr.bf16.mxu0 %v5364
    %5618 = vmatpush1.bf16.msra.mxu0 %v5363
    %5619 = vmatprep.subr.bf16.mxu0 %v5368
    %5620 = vmatpush1.bf16.msra.mxu0 %v5367
    %5621 = vmatprep.subr.bf16.mxu0 %v5372
    %5622 = vmatpush1.bf16.msra.mxu0 %v5371
    %5623 = vmatprep.subr.bf16.mxu0 %v5376
    %5624 = vmatpush1.bf16.msra.mxu0 %v5375
    %5625 = vmatprep.subr.bf16.mxu0 %v5380
    %5626 = vmatpush1.bf16.msra.mxu0 %v5379
    %5627 = vmatprep.subr.bf16.mxu0 %v5384
    %5628 = vmatpush1.bf16.msra.mxu0 %v5383
    %5629 = vmatprep.subr.bf16.mxu0 %v5388
    %5630 = vmatpush1.bf16.msra.mxu0 %v5387
    %5631 = vmatprep.subr.bf16.mxu0 %v5392
    %5632 = vmatpush1.bf16.msra.mxu0 %v5391
    %5633 = vmatprep.subr.bf16.mxu0 %v5396
    %5634 = vmatpush1.bf16.msra.mxu0 %v5395
    %5635 = vmatprep.subr.bf16.mxu0 %v5400
    %5636 = vmatpush1.bf16.msra.mxu0 %v5399
    %5637 = vmatprep.subr.bf16.mxu0 %v5404
    %5638 = vmatpush1.bf16.msra.mxu0 %v5403
    %5639 = vmatprep.subr.bf16.mxu0 %v5408
    %5640 = vmatpush1.bf16.msra.mxu0 %v5407
    %5641 = vmatprep.subr.bf16.mxu0 %v5412
    %5642 = vmatpush1.bf16.msra.mxu0 %v5411
    %5643 = vmatprep.subr.bf16.mxu0 %v5416
    %5644 = vmatpush1.bf16.msra.mxu0 %v5415
    %5645 = vmatprep.subr.bf16.mxu0 %v5420
    %5646 = vmatpush1.bf16.msra.mxu0 %v5419
    %5647 = vmatprep.mubr.bf16.mxu0 %v4820
    %5648 = vmatmul.mubr.bf16.gmra.mrb[0].mxu0 %v4819
    %v5649 = vpop.f32.mrb[0].mxu0
    %v5650 = vadd.f32 %v4958, %v5649
    %v5651 = vpop.f32.mrb[0].mxu0
    %v5652 = vadd.f32 %v4962, %v5651
    %v5653 = vpop.f32.mrb[0].mxu0
    %v5654 = vpop.f32.mrb[0].mxu0
    %5655 = vdwg.mxu0
    %5656 = vmatprep.subr.bf16.mxu0 %v5424
    %5657 = vmatpush1.bf16.msra.mxu0 %v5423
    %5658 = vmatprep.subr.bf16.mxu0 %v5428
    %5659 = vmatpush1.bf16.msra.mxu0 %v5427
    %5660 = vmatprep.subr.bf16.mxu0 %v5432
    %5661 = vmatpush1.bf16.msra.mxu0 %v5431
    %5662 = vmatprep.subr.bf16.mxu0 %v5436
    %5663 = vmatpush1.bf16.msra.mxu0 %v5435
    %5664 = vmatprep.subr.bf16.mxu0 %v5440
    %5665 = vmatpush1.bf16.msra.mxu0 %v5439
    %5666 = vmatprep.subr.bf16.mxu0 %v5444
    %5667 = vmatpush1.bf16.msra.mxu0 %v5443
    %5668 = vmatprep.subr.bf16.mxu0 %v5448
    %5669 = vmatpush1.bf16.msra.mxu0 %v5447
    %5670 = vmatprep.subr.bf16.mxu0 %v5452
    %5671 = vmatpush1.bf16.msra.mxu0 %v5451
    %5672 = vmatprep.subr.bf16.mxu0 %v5456
    %5673 = vmatpush1.bf16.msra.mxu0 %v5455
    %5674 = vmatprep.subr.bf16.mxu0 %v5460
    %5675 = vmatpush1.bf16.msra.mxu0 %v5459
    %5676 = vmatprep.subr.bf16.mxu0 %v5464
    %5677 = vmatpush1.bf16.msra.mxu0 %v5463
    %5678 = vmatprep.subr.bf16.mxu0 %v5468
    %5679 = vmatpush1.bf16.msra.mxu0 %v5467
    %5680 = vmatprep.subr.bf16.mxu0 %v5472
    %5681 = vmatpush1.bf16.msra.mxu0 %v5471
    %5682 = vmatprep.subr.bf16.mxu0 %v5476
    %5683 = vmatpush1.bf16.msra.mxu0 %v5475
    %5684 = vmatprep.subr.bf16.mxu0 %v5480
    %5685 = vmatpush1.bf16.msra.mxu0 %v5479
    %5686 = vmatprep.subr.bf16.mxu0 %v5484
    %5687 = vmatpush1.bf16.msra.mxu0 %v5483
    %5688 = vmatprep.mubr.bf16.mxu0 %v4822
    %5689 = vmatmul.mubr.bf16.gmra.mrb[0].mxu0 %v4821
    %v5690 = vpop.f32.mrb[0].mxu0
    %v5691 = vadd.f32 %v5650, %v5690
    %v5692 = vpop.f32.mrb[0].mxu0
    %v5693 = vadd.f32 %v5652, %v5692
    %v5694 = vpop.f32.mrb[0].mxu0
    %v5695 = vpop.f32.mrb[0].mxu0
    %5696 = vdwg.mxu0
    %5697 = vmatprep.subr.bf16.mxu0 %v5362
    %5698 = vmatpush1.bf16.msra.mxu0 %v5361
    %5699 = vmatprep.subr.bf16.mxu0 %v5366
    %5700 = vmatpush1.bf16.msra.mxu0 %v5365
    %5701 = vmatprep.subr.bf16.mxu0 %v5370
    %5702 = vmatpush1.bf16.msra.mxu0 %v5369
    %5703 = vmatprep.subr.bf16.mxu0 %v5374
    %5704 = vmatpush1.bf16.msra.mxu0 %v5373
    %5705 = vmatprep.subr.bf16.mxu0 %v5378
    %5706 = vmatpush1.bf16.msra.mxu0 %v5377
    %5707 = vmatprep.subr.bf16.mxu0 %v5382
    %5708 = vmatpush1.bf16.msra.mxu0 %v5381
    %5709 = vmatprep.subr.bf16.mxu0 %v5386
    %5710 = vmatpush1.bf16.msra.mxu0 %v5385
    %5711 = vmatprep.subr.bf16.mxu0 %v5390
    %5712 = vmatpush1.bf16.msra.mxu0 %v5389
    %5713 = vmatprep.subr.bf16.mxu0 %v5394
    %5714 = vmatpush1.bf16.msra.mxu0 %v5393
    %5715 = vmatprep.subr.bf16.mxu0 %v5398
    %5716 = vmatpush1.bf16.msra.mxu0 %v5397
    %5717 = vmatprep.subr.bf16.mxu0 %v5402
    %5718 = vmatpush1.bf16.msra.mxu0 %v5401
    %5719 = vmatprep.subr.bf16.mxu0 %v5406
    %5720 = vmatpush1.bf16.msra.mxu0 %v5405
    %5721 = vmatprep.subr.bf16.mxu0 %v5410
    %5722 = vmatpush1.bf16.msra.mxu0 %v5409
    %5723 = vmatprep.subr.bf16.mxu0 %v5414
    %5724 = vmatpush1.bf16.msra.mxu0 %v5413
    %5725 = vmatprep.subr.bf16.mxu0 %v5418
    %5726 = vmatpush1.bf16.msra.mxu0 %v5417
    %5727 = vmatprep.subr.bf16.mxu0 %v5422
    %5728 = vmatpush1.bf16.msra.mxu0 %v5421
    %5729 = vmatprep.mubr.bf16.mxu0 %v4820
    %5730 = vmatmul.mubr.bf16.gmra.mrb[0].mxu0 %v4819
    %v5731 = vpop.f32.mrb[0].mxu0
    %v5732 = vadd.f32 %v4966, %v5731
    %v5733 = vpop.f32.mrb[0].mxu0
    %v5734 = vadd.f32 %v4970, %v5733
    %v5735 = vpop.f32.mrb[0].mxu0
    %v5736 = vpop.f32.mrb[0].mxu0
    %5737 = vdwg.mxu0
    %5738 = vmatprep.subr.bf16.mxu0 %v5426
    %5739 = vmatpush1.bf16.msra.mxu0 %v5425
    %5740 = vmatprep.subr.bf16.mxu0 %v5430
    %5741 = vmatpush1.bf16.msra.mxu0 %v5429
    %5742 = vmatprep.subr.bf16.mxu0 %v5434
    %5743 = vmatpush1.bf16.msra.mxu0 %v5433
    %5744 = vmatprep.subr.bf16.mxu0 %v5438
    %5745 = vmatpush1.bf16.msra.mxu0 %v5437
    %5746 = vmatprep.subr.bf16.mxu0 %v5442
    %5747 = vmatpush1.bf16.msra.mxu0 %v5441
    %5748 = vmatprep.subr.bf16.mxu0 %v5446
    %5749 = vmatpush1.bf16.msra.mxu0 %v5445
    %5750 = vmatprep.subr.bf16.mxu0 %v5450
    %5751 = vmatpush1.bf16.msra.mxu0 %v5449
    %5752 = vmatprep.subr.bf16.mxu0 %v5454
    %5753 = vmatpush1.bf16.msra.mxu0 %v5453
    %5754 = vmatprep.subr.bf16.mxu0 %v5458
    %5755 = vmatpush1.bf16.msra.mxu0 %v5457
    %5756 = vmatprep.subr.bf16.mxu0 %v5462
    %5757 = vmatpush1.bf16.msra.mxu0 %v5461
    %5758 = vmatprep.subr.bf16.mxu0 %v5466
    %5759 = vmatpush1.bf16.msra.mxu0 %v5465
    %5760 = vmatprep.subr.bf16.mxu0 %v5470
    %5761 = vmatpush1.bf16.msra.mxu0 %v5469
    %5762 = vmatprep.subr.bf16.mxu0 %v5474
    %5763 = vmatpush1.bf16.msra.mxu0 %v5473
    %5764 = vmatprep.subr.bf16.mxu0 %v5478
    %5765 = vmatpush1.bf16.msra.mxu0 %v5477
    %5766 = vmatprep.subr.bf16.mxu0 %v5482
    %5767 = vmatpush1.bf16.msra.mxu0 %v5481
    %5768 = vmatprep.subr.bf16.mxu0 %v5486
    %5769 = vmatpush1.bf16.msra.mxu0 %v5485
    %5770 = vmatprep.mubr.bf16.mxu0 %v4822
    %5771 = vmatmul.mubr.bf16.gmra.mrb[0].mxu0 %v4821
    %v5772 = vpop.f32.mrb[0].mxu0
    %v5773 = vadd.f32 %v5732, %v5772
    %v5774 = vpop.f32.mrb[0].mxu0
    %v5775 = vadd.f32 %v5734, %v5774
    %v5776 = vpop.f32.mrb[0].mxu0
    %v5777 = vpop.f32.mrb[0].mxu0
    %5778 = vdwg.mxu0
    %vm5779 = vcmp.ge.f32.partialorder %v5691, 0.0
    %vm5780 = vcmp.ge.f32.partialorder %v5693, 0.0
    %vm5781 = vcmp.ge.f32.partialorder %v5773, 0.0
    %vm5782 = vcmp.ge.f32.partialorder %v5775, 0.0
    %v5783 = vmul.f32 %v5691, 0.2
    %v5784 = vmul.f32 %v5693, 0.2
    %v5785 = vmul.f32 %v5773, 0.2
    %v5786 = vmul.f32 %v5775, 0.2
    %v5787 = vsel %vm5779, %v5691, %v5783
    %v5788 = vsel %vm5780, %v5693, %v5784
    %v5789 = vsel %vm5781, %v5773, %v5785
    %v5790 = vsel %vm5782, %v5775, %v5786
    %v5791 = vpack.c.bf16 %v5787, %v5787
    %v5792 = vpack.c.bf16 %v5788, %v5788
    %v5793 = vpack.c.bf16 %v5789, %v5789
    %v5794 = vpack.c.bf16 %v5790, %v5790
    %s5795 = scalar_lea.vmem [#allocation4], 5120
    %v5796 = vld [vmem:[%s5795] sm:$0xff]
    %v5797 = vld [vmem:[%s5795 + $0x8] sm:$0xff]
    %v5798 = vld [vmem:[%s5795 + $0x10] sm:$0xff]
    %v5799 = vld [vmem:[%s5795 + $0x18] sm:$0xff]
    %v5800 = vld [vmem:[%s5795 + $0x20] sm:$0xff]
    %v5801 = vld [vmem:[%s5795 + $0x28] sm:$0xff]
    %v5802 = vld [vmem:[%s5795 + $0x30] sm:$0xff]
    %v5803 = vld [vmem:[%s5795 + $0x38] sm:$0xff]
    %v5804 = vld [vmem:[%s5795 + $0x40] sm:$0xff]
    %v5805 = vld [vmem:[%s5795 + $0x48] sm:$0xff]
    %v5806 = vld [vmem:[%s5795 + $0x50] sm:$0xff]
    %v5807 = vld [vmem:[%s5795 + $0x58] sm:$0xff]
    %v5808 = vld [vmem:[%s5795 + $0x60] sm:$0xff]
    %v5809 = vld [vmem:[%s5795 + $0x68] sm:$0xff]
    %v5810 = vld [vmem:[%s5795 + $0x70] sm:$0xff]
    %v5811 = vld [vmem:[%s5795 + $0x78] sm:$0xff]
    %v5812 = vld [vmem:[%s5795 + $0x80] sm:$0xff]
    %v5813 = vld [vmem:[%s5795 + $0x88] sm:$0xff]
    %v5814 = vld [vmem:[%s5795 + $0x90] sm:$0xff]
    %v5815 = vld [vmem:[%s5795 + $0x98] sm:$0xff]
    %v5816 = vld [vmem:[%s5795 + $0xa0] sm:$0xff]
    %v5817 = vld [vmem:[%s5795 + $0xa8] sm:$0xff]
    %v5818 = vld [vmem:[%s5795 + $0xb0] sm:$0xff]
    %v5819 = vld [vmem:[%s5795 + $0xb8] sm:$0xff]
    %v5820 = vld [vmem:[%s5795 + $0xc0] sm:$0xff]
    %v5821 = vld [vmem:[%s5795 + $0xc8] sm:$0xff]
    %v5822 = vld [vmem:[%s5795 + $0xd0] sm:$0xff]
    %v5823 = vld [vmem:[%s5795 + $0xd8] sm:$0xff]
    %v5824 = vld [vmem:[%s5795 + $0xe0] sm:$0xff]
    %v5825 = vld [vmem:[%s5795 + $0xe8] sm:$0xff]
    %v5826 = vld [vmem:[%s5795 + $0xf0] sm:$0xff]
    %v5827 = vld [vmem:[%s5795 + $0xf8] sm:$0xff]
    %v5828 = vld [vmem:[%s5795 + $0x100] sm:$0xff]
    %v5829 = vld [vmem:[%s5795 + $0x108] sm:$0xff]
    %v5830 = vld [vmem:[%s5795 + $0x110] sm:$0xff]
    %v5831 = vld [vmem:[%s5795 + $0x118] sm:$0xff]
    %v5832 = vld [vmem:[%s5795 + $0x120] sm:$0xff]
    %v5833 = vld [vmem:[%s5795 + $0x128] sm:$0xff]
    %v5834 = vld [vmem:[%s5795 + $0x130] sm:$0xff]
    %v5835 = vld [vmem:[%s5795 + $0x138] sm:$0xff]
    %v5836 = vld [vmem:[%s5795 + $0x140] sm:$0xff]
    %v5837 = vld [vmem:[%s5795 + $0x148] sm:$0xff]
    %v5838 = vld [vmem:[%s5795 + $0x150] sm:$0xff]
    %v5839 = vld [vmem:[%s5795 + $0x158] sm:$0xff]
    %v5840 = vld [vmem:[%s5795 + $0x160] sm:$0xff]
    %v5841 = vld [vmem:[%s5795 + $0x168] sm:$0xff]
    %v5842 = vld [vmem:[%s5795 + $0x170] sm:$0xff]
    %v5843 = vld [vmem:[%s5795 + $0x178] sm:$0xff]
    %v5844 = vld [vmem:[%s5795 + $0x180] sm:$0xff]
    %v5845 = vld [vmem:[%s5795 + $0x188] sm:$0xff]
    %v5846 = vld [vmem:[%s5795 + $0x190] sm:$0xff]
    %v5847 = vld [vmem:[%s5795 + $0x198] sm:$0xff]
    %v5848 = vld [vmem:[%s5795 + $0x1a0] sm:$0xff]
    %v5849 = vld [vmem:[%s5795 + $0x1a8] sm:$0xff]
    %v5850 = vld [vmem:[%s5795 + $0x1b0] sm:$0xff]
    %v5851 = vld [vmem:[%s5795 + $0x1b8] sm:$0xff]
    %v5852 = vld [vmem:[%s5795 + $0x1c0] sm:$0xff]
    %v5853 = vld [vmem:[%s5795 + $0x1c8] sm:$0xff]
    %v5854 = vld [vmem:[%s5795 + $0x1d0] sm:$0xff]
    %v5855 = vld [vmem:[%s5795 + $0x1d8] sm:$0xff]
    %v5856 = vld [vmem:[%s5795 + $0x1e0] sm:$0xff]
    %v5857 = vld [vmem:[%s5795 + $0x1e8] sm:$0xff]
    %v5858 = vld [vmem:[%s5795 + $0x1f0] sm:$0xff]
    %v5859 = vld [vmem:[%s5795 + $0x1f8] sm:$0xff]
    %v5860 = vld [vmem:[%s5795 + $0x200] sm:$0xff]
    %v5861 = vld [vmem:[%s5795 + $0x208] sm:$0xff]
    %v5862 = vld [vmem:[%s5795 + $0x210] sm:$0xff]
    %v5863 = vld [vmem:[%s5795 + $0x218] sm:$0xff]
    %v5864 = vld [vmem:[%s5795 + $0x220] sm:$0xff]
    %v5865 = vld [vmem:[%s5795 + $0x228] sm:$0xff]
    %v5866 = vld [vmem:[%s5795 + $0x230] sm:$0xff]
    %v5867 = vld [vmem:[%s5795 + $0x238] sm:$0xff]
    %v5868 = vld [vmem:[%s5795 + $0x240] sm:$0xff]
    %v5869 = vld [vmem:[%s5795 + $0x248] sm:$0xff]
    %v5870 = vld [vmem:[%s5795 + $0x250] sm:$0xff]
    %v5871 = vld [vmem:[%s5795 + $0x258] sm:$0xff]
    %v5872 = vld [vmem:[%s5795 + $0x260] sm:$0xff]
    %v5873 = vld [vmem:[%s5795 + $0x268] sm:$0xff]
    %v5874 = vld [vmem:[%s5795 + $0x270] sm:$0xff]
    %v5875 = vld [vmem:[%s5795 + $0x278] sm:$0xff]
    %v5876 = vld [vmem:[%s5795 + $0x280] sm:$0xff]
    %v5877 = vld [vmem:[%s5795 + $0x288] sm:$0xff]
    %v5878 = vld [vmem:[%s5795 + $0x290] sm:$0xff]
    %v5879 = vld [vmem:[%s5795 + $0x298] sm:$0xff]
    %v5880 = vld [vmem:[%s5795 + $0x2a0] sm:$0xff]
    %v5881 = vld [vmem:[%s5795 + $0x2a8] sm:$0xff]
    %v5882 = vld [vmem:[%s5795 + $0x2b0] sm:$0xff]
    %v5883 = vld [vmem:[%s5795 + $0x2b8] sm:$0xff]
    %v5884 = vld [vmem:[%s5795 + $0x2c0] sm:$0xff]
    %v5885 = vld [vmem:[%s5795 + $0x2c8] sm:$0xff]
    %v5886 = vld [vmem:[%s5795 + $0x2d0] sm:$0xff]
    %v5887 = vld [vmem:[%s5795 + $0x2d8] sm:$0xff]
    %v5888 = vld [vmem:[%s5795 + $0x2e0] sm:$0xff]
    %v5889 = vld [vmem:[%s5795 + $0x2e8] sm:$0xff]
    %v5890 = vld [vmem:[%s5795 + $0x2f0] sm:$0xff]
    %v5891 = vld [vmem:[%s5795 + $0x2f8] sm:$0xff]
    %v5892 = vld [vmem:[%s5795 + $0x300] sm:$0xff]
    %v5893 = vld [vmem:[%s5795 + $0x308] sm:$0xff]
    %v5894 = vld [vmem:[%s5795 + $0x310] sm:$0xff]
    %v5895 = vld [vmem:[%s5795 + $0x318] sm:$0xff]
    %v5896 = vld [vmem:[%s5795 + $0x320] sm:$0xff]
    %v5897 = vld [vmem:[%s5795 + $0x328] sm:$0xff]
    %v5898 = vld [vmem:[%s5795 + $0x330] sm:$0xff]
    %v5899 = vld [vmem:[%s5795 + $0x338] sm:$0xff]
    %v5900 = vld [vmem:[%s5795 + $0x340] sm:$0xff]
    %v5901 = vld [vmem:[%s5795 + $0x348] sm:$0xff]
    %v5902 = vld [vmem:[%s5795 + $0x350] sm:$0xff]
    %v5903 = vld [vmem:[%s5795 + $0x358] sm:$0xff]
    %v5904 = vld [vmem:[%s5795 + $0x360] sm:$0xff]
    %v5905 = vld [vmem:[%s5795 + $0x368] sm:$0xff]
    %v5906 = vld [vmem:[%s5795 + $0x370] sm:$0xff]
    %v5907 = vld [vmem:[%s5795 + $0x378] sm:$0xff]
    %v5908 = vld [vmem:[%s5795 + $0x380] sm:$0xff]
    %v5909 = vld [vmem:[%s5795 + $0x388] sm:$0xff]
    %v5910 = vld [vmem:[%s5795 + $0x390] sm:$0xff]
    %v5911 = vld [vmem:[%s5795 + $0x398] sm:$0xff]
    %v5912 = vld [vmem:[%s5795 + $0x3a0] sm:$0xff]
    %v5913 = vld [vmem:[%s5795 + $0x3a8] sm:$0xff]
    %v5914 = vld [vmem:[%s5795 + $0x3b0] sm:$0xff]
    %v5915 = vld [vmem:[%s5795 + $0x3b8] sm:$0xff]
    %v5916 = vld [vmem:[%s5795 + $0x3c0] sm:$0xff]
    %v5917 = vld [vmem:[%s5795 + $0x3c8] sm:$0xff]
    %v5918 = vld [vmem:[%s5795 + $0x3d0] sm:$0xff]
    %v5919 = vld [vmem:[%s5795 + $0x3d8] sm:$0xff]
    %v5920 = vld [vmem:[%s5795 + $0x3e0] sm:$0xff]
    %v5921 = vld [vmem:[%s5795 + $0x3e8] sm:$0xff]
    %v5922 = vld [vmem:[%s5795 + $0x3f0] sm:$0xff]
    %v5923 = vld [vmem:[%s5795 + $0x3f8] sm:$0xff]
    %s5924 = scalar_lea.vmem [#allocation6], 20
    %v5925 = vld [vmem:[%s5924] sm:$0xf]
    %v5927 = vlaneseq
    %v5928 = vshrl.u32 %v5927, 7
    %v5929 = vsub.s32 0, %v5928
    %v5930 = vrot.slane %v5925, %v5929
    %v5931 = vlaneseq
    %v5932 = vshrl.u32 %v5931, 7
    %v5933 = vsub.s32 1, %v5932
    %v5934 = vrot.slane %v5925, %v5933
    %v5935 = vlaneseq
    %v5936 = vshrl.u32 %v5935, 7
    %v5937 = vsub.s32 2, %v5936
    %v5938 = vrot.slane %v5925, %v5937
    %v5939 = vlaneseq
    %v5940 = vshrl.u32 %v5939, 7
    %v5941 = vsub.s32 3, %v5940
    %v5942 = vrot.slane %v5925, %v5941
    %v6075 = vunpack.c.l.b16 %v5796
    %v6076 = vunpack.c.h.b16 %v5796
    %v6077 = vunpack.c.l.b16 %v5797
    %v6078 = vunpack.c.h.b16 %v5797
    %v6079 = vunpack.c.l.b16 %v5798
    %v6080 = vunpack.c.h.b16 %v5798
    %v6081 = vunpack.c.l.b16 %v5799
    %v6082 = vunpack.c.h.b16 %v5799
    %v6083 = vunpack.c.l.b16 %v5800
    %v6084 = vunpack.c.h.b16 %v5800
    %v6085 = vunpack.c.l.b16 %v5801
    %v6086 = vunpack.c.h.b16 %v5801
    %v6087 = vunpack.c.l.b16 %v5802
    %v6088 = vunpack.c.h.b16 %v5802
    %v6089 = vunpack.c.l.b16 %v5803
    %v6090 = vunpack.c.h.b16 %v5803
    %v6091 = vunpack.c.l.b16 %v5804
    %v6092 = vunpack.c.h.b16 %v5804
    %v6093 = vunpack.c.l.b16 %v5805
    %v6094 = vunpack.c.h.b16 %v5805
    %v6095 = vunpack.c.l.b16 %v5806
    %v6096 = vunpack.c.h.b16 %v5806
    %v6097 = vunpack.c.l.b16 %v5807
    %v6098 = vunpack.c.h.b16 %v5807
    %v6099 = vunpack.c.l.b16 %v5808
    %v6100 = vunpack.c.h.b16 %v5808
    %v6101 = vunpack.c.l.b16 %v5809
    %v6102 = vunpack.c.h.b16 %v5809
    %v6103 = vunpack.c.l.b16 %v5810
    %v6104 = vunpack.c.h.b16 %v5810
    %v6105 = vunpack.c.l.b16 %v5811
    %v6106 = vunpack.c.h.b16 %v5811
    %v6107 = vunpack.c.l.b16 %v5812
    %v6108 = vunpack.c.h.b16 %v5812
    %v6109 = vunpack.c.l.b16 %v5813
    %v6110 = vunpack.c.h.b16 %v5813
    %v6111 = vunpack.c.l.b16 %v5814
    %v6112 = vunpack.c.h.b16 %v5814
    %v6113 = vunpack.c.l.b16 %v5815
    %v6114 = vunpack.c.h.b16 %v5815
    %v6115 = vunpack.c.l.b16 %v5816
    %v6116 = vunpack.c.h.b16 %v5816
    %v6117 = vunpack.c.l.b16 %v5817
    %v6118 = vunpack.c.h.b16 %v5817
    %v6119 = vunpack.c.l.b16 %v5818
    %v6120 = vunpack.c.h.b16 %v5818
    %v6121 = vunpack.c.l.b16 %v5819
    %v6122 = vunpack.c.h.b16 %v5819
    %v6123 = vunpack.c.l.b16 %v5820
    %v6124 = vunpack.c.h.b16 %v5820
    %v6125 = vunpack.c.l.b16 %v5821
    %v6126 = vunpack.c.h.b16 %v5821
    %v6127 = vunpack.c.l.b16 %v5822
    %v6128 = vunpack.c.h.b16 %v5822
    %v6129 = vunpack.c.l.b16 %v5823
    %v6130 = vunpack.c.h.b16 %v5823
    %v6131 = vunpack.c.l.b16 %v5824
    %v6132 = vunpack.c.h.b16 %v5824
    %v6133 = vunpack.c.l.b16 %v5825
    %v6134 = vunpack.c.h.b16 %v5825
    %v6135 = vunpack.c.l.b16 %v5826
    %v6136 = vunpack.c.h.b16 %v5826
    %v6137 = vunpack.c.l.b16 %v5827
    %v6138 = vunpack.c.h.b16 %v5827
    %v6139 = vunpack.c.l.b16 %v5828
    %v6140 = vunpack.c.h.b16 %v5828
    %v6141 = vunpack.c.l.b16 %v5829
    %v6142 = vunpack.c.h.b16 %v5829
    %v6143 = vunpack.c.l.b16 %v5830
    %v6144 = vunpack.c.h.b16 %v5830
    %v6145 = vunpack.c.l.b16 %v5831
    %v6146 = vunpack.c.h.b16 %v5831
    %v6147 = vunpack.c.l.b16 %v5832
    %v6148 = vunpack.c.h.b16 %v5832
    %v6149 = vunpack.c.l.b16 %v5833
    %v6150 = vunpack.c.h.b16 %v5833
    %v6151 = vunpack.c.l.b16 %v5834
    %v6152 = vunpack.c.h.b16 %v5834
    %v6153 = vunpack.c.l.b16 %v5835
    %v6154 = vunpack.c.h.b16 %v5835
    %v6155 = vunpack.c.l.b16 %v5836
    %v6156 = vunpack.c.h.b16 %v5836
    %v6157 = vunpack.c.l.b16 %v5837
    %v6158 = vunpack.c.h.b16 %v5837
    %v6159 = vunpack.c.l.b16 %v5838
    %v6160 = vunpack.c.h.b16 %v5838
    %v6161 = vunpack.c.l.b16 %v5839
    %v6162 = vunpack.c.h.b16 %v5839
    %v6163 = vunpack.c.l.b16 %v5840
    %v6164 = vunpack.c.h.b16 %v5840
    %v6165 = vunpack.c.l.b16 %v5841
    %v6166 = vunpack.c.h.b16 %v5841
    %v6167 = vunpack.c.l.b16 %v5842
    %v6168 = vunpack.c.h.b16 %v5842
    %v6169 = vunpack.c.l.b16 %v5843
    %v6170 = vunpack.c.h.b16 %v5843
    %v6171 = vunpack.c.l.b16 %v5844
    %v6172 = vunpack.c.h.b16 %v5844
    %v6173 = vunpack.c.l.b16 %v5845
    %v6174 = vunpack.c.h.b16 %v5845
    %v6175 = vunpack.c.l.b16 %v5846
    %v6176 = vunpack.c.h.b16 %v5846
    %v6177 = vunpack.c.l.b16 %v5847
    %v6178 = vunpack.c.h.b16 %v5847
    %v6179 = vunpack.c.l.b16 %v5848
    %v6180 = vunpack.c.h.b16 %v5848
    %v6181 = vunpack.c.l.b16 %v5849
    %v6182 = vunpack.c.h.b16 %v5849
    %v6183 = vunpack.c.l.b16 %v5850
    %v6184 = vunpack.c.h.b16 %v5850
    %v6185 = vunpack.c.l.b16 %v5851
    %v6186 = vunpack.c.h.b16 %v5851
    %v6187 = vunpack.c.l.b16 %v5852
    %v6188 = vunpack.c.h.b16 %v5852
    %v6189 = vunpack.c.l.b16 %v5853
    %v6190 = vunpack.c.h.b16 %v5853
    %v6191 = vunpack.c.l.b16 %v5854
    %v6192 = vunpack.c.h.b16 %v5854
    %v6193 = vunpack.c.l.b16 %v5855
    %v6194 = vunpack.c.h.b16 %v5855
    %v6195 = vunpack.c.l.b16 %v5856
    %v6196 = vunpack.c.h.b16 %v5856
    %v6197 = vunpack.c.l.b16 %v5857
    %v6198 = vunpack.c.h.b16 %v5857
    %v6199 = vunpack.c.l.b16 %v5858
    %v6200 = vunpack.c.h.b16 %v5858
    %v6201 = vunpack.c.l.b16 %v5859
    %v6202 = vunpack.c.h.b16 %v5859
    %v6203 = vunpack.c.l.b16 %v5860
    %v6204 = vunpack.c.h.b16 %v5860
    %v6205 = vunpack.c.l.b16 %v5861
    %v6206 = vunpack.c.h.b16 %v5861
    %v6207 = vunpack.c.l.b16 %v5862
    %v6208 = vunpack.c.h.b16 %v5862
    %v6209 = vunpack.c.l.b16 %v5863
    %v6210 = vunpack.c.h.b16 %v5863
    %v6211 = vunpack.c.l.b16 %v5864
    %v6212 = vunpack.c.h.b16 %v5864
    %v6213 = vunpack.c.l.b16 %v5865
    %v6214 = vunpack.c.h.b16 %v5865
    %v6215 = vunpack.c.l.b16 %v5866
    %v6216 = vunpack.c.h.b16 %v5866
    %v6217 = vunpack.c.l.b16 %v5867
    %v6218 = vunpack.c.h.b16 %v5867
    %v6219 = vunpack.c.l.b16 %v5868
    %v6220 = vunpack.c.h.b16 %v5868
    %v6221 = vunpack.c.l.b16 %v5869
    %v6222 = vunpack.c.h.b16 %v5869
    %v6223 = vunpack.c.l.b16 %v5870
    %v6224 = vunpack.c.h.b16 %v5870
    %v6225 = vunpack.c.l.b16 %v5871
    %v6226 = vunpack.c.h.b16 %v5871
    %v6227 = vunpack.c.l.b16 %v5872
    %v6228 = vunpack.c.h.b16 %v5872
    %v6229 = vunpack.c.l.b16 %v5873
    %v6230 = vunpack.c.h.b16 %v5873
    %v6231 = vunpack.c.l.b16 %v5874
    %v6232 = vunpack.c.h.b16 %v5874
    %v6233 = vunpack.c.l.b16 %v5875
    %v6234 = vunpack.c.h.b16 %v5875
    %v6235 = vunpack.c.l.b16 %v5876
    %v6236 = vunpack.c.h.b16 %v5876
    %v6237 = vunpack.c.l.b16 %v5877
    %v6238 = vunpack.c.h.b16 %v5877
    %v6239 = vunpack.c.l.b16 %v5878
    %v6240 = vunpack.c.h.b16 %v5878
    %v6241 = vunpack.c.l.b16 %v5879
    %v6242 = vunpack.c.h.b16 %v5879
    %v6243 = vunpack.c.l.b16 %v5880
    %v6244 = vunpack.c.h.b16 %v5880
    %v6245 = vunpack.c.l.b16 %v5881
    %v6246 = vunpack.c.h.b16 %v5881
    %v6247 = vunpack.c.l.b16 %v5882
    %v6248 = vunpack.c.h.b16 %v5882
    %v6249 = vunpack.c.l.b16 %v5883
    %v6250 = vunpack.c.h.b16 %v5883
    %v6251 = vunpack.c.l.b16 %v5884
    %v6252 = vunpack.c.h.b16 %v5884
    %v6253 = vunpack.c.l.b16 %v5885
    %v6254 = vunpack.c.h.b16 %v5885
    %v6255 = vunpack.c.l.b16 %v5886
    %v6256 = vunpack.c.h.b16 %v5886
    %v6257 = vunpack.c.l.b16 %v5887
    %v6258 = vunpack.c.h.b16 %v5887
    %v6259 = vunpack.c.l.b16 %v5888
    %v6260 = vunpack.c.h.b16 %v5888
    %v6261 = vunpack.c.l.b16 %v5889
    %v6262 = vunpack.c.h.b16 %v5889
    %v6263 = vunpack.c.l.b16 %v5890
    %v6264 = vunpack.c.h.b16 %v5890
    %v6265 = vunpack.c.l.b16 %v5891
    %v6266 = vunpack.c.h.b16 %v5891
    %v6267 = vunpack.c.l.b16 %v5892
    %v6268 = vunpack.c.h.b16 %v5892
    %v6269 = vunpack.c.l.b16 %v5893
    %v6270 = vunpack.c.h.b16 %v5893
    %v6271 = vunpack.c.l.b16 %v5894
    %v6272 = vunpack.c.h.b16 %v5894
    %v6273 = vunpack.c.l.b16 %v5895
    %v6274 = vunpack.c.h.b16 %v5895
    %v6275 = vunpack.c.l.b16 %v5896
    %v6276 = vunpack.c.h.b16 %v5896
    %v6277 = vunpack.c.l.b16 %v5897
    %v6278 = vunpack.c.h.b16 %v5897
    %v6279 = vunpack.c.l.b16 %v5898
    %v6280 = vunpack.c.h.b16 %v5898
    %v6281 = vunpack.c.l.b16 %v5899
    %v6282 = vunpack.c.h.b16 %v5899
    %v6283 = vunpack.c.l.b16 %v5900
    %v6284 = vunpack.c.h.b16 %v5900
    %v6285 = vunpack.c.l.b16 %v5901
    %v6286 = vunpack.c.h.b16 %v5901
    %v6287 = vunpack.c.l.b16 %v5902
    %v6288 = vunpack.c.h.b16 %v5902
    %v6289 = vunpack.c.l.b16 %v5903
    %v6290 = vunpack.c.h.b16 %v5903
    %v6291 = vunpack.c.l.b16 %v5904
    %v6292 = vunpack.c.h.b16 %v5904
    %v6293 = vunpack.c.l.b16 %v5905
    %v6294 = vunpack.c.h.b16 %v5905
    %v6295 = vunpack.c.l.b16 %v5906
    %v6296 = vunpack.c.h.b16 %v5906
    %v6297 = vunpack.c.l.b16 %v5907
    %v6298 = vunpack.c.h.b16 %v5907
    %v6299 = vunpack.c.l.b16 %v5908
    %v6300 = vunpack.c.h.b16 %v5908
    %v6301 = vunpack.c.l.b16 %v5909
    %v6302 = vunpack.c.h.b16 %v5909
    %v6303 = vunpack.c.l.b16 %v5910
    %v6304 = vunpack.c.h.b16 %v5910
    %v6305 = vunpack.c.l.b16 %v5911
    %v6306 = vunpack.c.h.b16 %v5911
    %v6307 = vunpack.c.l.b16 %v5912
    %v6308 = vunpack.c.h.b16 %v5912
    %v6309 = vunpack.c.l.b16 %v5913
    %v6310 = vunpack.c.h.b16 %v5913
    %v6311 = vunpack.c.l.b16 %v5914
    %v6312 = vunpack.c.h.b16 %v5914
    %v6313 = vunpack.c.l.b16 %v5915
    %v6314 = vunpack.c.h.b16 %v5915
    %v6315 = vunpack.c.l.b16 %v5916
    %v6316 = vunpack.c.h.b16 %v5916
    %v6317 = vunpack.c.l.b16 %v5917
    %v6318 = vunpack.c.h.b16 %v5917
    %v6319 = vunpack.c.l.b16 %v5918
    %v6320 = vunpack.c.h.b16 %v5918
    %v6321 = vunpack.c.l.b16 %v5919
    %v6322 = vunpack.c.h.b16 %v5919
    %v6323 = vunpack.c.l.b16 %v5920
    %v6324 = vunpack.c.h.b16 %v5920
    %v6325 = vunpack.c.l.b16 %v5921
    %v6326 = vunpack.c.h.b16 %v5921
    %v6327 = vunpack.c.l.b16 %v5922
    %v6328 = vunpack.c.h.b16 %v5922
    %v6329 = vunpack.c.l.b16 %v5923
    %v6330 = vunpack.c.h.b16 %v5923
    %v6331 = vpack.c.b16 %v6079, %v6075
    %v6332 = vpack.c.b16 %v6080, %v6076
    %v6333 = vpack.c.b16 %v6081, %v6077
    %v6334 = vpack.c.b16 %v6082, %v6078
    %v6335 = vpack.c.b16 %v6087, %v6083
    %v6336 = vpack.c.b16 %v6088, %v6084
    %v6337 = vpack.c.b16 %v6089, %v6085
    %v6338 = vpack.c.b16 %v6090, %v6086
    %v6339 = vpack.c.b16 %v6095, %v6091
    %v6340 = vpack.c.b16 %v6096, %v6092
    %v6341 = vpack.c.b16 %v6097, %v6093
    %v6342 = vpack.c.b16 %v6098, %v6094
    %v6343 = vpack.c.b16 %v6103, %v6099
    %v6344 = vpack.c.b16 %v6104, %v6100
    %v6345 = vpack.c.b16 %v6105, %v6101
    %v6346 = vpack.c.b16 %v6106, %v6102
    %v6347 = vpack.c.b16 %v6111, %v6107
    %v6348 = vpack.c.b16 %v6112, %v6108
    %v6349 = vpack.c.b16 %v6113, %v6109
    %v6350 = vpack.c.b16 %v6114, %v6110
    %v6351 = vpack.c.b16 %v6119, %v6115
    %v6352 = vpack.c.b16 %v6120, %v6116
    %v6353 = vpack.c.b16 %v6121, %v6117
    %v6354 = vpack.c.b16 %v6122, %v6118
    %v6355 = vpack.c.b16 %v6127, %v6123
    %v6356 = vpack.c.b16 %v6128, %v6124
    %v6357 = vpack.c.b16 %v6129, %v6125
    %v6358 = vpack.c.b16 %v6130, %v6126
    %v6359 = vpack.c.b16 %v6135, %v6131
    %v6360 = vpack.c.b16 %v6136, %v6132
    %v6361 = vpack.c.b16 %v6137, %v6133
    %v6362 = vpack.c.b16 %v6138, %v6134
    %v6363 = vpack.c.b16 %v6143, %v6139
    %v6364 = vpack.c.b16 %v6144, %v6140
    %v6365 = vpack.c.b16 %v6145, %v6141
    %v6366 = vpack.c.b16 %v6146, %v6142
    %v6367 = vpack.c.b16 %v6151, %v6147
    %v6368 = vpack.c.b16 %v6152, %v6148
    %v6369 = vpack.c.b16 %v6153, %v6149
    %v6370 = vpack.c.b16 %v6154, %v6150
    %v6371 = vpack.c.b16 %v6159, %v6155
    %v6372 = vpack.c.b16 %v6160, %v6156
    %v6373 = vpack.c.b16 %v6161, %v6157
    %v6374 = vpack.c.b16 %v6162, %v6158
    %v6375 = vpack.c.b16 %v6167, %v6163
    %v6376 = vpack.c.b16 %v6168, %v6164
    %v6377 = vpack.c.b16 %v6169, %v6165
    %v6378 = vpack.c.b16 %v6170, %v6166
    %v6379 = vpack.c.b16 %v6175, %v6171
    %v6380 = vpack.c.b16 %v6176, %v6172
    %v6381 = vpack.c.b16 %v6177, %v6173
    %v6382 = vpack.c.b16 %v6178, %v6174
    %v6383 = vpack.c.b16 %v6183, %v6179
    %v6384 = vpack.c.b16 %v6184, %v6180
    %v6385 = vpack.c.b16 %v6185, %v6181
    %v6386 = vpack.c.b16 %v6186, %v6182
    %v6387 = vpack.c.b16 %v6191, %v6187
    %v6388 = vpack.c.b16 %v6192, %v6188
    %v6389 = vpack.c.b16 %v6193, %v6189
    %v6390 = vpack.c.b16 %v6194, %v6190
    %v6391 = vpack.c.b16 %v6199, %v6195
    %v6392 = vpack.c.b16 %v6200, %v6196
    %v6393 = vpack.c.b16 %v6201, %v6197
    %v6394 = vpack.c.b16 %v6202, %v6198
    %v6395 = vpack.c.b16 %v6207, %v6203
    %v6396 = vpack.c.b16 %v6208, %v6204
    %v6397 = vpack.c.b16 %v6209, %v6205
    %v6398 = vpack.c.b16 %v6210, %v6206
    %v6399 = vpack.c.b16 %v6215, %v6211
    %v6400 = vpack.c.b16 %v6216, %v6212
    %v6401 = vpack.c.b16 %v6217, %v6213
    %v6402 = vpack.c.b16 %v6218, %v6214
    %v6403 = vpack.c.b16 %v6223, %v6219
    %v6404 = vpack.c.b16 %v6224, %v6220
    %v6405 = vpack.c.b16 %v6225, %v6221
    %v6406 = vpack.c.b16 %v6226, %v6222
    %v6407 = vpack.c.b16 %v6231, %v6227
    %v6408 = vpack.c.b16 %v6232, %v6228
    %v6409 = vpack.c.b16 %v6233, %v6229
    %v6410 = vpack.c.b16 %v6234, %v6230
    %v6411 = vpack.c.b16 %v6239, %v6235
    %v6412 = vpack.c.b16 %v6240, %v6236
    %v6413 = vpack.c.b16 %v6241, %v6237
    %v6414 = vpack.c.b16 %v6242, %v6238
    %v6415 = vpack.c.b16 %v6247, %v6243
    %v6416 = vpack.c.b16 %v6248, %v6244
    %v6417 = vpack.c.b16 %v6249, %v6245
    %v6418 = vpack.c.b16 %v6250, %v6246
    %v6419 = vpack.c.b16 %v6255, %v6251
    %v6420 = vpack.c.b16 %v6256, %v6252
    %v6421 = vpack.c.b16 %v6257, %v6253
    %v6422 = vpack.c.b16 %v6258, %v6254
    %v6423 = vpack.c.b16 %v6263, %v6259
    %v6424 = vpack.c.b16 %v6264, %v6260
    %v6425 = vpack.c.b16 %v6265, %v6261
    %v6426 = vpack.c.b16 %v6266, %v6262
    %v6427 = vpack.c.b16 %v6271, %v6267
    %v6428 = vpack.c.b16 %v6272, %v6268
    %v6429 = vpack.c.b16 %v6273, %v6269
    %v6430 = vpack.c.b16 %v6274, %v6270
    %v6431 = vpack.c.b16 %v6279, %v6275
    %v6432 = vpack.c.b16 %v6280, %v6276
    %v6433 = vpack.c.b16 %v6281, %v6277
    %v6434 = vpack.c.b16 %v6282, %v6278
    %v6435 = vpack.c.b16 %v6287, %v6283
    %v6436 = vpack.c.b16 %v6288, %v6284
    %v6437 = vpack.c.b16 %v6289, %v6285
    %v6438 = vpack.c.b16 %v6290, %v6286
    %v6439 = vpack.c.b16 %v6295, %v6291
    %v6440 = vpack.c.b16 %v6296, %v6292
    %v6441 = vpack.c.b16 %v6297, %v6293
    %v6442 = vpack.c.b16 %v6298, %v6294
    %v6443 = vpack.c.b16 %v6303, %v6299
    %v6444 = vpack.c.b16 %v6304, %v6300
    %v6445 = vpack.c.b16 %v6305, %v6301
    %v6446 = vpack.c.b16 %v6306, %v6302
    %v6447 = vpack.c.b16 %v6311, %v6307
    %v6448 = vpack.c.b16 %v6312, %v6308
    %v6449 = vpack.c.b16 %v6313, %v6309
    %v6450 = vpack.c.b16 %v6314, %v6310
    %v6451 = vpack.c.b16 %v6319, %v6315
    %v6452 = vpack.c.b16 %v6320, %v6316
    %v6453 = vpack.c.b16 %v6321, %v6317
    %v6454 = vpack.c.b16 %v6322, %v6318
    %v6455 = vpack.c.b16 %v6327, %v6323
    %v6456 = vpack.c.b16 %v6328, %v6324
    %v6457 = vpack.c.b16 %v6329, %v6325
    %v6458 = vpack.c.b16 %v6330, %v6326
    %6587 = vmatprep.subr.bf16.mxu0 %v6332
    %6588 = vmatpush1.bf16.msra.mxu0 %v6331
    %6589 = vmatprep.subr.bf16.mxu0 %v6336
    %6590 = vmatpush1.bf16.msra.mxu0 %v6335
    %6591 = vmatprep.subr.bf16.mxu0 %v6340
    %6592 = vmatpush1.bf16.msra.mxu0 %v6339
    %6593 = vmatprep.subr.bf16.mxu0 %v6344
    %6594 = vmatpush1.bf16.msra.mxu0 %v6343
    %6595 = vmatprep.subr.bf16.mxu0 %v6348
    %6596 = vmatpush1.bf16.msra.mxu0 %v6347
    %6597 = vmatprep.subr.bf16.mxu0 %v6352
    %6598 = vmatpush1.bf16.msra.mxu0 %v6351
    %6599 = vmatprep.subr.bf16.mxu0 %v6356
    %6600 = vmatpush1.bf16.msra.mxu0 %v6355
    %6601 = vmatprep.subr.bf16.mxu0 %v6360
    %6602 = vmatpush1.bf16.msra.mxu0 %v6359
    %6603 = vmatprep.subr.bf16.mxu0 %v6364
    %6604 = vmatpush1.bf16.msra.mxu0 %v6363
    %6605 = vmatprep.subr.bf16.mxu0 %v6368
    %6606 = vmatpush1.bf16.msra.mxu0 %v6367
    %6607 = vmatprep.subr.bf16.mxu0 %v6372
    %6608 = vmatpush1.bf16.msra.mxu0 %v6371
    %6609 = vmatprep.subr.bf16.mxu0 %v6376
    %6610 = vmatpush1.bf16.msra.mxu0 %v6375
    %6611 = vmatprep.subr.bf16.mxu0 %v6380
    %6612 = vmatpush1.bf16.msra.mxu0 %v6379
    %6613 = vmatprep.subr.bf16.mxu0 %v6384
    %6614 = vmatpush1.bf16.msra.mxu0 %v6383
    %6615 = vmatprep.subr.bf16.mxu0 %v6388
    %6616 = vmatpush1.bf16.msra.mxu0 %v6387
    %6617 = vmatprep.subr.bf16.mxu0 %v6392
    %6618 = vmatpush1.bf16.msra.mxu0 %v6391
    %6619 = vmatprep.mubr.bf16.mxu0 %v5792
    %6620 = vmatmul.mubr.bf16.gmra.mrb[0].mxu0 %v5791
    %v6621 = vpop.f32.mrb[0].mxu0
    %v6622 = vadd.f32 %v5930, %v6621
    %v6623 = vpop.f32.mrb[0].mxu0
    %v6624 = vadd.f32 %v5934, %v6623
    %v6625 = vpop.f32.mrb[0].mxu0
    %v6626 = vpop.f32.mrb[0].mxu0
    %6627 = vdwg.mxu0
    %6628 = vmatprep.subr.bf16.mxu0 %v6396
    %6629 = vmatpush1.bf16.msra.mxu0 %v6395
    %6630 = vmatprep.subr.bf16.mxu0 %v6400
    %6631 = vmatpush1.bf16.msra.mxu0 %v6399
    %6632 = vmatprep.subr.bf16.mxu0 %v6404
    %6633 = vmatpush1.bf16.msra.mxu0 %v6403
    %6634 = vmatprep.subr.bf16.mxu0 %v6408
    %6635 = vmatpush1.bf16.msra.mxu0 %v6407
    %6636 = vmatprep.subr.bf16.mxu0 %v6412
    %6637 = vmatpush1.bf16.msra.mxu0 %v6411
    %6638 = vmatprep.subr.bf16.mxu0 %v6416
    %6639 = vmatpush1.bf16.msra.mxu0 %v6415
    %6640 = vmatprep.subr.bf16.mxu0 %v6420
    %6641 = vmatpush1.bf16.msra.mxu0 %v6419
    %6642 = vmatprep.subr.bf16.mxu0 %v6424
    %6643 = vmatpush1.bf16.msra.mxu0 %v6423
    %6644 = vmatprep.subr.bf16.mxu0 %v6428
    %6645 = vmatpush1.bf16.msra.mxu0 %v6427
    %6646 = vmatprep.subr.bf16.mxu0 %v6432
    %6647 = vmatpush1.bf16.msra.mxu0 %v6431
    %6648 = vmatprep.subr.bf16.mxu0 %v6436
    %6649 = vmatpush1.bf16.msra.mxu0 %v6435
    %6650 = vmatprep.subr.bf16.mxu0 %v6440
    %6651 = vmatpush1.bf16.msra.mxu0 %v6439
    %6652 = vmatprep.subr.bf16.mxu0 %v6444
    %6653 = vmatpush1.bf16.msra.mxu0 %v6443
    %6654 = vmatprep.subr.bf16.mxu0 %v6448
    %6655 = vmatpush1.bf16.msra.mxu0 %v6447
    %6656 = vmatprep.subr.bf16.mxu0 %v6452
    %6657 = vmatpush1.bf16.msra.mxu0 %v6451
    %6658 = vmatprep.subr.bf16.mxu0 %v6456
    %6659 = vmatpush1.bf16.msra.mxu0 %v6455
    %6660 = vmatprep.mubr.bf16.mxu0 %v5794
    %6661 = vmatmul.mubr.bf16.gmra.mrb[0].mxu0 %v5793
    %v6662 = vpop.f32.mrb[0].mxu0
    %v6663 = vadd.f32 %v6622, %v6662
    %v6664 = vpop.f32.mrb[0].mxu0
    %v6665 = vadd.f32 %v6624, %v6664
    %v6666 = vpop.f32.mrb[0].mxu0
    %v6667 = vpop.f32.mrb[0].mxu0
    %6668 = vdwg.mxu0
    %6669 = vmatprep.subr.bf16.mxu0 %v6334
    %6670 = vmatpush1.bf16.msra.mxu0 %v6333
    %6671 = vmatprep.subr.bf16.mxu0 %v6338
    %6672 = vmatpush1.bf16.msra.mxu0 %v6337
    %6673 = vmatprep.subr.bf16.mxu0 %v6342
    %6674 = vmatpush1.bf16.msra.mxu0 %v6341
    %6675 = vmatprep.subr.bf16.mxu0 %v6346
    %6676 = vmatpush1.bf16.msra.mxu0 %v6345
    %6677 = vmatprep.subr.bf16.mxu0 %v6350
    %6678 = vmatpush1.bf16.msra.mxu0 %v6349
    %6679 = vmatprep.subr.bf16.mxu0 %v6354
    %6680 = vmatpush1.bf16.msra.mxu0 %v6353
    %6681 = vmatprep.subr.bf16.mxu0 %v6358
    %6682 = vmatpush1.bf16.msra.mxu0 %v6357
    %6683 = vmatprep.subr.bf16.mxu0 %v6362
    %6684 = vmatpush1.bf16.msra.mxu0 %v6361
    %6685 = vmatprep.subr.bf16.mxu0 %v6366
    %6686 = vmatpush1.bf16.msra.mxu0 %v6365
    %6687 = vmatprep.subr.bf16.mxu0 %v6370
    %6688 = vmatpush1.bf16.msra.mxu0 %v6369
    %6689 = vmatprep.subr.bf16.mxu0 %v6374
    %6690 = vmatpush1.bf16.msra.mxu0 %v6373
    %6691 = vmatprep.subr.bf16.mxu0 %v6378
    %6692 = vmatpush1.bf16.msra.mxu0 %v6377
    %6693 = vmatprep.subr.bf16.mxu0 %v6382
    %6694 = vmatpush1.bf16.msra.mxu0 %v6381
    %6695 = vmatprep.subr.bf16.mxu0 %v6386
    %6696 = vmatpush1.bf16.msra.mxu0 %v6385
    %6697 = vmatprep.subr.bf16.mxu0 %v6390
    %6698 = vmatpush1.bf16.msra.mxu0 %v6389
    %6699 = vmatprep.subr.bf16.mxu0 %v6394
    %6700 = vmatpush1.bf16.msra.mxu0 %v6393
    %6701 = vmatprep.mubr.bf16.mxu0 %v5792
    %6702 = vmatmul.mubr.bf16.gmra.mrb[0].mxu0 %v5791
    %v6703 = vpop.f32.mrb[0].mxu0
    %v6704 = vadd.f32 %v5938, %v6703
    %v6705 = vpop.f32.mrb[0].mxu0
    %v6706 = vadd.f32 %v5942, %v6705
    %v6707 = vpop.f32.mrb[0].mxu0
    %v6708 = vpop.f32.mrb[0].mxu0
    %6709 = vdwg.mxu0
    %6710 = vmatprep.subr.bf16.mxu0 %v6398
    %6711 = vmatpush1.bf16.msra.mxu0 %v6397
    %6712 = vmatprep.subr.bf16.mxu0 %v6402
    %6713 = vmatpush1.bf16.msra.mxu0 %v6401
    %6714 = vmatprep.subr.bf16.mxu0 %v6406
    %6715 = vmatpush1.bf16.msra.mxu0 %v6405
    %6716 = vmatprep.subr.bf16.mxu0 %v6410
    %6717 = vmatpush1.bf16.msra.mxu0 %v6409
    %6718 = vmatprep.subr.bf16.mxu0 %v6414
    %6719 = vmatpush1.bf16.msra.mxu0 %v6413
    %6720 = vmatprep.subr.bf16.mxu0 %v6418
    %6721 = vmatpush1.bf16.msra.mxu0 %v6417
    %6722 = vmatprep.subr.bf16.mxu0 %v6422
    %6723 = vmatpush1.bf16.msra.mxu0 %v6421
    %6724 = vmatprep.subr.bf16.mxu0 %v6426
    %6725 = vmatpush1.bf16.msra.mxu0 %v6425
    %6726 = vmatprep.subr.bf16.mxu0 %v6430
    %6727 = vmatpush1.bf16.msra.mxu0 %v6429
    %6728 = vmatprep.subr.bf16.mxu0 %v6434
    %6729 = vmatpush1.bf16.msra.mxu0 %v6433
    %6730 = vmatprep.subr.bf16.mxu0 %v6438
    %6731 = vmatpush1.bf16.msra.mxu0 %v6437
    %6732 = vmatprep.subr.bf16.mxu0 %v6442
    %6733 = vmatpush1.bf16.msra.mxu0 %v6441
    %6734 = vmatprep.subr.bf16.mxu0 %v6446
    %6735 = vmatpush1.bf16.msra.mxu0 %v6445
    %6736 = vmatprep.subr.bf16.mxu0 %v6450
    %6737 = vmatpush1.bf16.msra.mxu0 %v6449
    %6738 = vmatprep.subr.bf16.mxu0 %v6454
    %6739 = vmatpush1.bf16.msra.mxu0 %v6453
    %6740 = vmatprep.subr.bf16.mxu0 %v6458
    %6741 = vmatpush1.bf16.msra.mxu0 %v6457
    %6742 = vmatprep.mubr.bf16.mxu0 %v5794
    %6743 = vmatmul.mubr.bf16.gmra.mrb[0].mxu0 %v5793
    %v6744 = vpop.f32.mrb[0].mxu0
    %v6745 = vadd.f32 %v6704, %v6744
    %v6746 = vpop.f32.mrb[0].mxu0
    %v6747 = vadd.f32 %v6706, %v6746
    %v6748 = vpop.f32.mrb[0].mxu0
    %v6749 = vpop.f32.mrb[0].mxu0
    %6750 = vdwg.mxu0
    %vm6751 = vcmp.ge.f32.partialorder %v6663, 0.0
    %vm6752 = vcmp.ge.f32.partialorder %v6665, 0.0
    %vm6753 = vcmp.ge.f32.partialorder %v6745, 0.0
    %vm6754 = vcmp.ge.f32.partialorder %v6747, 0.0
    %v6755 = vmul.f32 %v6663, 0.2
    %v6756 = vmul.f32 %v6665, 0.2
    %v6757 = vmul.f32 %v6745, 0.2
    %v6758 = vmul.f32 %v6747, 0.2
    %v6759 = vsel %vm6751, %v6663, %v6755
    %v6760 = vsel %vm6752, %v6665, %v6756
    %v6761 = vsel %vm6753, %v6745, %v6757
    %v6762 = vsel %vm6754, %v6747, %v6758
    %v6763 = vpack.c.bf16 %v6759, %v6759
    %v6764 = vpack.c.bf16 %v6760, %v6760
    %v6765 = vpack.c.bf16 %v6761, %v6761
    %v6766 = vpack.c.bf16 %v6762, %v6762
    %s6767 = scalar_lea.vmem [#allocation4], 6144
    %v6768 = vld [vmem:[%s6767] sm:$0xff]
    %v6769 = vld [vmem:[%s6767 + $0x8] sm:$0xff]
    %v6770 = vld [vmem:[%s6767 + $0x10] sm:$0xff]
    %v6771 = vld [vmem:[%s6767 + $0x18] sm:$0xff]
    %v6772 = vld [vmem:[%s6767 + $0x20] sm:$0xff]
    %v6773 = vld [vmem:[%s6767 + $0x28] sm:$0xff]
    %v6774 = vld [vmem:[%s6767 + $0x30] sm:$0xff]
    %v6775 = vld [vmem:[%s6767 + $0x38] sm:$0xff]
    %v6776 = vld [vmem:[%s6767 + $0x40] sm:$0xff]
    %v6777 = vld [vmem:[%s6767 + $0x48] sm:$0xff]
    %v6778 = vld [vmem:[%s6767 + $0x50] sm:$0xff]
    %v6779 = vld [vmem:[%s6767 + $0x58] sm:$0xff]
    %v6780 = vld [vmem:[%s6767 + $0x60] sm:$0xff]
    %v6781 = vld [vmem:[%s6767 + $0x68] sm:$0xff]
    %v6782 = vld [vmem:[%s6767 + $0x70] sm:$0xff]
    %v6783 = vld [vmem:[%s6767 + $0x78] sm:$0xff]
    %v6784 = vld [vmem:[%s6767 + $0x80] sm:$0xff]
    %v6785 = vld [vmem:[%s6767 + $0x88] sm:$0xff]
    %v6786 = vld [vmem:[%s6767 + $0x90] sm:$0xff]
    %v6787 = vld [vmem:[%s6767 + $0x98] sm:$0xff]
    %v6788 = vld [vmem:[%s6767 + $0xa0] sm:$0xff]
    %v6789 = vld [vmem:[%s6767 + $0xa8] sm:$0xff]
    %v6790 = vld [vmem:[%s6767 + $0xb0] sm:$0xff]
    %v6791 = vld [vmem:[%s6767 + $0xb8] sm:$0xff]
    %v6792 = vld [vmem:[%s6767 + $0xc0] sm:$0xff]
    %v6793 = vld [vmem:[%s6767 + $0xc8] sm:$0xff]
    %v6794 = vld [vmem:[%s6767 + $0xd0] sm:$0xff]
    %v6795 = vld [vmem:[%s6767 + $0xd8] sm:$0xff]
    %v6796 = vld [vmem:[%s6767 + $0xe0] sm:$0xff]
    %v6797 = vld [vmem:[%s6767 + $0xe8] sm:$0xff]
    %v6798 = vld [vmem:[%s6767 + $0xf0] sm:$0xff]
    %v6799 = vld [vmem:[%s6767 + $0xf8] sm:$0xff]
    %v6800 = vld [vmem:[%s6767 + $0x100] sm:$0xff]
    %v6801 = vld [vmem:[%s6767 + $0x108] sm:$0xff]
    %v6802 = vld [vmem:[%s6767 + $0x110] sm:$0xff]
    %v6803 = vld [vmem:[%s6767 + $0x118] sm:$0xff]
    %v6804 = vld [vmem:[%s6767 + $0x120] sm:$0xff]
    %v6805 = vld [vmem:[%s6767 + $0x128] sm:$0xff]
    %v6806 = vld [vmem:[%s6767 + $0x130] sm:$0xff]
    %v6807 = vld [vmem:[%s6767 + $0x138] sm:$0xff]
    %v6808 = vld [vmem:[%s6767 + $0x140] sm:$0xff]
    %v6809 = vld [vmem:[%s6767 + $0x148] sm:$0xff]
    %v6810 = vld [vmem:[%s6767 + $0x150] sm:$0xff]
    %v6811 = vld [vmem:[%s6767 + $0x158] sm:$0xff]
    %v6812 = vld [vmem:[%s6767 + $0x160] sm:$0xff]
    %v6813 = vld [vmem:[%s6767 + $0x168] sm:$0xff]
    %v6814 = vld [vmem:[%s6767 + $0x170] sm:$0xff]
    %v6815 = vld [vmem:[%s6767 + $0x178] sm:$0xff]
    %v6816 = vld [vmem:[%s6767 + $0x180] sm:$0xff]
    %v6817 = vld [vmem:[%s6767 + $0x188] sm:$0xff]
    %v6818 = vld [vmem:[%s6767 + $0x190] sm:$0xff]
    %v6819 = vld [vmem:[%s6767 + $0x198] sm:$0xff]
    %v6820 = vld [vmem:[%s6767 + $0x1a0] sm:$0xff]
    %v6821 = vld [vmem:[%s6767 + $0x1a8] sm:$0xff]
    %v6822 = vld [vmem:[%s6767 + $0x1b0] sm:$0xff]
    %v6823 = vld [vmem:[%s6767 + $0x1b8] sm:$0xff]
    %v6824 = vld [vmem:[%s6767 + $0x1c0] sm:$0xff]
    %v6825 = vld [vmem:[%s6767 + $0x1c8] sm:$0xff]
    %v6826 = vld [vmem:[%s6767 + $0x1d0] sm:$0xff]
    %v6827 = vld [vmem:[%s6767 + $0x1d8] sm:$0xff]
    %v6828 = vld [vmem:[%s6767 + $0x1e0] sm:$0xff]
    %v6829 = vld [vmem:[%s6767 + $0x1e8] sm:$0xff]
    %v6830 = vld [vmem:[%s6767 + $0x1f0] sm:$0xff]
    %v6831 = vld [vmem:[%s6767 + $0x1f8] sm:$0xff]
    %v6832 = vld [vmem:[%s6767 + $0x200] sm:$0xff]
    %v6833 = vld [vmem:[%s6767 + $0x208] sm:$0xff]
    %v6834 = vld [vmem:[%s6767 + $0x210] sm:$0xff]
    %v6835 = vld [vmem:[%s6767 + $0x218] sm:$0xff]
    %v6836 = vld [vmem:[%s6767 + $0x220] sm:$0xff]
    %v6837 = vld [vmem:[%s6767 + $0x228] sm:$0xff]
    %v6838 = vld [vmem:[%s6767 + $0x230] sm:$0xff]
    %v6839 = vld [vmem:[%s6767 + $0x238] sm:$0xff]
    %v6840 = vld [vmem:[%s6767 + $0x240] sm:$0xff]
    %v6841 = vld [vmem:[%s6767 + $0x248] sm:$0xff]
    %v6842 = vld [vmem:[%s6767 + $0x250] sm:$0xff]
    %v6843 = vld [vmem:[%s6767 + $0x258] sm:$0xff]
    %v6844 = vld [vmem:[%s6767 + $0x260] sm:$0xff]
    %v6845 = vld [vmem:[%s6767 + $0x268] sm:$0xff]
    %v6846 = vld [vmem:[%s6767 + $0x270] sm:$0xff]
    %v6847 = vld [vmem:[%s6767 + $0x278] sm:$0xff]
    %v6848 = vld [vmem:[%s6767 + $0x280] sm:$0xff]
    %v6849 = vld [vmem:[%s6767 + $0x288] sm:$0xff]
    %v6850 = vld [vmem:[%s6767 + $0x290] sm:$0xff]
    %v6851 = vld [vmem:[%s6767 + $0x298] sm:$0xff]
    %v6852 = vld [vmem:[%s6767 + $0x2a0] sm:$0xff]
    %v6853 = vld [vmem:[%s6767 + $0x2a8] sm:$0xff]
    %v6854 = vld [vmem:[%s6767 + $0x2b0] sm:$0xff]
    %v6855 = vld [vmem:[%s6767 + $0x2b8] sm:$0xff]
    %v6856 = vld [vmem:[%s6767 + $0x2c0] sm:$0xff]
    %v6857 = vld [vmem:[%s6767 + $0x2c8] sm:$0xff]
    %v6858 = vld [vmem:[%s6767 + $0x2d0] sm:$0xff]
    %v6859 = vld [vmem:[%s6767 + $0x2d8] sm:$0xff]
    %v6860 = vld [vmem:[%s6767 + $0x2e0] sm:$0xff]
    %v6861 = vld [vmem:[%s6767 + $0x2e8] sm:$0xff]
    %v6862 = vld [vmem:[%s6767 + $0x2f0] sm:$0xff]
    %v6863 = vld [vmem:[%s6767 + $0x2f8] sm:$0xff]
    %v6864 = vld [vmem:[%s6767 + $0x300] sm:$0xff]
    %v6865 = vld [vmem:[%s6767 + $0x308] sm:$0xff]
    %v6866 = vld [vmem:[%s6767 + $0x310] sm:$0xff]
    %v6867 = vld [vmem:[%s6767 + $0x318] sm:$0xff]
    %v6868 = vld [vmem:[%s6767 + $0x320] sm:$0xff]
    %v6869 = vld [vmem:[%s6767 + $0x328] sm:$0xff]
    %v6870 = vld [vmem:[%s6767 + $0x330] sm:$0xff]
    %v6871 = vld [vmem:[%s6767 + $0x338] sm:$0xff]
    %v6872 = vld [vmem:[%s6767 + $0x340] sm:$0xff]
    %v6873 = vld [vmem:[%s6767 + $0x348] sm:$0xff]
    %v6874 = vld [vmem:[%s6767 + $0x350] sm:$0xff]
    %v6875 = vld [vmem:[%s6767 + $0x358] sm:$0xff]
    %v6876 = vld [vmem:[%s6767 + $0x360] sm:$0xff]
    %v6877 = vld [vmem:[%s6767 + $0x368] sm:$0xff]
    %v6878 = vld [vmem:[%s6767 + $0x370] sm:$0xff]
    %v6879 = vld [vmem:[%s6767 + $0x378] sm:$0xff]
    %v6880 = vld [vmem:[%s6767 + $0x380] sm:$0xff]
    %v6881 = vld [vmem:[%s6767 + $0x388] sm:$0xff]
    %v6882 = vld [vmem:[%s6767 + $0x390] sm:$0xff]
    %v6883 = vld [vmem:[%s6767 + $0x398] sm:$0xff]
    %v6884 = vld [vmem:[%s6767 + $0x3a0] sm:$0xff]
    %v6885 = vld [vmem:[%s6767 + $0x3a8] sm:$0xff]
    %v6886 = vld [vmem:[%s6767 + $0x3b0] sm:$0xff]
    %v6887 = vld [vmem:[%s6767 + $0x3b8] sm:$0xff]
    %v6888 = vld [vmem:[%s6767 + $0x3c0] sm:$0xff]
    %v6889 = vld [vmem:[%s6767 + $0x3c8] sm:$0xff]
    %v6890 = vld [vmem:[%s6767 + $0x3d0] sm:$0xff]
    %v6891 = vld [vmem:[%s6767 + $0x3d8] sm:$0xff]
    %v6892 = vld [vmem:[%s6767 + $0x3e0] sm:$0xff]
    %v6893 = vld [vmem:[%s6767 + $0x3e8] sm:$0xff]
    %v6894 = vld [vmem:[%s6767 + $0x3f0] sm:$0xff]
    %v6895 = vld [vmem:[%s6767 + $0x3f8] sm:$0xff]
    %s6896 = scalar_lea.vmem [#allocation6], 24
    %v6897 = vld [vmem:[%s6896] sm:$0xf]
    %v6899 = vlaneseq
    %v6900 = vshrl.u32 %v6899, 7
    %v6901 = vsub.s32 0, %v6900
    %v6902 = vrot.slane %v6897, %v6901
    %v6903 = vlaneseq
    %v6904 = vshrl.u32 %v6903, 7
    %v6905 = vsub.s32 1, %v6904
    %v6906 = vrot.slane %v6897, %v6905
    %v6907 = vlaneseq
    %v6908 = vshrl.u32 %v6907, 7
    %v6909 = vsub.s32 2, %v6908
    %v6910 = vrot.slane %v6897, %v6909
    %v6911 = vlaneseq
    %v6912 = vshrl.u32 %v6911, 7
    %v6913 = vsub.s32 3, %v6912
    %v6914 = vrot.slane %v6897, %v6913
    %v7047 = vunpack.c.l.b16 %v6768
    %v7048 = vunpack.c.h.b16 %v6768
    %v7049 = vunpack.c.l.b16 %v6769
    %v7050 = vunpack.c.h.b16 %v6769
    %v7051 = vunpack.c.l.b16 %v6770
    %v7052 = vunpack.c.h.b16 %v6770
    %v7053 = vunpack.c.l.b16 %v6771
    %v7054 = vunpack.c.h.b16 %v6771
    %v7055 = vunpack.c.l.b16 %v6772
    %v7056 = vunpack.c.h.b16 %v6772
    %v7057 = vunpack.c.l.b16 %v6773
    %v7058 = vunpack.c.h.b16 %v6773
    %v7059 = vunpack.c.l.b16 %v6774
    %v7060 = vunpack.c.h.b16 %v6774
    %v7061 = vunpack.c.l.b16 %v6775
    %v7062 = vunpack.c.h.b16 %v6775
    %v7063 = vunpack.c.l.b16 %v6776
    %v7064 = vunpack.c.h.b16 %v6776
    %v7065 = vunpack.c.l.b16 %v6777
    %v7066 = vunpack.c.h.b16 %v6777
    %v7067 = vunpack.c.l.b16 %v6778
    %v7068 = vunpack.c.h.b16 %v6778
    %v7069 = vunpack.c.l.b16 %v6779
    %v7070 = vunpack.c.h.b16 %v6779
    %v7071 = vunpack.c.l.b16 %v6780
    %v7072 = vunpack.c.h.b16 %v6780
    %v7073 = vunpack.c.l.b16 %v6781
    %v7074 = vunpack.c.h.b16 %v6781
    %v7075 = vunpack.c.l.b16 %v6782
    %v7076 = vunpack.c.h.b16 %v6782
    %v7077 = vunpack.c.l.b16 %v6783
    %v7078 = vunpack.c.h.b16 %v6783
    %v7079 = vunpack.c.l.b16 %v6784
    %v7080 = vunpack.c.h.b16 %v6784
    %v7081 = vunpack.c.l.b16 %v6785
    %v7082 = vunpack.c.h.b16 %v6785
    %v7083 = vunpack.c.l.b16 %v6786
    %v7084 = vunpack.c.h.b16 %v6786
    %v7085 = vunpack.c.l.b16 %v6787
    %v7086 = vunpack.c.h.b16 %v6787
    %v7087 = vunpack.c.l.b16 %v6788
    %v7088 = vunpack.c.h.b16 %v6788
    %v7089 = vunpack.c.l.b16 %v6789
    %v7090 = vunpack.c.h.b16 %v6789
    %v7091 = vunpack.c.l.b16 %v6790
    %v7092 = vunpack.c.h.b16 %v6790
    %v7093 = vunpack.c.l.b16 %v6791
    %v7094 = vunpack.c.h.b16 %v6791
    %v7095 = vunpack.c.l.b16 %v6792
    %v7096 = vunpack.c.h.b16 %v6792
    %v7097 = vunpack.c.l.b16 %v6793
    %v7098 = vunpack.c.h.b16 %v6793
    %v7099 = vunpack.c.l.b16 %v6794
    %v7100 = vunpack.c.h.b16 %v6794
    %v7101 = vunpack.c.l.b16 %v6795
    %v7102 = vunpack.c.h.b16 %v6795
    %v7103 = vunpack.c.l.b16 %v6796
    %v7104 = vunpack.c.h.b16 %v6796
    %v7105 = vunpack.c.l.b16 %v6797
    %v7106 = vunpack.c.h.b16 %v6797
    %v7107 = vunpack.c.l.b16 %v6798
    %v7108 = vunpack.c.h.b16 %v6798
    %v7109 = vunpack.c.l.b16 %v6799
    %v7110 = vunpack.c.h.b16 %v6799
    %v7111 = vunpack.c.l.b16 %v6800
    %v7112 = vunpack.c.h.b16 %v6800
    %v7113 = vunpack.c.l.b16 %v6801
    %v7114 = vunpack.c.h.b16 %v6801
    %v7115 = vunpack.c.l.b16 %v6802
    %v7116 = vunpack.c.h.b16 %v6802
    %v7117 = vunpack.c.l.b16 %v6803
    %v7118 = vunpack.c.h.b16 %v6803
    %v7119 = vunpack.c.l.b16 %v6804
    %v7120 = vunpack.c.h.b16 %v6804
    %v7121 = vunpack.c.l.b16 %v6805
    %v7122 = vunpack.c.h.b16 %v6805
    %v7123 = vunpack.c.l.b16 %v6806
    %v7124 = vunpack.c.h.b16 %v6806
    %v7125 = vunpack.c.l.b16 %v6807
    %v7126 = vunpack.c.h.b16 %v6807
    %v7127 = vunpack.c.l.b16 %v6808
    %v7128 = vunpack.c.h.b16 %v6808
    %v7129 = vunpack.c.l.b16 %v6809
    %v7130 = vunpack.c.h.b16 %v6809
    %v7131 = vunpack.c.l.b16 %v6810
    %v7132 = vunpack.c.h.b16 %v6810
    %v7133 = vunpack.c.l.b16 %v6811
    %v7134 = vunpack.c.h.b16 %v6811
    %v7135 = vunpack.c.l.b16 %v6812
    %v7136 = vunpack.c.h.b16 %v6812
    %v7137 = vunpack.c.l.b16 %v6813
    %v7138 = vunpack.c.h.b16 %v6813
    %v7139 = vunpack.c.l.b16 %v6814
    %v7140 = vunpack.c.h.b16 %v6814
    %v7141 = vunpack.c.l.b16 %v6815
    %v7142 = vunpack.c.h.b16 %v6815
    %v7143 = vunpack.c.l.b16 %v6816
    %v7144 = vunpack.c.h.b16 %v6816
    %v7145 = vunpack.c.l.b16 %v6817
    %v7146 = vunpack.c.h.b16 %v6817
    %v7147 = vunpack.c.l.b16 %v6818
    %v7148 = vunpack.c.h.b16 %v6818
    %v7149 = vunpack.c.l.b16 %v6819
    %v7150 = vunpack.c.h.b16 %v6819
    %v7151 = vunpack.c.l.b16 %v6820
    %v7152 = vunpack.c.h.b16 %v6820
    %v7153 = vunpack.c.l.b16 %v6821
    %v7154 = vunpack.c.h.b16 %v6821
    %v7155 = vunpack.c.l.b16 %v6822
    %v7156 = vunpack.c.h.b16 %v6822
    %v7157 = vunpack.c.l.b16 %v6823
    %v7158 = vunpack.c.h.b16 %v6823
    %v7159 = vunpack.c.l.b16 %v6824
    %v7160 = vunpack.c.h.b16 %v6824
    %v7161 = vunpack.c.l.b16 %v6825
    %v7162 = vunpack.c.h.b16 %v6825
    %v7163 = vunpack.c.l.b16 %v6826
    %v7164 = vunpack.c.h.b16 %v6826
    %v7165 = vunpack.c.l.b16 %v6827
    %v7166 = vunpack.c.h.b16 %v6827
    %v7167 = vunpack.c.l.b16 %v6828
    %v7168 = vunpack.c.h.b16 %v6828
    %v7169 = vunpack.c.l.b16 %v6829
    %v7170 = vunpack.c.h.b16 %v6829
    %v7171 = vunpack.c.l.b16 %v6830
    %v7172 = vunpack.c.h.b16 %v6830
    %v7173 = vunpack.c.l.b16 %v6831
    %v7174 = vunpack.c.h.b16 %v6831
    %v7175 = vunpack.c.l.b16 %v6832
    %v7176 = vunpack.c.h.b16 %v6832
    %v7177 = vunpack.c.l.b16 %v6833
    %v7178 = vunpack.c.h.b16 %v6833
    %v7179 = vunpack.c.l.b16 %v6834
    %v7180 = vunpack.c.h.b16 %v6834
    %v7181 = vunpack.c.l.b16 %v6835
    %v7182 = vunpack.c.h.b16 %v6835
    %v7183 = vunpack.c.l.b16 %v6836
    %v7184 = vunpack.c.h.b16 %v6836
    %v7185 = vunpack.c.l.b16 %v6837
    %v7186 = vunpack.c.h.b16 %v6837
    %v7187 = vunpack.c.l.b16 %v6838
    %v7188 = vunpack.c.h.b16 %v6838
    %v7189 = vunpack.c.l.b16 %v6839
    %v7190 = vunpack.c.h.b16 %v6839
    %v7191 = vunpack.c.l.b16 %v6840
    %v7192 = vunpack.c.h.b16 %v6840
    %v7193 = vunpack.c.l.b16 %v6841
    %v7194 = vunpack.c.h.b16 %v6841
    %v7195 = vunpack.c.l.b16 %v6842
    %v7196 = vunpack.c.h.b16 %v6842
    %v7197 = vunpack.c.l.b16 %v6843
    %v7198 = vunpack.c.h.b16 %v6843
    %v7199 = vunpack.c.l.b16 %v6844
    %v7200 = vunpack.c.h.b16 %v6844
    %v7201 = vunpack.c.l.b16 %v6845
    %v7202 = vunpack.c.h.b16 %v6845
    %v7203 = vunpack.c.l.b16 %v6846
    %v7204 = vunpack.c.h.b16 %v6846
    %v7205 = vunpack.c.l.b16 %v6847
    %v7206 = vunpack.c.h.b16 %v6847
    %v7207 = vunpack.c.l.b16 %v6848
    %v7208 = vunpack.c.h.b16 %v6848
    %v7209 = vunpack.c.l.b16 %v6849
    %v7210 = vunpack.c.h.b16 %v6849
    %v7211 = vunpack.c.l.b16 %v6850
    %v7212 = vunpack.c.h.b16 %v6850
    %v7213 = vunpack.c.l.b16 %v6851
    %v7214 = vunpack.c.h.b16 %v6851
    %v7215 = vunpack.c.l.b16 %v6852
    %v7216 = vunpack.c.h.b16 %v6852
    %v7217 = vunpack.c.l.b16 %v6853
    %v7218 = vunpack.c.h.b16 %v6853
    %v7219 = vunpack.c.l.b16 %v6854
    %v7220 = vunpack.c.h.b16 %v6854
    %v7221 = vunpack.c.l.b16 %v6855
    %v7222 = vunpack.c.h.b16 %v6855
    %v7223 = vunpack.c.l.b16 %v6856
    %v7224 = vunpack.c.h.b16 %v6856
    %v7225 = vunpack.c.l.b16 %v6857
    %v7226 = vunpack.c.h.b16 %v6857
    %v7227 = vunpack.c.l.b16 %v6858
    %v7228 = vunpack.c.h.b16 %v6858
    %v7229 = vunpack.c.l.b16 %v6859
    %v7230 = vunpack.c.h.b16 %v6859
    %v7231 = vunpack.c.l.b16 %v6860
    %v7232 = vunpack.c.h.b16 %v6860
    %v7233 = vunpack.c.l.b16 %v6861
    %v7234 = vunpack.c.h.b16 %v6861
    %v7235 = vunpack.c.l.b16 %v6862
    %v7236 = vunpack.c.h.b16 %v6862
    %v7237 = vunpack.c.l.b16 %v6863
    %v7238 = vunpack.c.h.b16 %v6863
    %v7239 = vunpack.c.l.b16 %v6864
    %v7240 = vunpack.c.h.b16 %v6864
    %v7241 = vunpack.c.l.b16 %v6865
    %v7242 = vunpack.c.h.b16 %v6865
    %v7243 = vunpack.c.l.b16 %v6866
    %v7244 = vunpack.c.h.b16 %v6866
    %v7245 = vunpack.c.l.b16 %v6867
    %v7246 = vunpack.c.h.b16 %v6867
    %v7247 = vunpack.c.l.b16 %v6868
    %v7248 = vunpack.c.h.b16 %v6868
    %v7249 = vunpack.c.l.b16 %v6869
    %v7250 = vunpack.c.h.b16 %v6869
    %v7251 = vunpack.c.l.b16 %v6870
    %v7252 = vunpack.c.h.b16 %v6870
    %v7253 = vunpack.c.l.b16 %v6871
    %v7254 = vunpack.c.h.b16 %v6871
    %v7255 = vunpack.c.l.b16 %v6872
    %v7256 = vunpack.c.h.b16 %v6872
    %v7257 = vunpack.c.l.b16 %v6873
    %v7258 = vunpack.c.h.b16 %v6873
    %v7259 = vunpack.c.l.b16 %v6874
    %v7260 = vunpack.c.h.b16 %v6874
    %v7261 = vunpack.c.l.b16 %v6875
    %v7262 = vunpack.c.h.b16 %v6875
    %v7263 = vunpack.c.l.b16 %v6876
    %v7264 = vunpack.c.h.b16 %v6876
    %v7265 = vunpack.c.l.b16 %v6877
    %v7266 = vunpack.c.h.b16 %v6877
    %v7267 = vunpack.c.l.b16 %v6878
    %v7268 = vunpack.c.h.b16 %v6878
    %v7269 = vunpack.c.l.b16 %v6879
    %v7270 = vunpack.c.h.b16 %v6879
    %v7271 = vunpack.c.l.b16 %v6880
    %v7272 = vunpack.c.h.b16 %v6880
    %v7273 = vunpack.c.l.b16 %v6881
    %v7274 = vunpack.c.h.b16 %v6881
    %v7275 = vunpack.c.l.b16 %v6882
    %v7276 = vunpack.c.h.b16 %v6882
    %v7277 = vunpack.c.l.b16 %v6883
    %v7278 = vunpack.c.h.b16 %v6883
    %v7279 = vunpack.c.l.b16 %v6884
    %v7280 = vunpack.c.h.b16 %v6884
    %v7281 = vunpack.c.l.b16 %v6885
    %v7282 = vunpack.c.h.b16 %v6885
    %v7283 = vunpack.c.l.b16 %v6886
    %v7284 = vunpack.c.h.b16 %v6886
    %v7285 = vunpack.c.l.b16 %v6887
    %v7286 = vunpack.c.h.b16 %v6887
    %v7287 = vunpack.c.l.b16 %v6888
    %v7288 = vunpack.c.h.b16 %v6888
    %v7289 = vunpack.c.l.b16 %v6889
    %v7290 = vunpack.c.h.b16 %v6889
    %v7291 = vunpack.c.l.b16 %v6890
    %v7292 = vunpack.c.h.b16 %v6890
    %v7293 = vunpack.c.l.b16 %v6891
    %v7294 = vunpack.c.h.b16 %v6891
    %v7295 = vunpack.c.l.b16 %v6892
    %v7296 = vunpack.c.h.b16 %v6892
    %v7297 = vunpack.c.l.b16 %v6893
    %v7298 = vunpack.c.h.b16 %v6893
    %v7299 = vunpack.c.l.b16 %v6894
    %v7300 = vunpack.c.h.b16 %v6894
    %v7301 = vunpack.c.l.b16 %v6895
    %v7302 = vunpack.c.h.b16 %v6895
    %v7303 = vpack.c.b16 %v7051, %v7047
    %v7304 = vpack.c.b16 %v7052, %v7048
    %v7305 = vpack.c.b16 %v7053, %v7049
    %v7306 = vpack.c.b16 %v7054, %v7050
    %v7307 = vpack.c.b16 %v7059, %v7055
    %v7308 = vpack.c.b16 %v7060, %v7056
    %v7309 = vpack.c.b16 %v7061, %v7057
    %v7310 = vpack.c.b16 %v7062, %v7058
    %v7311 = vpack.c.b16 %v7067, %v7063
    %v7312 = vpack.c.b16 %v7068, %v7064
    %v7313 = vpack.c.b16 %v7069, %v7065
    %v7314 = vpack.c.b16 %v7070, %v7066
    %v7315 = vpack.c.b16 %v7075, %v7071
    %v7316 = vpack.c.b16 %v7076, %v7072
    %v7317 = vpack.c.b16 %v7077, %v7073
    %v7318 = vpack.c.b16 %v7078, %v7074
    %v7319 = vpack.c.b16 %v7083, %v7079
    %v7320 = vpack.c.b16 %v7084, %v7080
    %v7321 = vpack.c.b16 %v7085, %v7081
    %v7322 = vpack.c.b16 %v7086, %v7082
    %v7323 = vpack.c.b16 %v7091, %v7087
    %v7324 = vpack.c.b16 %v7092, %v7088
    %v7325 = vpack.c.b16 %v7093, %v7089
    %v7326 = vpack.c.b16 %v7094, %v7090
    %v7327 = vpack.c.b16 %v7099, %v7095
    %v7328 = vpack.c.b16 %v7100, %v7096
    %v7329 = vpack.c.b16 %v7101, %v7097
    %v7330 = vpack.c.b16 %v7102, %v7098
    %v7331 = vpack.c.b16 %v7107, %v7103
    %v7332 = vpack.c.b16 %v7108, %v7104
    %v7333 = vpack.c.b16 %v7109, %v7105
    %v7334 = vpack.c.b16 %v7110, %v7106
    %v7335 = vpack.c.b16 %v7115, %v7111
    %v7336 = vpack.c.b16 %v7116, %v7112
    %v7337 = vpack.c.b16 %v7117, %v7113
    %v7338 = vpack.c.b16 %v7118, %v7114
    %v7339 = vpack.c.b16 %v7123, %v7119
    %v7340 = vpack.c.b16 %v7124, %v7120
    %v7341 = vpack.c.b16 %v7125, %v7121
    %v7342 = vpack.c.b16 %v7126, %v7122
    %v7343 = vpack.c.b16 %v7131, %v7127
    %v7344 = vpack.c.b16 %v7132, %v7128
    %v7345 = vpack.c.b16 %v7133, %v7129
    %v7346 = vpack.c.b16 %v7134, %v7130
    %v7347 = vpack.c.b16 %v7139, %v7135
    %v7348 = vpack.c.b16 %v7140, %v7136
    %v7349 = vpack.c.b16 %v7141, %v7137
    %v7350 = vpack.c.b16 %v7142, %v7138
    %v7351 = vpack.c.b16 %v7147, %v7143
    %v7352 = vpack.c.b16 %v7148, %v7144
    %v7353 = vpack.c.b16 %v7149, %v7145
    %v7354 = vpack.c.b16 %v7150, %v7146
    %v7355 = vpack.c.b16 %v7155, %v7151
    %v7356 = vpack.c.b16 %v7156, %v7152
    %v7357 = vpack.c.b16 %v7157, %v7153
    %v7358 = vpack.c.b16 %v7158, %v7154
    %v7359 = vpack.c.b16 %v7163, %v7159
    %v7360 = vpack.c.b16 %v7164, %v7160
    %v7361 = vpack.c.b16 %v7165, %v7161
    %v7362 = vpack.c.b16 %v7166, %v7162
    %v7363 = vpack.c.b16 %v7171, %v7167
    %v7364 = vpack.c.b16 %v7172, %v7168
    %v7365 = vpack.c.b16 %v7173, %v7169
    %v7366 = vpack.c.b16 %v7174, %v7170
    %v7367 = vpack.c.b16 %v7179, %v7175
    %v7368 = vpack.c.b16 %v7180, %v7176
    %v7369 = vpack.c.b16 %v7181, %v7177
    %v7370 = vpack.c.b16 %v7182, %v7178
    %v7371 = vpack.c.b16 %v7187, %v7183
    %v7372 = vpack.c.b16 %v7188, %v7184
    %v7373 = vpack.c.b16 %v7189, %v7185
    %v7374 = vpack.c.b16 %v7190, %v7186
    %v7375 = vpack.c.b16 %v7195, %v7191
    %v7376 = vpack.c.b16 %v7196, %v7192
    %v7377 = vpack.c.b16 %v7197, %v7193
    %v7378 = vpack.c.b16 %v7198, %v7194
    %v7379 = vpack.c.b16 %v7203, %v7199
    %v7380 = vpack.c.b16 %v7204, %v7200
    %v7381 = vpack.c.b16 %v7205, %v7201
    %v7382 = vpack.c.b16 %v7206, %v7202
    %v7383 = vpack.c.b16 %v7211, %v7207
    %v7384 = vpack.c.b16 %v7212, %v7208
    %v7385 = vpack.c.b16 %v7213, %v7209
    %v7386 = vpack.c.b16 %v7214, %v7210
    %v7387 = vpack.c.b16 %v7219, %v7215
    %v7388 = vpack.c.b16 %v7220, %v7216
    %v7389 = vpack.c.b16 %v7221, %v7217
    %v7390 = vpack.c.b16 %v7222, %v7218
    %v7391 = vpack.c.b16 %v7227, %v7223
    %v7392 = vpack.c.b16 %v7228, %v7224
    %v7393 = vpack.c.b16 %v7229, %v7225
    %v7394 = vpack.c.b16 %v7230, %v7226
    %v7395 = vpack.c.b16 %v7235, %v7231
    %v7396 = vpack.c.b16 %v7236, %v7232
    %v7397 = vpack.c.b16 %v7237, %v7233
    %v7398 = vpack.c.b16 %v7238, %v7234
    %v7399 = vpack.c.b16 %v7243, %v7239
    %v7400 = vpack.c.b16 %v7244, %v7240
    %v7401 = vpack.c.b16 %v7245, %v7241
    %v7402 = vpack.c.b16 %v7246, %v7242
    %v7403 = vpack.c.b16 %v7251, %v7247
    %v7404 = vpack.c.b16 %v7252, %v7248
    %v7405 = vpack.c.b16 %v7253, %v7249
    %v7406 = vpack.c.b16 %v7254, %v7250
    %v7407 = vpack.c.b16 %v7259, %v7255
    %v7408 = vpack.c.b16 %v7260, %v7256
    %v7409 = vpack.c.b16 %v7261, %v7257
    %v7410 = vpack.c.b16 %v7262, %v7258
    %v7411 = vpack.c.b16 %v7267, %v7263
    %v7412 = vpack.c.b16 %v7268, %v7264
    %v7413 = vpack.c.b16 %v7269, %v7265
    %v7414 = vpack.c.b16 %v7270, %v7266
    %v7415 = vpack.c.b16 %v7275, %v7271
    %v7416 = vpack.c.b16 %v7276, %v7272
    %v7417 = vpack.c.b16 %v7277, %v7273
    %v7418 = vpack.c.b16 %v7278, %v7274
    %v7419 = vpack.c.b16 %v7283, %v7279
    %v7420 = vpack.c.b16 %v7284, %v7280
    %v7421 = vpack.c.b16 %v7285, %v7281
    %v7422 = vpack.c.b16 %v7286, %v7282
    %v7423 = vpack.c.b16 %v7291, %v7287
    %v7424 = vpack.c.b16 %v7292, %v7288
    %v7425 = vpack.c.b16 %v7293, %v7289
    %v7426 = vpack.c.b16 %v7294, %v7290
    %v7427 = vpack.c.b16 %v7299, %v7295
    %v7428 = vpack.c.b16 %v7300, %v7296
    %v7429 = vpack.c.b16 %v7301, %v7297
    %v7430 = vpack.c.b16 %v7302, %v7298
    %7559 = vmatprep.subr.bf16.mxu0 %v7304
    %7560 = vmatpush1.bf16.msra.mxu0 %v7303
    %7561 = vmatprep.subr.bf16.mxu0 %v7308
    %7562 = vmatpush1.bf16.msra.mxu0 %v7307
    %7563 = vmatprep.subr.bf16.mxu0 %v7312
    %7564 = vmatpush1.bf16.msra.mxu0 %v7311
    %7565 = vmatprep.subr.bf16.mxu0 %v7316
    %7566 = vmatpush1.bf16.msra.mxu0 %v7315
    %7567 = vmatprep.subr.bf16.mxu0 %v7320
    %7568 = vmatpush1.bf16.msra.mxu0 %v7319
    %7569 = vmatprep.subr.bf16.mxu0 %v7324
    %7570 = vmatpush1.bf16.msra.mxu0 %v7323
    %7571 = vmatprep.subr.bf16.mxu0 %v7328
    %7572 = vmatpush1.bf16.msra.mxu0 %v7327
    %7573 = vmatprep.subr.bf16.mxu0 %v7332
    %7574 = vmatpush1.bf16.msra.mxu0 %v7331
    %7575 = vmatprep.subr.bf16.mxu0 %v7336
    %7576 = vmatpush1.bf16.msra.mxu0 %v7335
    %7577 = vmatprep.subr.bf16.mxu0 %v7340
    %7578 = vmatpush1.bf16.msra.mxu0 %v7339
    %7579 = vmatprep.subr.bf16.mxu0 %v7344
    %7580 = vmatpush1.bf16.msra.mxu0 %v7343
    %7581 = vmatprep.subr.bf16.mxu0 %v7348
    %7582 = vmatpush1.bf16.msra.mxu0 %v7347
    %7583 = vmatprep.subr.bf16.mxu0 %v7352
    %7584 = vmatpush1.bf16.msra.mxu0 %v7351
    %7585 = vmatprep.subr.bf16.mxu0 %v7356
    %7586 = vmatpush1.bf16.msra.mxu0 %v7355
    %7587 = vmatprep.subr.bf16.mxu0 %v7360
    %7588 = vmatpush1.bf16.msra.mxu0 %v7359
    %7589 = vmatprep.subr.bf16.mxu0 %v7364
    %7590 = vmatpush1.bf16.msra.mxu0 %v7363
    %7591 = vmatprep.mubr.bf16.mxu0 %v6764
    %7592 = vmatmul.mubr.bf16.gmra.mrb[0].mxu0 %v6763
    %v7593 = vpop.f32.mrb[0].mxu0
    %v7594 = vadd.f32 %v6902, %v7593
    %v7595 = vpop.f32.mrb[0].mxu0
    %v7596 = vadd.f32 %v6906, %v7595
    %v7597 = vpop.f32.mrb[0].mxu0
    %v7598 = vpop.f32.mrb[0].mxu0
    %7599 = vdwg.mxu0
    %7600 = vmatprep.subr.bf16.mxu0 %v7368
    %7601 = vmatpush1.bf16.msra.mxu0 %v7367
    %7602 = vmatprep.subr.bf16.mxu0 %v7372
    %7603 = vmatpush1.bf16.msra.mxu0 %v7371
    %7604 = vmatprep.subr.bf16.mxu0 %v7376
    %7605 = vmatpush1.bf16.msra.mxu0 %v7375
    %7606 = vmatprep.subr.bf16.mxu0 %v7380
    %7607 = vmatpush1.bf16.msra.mxu0 %v7379
    %7608 = vmatprep.subr.bf16.mxu0 %v7384
    %7609 = vmatpush1.bf16.msra.mxu0 %v7383
    %7610 = vmatprep.subr.bf16.mxu0 %v7388
    %7611 = vmatpush1.bf16.msra.mxu0 %v7387
    %7612 = vmatprep.subr.bf16.mxu0 %v7392
    %7613 = vmatpush1.bf16.msra.mxu0 %v7391
    %7614 = vmatprep.subr.bf16.mxu0 %v7396
    %7615 = vmatpush1.bf16.msra.mxu0 %v7395
    %7616 = vmatprep.subr.bf16.mxu0 %v7400
    %7617 = vmatpush1.bf16.msra.mxu0 %v7399
    %7618 = vmatprep.subr.bf16.mxu0 %v7404
    %7619 = vmatpush1.bf16.msra.mxu0 %v7403
    %7620 = vmatprep.subr.bf16.mxu0 %v7408
    %7621 = vmatpush1.bf16.msra.mxu0 %v7407
    %7622 = vmatprep.subr.bf16.mxu0 %v7412
    %7623 = vmatpush1.bf16.msra.mxu0 %v7411
    %7624 = vmatprep.subr.bf16.mxu0 %v7416
    %7625 = vmatpush1.bf16.msra.mxu0 %v7415
    %7626 = vmatprep.subr.bf16.mxu0 %v7420
    %7627 = vmatpush1.bf16.msra.mxu0 %v7419
    %7628 = vmatprep.subr.bf16.mxu0 %v7424
    %7629 = vmatpush1.bf16.msra.mxu0 %v7423
    %7630 = vmatprep.subr.bf16.mxu0 %v7428
    %7631 = vmatpush1.bf16.msra.mxu0 %v7427
    %7632 = vmatprep.mubr.bf16.mxu0 %v6766
    %7633 = vmatmul.mubr.bf16.gmra.mrb[0].mxu0 %v6765
    %v7634 = vpop.f32.mrb[0].mxu0
    %v7635 = vadd.f32 %v7594, %v7634
    %v7636 = vpop.f32.mrb[0].mxu0
    %v7637 = vadd.f32 %v7596, %v7636
    %v7638 = vpop.f32.mrb[0].mxu0
    %v7639 = vpop.f32.mrb[0].mxu0
    %7640 = vdwg.mxu0
    %7641 = vmatprep.subr.bf16.mxu0 %v7306
    %7642 = vmatpush1.bf16.msra.mxu0 %v7305
    %7643 = vmatprep.subr.bf16.mxu0 %v7310
    %7644 = vmatpush1.bf16.msra.mxu0 %v7309
    %7645 = vmatprep.subr.bf16.mxu0 %v7314
    %7646 = vmatpush1.bf16.msra.mxu0 %v7313
    %7647 = vmatprep.subr.bf16.mxu0 %v7318
    %7648 = vmatpush1.bf16.msra.mxu0 %v7317
    %7649 = vmatprep.subr.bf16.mxu0 %v7322
    %7650 = vmatpush1.bf16.msra.mxu0 %v7321
    %7651 = vmatprep.subr.bf16.mxu0 %v7326
    %7652 = vmatpush1.bf16.msra.mxu0 %v7325
    %7653 = vmatprep.subr.bf16.mxu0 %v7330
    %7654 = vmatpush1.bf16.msra.mxu0 %v7329
    %7655 = vmatprep.subr.bf16.mxu0 %v7334
    %7656 = vmatpush1.bf16.msra.mxu0 %v7333
    %7657 = vmatprep.subr.bf16.mxu0 %v7338
    %7658 = vmatpush1.bf16.msra.mxu0 %v7337
    %7659 = vmatprep.subr.bf16.mxu0 %v7342
    %7660 = vmatpush1.bf16.msra.mxu0 %v7341
    %7661 = vmatprep.subr.bf16.mxu0 %v7346
    %7662 = vmatpush1.bf16.msra.mxu0 %v7345
    %7663 = vmatprep.subr.bf16.mxu0 %v7350
    %7664 = vmatpush1.bf16.msra.mxu0 %v7349
    %7665 = vmatprep.subr.bf16.mxu0 %v7354
    %7666 = vmatpush1.bf16.msra.mxu0 %v7353
    %7667 = vmatprep.subr.bf16.mxu0 %v7358
    %7668 = vmatpush1.bf16.msra.mxu0 %v7357
    %7669 = vmatprep.subr.bf16.mxu0 %v7362
    %7670 = vmatpush1.bf16.msra.mxu0 %v7361
    %7671 = vmatprep.subr.bf16.mxu0 %v7366
    %7672 = vmatpush1.bf16.msra.mxu0 %v7365
    %7673 = vmatprep.mubr.bf16.mxu0 %v6764
    %7674 = vmatmul.mubr.bf16.gmra.mrb[0].mxu0 %v6763
    %v7675 = vpop.f32.mrb[0].mxu0
    %v7676 = vadd.f32 %v6910, %v7675
    %v7677 = vpop.f32.mrb[0].mxu0
    %v7678 = vadd.f32 %v6914, %v7677
    %v7679 = vpop.f32.mrb[0].mxu0
    %v7680 = vpop.f32.mrb[0].mxu0
    %7681 = vdwg.mxu0
    %7682 = vmatprep.subr.bf16.mxu0 %v7370
    %7683 = vmatpush1.bf16.msra.mxu0 %v7369
    %7684 = vmatprep.subr.bf16.mxu0 %v7374
    %7685 = vmatpush1.bf16.msra.mxu0 %v7373
    %7686 = vmatprep.subr.bf16.mxu0 %v7378
    %7687 = vmatpush1.bf16.msra.mxu0 %v7377
    %7688 = vmatprep.subr.bf16.mxu0 %v7382
    %7689 = vmatpush1.bf16.msra.mxu0 %v7381
    %7690 = vmatprep.subr.bf16.mxu0 %v7386
    %7691 = vmatpush1.bf16.msra.mxu0 %v7385
    %7692 = vmatprep.subr.bf16.mxu0 %v7390
    %7693 = vmatpush1.bf16.msra.mxu0 %v7389
    %7694 = vmatprep.subr.bf16.mxu0 %v7394
    %7695 = vmatpush1.bf16.msra.mxu0 %v7393
    %7696 = vmatprep.subr.bf16.mxu0 %v7398
    %7697 = vmatpush1.bf16.msra.mxu0 %v7397
    %7698 = vmatprep.subr.bf16.mxu0 %v7402
    %7699 = vmatpush1.bf16.msra.mxu0 %v7401
    %7700 = vmatprep.subr.bf16.mxu0 %v7406
    %7701 = vmatpush1.bf16.msra.mxu0 %v7405
    %7702 = vmatprep.subr.bf16.mxu0 %v7410
    %7703 = vmatpush1.bf16.msra.mxu0 %v7409
    %7704 = vmatprep.subr.bf16.mxu0 %v7414
    %7705 = vmatpush1.bf16.msra.mxu0 %v7413
    %7706 = vmatprep.subr.bf16.mxu0 %v7418
    %7707 = vmatpush1.bf16.msra.mxu0 %v7417
    %7708 = vmatprep.subr.bf16.mxu0 %v7422
    %7709 = vmatpush1.bf16.msra.mxu0 %v7421
    %7710 = vmatprep.subr.bf16.mxu0 %v7426
    %7711 = vmatpush1.bf16.msra.mxu0 %v7425
    %7712 = vmatprep.subr.bf16.mxu0 %v7430
    %7713 = vmatpush1.bf16.msra.mxu0 %v7429
    %7714 = vmatprep.mubr.bf16.mxu0 %v6766
    %7715 = vmatmul.mubr.bf16.gmra.mrb[0].mxu0 %v6765
    %v7716 = vpop.f32.mrb[0].mxu0
    %v7717 = vadd.f32 %v7676, %v7716
    %v7718 = vpop.f32.mrb[0].mxu0
    %v7719 = vadd.f32 %v7678, %v7718
    %v7720 = vpop.f32.mrb[0].mxu0
    %v7721 = vpop.f32.mrb[0].mxu0
    %7722 = vdwg.mxu0
    %vm7723 = vcmp.ge.f32.partialorder %v7635, 0.0
    %vm7724 = vcmp.ge.f32.partialorder %v7637, 0.0
    %vm7725 = vcmp.ge.f32.partialorder %v7717, 0.0
    %vm7726 = vcmp.ge.f32.partialorder %v7719, 0.0
    %v7727 = vmul.f32 %v7635, 0.2
    %v7728 = vmul.f32 %v7637, 0.2
    %v7729 = vmul.f32 %v7717, 0.2
    %v7730 = vmul.f32 %v7719, 0.2
    %v7731 = vsel %vm7723, %v7635, %v7727
    %v7732 = vsel %vm7724, %v7637, %v7728
    %v7733 = vsel %vm7725, %v7717, %v7729
    %v7734 = vsel %vm7726, %v7719, %v7730
    %v7735 = vpack.c.bf16 %v7731, %v7731
    %v7736 = vpack.c.bf16 %v7732, %v7732
    %v7737 = vpack.c.bf16 %v7733, %v7733
    %v7738 = vpack.c.bf16 %v7734, %v7734
    %s7739 = scalar_lea.vmem [#allocation4], 7168
    %v7740 = vld [vmem:[%s7739] sm:$0xff]
    %v7741 = vld [vmem:[%s7739 + $0x8] sm:$0xff]
    %v7742 = vld [vmem:[%s7739 + $0x10] sm:$0xff]
    %v7743 = vld [vmem:[%s7739 + $0x18] sm:$0xff]
    %v7744 = vld [vmem:[%s7739 + $0x20] sm:$0xff]
    %v7745 = vld [vmem:[%s7739 + $0x28] sm:$0xff]
    %v7746 = vld [vmem:[%s7739 + $0x30] sm:$0xff]
    %v7747 = vld [vmem:[%s7739 + $0x38] sm:$0xff]
    %v7748 = vld [vmem:[%s7739 + $0x40] sm:$0xff]
    %v7749 = vld [vmem:[%s7739 + $0x48] sm:$0xff]
    %v7750 = vld [vmem:[%s7739 + $0x50] sm:$0xff]
    %v7751 = vld [vmem:[%s7739 + $0x58] sm:$0xff]
    %v7752 = vld [vmem:[%s7739 + $0x60] sm:$0xff]
    %v7753 = vld [vmem:[%s7739 + $0x68] sm:$0xff]
    %v7754 = vld [vmem:[%s7739 + $0x70] sm:$0xff]
    %v7755 = vld [vmem:[%s7739 + $0x78] sm:$0xff]
    %v7756 = vld [vmem:[%s7739 + $0x80] sm:$0xff]
    %v7757 = vld [vmem:[%s7739 + $0x88] sm:$0xff]
    %v7758 = vld [vmem:[%s7739 + $0x90] sm:$0xff]
    %v7759 = vld [vmem:[%s7739 + $0x98] sm:$0xff]
    %v7760 = vld [vmem:[%s7739 + $0xa0] sm:$0xff]
    %v7761 = vld [vmem:[%s7739 + $0xa8] sm:$0xff]
    %v7762 = vld [vmem:[%s7739 + $0xb0] sm:$0xff]
    %v7763 = vld [vmem:[%s7739 + $0xb8] sm:$0xff]
    %v7764 = vld [vmem:[%s7739 + $0xc0] sm:$0xff]
    %v7765 = vld [vmem:[%s7739 + $0xc8] sm:$0xff]
    %v7766 = vld [vmem:[%s7739 + $0xd0] sm:$0xff]
    %v7767 = vld [vmem:[%s7739 + $0xd8] sm:$0xff]
    %v7768 = vld [vmem:[%s7739 + $0xe0] sm:$0xff]
    %v7769 = vld [vmem:[%s7739 + $0xe8] sm:$0xff]
    %v7770 = vld [vmem:[%s7739 + $0xf0] sm:$0xff]
    %v7771 = vld [vmem:[%s7739 + $0xf8] sm:$0xff]
    %v7772 = vld [vmem:[%s7739 + $0x100] sm:$0xff]
    %v7773 = vld [vmem:[%s7739 + $0x108] sm:$0xff]
    %v7774 = vld [vmem:[%s7739 + $0x110] sm:$0xff]
    %v7775 = vld [vmem:[%s7739 + $0x118] sm:$0xff]
    %v7776 = vld [vmem:[%s7739 + $0x120] sm:$0xff]
    %v7777 = vld [vmem:[%s7739 + $0x128] sm:$0xff]
    %v7778 = vld [vmem:[%s7739 + $0x130] sm:$0xff]
    %v7779 = vld [vmem:[%s7739 + $0x138] sm:$0xff]
    %v7780 = vld [vmem:[%s7739 + $0x140] sm:$0xff]
    %v7781 = vld [vmem:[%s7739 + $0x148] sm:$0xff]
    %v7782 = vld [vmem:[%s7739 + $0x150] sm:$0xff]
    %v7783 = vld [vmem:[%s7739 + $0x158] sm:$0xff]
    %v7784 = vld [vmem:[%s7739 + $0x160] sm:$0xff]
    %v7785 = vld [vmem:[%s7739 + $0x168] sm:$0xff]
    %v7786 = vld [vmem:[%s7739 + $0x170] sm:$0xff]
    %v7787 = vld [vmem:[%s7739 + $0x178] sm:$0xff]
    %v7788 = vld [vmem:[%s7739 + $0x180] sm:$0xff]
    %v7789 = vld [vmem:[%s7739 + $0x188] sm:$0xff]
    %v7790 = vld [vmem:[%s7739 + $0x190] sm:$0xff]
    %v7791 = vld [vmem:[%s7739 + $0x198] sm:$0xff]
    %v7792 = vld [vmem:[%s7739 + $0x1a0] sm:$0xff]
    %v7793 = vld [vmem:[%s7739 + $0x1a8] sm:$0xff]
    %v7794 = vld [vmem:[%s7739 + $0x1b0] sm:$0xff]
    %v7795 = vld [vmem:[%s7739 + $0x1b8] sm:$0xff]
    %v7796 = vld [vmem:[%s7739 + $0x1c0] sm:$0xff]
    %v7797 = vld [vmem:[%s7739 + $0x1c8] sm:$0xff]
    %v7798 = vld [vmem:[%s7739 + $0x1d0] sm:$0xff]
    %v7799 = vld [vmem:[%s7739 + $0x1d8] sm:$0xff]
    %v7800 = vld [vmem:[%s7739 + $0x1e0] sm:$0xff]
    %v7801 = vld [vmem:[%s7739 + $0x1e8] sm:$0xff]
    %v7802 = vld [vmem:[%s7739 + $0x1f0] sm:$0xff]
    %v7803 = vld [vmem:[%s7739 + $0x1f8] sm:$0xff]
    %v7804 = vld [vmem:[%s7739 + $0x200] sm:$0xff]
    %v7805 = vld [vmem:[%s7739 + $0x208] sm:$0xff]
    %v7806 = vld [vmem:[%s7739 + $0x210] sm:$0xff]
    %v7807 = vld [vmem:[%s7739 + $0x218] sm:$0xff]
    %v7808 = vld [vmem:[%s7739 + $0x220] sm:$0xff]
    %v7809 = vld [vmem:[%s7739 + $0x228] sm:$0xff]
    %v7810 = vld [vmem:[%s7739 + $0x230] sm:$0xff]
    %v7811 = vld [vmem:[%s7739 + $0x238] sm:$0xff]
    %v7812 = vld [vmem:[%s7739 + $0x240] sm:$0xff]
    %v7813 = vld [vmem:[%s7739 + $0x248] sm:$0xff]
    %v7814 = vld [vmem:[%s7739 + $0x250] sm:$0xff]
    %v7815 = vld [vmem:[%s7739 + $0x258] sm:$0xff]
    %v7816 = vld [vmem:[%s7739 + $0x260] sm:$0xff]
    %v7817 = vld [vmem:[%s7739 + $0x268] sm:$0xff]
    %v7818 = vld [vmem:[%s7739 + $0x270] sm:$0xff]
    %v7819 = vld [vmem:[%s7739 + $0x278] sm:$0xff]
    %v7820 = vld [vmem:[%s7739 + $0x280] sm:$0xff]
    %v7821 = vld [vmem:[%s7739 + $0x288] sm:$0xff]
    %v7822 = vld [vmem:[%s7739 + $0x290] sm:$0xff]
    %v7823 = vld [vmem:[%s7739 + $0x298] sm:$0xff]
    %v7824 = vld [vmem:[%s7739 + $0x2a0] sm:$0xff]
    %v7825 = vld [vmem:[%s7739 + $0x2a8] sm:$0xff]
    %v7826 = vld [vmem:[%s7739 + $0x2b0] sm:$0xff]
    %v7827 = vld [vmem:[%s7739 + $0x2b8] sm:$0xff]
    %v7828 = vld [vmem:[%s7739 + $0x2c0] sm:$0xff]
    %v7829 = vld [vmem:[%s7739 + $0x2c8] sm:$0xff]
    %v7830 = vld [vmem:[%s7739 + $0x2d0] sm:$0xff]
    %v7831 = vld [vmem:[%s7739 + $0x2d8] sm:$0xff]
    %v7832 = vld [vmem:[%s7739 + $0x2e0] sm:$0xff]
    %v7833 = vld [vmem:[%s7739 + $0x2e8] sm:$0xff]
    %v7834 = vld [vmem:[%s7739 + $0x2f0] sm:$0xff]
    %v7835 = vld [vmem:[%s7739 + $0x2f8] sm:$0xff]
    %v7836 = vld [vmem:[%s7739 + $0x300] sm:$0xff]
    %v7837 = vld [vmem:[%s7739 + $0x308] sm:$0xff]
    %v7838 = vld [vmem:[%s7739 + $0x310] sm:$0xff]
    %v7839 = vld [vmem:[%s7739 + $0x318] sm:$0xff]
    %v7840 = vld [vmem:[%s7739 + $0x320] sm:$0xff]
    %v7841 = vld [vmem:[%s7739 + $0x328] sm:$0xff]
    %v7842 = vld [vmem:[%s7739 + $0x330] sm:$0xff]
    %v7843 = vld [vmem:[%s7739 + $0x338] sm:$0xff]
    %v7844 = vld [vmem:[%s7739 + $0x340] sm:$0xff]
    %v7845 = vld [vmem:[%s7739 + $0x348] sm:$0xff]
    %v7846 = vld [vmem:[%s7739 + $0x350] sm:$0xff]
    %v7847 = vld [vmem:[%s7739 + $0x358] sm:$0xff]
    %v7848 = vld [vmem:[%s7739 + $0x360] sm:$0xff]
    %v7849 = vld [vmem:[%s7739 + $0x368] sm:$0xff]
    %v7850 = vld [vmem:[%s7739 + $0x370] sm:$0xff]
    %v7851 = vld [vmem:[%s7739 + $0x378] sm:$0xff]
    %v7852 = vld [vmem:[%s7739 + $0x380] sm:$0xff]
    %v7853 = vld [vmem:[%s7739 + $0x388] sm:$0xff]
    %v7854 = vld [vmem:[%s7739 + $0x390] sm:$0xff]
    %v7855 = vld [vmem:[%s7739 + $0x398] sm:$0xff]
    %v7856 = vld [vmem:[%s7739 + $0x3a0] sm:$0xff]
    %v7857 = vld [vmem:[%s7739 + $0x3a8] sm:$0xff]
    %v7858 = vld [vmem:[%s7739 + $0x3b0] sm:$0xff]
    %v7859 = vld [vmem:[%s7739 + $0x3b8] sm:$0xff]
    %v7860 = vld [vmem:[%s7739 + $0x3c0] sm:$0xff]
    %v7861 = vld [vmem:[%s7739 + $0x3c8] sm:$0xff]
    %v7862 = vld [vmem:[%s7739 + $0x3d0] sm:$0xff]
    %v7863 = vld [vmem:[%s7739 + $0x3d8] sm:$0xff]
    %v7864 = vld [vmem:[%s7739 + $0x3e0] sm:$0xff]
    %v7865 = vld [vmem:[%s7739 + $0x3e8] sm:$0xff]
    %v7866 = vld [vmem:[%s7739 + $0x3f0] sm:$0xff]
    %v7867 = vld [vmem:[%s7739 + $0x3f8] sm:$0xff]
    %s7868 = scalar_lea.vmem [#allocation6], 28
    %v7869 = vld [vmem:[%s7868] sm:$0xf]
    %v7871 = vlaneseq
    %v7872 = vshrl.u32 %v7871, 7
    %v7873 = vsub.s32 0, %v7872
    %v7874 = vrot.slane %v7869, %v7873
    %v7875 = vlaneseq
    %v7876 = vshrl.u32 %v7875, 7
    %v7877 = vsub.s32 1, %v7876
    %v7878 = vrot.slane %v7869, %v7877
    %v7879 = vlaneseq
    %v7880 = vshrl.u32 %v7879, 7
    %v7881 = vsub.s32 2, %v7880
    %v7882 = vrot.slane %v7869, %v7881
    %v7883 = vlaneseq
    %v7884 = vshrl.u32 %v7883, 7
    %v7885 = vsub.s32 3, %v7884
    %v7886 = vrot.slane %v7869, %v7885
    %v8019 = vunpack.c.l.b16 %v7740
    %v8020 = vunpack.c.h.b16 %v7740
    %v8021 = vunpack.c.l.b16 %v7741
    %v8022 = vunpack.c.h.b16 %v7741
    %v8023 = vunpack.c.l.b16 %v7742
    %v8024 = vunpack.c.h.b16 %v7742
    %v8025 = vunpack.c.l.b16 %v7743
    %v8026 = vunpack.c.h.b16 %v7743
    %v8027 = vunpack.c.l.b16 %v7744
    %v8028 = vunpack.c.h.b16 %v7744
    %v8029 = vunpack.c.l.b16 %v7745
    %v8030 = vunpack.c.h.b16 %v7745
    %v8031 = vunpack.c.l.b16 %v7746
    %v8032 = vunpack.c.h.b16 %v7746
    %v8033 = vunpack.c.l.b16 %v7747
    %v8034 = vunpack.c.h.b16 %v7747
    %v8035 = vunpack.c.l.b16 %v7748
    %v8036 = vunpack.c.h.b16 %v7748
    %v8037 = vunpack.c.l.b16 %v7749
    %v8038 = vunpack.c.h.b16 %v7749
    %v8039 = vunpack.c.l.b16 %v7750
    %v8040 = vunpack.c.h.b16 %v7750
    %v8041 = vunpack.c.l.b16 %v7751
    %v8042 = vunpack.c.h.b16 %v7751
    %v8043 = vunpack.c.l.b16 %v7752
    %v8044 = vunpack.c.h.b16 %v7752
    %v8045 = vunpack.c.l.b16 %v7753
    %v8046 = vunpack.c.h.b16 %v7753
    %v8047 = vunpack.c.l.b16 %v7754
    %v8048 = vunpack.c.h.b16 %v7754
    %v8049 = vunpack.c.l.b16 %v7755
    %v8050 = vunpack.c.h.b16 %v7755
    %v8051 = vunpack.c.l.b16 %v7756
    %v8052 = vunpack.c.h.b16 %v7756
    %v8053 = vunpack.c.l.b16 %v7757
    %v8054 = vunpack.c.h.b16 %v7757
    %v8055 = vunpack.c.l.b16 %v7758
    %v8056 = vunpack.c.h.b16 %v7758
    %v8057 = vunpack.c.l.b16 %v7759
    %v8058 = vunpack.c.h.b16 %v7759
    %v8059 = vunpack.c.l.b16 %v7760
    %v8060 = vunpack.c.h.b16 %v7760
    %v8061 = vunpack.c.l.b16 %v7761
    %v8062 = vunpack.c.h.b16 %v7761
    %v8063 = vunpack.c.l.b16 %v7762
    %v8064 = vunpack.c.h.b16 %v7762
    %v8065 = vunpack.c.l.b16 %v7763
    %v8066 = vunpack.c.h.b16 %v7763
    %v8067 = vunpack.c.l.b16 %v7764
    %v8068 = vunpack.c.h.b16 %v7764
    %v8069 = vunpack.c.l.b16 %v7765
    %v8070 = vunpack.c.h.b16 %v7765
    %v8071 = vunpack.c.l.b16 %v7766
    %v8072 = vunpack.c.h.b16 %v7766
    %v8073 = vunpack.c.l.b16 %v7767
    %v8074 = vunpack.c.h.b16 %v7767
    %v8075 = vunpack.c.l.b16 %v7768
    %v8076 = vunpack.c.h.b16 %v7768
    %v8077 = vunpack.c.l.b16 %v7769
    %v8078 = vunpack.c.h.b16 %v7769
    %v8079 = vunpack.c.l.b16 %v7770
    %v8080 = vunpack.c.h.b16 %v7770
    %v8081 = vunpack.c.l.b16 %v7771
    %v8082 = vunpack.c.h.b16 %v7771
    %v8083 = vunpack.c.l.b16 %v7772
    %v8084 = vunpack.c.h.b16 %v7772
    %v8085 = vunpack.c.l.b16 %v7773
    %v8086 = vunpack.c.h.b16 %v7773
    %v8087 = vunpack.c.l.b16 %v7774
    %v8088 = vunpack.c.h.b16 %v7774
    %v8089 = vunpack.c.l.b16 %v7775
    %v8090 = vunpack.c.h.b16 %v7775
    %v8091 = vunpack.c.l.b16 %v7776
    %v8092 = vunpack.c.h.b16 %v7776
    %v8093 = vunpack.c.l.b16 %v7777
    %v8094 = vunpack.c.h.b16 %v7777
    %v8095 = vunpack.c.l.b16 %v7778
    %v8096 = vunpack.c.h.b16 %v7778
    %v8097 = vunpack.c.l.b16 %v7779
    %v8098 = vunpack.c.h.b16 %v7779
    %v8099 = vunpack.c.l.b16 %v7780
    %v8100 = vunpack.c.h.b16 %v7780
    %v8101 = vunpack.c.l.b16 %v7781
    %v8102 = vunpack.c.h.b16 %v7781
    %v8103 = vunpack.c.l.b16 %v7782
    %v8104 = vunpack.c.h.b16 %v7782
    %v8105 = vunpack.c.l.b16 %v7783
    %v8106 = vunpack.c.h.b16 %v7783
    %v8107 = vunpack.c.l.b16 %v7784
    %v8108 = vunpack.c.h.b16 %v7784
    %v8109 = vunpack.c.l.b16 %v7785
    %v8110 = vunpack.c.h.b16 %v7785
    %v8111 = vunpack.c.l.b16 %v7786
    %v8112 = vunpack.c.h.b16 %v7786
    %v8113 = vunpack.c.l.b16 %v7787
    %v8114 = vunpack.c.h.b16 %v7787
    %v8115 = vunpack.c.l.b16 %v7788
    %v8116 = vunpack.c.h.b16 %v7788
    %v8117 = vunpack.c.l.b16 %v7789
    %v8118 = vunpack.c.h.b16 %v7789
    %v8119 = vunpack.c.l.b16 %v7790
    %v8120 = vunpack.c.h.b16 %v7790
    %v8121 = vunpack.c.l.b16 %v7791
    %v8122 = vunpack.c.h.b16 %v7791
    %v8123 = vunpack.c.l.b16 %v7792
    %v8124 = vunpack.c.h.b16 %v7792
    %v8125 = vunpack.c.l.b16 %v7793
    %v8126 = vunpack.c.h.b16 %v7793
    %v8127 = vunpack.c.l.b16 %v7794
    %v8128 = vunpack.c.h.b16 %v7794
    %v8129 = vunpack.c.l.b16 %v7795
    %v8130 = vunpack.c.h.b16 %v7795
    %v8131 = vunpack.c.l.b16 %v7796
    %v8132 = vunpack.c.h.b16 %v7796
    %v8133 = vunpack.c.l.b16 %v7797
    %v8134 = vunpack.c.h.b16 %v7797
    %v8135 = vunpack.c.l.b16 %v7798
    %v8136 = vunpack.c.h.b16 %v7798
    %v8137 = vunpack.c.l.b16 %v7799
    %v8138 = vunpack.c.h.b16 %v7799
    %v8139 = vunpack.c.l.b16 %v7800
    %v8140 = vunpack.c.h.b16 %v7800
    %v8141 = vunpack.c.l.b16 %v7801
    %v8142 = vunpack.c.h.b16 %v7801
    %v8143 = vunpack.c.l.b16 %v7802
    %v8144 = vunpack.c.h.b16 %v7802
    %v8145 = vunpack.c.l.b16 %v7803
    %v8146 = vunpack.c.h.b16 %v7803
    %v8147 = vunpack.c.l.b16 %v7804
    %v8148 = vunpack.c.h.b16 %v7804
    %v8149 = vunpack.c.l.b16 %v7805
    %v8150 = vunpack.c.h.b16 %v7805
    %v8151 = vunpack.c.l.b16 %v7806
    %v8152 = vunpack.c.h.b16 %v7806
    %v8153 = vunpack.c.l.b16 %v7807
    %v8154 = vunpack.c.h.b16 %v7807
    %v8155 = vunpack.c.l.b16 %v7808
    %v8156 = vunpack.c.h.b16 %v7808
    %v8157 = vunpack.c.l.b16 %v7809
    %v8158 = vunpack.c.h.b16 %v7809
    %v8159 = vunpack.c.l.b16 %v7810
    %v8160 = vunpack.c.h.b16 %v7810
    %v8161 = vunpack.c.l.b16 %v7811
    %v8162 = vunpack.c.h.b16 %v7811
    %v8163 = vunpack.c.l.b16 %v7812
    %v8164 = vunpack.c.h.b16 %v7812
    %v8165 = vunpack.c.l.b16 %v7813
    %v8166 = vunpack.c.h.b16 %v7813
    %v8167 = vunpack.c.l.b16 %v7814
    %v8168 = vunpack.c.h.b16 %v7814
    %v8169 = vunpack.c.l.b16 %v7815
    %v8170 = vunpack.c.h.b16 %v7815
    %v8171 = vunpack.c.l.b16 %v7816
    %v8172 = vunpack.c.h.b16 %v7816
    %v8173 = vunpack.c.l.b16 %v7817
    %v8174 = vunpack.c.h.b16 %v7817
    %v8175 = vunpack.c.l.b16 %v7818
    %v8176 = vunpack.c.h.b16 %v7818
    %v8177 = vunpack.c.l.b16 %v7819
    %v8178 = vunpack.c.h.b16 %v7819
    %v8179 = vunpack.c.l.b16 %v7820
    %v8180 = vunpack.c.h.b16 %v7820
    %v8181 = vunpack.c.l.b16 %v7821
    %v8182 = vunpack.c.h.b16 %v7821
    %v8183 = vunpack.c.l.b16 %v7822
    %v8184 = vunpack.c.h.b16 %v7822
    %v8185 = vunpack.c.l.b16 %v7823
    %v8186 = vunpack.c.h.b16 %v7823
    %v8187 = vunpack.c.l.b16 %v7824
    %v8188 = vunpack.c.h.b16 %v7824
    %v8189 = vunpack.c.l.b16 %v7825
    %v8190 = vunpack.c.h.b16 %v7825
    %v8191 = vunpack.c.l.b16 %v7826
    %v8192 = vunpack.c.h.b16 %v7826
    %v8193 = vunpack.c.l.b16 %v7827
    %v8194 = vunpack.c.h.b16 %v7827
    %v8195 = vunpack.c.l.b16 %v7828
    %v8196 = vunpack.c.h.b16 %v7828
    %v8197 = vunpack.c.l.b16 %v7829
    %v8198 = vunpack.c.h.b16 %v7829
    %v8199 = vunpack.c.l.b16 %v7830
    %v8200 = vunpack.c.h.b16 %v7830
    %v8201 = vunpack.c.l.b16 %v7831
    %v8202 = vunpack.c.h.b16 %v7831
    %v8203 = vunpack.c.l.b16 %v7832
    %v8204 = vunpack.c.h.b16 %v7832
    %v8205 = vunpack.c.l.b16 %v7833
    %v8206 = vunpack.c.h.b16 %v7833
    %v8207 = vunpack.c.l.b16 %v7834
    %v8208 = vunpack.c.h.b16 %v7834
    %v8209 = vunpack.c.l.b16 %v7835
    %v8210 = vunpack.c.h.b16 %v7835
    %v8211 = vunpack.c.l.b16 %v7836
    %v8212 = vunpack.c.h.b16 %v7836
    %v8213 = vunpack.c.l.b16 %v7837
    %v8214 = vunpack.c.h.b16 %v7837
    %v8215 = vunpack.c.l.b16 %v7838
    %v8216 = vunpack.c.h.b16 %v7838
    %v8217 = vunpack.c.l.b16 %v7839
    %v8218 = vunpack.c.h.b16 %v7839
    %v8219 = vunpack.c.l.b16 %v7840
    %v8220 = vunpack.c.h.b16 %v7840
    %v8221 = vunpack.c.l.b16 %v7841
    %v8222 = vunpack.c.h.b16 %v7841
    %v8223 = vunpack.c.l.b16 %v7842
    %v8224 = vunpack.c.h.b16 %v7842
    %v8225 = vunpack.c.l.b16 %v7843
    %v8226 = vunpack.c.h.b16 %v7843
    %v8227 = vunpack.c.l.b16 %v7844
    %v8228 = vunpack.c.h.b16 %v7844
    %v8229 = vunpack.c.l.b16 %v7845
    %v8230 = vunpack.c.h.b16 %v7845
    %v8231 = vunpack.c.l.b16 %v7846
    %v8232 = vunpack.c.h.b16 %v7846
    %v8233 = vunpack.c.l.b16 %v7847
    %v8234 = vunpack.c.h.b16 %v7847
    %v8235 = vunpack.c.l.b16 %v7848
    %v8236 = vunpack.c.h.b16 %v7848
    %v8237 = vunpack.c.l.b16 %v7849
    %v8238 = vunpack.c.h.b16 %v7849
    %v8239 = vunpack.c.l.b16 %v7850
    %v8240 = vunpack.c.h.b16 %v7850
    %v8241 = vunpack.c.l.b16 %v7851
    %v8242 = vunpack.c.h.b16 %v7851
    %v8243 = vunpack.c.l.b16 %v7852
    %v8244 = vunpack.c.h.b16 %v7852
    %v8245 = vunpack.c.l.b16 %v7853
    %v8246 = vunpack.c.h.b16 %v7853
    %v8247 = vunpack.c.l.b16 %v7854
    %v8248 = vunpack.c.h.b16 %v7854
    %v8249 = vunpack.c.l.b16 %v7855
    %v8250 = vunpack.c.h.b16 %v7855
    %v8251 = vunpack.c.l.b16 %v7856
    %v8252 = vunpack.c.h.b16 %v7856
    %v8253 = vunpack.c.l.b16 %v7857
    %v8254 = vunpack.c.h.b16 %v7857
    %v8255 = vunpack.c.l.b16 %v7858
    %v8256 = vunpack.c.h.b16 %v7858
    %v8257 = vunpack.c.l.b16 %v7859
    %v8258 = vunpack.c.h.b16 %v7859
    %v8259 = vunpack.c.l.b16 %v7860
    %v8260 = vunpack.c.h.b16 %v7860
    %v8261 = vunpack.c.l.b16 %v7861
    %v8262 = vunpack.c.h.b16 %v7861
    %v8263 = vunpack.c.l.b16 %v7862
    %v8264 = vunpack.c.h.b16 %v7862
    %v8265 = vunpack.c.l.b16 %v7863
    %v8266 = vunpack.c.h.b16 %v7863
    %v8267 = vunpack.c.l.b16 %v7864
    %v8268 = vunpack.c.h.b16 %v7864
    %v8269 = vunpack.c.l.b16 %v7865
    %v8270 = vunpack.c.h.b16 %v7865
    %v8271 = vunpack.c.l.b16 %v7866
    %v8272 = vunpack.c.h.b16 %v7866
    %v8273 = vunpack.c.l.b16 %v7867
    %v8274 = vunpack.c.h.b16 %v7867
    %v8275 = vpack.c.b16 %v8023, %v8019
    %v8276 = vpack.c.b16 %v8024, %v8020
    %v8277 = vpack.c.b16 %v8025, %v8021
    %v8278 = vpack.c.b16 %v8026, %v8022
    %v8279 = vpack.c.b16 %v8031, %v8027
    %v8280 = vpack.c.b16 %v8032, %v8028
    %v8281 = vpack.c.b16 %v8033, %v8029
    %v8282 = vpack.c.b16 %v8034, %v8030
    %v8283 = vpack.c.b16 %v8039, %v8035
    %v8284 = vpack.c.b16 %v8040, %v8036
    %v8285 = vpack.c.b16 %v8041, %v8037
    %v8286 = vpack.c.b16 %v8042, %v8038
    %v8287 = vpack.c.b16 %v8047, %v8043
    %v8288 = vpack.c.b16 %v8048, %v8044
    %v8289 = vpack.c.b16 %v8049, %v8045
    %v8290 = vpack.c.b16 %v8050, %v8046
    %v8291 = vpack.c.b16 %v8055, %v8051
    %v8292 = vpack.c.b16 %v8056, %v8052
    %v8293 = vpack.c.b16 %v8057, %v8053
    %v8294 = vpack.c.b16 %v8058, %v8054
    %v8295 = vpack.c.b16 %v8063, %v8059
    %v8296 = vpack.c.b16 %v8064, %v8060
    %v8297 = vpack.c.b16 %v8065, %v8061
    %v8298 = vpack.c.b16 %v8066, %v8062
    %v8299 = vpack.c.b16 %v8071, %v8067
    %v8300 = vpack.c.b16 %v8072, %v8068
    %v8301 = vpack.c.b16 %v8073, %v8069
    %v8302 = vpack.c.b16 %v8074, %v8070
    %v8303 = vpack.c.b16 %v8079, %v8075
    %v8304 = vpack.c.b16 %v8080, %v8076
    %v8305 = vpack.c.b16 %v8081, %v8077
    %v8306 = vpack.c.b16 %v8082, %v8078
    %v8307 = vpack.c.b16 %v8087, %v8083
    %v8308 = vpack.c.b16 %v8088, %v8084
    %v8309 = vpack.c.b16 %v8089, %v8085
    %v8310 = vpack.c.b16 %v8090, %v8086
    %v8311 = vpack.c.b16 %v8095, %v8091
    %v8312 = vpack.c.b16 %v8096, %v8092
    %v8313 = vpack.c.b16 %v8097, %v8093
    %v8314 = vpack.c.b16 %v8098, %v8094
    %v8315 = vpack.c.b16 %v8103, %v8099
    %v8316 = vpack.c.b16 %v8104, %v8100
    %v8317 = vpack.c.b16 %v8105, %v8101
    %v8318 = vpack.c.b16 %v8106, %v8102
    %v8319 = vpack.c.b16 %v8111, %v8107
    %v8320 = vpack.c.b16 %v8112, %v8108
    %v8321 = vpack.c.b16 %v8113, %v8109
    %v8322 = vpack.c.b16 %v8114, %v8110
    %v8323 = vpack.c.b16 %v8119, %v8115
    %v8324 = vpack.c.b16 %v8120, %v8116
    %v8325 = vpack.c.b16 %v8121, %v8117
    %v8326 = vpack.c.b16 %v8122, %v8118
    %v8327 = vpack.c.b16 %v8127, %v8123
    %v8328 = vpack.c.b16 %v8128, %v8124
    %v8329 = vpack.c.b16 %v8129, %v8125
    %v8330 = vpack.c.b16 %v8130, %v8126
    %v8331 = vpack.c.b16 %v8135, %v8131
    %v8332 = vpack.c.b16 %v8136, %v8132
    %v8333 = vpack.c.b16 %v8137, %v8133
    %v8334 = vpack.c.b16 %v8138, %v8134
    %v8335 = vpack.c.b16 %v8143, %v8139
    %v8336 = vpack.c.b16 %v8144, %v8140
    %v8337 = vpack.c.b16 %v8145, %v8141
    %v8338 = vpack.c.b16 %v8146, %v8142
    %v8339 = vpack.c.b16 %v8151, %v8147
    %v8340 = vpack.c.b16 %v8152, %v8148
    %v8341 = vpack.c.b16 %v8153, %v8149
    %v8342 = vpack.c.b16 %v8154, %v8150
    %v8343 = vpack.c.b16 %v8159, %v8155
    %v8344 = vpack.c.b16 %v8160, %v8156
    %v8345 = vpack.c.b16 %v8161, %v8157
    %v8346 = vpack.c.b16 %v8162, %v8158
    %v8347 = vpack.c.b16 %v8167, %v8163
    %v8348 = vpack.c.b16 %v8168, %v8164
    %v8349 = vpack.c.b16 %v8169, %v8165
    %v8350 = vpack.c.b16 %v8170, %v8166
    %v8351 = vpack.c.b16 %v8175, %v8171
    %v8352 = vpack.c.b16 %v8176, %v8172
    %v8353 = vpack.c.b16 %v8177, %v8173
    %v8354 = vpack.c.b16 %v8178, %v8174
    %v8355 = vpack.c.b16 %v8183, %v8179
    %v8356 = vpack.c.b16 %v8184, %v8180
    %v8357 = vpack.c.b16 %v8185, %v8181
    %v8358 = vpack.c.b16 %v8186, %v8182
    %v8359 = vpack.c.b16 %v8191, %v8187
    %v8360 = vpack.c.b16 %v8192, %v8188
    %v8361 = vpack.c.b16 %v8193, %v8189
    %v8362 = vpack.c.b16 %v8194, %v8190
    %v8363 = vpack.c.b16 %v8199, %v8195
    %v8364 = vpack.c.b16 %v8200, %v8196
    %v8365 = vpack.c.b16 %v8201, %v8197
    %v8366 = vpack.c.b16 %v8202, %v8198
    %v8367 = vpack.c.b16 %v8207, %v8203
    %v8368 = vpack.c.b16 %v8208, %v8204
    %v8369 = vpack.c.b16 %v8209, %v8205
    %v8370 = vpack.c.b16 %v8210, %v8206
    %v8371 = vpack.c.b16 %v8215, %v8211
    %v8372 = vpack.c.b16 %v8216, %v8212
    %v8373 = vpack.c.b16 %v8217, %v8213
    %v8374 = vpack.c.b16 %v8218, %v8214
    %v8375 = vpack.c.b16 %v8223, %v8219
    %v8376 = vpack.c.b16 %v8224, %v8220
    %v8377 = vpack.c.b16 %v8225, %v8221
    %v8378 = vpack.c.b16 %v8226, %v8222
    %v8379 = vpack.c.b16 %v8231, %v8227
    %v8380 = vpack.c.b16 %v8232, %v8228
    %v8381 = vpack.c.b16 %v8233, %v8229
    %v8382 = vpack.c.b16 %v8234, %v8230
    %v8383 = vpack.c.b16 %v8239, %v8235
    %v8384 = vpack.c.b16 %v8240, %v8236
    %v8385 = vpack.c.b16 %v8241, %v8237
    %v8386 = vpack.c.b16 %v8242, %v8238
    %v8387 = vpack.c.b16 %v8247, %v8243
    %v8388 = vpack.c.b16 %v8248, %v8244
    %v8389 = vpack.c.b16 %v8249, %v8245
    %v8390 = vpack.c.b16 %v8250, %v8246
    %v8391 = vpack.c.b16 %v8255, %v8251
    %v8392 = vpack.c.b16 %v8256, %v8252
    %v8393 = vpack.c.b16 %v8257, %v8253
    %v8394 = vpack.c.b16 %v8258, %v8254
    %v8395 = vpack.c.b16 %v8263, %v8259
    %v8396 = vpack.c.b16 %v8264, %v8260
    %v8397 = vpack.c.b16 %v8265, %v8261
    %v8398 = vpack.c.b16 %v8266, %v8262
    %v8399 = vpack.c.b16 %v8271, %v8267
    %v8400 = vpack.c.b16 %v8272, %v8268
    %v8401 = vpack.c.b16 %v8273, %v8269
    %v8402 = vpack.c.b16 %v8274, %v8270
    %8531 = vmatprep.subr.bf16.mxu0 %v8276
    %8532 = vmatpush1.bf16.msra.mxu0 %v8275
    %8533 = vmatprep.subr.bf16.mxu0 %v8280
    %8534 = vmatpush1.bf16.msra.mxu0 %v8279
    %8535 = vmatprep.subr.bf16.mxu0 %v8284
    %8536 = vmatpush1.bf16.msra.mxu0 %v8283
    %8537 = vmatprep.subr.bf16.mxu0 %v8288
    %8538 = vmatpush1.bf16.msra.mxu0 %v8287
    %8539 = vmatprep.subr.bf16.mxu0 %v8292
    %8540 = vmatpush1.bf16.msra.mxu0 %v8291
    %8541 = vmatprep.subr.bf16.mxu0 %v8296
    %8542 = vmatpush1.bf16.msra.mxu0 %v8295
    %8543 = vmatprep.subr.bf16.mxu0 %v8300
    %8544 = vmatpush1.bf16.msra.mxu0 %v8299
    %8545 = vmatprep.subr.bf16.mxu0 %v8304
    %8546 = vmatpush1.bf16.msra.mxu0 %v8303
    %8547 = vmatprep.subr.bf16.mxu0 %v8308
    %8548 = vmatpush1.bf16.msra.mxu0 %v8307
    %8549 = vmatprep.subr.bf16.mxu0 %v8312
    %8550 = vmatpush1.bf16.msra.mxu0 %v8311
    %8551 = vmatprep.subr.bf16.mxu0 %v8316
    %8552 = vmatpush1.bf16.msra.mxu0 %v8315
    %8553 = vmatprep.subr.bf16.mxu0 %v8320
    %8554 = vmatpush1.bf16.msra.mxu0 %v8319
    %8555 = vmatprep.subr.bf16.mxu0 %v8324
    %8556 = vmatpush1.bf16.msra.mxu0 %v8323
    %8557 = vmatprep.subr.bf16.mxu0 %v8328
    %8558 = vmatpush1.bf16.msra.mxu0 %v8327
    %8559 = vmatprep.subr.bf16.mxu0 %v8332
    %8560 = vmatpush1.bf16.msra.mxu0 %v8331
    %8561 = vmatprep.subr.bf16.mxu0 %v8336
    %8562 = vmatpush1.bf16.msra.mxu0 %v8335
    %8563 = vmatprep.mubr.bf16.mxu0 %v7736
    %8564 = vmatmul.mubr.bf16.gmra.mrb[0].mxu0 %v7735
    %v8565 = vpop.f32.mrb[0].mxu0
    %v8566 = vadd.f32 %v7874, %v8565
    %v8567 = vpop.f32.mrb[0].mxu0
    %v8568 = vadd.f32 %v7878, %v8567
    %v8569 = vpop.f32.mrb[0].mxu0
    %v8570 = vpop.f32.mrb[0].mxu0
    %8571 = vdwg.mxu0
    %8572 = vmatprep.subr.bf16.mxu0 %v8340
    %8573 = vmatpush1.bf16.msra.mxu0 %v8339
    %8574 = vmatprep.subr.bf16.mxu0 %v8344
    %8575 = vmatpush1.bf16.msra.mxu0 %v8343
    %8576 = vmatprep.subr.bf16.mxu0 %v8348
    %8577 = vmatpush1.bf16.msra.mxu0 %v8347
    %8578 = vmatprep.subr.bf16.mxu0 %v8352
    %8579 = vmatpush1.bf16.msra.mxu0 %v8351
    %8580 = vmatprep.subr.bf16.mxu0 %v8356
    %8581 = vmatpush1.bf16.msra.mxu0 %v8355
    %8582 = vmatprep.subr.bf16.mxu0 %v8360
    %8583 = vmatpush1.bf16.msra.mxu0 %v8359
    %8584 = vmatprep.subr.bf16.mxu0 %v8364
    %8585 = vmatpush1.bf16.msra.mxu0 %v8363
    %8586 = vmatprep.subr.bf16.mxu0 %v8368
    %8587 = vmatpush1.bf16.msra.mxu0 %v8367
    %8588 = vmatprep.subr.bf16.mxu0 %v8372
    %8589 = vmatpush1.bf16.msra.mxu0 %v8371
    %8590 = vmatprep.subr.bf16.mxu0 %v8376
    %8591 = vmatpush1.bf16.msra.mxu0 %v8375
    %8592 = vmatprep.subr.bf16.mxu0 %v8380
    %8593 = vmatpush1.bf16.msra.mxu0 %v8379
    %8594 = vmatprep.subr.bf16.mxu0 %v8384
    %8595 = vmatpush1.bf16.msra.mxu0 %v8383
    %8596 = vmatprep.subr.bf16.mxu0 %v8388
    %8597 = vmatpush1.bf16.msra.mxu0 %v8387
    %8598 = vmatprep.subr.bf16.mxu0 %v8392
    %8599 = vmatpush1.bf16.msra.mxu0 %v8391
    %8600 = vmatprep.subr.bf16.mxu0 %v8396
    %8601 = vmatpush1.bf16.msra.mxu0 %v8395
    %8602 = vmatprep.subr.bf16.mxu0 %v8400
    %8603 = vmatpush1.bf16.msra.mxu0 %v8399
    %8604 = vmatprep.mubr.bf16.mxu0 %v7738
    %8605 = vmatmul.mubr.bf16.gmra.mrb[0].mxu0 %v7737
    %v8606 = vpop.f32.mrb[0].mxu0
    %v8607 = vadd.f32 %v8566, %v8606
    %v8608 = vpop.f32.mrb[0].mxu0
    %v8609 = vadd.f32 %v8568, %v8608
    %v8610 = vpop.f32.mrb[0].mxu0
    %v8611 = vpop.f32.mrb[0].mxu0
    %8612 = vdwg.mxu0
    %8613 = vmatprep.subr.bf16.mxu0 %v8278
    %8614 = vmatpush1.bf16.msra.mxu0 %v8277
    %8615 = vmatprep.subr.bf16.mxu0 %v8282
    %8616 = vmatpush1.bf16.msra.mxu0 %v8281
    %8617 = vmatprep.subr.bf16.mxu0 %v8286
    %8618 = vmatpush1.bf16.msra.mxu0 %v8285
    %8619 = vmatprep.subr.bf16.mxu0 %v8290
    %8620 = vmatpush1.bf16.msra.mxu0 %v8289
    %8621 = vmatprep.subr.bf16.mxu0 %v8294
    %8622 = vmatpush1.bf16.msra.mxu0 %v8293
    %8623 = vmatprep.subr.bf16.mxu0 %v8298
    %8624 = vmatpush1.bf16.msra.mxu0 %v8297
    %8625 = vmatprep.subr.bf16.mxu0 %v8302
    %8626 = vmatpush1.bf16.msra.mxu0 %v8301
    %8627 = vmatprep.subr.bf16.mxu0 %v8306
    %8628 = vmatpush1.bf16.msra.mxu0 %v8305
    %8629 = vmatprep.subr.bf16.mxu0 %v8310
    %8630 = vmatpush1.bf16.msra.mxu0 %v8309
    %8631 = vmatprep.subr.bf16.mxu0 %v8314
    %8632 = vmatpush1.bf16.msra.mxu0 %v8313
    %8633 = vmatprep.subr.bf16.mxu0 %v8318
    %8634 = vmatpush1.bf16.msra.mxu0 %v8317
    %8635 = vmatprep.subr.bf16.mxu0 %v8322
    %8636 = vmatpush1.bf16.msra.mxu0 %v8321
    %8637 = vmatprep.subr.bf16.mxu0 %v8326
    %8638 = vmatpush1.bf16.msra.mxu0 %v8325
    %8639 = vmatprep.subr.bf16.mxu0 %v8330
    %8640 = vmatpush1.bf16.msra.mxu0 %v8329
    %8641 = vmatprep.subr.bf16.mxu0 %v8334
    %8642 = vmatpush1.bf16.msra.mxu0 %v8333
    %8643 = vmatprep.subr.bf16.mxu0 %v8338
    %8644 = vmatpush1.bf16.msra.mxu0 %v8337
    %8645 = vmatprep.mubr.bf16.mxu0 %v7736
    %8646 = vmatmul.mubr.bf16.gmra.mrb[0].mxu0 %v7735
    %v8647 = vpop.f32.mrb[0].mxu0
    %v8648 = vadd.f32 %v7882, %v8647
    %v8649 = vpop.f32.mrb[0].mxu0
    %v8650 = vadd.f32 %v7886, %v8649
    %v8651 = vpop.f32.mrb[0].mxu0
    %v8652 = vpop.f32.mrb[0].mxu0
    %8653 = vdwg.mxu0
    %8654 = vmatprep.subr.bf16.mxu0 %v8342
    %8655 = vmatpush1.bf16.msra.mxu0 %v8341
    %8656 = vmatprep.subr.bf16.mxu0 %v8346
    %8657 = vmatpush1.bf16.msra.mxu0 %v8345
    %8658 = vmatprep.subr.bf16.mxu0 %v8350
    %8659 = vmatpush1.bf16.msra.mxu0 %v8349
    %8660 = vmatprep.subr.bf16.mxu0 %v8354
    %8661 = vmatpush1.bf16.msra.mxu0 %v8353
    %8662 = vmatprep.subr.bf16.mxu0 %v8358
    %8663 = vmatpush1.bf16.msra.mxu0 %v8357
    %8664 = vmatprep.subr.bf16.mxu0 %v8362
    %8665 = vmatpush1.bf16.msra.mxu0 %v8361
    %8666 = vmatprep.subr.bf16.mxu0 %v8366
    %8667 = vmatpush1.bf16.msra.mxu0 %v8365
    %8668 = vmatprep.subr.bf16.mxu0 %v8370
    %8669 = vmatpush1.bf16.msra.mxu0 %v8369
    %8670 = vmatprep.subr.bf16.mxu0 %v8374
    %8671 = vmatpush1.bf16.msra.mxu0 %v8373
    %8672 = vmatprep.subr.bf16.mxu0 %v8378
    %8673 = vmatpush1.bf16.msra.mxu0 %v8377
    %8674 = vmatprep.subr.bf16.mxu0 %v8382
    %8675 = vmatpush1.bf16.msra.mxu0 %v8381
    %8676 = vmatprep.subr.bf16.mxu0 %v8386
    %8677 = vmatpush1.bf16.msra.mxu0 %v8385
    %8678 = vmatprep.subr.bf16.mxu0 %v8390
    %8679 = vmatpush1.bf16.msra.mxu0 %v8389
    %8680 = vmatprep.subr.bf16.mxu0 %v8394
    %8681 = vmatpush1.bf16.msra.mxu0 %v8393
    %8682 = vmatprep.subr.bf16.mxu0 %v8398
    %8683 = vmatpush1.bf16.msra.mxu0 %v8397
    %8684 = vmatprep.subr.bf16.mxu0 %v8402
    %8685 = vmatpush1.bf16.msra.mxu0 %v8401
    %8686 = vmatprep.mubr.bf16.mxu0 %v7738
    %8687 = vmatmul.mubr.bf16.gmra.mrb[0].mxu0 %v7737
    %v8688 = vpop.f32.mrb[0].mxu0
    %v8689 = vadd.f32 %v8648, %v8688
    %v8690 = vpop.f32.mrb[0].mxu0
    %v8691 = vadd.f32 %v8650, %v8690
    %v8692 = vpop.f32.mrb[0].mxu0
    %v8693 = vpop.f32.mrb[0].mxu0
    %8694 = vdwg.mxu0
    %vm8695 = vcmp.ge.f32.partialorder %v8607, 0.0
    %vm8696 = vcmp.ge.f32.partialorder %v8609, 0.0
    %vm8697 = vcmp.ge.f32.partialorder %v8689, 0.0
    %vm8698 = vcmp.ge.f32.partialorder %v8691, 0.0
    %v8699 = vmul.f32 %v8607, 0.2
    %v8700 = vmul.f32 %v8609, 0.2
    %v8701 = vmul.f32 %v8689, 0.2
    %v8702 = vmul.f32 %v8691, 0.2
    %v8703 = vsel %vm8695, %v8607, %v8699
    %v8704 = vsel %vm8696, %v8609, %v8700
    %v8705 = vsel %vm8697, %v8689, %v8701
    %v8706 = vsel %vm8698, %v8691, %v8702
    %v8707 = vmul.f32 %v8703, 1.4142135
    %v8708 = vmul.f32 %v8704, 1.4142135
    %v8709 = vmul.f32 %v8705, 1.4142135
    %v8710 = vmul.f32 %v8706, 1.4142135
    %v8715 = vcombine.low %v8707, %v8708
    %v8716 = vcombine.high %v8707, %v8708
    %v8717 = vcombine.low %v8709, %v8710
    %v8718 = vcombine.high %v8709, %v8710
    %v8720 = vunpack.c.l.s4 1983009808
    %v8721 = vunpack.c.0.s8 %v8720
    %v8722 = vlaneseq
    %v8723 = vshrl.u32 %v8722, 7
    %v8724 = vsub.s32 %v8721, %v8723
    %v8725 = vrot.slane %v8715, %v8724
    %v8727 = vunpack.c.l.s4 1983009808
    %v8728 = vunpack.c.0.s8 %v8727
    %v8729 = vlaneseq
    %v8730 = vshrl.u32 %v8729, 7
    %v8731 = vsub.s32 %v8728, %v8730
    %v8732 = vrot.slane %v8716, %v8731
    %v8734 = vunpack.c.l.s4 1983009808
    %v8735 = vunpack.c.0.s8 %v8734
    %v8736 = vlaneseq
    %v8737 = vshrl.u32 %v8736, 7
    %v8738 = vsub.s32 %v8735, %v8737
    %v8739 = vrot.slane %v8717, %v8738
    %v8741 = vunpack.c.l.s4 1983009808
    %v8742 = vunpack.c.0.s8 %v8741
    %v8743 = vlaneseq
    %v8744 = vshrl.u32 %v8743, 7
    %v8745 = vsub.s32 %v8742, %v8744
    %v8746 = vrot.slane %v8718, %v8745
    %v8747 = vcombine.low %v8725, %v8739
    %v8748 = vcombine.high %v8725, %v8739
    %v8749 = vcombine.low %v8732, %v8746
    %v8750 = vcombine.high %v8732, %v8746
    %s8755 = scalar_lea.vmem [#allocation3], 32
    %8756 = vst [vmem:[%s8755] sm:$0xff] %v8747
    %8757 = vst [vmem:[%s8755 + $0x8] sm:$0xff] %v8748
    %8758 = vst [vmem:[%s8755 + $0x10] sm:$0xff] %v8749
    %8759 = vst [vmem:[%s8755 + $0x18] sm:$0xff] %v8750
    %s8760 = scalar_lea.vmem [#allocation2], 64
    %v8761 = vld [vmem:[%s8760] sm:$0xff]
    %v8762 = vld [vmem:[%s8760 + $0x8] sm:$0xff]
    %v8763 = vld [vmem:[%s8760 + $0x10] sm:$0xff]
    %v8764 = vld [vmem:[%s8760 + $0x18] sm:$0xff]
    %v8765 = vld [vmem:[%s8760 + $0x20] sm:$0xff]
    %v8766 = vld [vmem:[%s8760 + $0x28] sm:$0xff]
    %v8767 = vld [vmem:[%s8760 + $0x30] sm:$0xff]
    %v8768 = vld [vmem:[%s8760 + $0x38] sm:$0xff]
    %v8769 = vld [vmem:[%s8760 + $0x40] sm:$0xff]
    %v8770 = vld [vmem:[%s8760 + $0x48] sm:$0xff]
    %v8771 = vmul.f32 %v8761, %v8761
    %v8772 = vmul.f32 %v8762, %v8762
    %v8773 = vmul.f32 %v8763, %v8763
    %v8774 = vmul.f32 %v8764, %v8764
    %v8775 = vmul.f32 %v8765, %v8765
    %v8776 = vmul.f32 %v8766, %v8766
    %v8777 = vmul.f32 %v8767, %v8767
    %v8778 = vmul.f32 %v8768, %v8768
    %v8779 = vmul.f32 %v8769, %v8769
    %v8780 = vmul.f32 %v8770, %v8770
    %v8791 = vcombine.high %v8771, %v8771
    %v8793 = vunpack.c.l.s4 1983009808
    %v8794 = vunpack.c.0.s8 %v8793
    %v8795 = vlaneseq
    %v8796 = vshrl.u32 %v8795, 7
    %v8797 = vsub.s32 %v8794, %v8796
    %v8798 = vrot.slane %v8771, %v8797
    %v8800 = vunpack.c.l.s4 1983009808
    %v8801 = vunpack.c.0.s8 %v8800
    %v8802 = vlaneseq
    %v8803 = vshrl.u32 %v8802, 7
    %v8804 = vsub.s32 %v8801, %v8803
    %v8805 = vrot.slane %v8791, %v8804
    %v8806 = vcombine.high %v8798, %v8798
    %v8807 = vcombine.high %v8805, %v8805
    %v8808 = vcombine.high %v8772, %v8772
    %v8810 = vunpack.c.l.s4 1983009808
    %v8811 = vunpack.c.0.s8 %v8810
    %v8812 = vlaneseq
    %v8813 = vshrl.u32 %v8812, 7
    %v8814 = vsub.s32 %v8811, %v8813
    %v8815 = vrot.slane %v8772, %v8814
    %v8817 = vunpack.c.l.s4 1983009808
    %v8818 = vunpack.c.0.s8 %v8817
    %v8819 = vlaneseq
    %v8820 = vshrl.u32 %v8819, 7
    %v8821 = vsub.s32 %v8818, %v8820
    %v8822 = vrot.slane %v8808, %v8821
    %v8823 = vcombine.high %v8815, %v8815
    %v8824 = vcombine.high %v8822, %v8822
    %v8825 = vcombine.high %v8773, %v8773
    %v8827 = vunpack.c.l.s4 1983009808
    %v8828 = vunpack.c.0.s8 %v8827
    %v8829 = vlaneseq
    %v8830 = vshrl.u32 %v8829, 7
    %v8831 = vsub.s32 %v8828, %v8830
    %v8832 = vrot.slane %v8773, %v8831
    %v8834 = vunpack.c.l.s4 1983009808
    %v8835 = vunpack.c.0.s8 %v8834
    %v8836 = vlaneseq
    %v8837 = vshrl.u32 %v8836, 7
    %v8838 = vsub.s32 %v8835, %v8837
    %v8839 = vrot.slane %v8825, %v8838
    %v8840 = vcombine.high %v8832, %v8832
    %v8841 = vcombine.high %v8839, %v8839
    %v8842 = vcombine.high %v8774, %v8774
    %v8844 = vunpack.c.l.s4 1983009808
    %v8845 = vunpack.c.0.s8 %v8844
    %v8846 = vlaneseq
    %v8847 = vshrl.u32 %v8846, 7
    %v8848 = vsub.s32 %v8845, %v8847
    %v8849 = vrot.slane %v8774, %v8848
    %v8851 = vunpack.c.l.s4 1983009808
    %v8852 = vunpack.c.0.s8 %v8851
    %v8853 = vlaneseq
    %v8854 = vshrl.u32 %v8853, 7
    %v8855 = vsub.s32 %v8852, %v8854
    %v8856 = vrot.slane %v8842, %v8855
    %v8857 = vcombine.high %v8849, %v8849
    %v8858 = vcombine.high %v8856, %v8856
    %v8859 = vcombine.high %v8775, %v8775
    %v8861 = vunpack.c.l.s4 1983009808
    %v8862 = vunpack.c.0.s8 %v8861
    %v8863 = vlaneseq
    %v8864 = vshrl.u32 %v8863, 7
    %v8865 = vsub.s32 %v8862, %v8864
    %v8866 = vrot.slane %v8775, %v8865
    %v8868 = vunpack.c.l.s4 1983009808
    %v8869 = vunpack.c.0.s8 %v8868
    %v8870 = vlaneseq
    %v8871 = vshrl.u32 %v8870, 7
    %v8872 = vsub.s32 %v8869, %v8871
    %v8873 = vrot.slane %v8859, %v8872
    %v8874 = vcombine.high %v8866, %v8866
    %v8875 = vcombine.high %v8873, %v8873
    %v8876 = vcombine.high %v8776, %v8776
    %v8878 = vunpack.c.l.s4 1983009808
    %v8879 = vunpack.c.0.s8 %v8878
    %v8880 = vlaneseq
    %v8881 = vshrl.u32 %v8880, 7
    %v8882 = vsub.s32 %v8879, %v8881
    %v8883 = vrot.slane %v8776, %v8882
    %v8885 = vunpack.c.l.s4 1983009808
    %v8886 = vunpack.c.0.s8 %v8885
    %v8887 = vlaneseq
    %v8888 = vshrl.u32 %v8887, 7
    %v8889 = vsub.s32 %v8886, %v8888
    %v8890 = vrot.slane %v8876, %v8889
    %v8891 = vcombine.high %v8883, %v8883
    %v8892 = vcombine.high %v8890, %v8890
    %v8893 = vcombine.high %v8777, %v8777
    %v8895 = vunpack.c.l.s4 1983009808
    %v8896 = vunpack.c.0.s8 %v8895
    %v8897 = vlaneseq
    %v8898 = vshrl.u32 %v8897, 7
    %v8899 = vsub.s32 %v8896, %v8898
    %v8900 = vrot.slane %v8777, %v8899
    %v8902 = vunpack.c.l.s4 1983009808
    %v8903 = vunpack.c.0.s8 %v8902
    %v8904 = vlaneseq
    %v8905 = vshrl.u32 %v8904, 7
    %v8906 = vsub.s32 %v8903, %v8905
    %v8907 = vrot.slane %v8893, %v8906
    %v8908 = vcombine.high %v8900, %v8900
    %v8909 = vcombine.high %v8907, %v8907
    %v8910 = vcombine.high %v8778, %v8778
    %v8912 = vunpack.c.l.s4 1983009808
    %v8913 = vunpack.c.0.s8 %v8912
    %v8914 = vlaneseq
    %v8915 = vshrl.u32 %v8914, 7
    %v8916 = vsub.s32 %v8913, %v8915
    %v8917 = vrot.slane %v8778, %v8916
    %v8919 = vunpack.c.l.s4 1983009808
    %v8920 = vunpack.c.0.s8 %v8919
    %v8921 = vlaneseq
    %v8922 = vshrl.u32 %v8921, 7
    %v8923 = vsub.s32 %v8920, %v8922
    %v8924 = vrot.slane %v8910, %v8923
    %v8925 = vcombine.high %v8917, %v8917
    %v8926 = vcombine.high %v8924, %v8924
    %v8927 = vcombine.high %v8779, %v8779
    %v8929 = vunpack.c.l.s4 1983009808
    %v8930 = vunpack.c.0.s8 %v8929
    %v8931 = vlaneseq
    %v8932 = vshrl.u32 %v8931, 7
    %v8933 = vsub.s32 %v8930, %v8932
    %v8934 = vrot.slane %v8779, %v8933
    %v8936 = vunpack.c.l.s4 1983009808
    %v8937 = vunpack.c.0.s8 %v8936
    %v8938 = vlaneseq
    %v8939 = vshrl.u32 %v8938, 7
    %v8940 = vsub.s32 %v8937, %v8939
    %v8941 = vrot.slane %v8927, %v8940
    %v8942 = vcombine.high %v8934, %v8934
    %v8943 = vcombine.high %v8941, %v8941
    %v8944 = vcombine.high %v8780, %v8780
    %v8946 = vunpack.c.l.s4 1983009808
    %v8947 = vunpack.c.0.s8 %v8946
    %v8948 = vlaneseq
    %v8949 = vshrl.u32 %v8948, 7
    %v8950 = vsub.s32 %v8947, %v8949
    %v8951 = vrot.slane %v8780, %v8950
    %v8953 = vunpack.c.l.s4 1983009808
    %v8954 = vunpack.c.0.s8 %v8953
    %v8955 = vlaneseq
    %v8956 = vshrl.u32 %v8955, 7
    %v8957 = vsub.s32 %v8954, %v8956
    %v8958 = vrot.slane %v8944, %v8957
    %v8959 = vcombine.high %v8951, %v8951
    %v8960 = vcombine.high %v8958, %v8958
    %v9001 = vsel %vm562, %v8798, 0.0
    %v9002 = vsel %vm562, %v8815, 0.0
    %v9003 = vadd.f32 %v9001, %v9002
    %v9004 = vsel %vm562, %v8832, 0.0
    %v9005 = vadd.f32 %v9003, %v9004
    %v9006 = vsel %vm562, %v8849, 0.0
    %v9007 = vadd.f32 %v9005, %v9006
    %v9008 = vsel %vm562, %v8866, 0.0
    %v9009 = vadd.f32 %v9007, %v9008
    %v9010 = vsel %vm562, %v8883, 0.0
    %v9011 = vadd.f32 %v9009, %v9010
    %v9012 = vsel %vm562, %v8900, 0.0
    %v9013 = vadd.f32 %v9011, %v9012
    %v9014 = vsel %vm562, %v8917, 0.0
    %v9015 = vadd.f32 %v9013, %v9014
    %v9016 = vsel %vm562, %v8934, 0.0
    %v9017 = vadd.f32 %v9015, %v9016
    %v9018 = vsel %vm562, %v8951, 0.0
    %v9019 = vadd.f32 %v9017, %v9018
    %v9020 = vsel %vm562, %v8806, 0.0
    %v9021 = vsel %vm562, %v8823, 0.0
    %v9022 = vadd.f32 %v9020, %v9021
    %v9023 = vsel %vm562, %v8840, 0.0
    %v9024 = vadd.f32 %v9022, %v9023
    %v9025 = vsel %vm562, %v8857, 0.0
    %v9026 = vadd.f32 %v9024, %v9025
    %v9027 = vsel %vm562, %v8874, 0.0
    %v9028 = vadd.f32 %v9026, %v9027
    %v9029 = vsel %vm562, %v8891, 0.0
    %v9030 = vadd.f32 %v9028, %v9029
    %v9031 = vsel %vm562, %v8908, 0.0
    %v9032 = vadd.f32 %v9030, %v9031
    %v9033 = vsel %vm562, %v8925, 0.0
    %v9034 = vadd.f32 %v9032, %v9033
    %v9035 = vsel %vm562, %v8942, 0.0
    %v9036 = vadd.f32 %v9034, %v9035
    %v9037 = vsel %vm562, %v8959, 0.0
    %v9038 = vadd.f32 %v9036, %v9037
    %v9039 = vsel %vm562, %v8805, 0.0
    %v9040 = vsel %vm562, %v8822, 0.0
    %v9041 = vadd.f32 %v9039, %v9040
    %v9042 = vsel %vm562, %v8839, 0.0
    %v9043 = vadd.f32 %v9041, %v9042
    %v9044 = vsel %vm562, %v8856, 0.0
    %v9045 = vadd.f32 %v9043, %v9044
    %v9046 = vsel %vm562, %v8873, 0.0
    %v9047 = vadd.f32 %v9045, %v9046
    %v9048 = vsel %vm562, %v8890, 0.0
    %v9049 = vadd.f32 %v9047, %v9048
    %v9050 = vsel %vm562, %v8907, 0.0
    %v9051 = vadd.f32 %v9049, %v9050
    %v9052 = vsel %vm562, %v8924, 0.0
    %v9053 = vadd.f32 %v9051, %v9052
    %v9054 = vsel %vm562, %v8941, 0.0
    %v9055 = vadd.f32 %v9053, %v9054
    %v9056 = vsel %vm562, %v8958, 0.0
    %v9057 = vadd.f32 %v9055, %v9056
    %v9058 = vsel %vm562, %v8807, 0.0
    %v9059 = vsel %vm562, %v8824, 0.0
    %v9060 = vadd.f32 %v9058, %v9059
    %v9061 = vsel %vm562, %v8841, 0.0
    %v9062 = vadd.f32 %v9060, %v9061
    %v9063 = vsel %vm562, %v8858, 0.0
    %v9064 = vadd.f32 %v9062, %v9063
    %v9065 = vsel %vm562, %v8875, 0.0
    %v9066 = vadd.f32 %v9064, %v9065
    %v9067 = vsel %vm562, %v8892, 0.0
    %v9068 = vadd.f32 %v9066, %v9067
    %v9069 = vsel %vm562, %v8909, 0.0
    %v9070 = vadd.f32 %v9068, %v9069
    %v9071 = vsel %vm562, %v8926, 0.0
    %v9072 = vadd.f32 %v9070, %v9071
    %v9073 = vsel %vm562, %v8943, 0.0
    %v9074 = vadd.f32 %v9072, %v9073
    %v9075 = vsel %vm562, %v8960, 0.0
    %v9076 = vadd.f32 %v9074, %v9075
    %v9077 = vrcp.pop 10.0
    %v9078 = vmul.f32 %v9019, %v9077
    %v9079 = vmul.f32 %v9038, %v9077
    %v9080 = vmul.f32 %v9057, %v9077
    %v9081 = vmul.f32 %v9076, %v9077
    %v9082 = vadd.f32 %v9078, 1e-08
    %v9083 = vadd.f32 %v9079, 1e-08
    %v9084 = vadd.f32 %v9080, 1e-08
    %v9085 = vadd.f32 %v9081, 1e-08
    %v9086 = vrsqrt.pop %v9082
    %v9087 = vrsqrt.pop %v9083
    %v9088 = vrsqrt.pop %v9084
    %v9089 = vrsqrt.pop %v9085
    %v9094 = vcombine.low %v9086, %v9087
    %v9095 = vcombine.low %v9088, %v9089
    %v9097 = vunpack.c.l.s4 1983009808
    %v9098 = vunpack.c.0.s8 %v9097
    %v9099 = vlaneseq
    %v9100 = vshrl.u32 %v9099, 7
    %v9101 = vsub.s32 %v9098, %v9100
    %v9102 = vrot.slane %v9094, %v9101
    %v9104 = vunpack.c.l.s4 1983009808
    %v9105 = vunpack.c.0.s8 %v9104
    %v9106 = vlaneseq
    %v9107 = vshrl.u32 %v9106, 7
    %v9108 = vsub.s32 %v9105, %v9107
    %v9109 = vrot.slane %v9095, %v9108
    %v9110 = vcombine.low %v9102, %v9109
    %v9112 = vmul.f32 %v8761, %v9110
    %v9113 = vmul.f32 %v8762, %v9110
    %v9114 = vmul.f32 %v8763, %v9110
    %v9115 = vmul.f32 %v8764, %v9110
    %v9116 = vmul.f32 %v8765, %v9110
    %v9117 = vmul.f32 %v8766, %v9110
    %v9118 = vmul.f32 %v8767, %v9110
    %v9119 = vmul.f32 %v8768, %v9110
    %v9120 = vmul.f32 %v8769, %v9110
    %v9121 = vmul.f32 %v8770, %v9110
    %v9132 = vcombine.low %v9112, %v9113
    %v9133 = vcombine.high %v9112, %v9113
    %v9134 = vcombine.low %v9114, %v9115
    %v9135 = vcombine.high %v9114, %v9115
    %v9137 = vunpack.c.l.s4 1983009808
    %v9138 = vunpack.c.0.s8 %v9137
    %v9139 = vlaneseq
    %v9140 = vshrl.u32 %v9139, 7
    %v9141 = vsub.s32 %v9138, %v9140
    %v9142 = vrot.slane %v9132, %v9141
    %v9144 = vunpack.c.l.s4 1983009808
    %v9145 = vunpack.c.0.s8 %v9144
    %v9146 = vlaneseq
    %v9147 = vshrl.u32 %v9146, 7
    %v9148 = vsub.s32 %v9145, %v9147
    %v9149 = vrot.slane %v9133, %v9148
    %v9151 = vunpack.c.l.s4 1983009808
    %v9152 = vunpack.c.0.s8 %v9151
    %v9153 = vlaneseq
    %v9154 = vshrl.u32 %v9153, 7
    %v9155 = vsub.s32 %v9152, %v9154
    %v9156 = vrot.slane %v9134, %v9155
    %v9158 = vunpack.c.l.s4 1983009808
    %v9159 = vunpack.c.0.s8 %v9158
    %v9160 = vlaneseq
    %v9161 = vshrl.u32 %v9160, 7
    %v9162 = vsub.s32 %v9159, %v9161
    %v9163 = vrot.slane %v9135, %v9162
    %v9164 = vcombine.low %v9142, %v9156
    %v9165 = vcombine.high %v9142, %v9156
    %v9166 = vcombine.low %v9149, %v9163
    %v9167 = vcombine.high %v9149, %v9163
    %v9168 = vcombine.low %v9116, %v9117
    %v9169 = vcombine.high %v9116, %v9117
    %v9170 = vcombine.low %v9118, %v9119
    %v9171 = vcombine.high %v9118, %v9119
    %v9173 = vunpack.c.l.s4 1983009808
    %v9174 = vunpack.c.0.s8 %v9173
    %v9175 = vlaneseq
    %v9176 = vshrl.u32 %v9175, 7
    %v9177 = vsub.s32 %v9174, %v9176
    %v9178 = vrot.slane %v9168, %v9177
    %v9180 = vunpack.c.l.s4 1983009808
    %v9181 = vunpack.c.0.s8 %v9180
    %v9182 = vlaneseq
    %v9183 = vshrl.u32 %v9182, 7
    %v9184 = vsub.s32 %v9181, %v9183
    %v9185 = vrot.slane %v9169, %v9184
    %v9187 = vunpack.c.l.s4 1983009808
    %v9188 = vunpack.c.0.s8 %v9187
    %v9189 = vlaneseq
    %v9190 = vshrl.u32 %v9189, 7
    %v9191 = vsub.s32 %v9188, %v9190
    %v9192 = vrot.slane %v9170, %v9191
    %v9194 = vunpack.c.l.s4 1983009808
    %v9195 = vunpack.c.0.s8 %v9194
    %v9196 = vlaneseq
    %v9197 = vshrl.u32 %v9196, 7
    %v9198 = vsub.s32 %v9195, %v9197
    %v9199 = vrot.slane %v9171, %v9198
    %v9200 = vcombine.low %v9178, %v9192
    %v9201 = vcombine.high %v9178, %v9192
    %v9202 = vcombine.low %v9185, %v9199
    %v9203 = vcombine.high %v9185, %v9199
    %v9204 = vcombine.low %v9120, %v9121
    %v9205 = vcombine.high %v9120, %v9121
    %v9207 = vunpack.c.l.s4 1983009808
    %v9208 = vunpack.c.0.s8 %v9207
    %v9209 = vlaneseq
    %v9210 = vshrl.u32 %v9209, 7
    %v9211 = vsub.s32 %v9208, %v9210
    %v9212 = vrot.slane %v9204, %v9211
    %v9214 = vunpack.c.l.s4 1983009808
    %v9215 = vunpack.c.0.s8 %v9214
    %v9216 = vlaneseq
    %v9217 = vshrl.u32 %v9216, 7
    %v9218 = vsub.s32 %v9215, %v9217
    %v9219 = vrot.slane %v9205, %v9218
    %v9220 = vcombine.high %v9212, %v9212
    %v9221 = vcombine.high %v9219, %v9219
    %v9234 = vpack.c.bf16 %v9200, %v9164
    %v9235 = vpack.c.bf16 %v9201, %v9165
    %v9236 = vpack.c.bf16 %v9202, %v9166
    %v9237 = vpack.c.bf16 %v9203, %v9167
    %v9238 = vpack.c.bf16 %v9212, %v9212
    %v9239 = vpack.c.bf16 %v9220, %v9220
    %v9240 = vpack.c.bf16 %v9219, %v9219
    %v9241 = vpack.c.bf16 %v9221, %v9221
    %s9242 = scalar_lea.vmem [#allocation4], 8192
    %v9243 = vld [vmem:[%s9242] sm:$0xff]
    %v9244 = vld [vmem:[%s9242 + $0x8] sm:$0xff]
    %v9245 = vld [vmem:[%s9242 + $0x10] sm:$0xff]
    %v9246 = vld [vmem:[%s9242 + $0x18] sm:$0xff]
    %v9247 = vld [vmem:[%s9242 + $0x20] sm:$0xff]
    %v9248 = vld [vmem:[%s9242 + $0x28] sm:$0xff]
    %v9249 = vld [vmem:[%s9242 + $0x30] sm:$0xff]
    %v9250 = vld [vmem:[%s9242 + $0x38] sm:$0xff]
    %v9251 = vld [vmem:[%s9242 + $0x40] sm:$0xff]
    %v9252 = vld [vmem:[%s9242 + $0x48] sm:$0xff]
    %v9253 = vld [vmem:[%s9242 + $0x50] sm:$0xff]
    %v9254 = vld [vmem:[%s9242 + $0x58] sm:$0xff]
    %v9255 = vld [vmem:[%s9242 + $0x60] sm:$0xff]
    %v9256 = vld [vmem:[%s9242 + $0x68] sm:$0xff]
    %v9257 = vld [vmem:[%s9242 + $0x70] sm:$0xff]
    %v9258 = vld [vmem:[%s9242 + $0x78] sm:$0xff]
    %v9259 = vld [vmem:[%s9242 + $0x80] sm:$0xff]
    %v9260 = vld [vmem:[%s9242 + $0x88] sm:$0xff]
    %v9261 = vld [vmem:[%s9242 + $0x90] sm:$0xff]
    %v9262 = vld [vmem:[%s9242 + $0x98] sm:$0xff]
    %v9263 = vld [vmem:[%s9242 + $0xa0] sm:$0xff]
    %v9264 = vld [vmem:[%s9242 + $0xa8] sm:$0xff]
    %v9265 = vld [vmem:[%s9242 + $0xb0] sm:$0xff]
    %v9266 = vld [vmem:[%s9242 + $0xb8] sm:$0xff]
    %v9267 = vld [vmem:[%s9242 + $0xc0] sm:$0xff]
    %v9268 = vld [vmem:[%s9242 + $0xc8] sm:$0xff]
    %v9269 = vld [vmem:[%s9242 + $0xd0] sm:$0xff]
    %v9270 = vld [vmem:[%s9242 + $0xd8] sm:$0xff]
    %v9271 = vld [vmem:[%s9242 + $0xe0] sm:$0xff]
    %v9272 = vld [vmem:[%s9242 + $0xe8] sm:$0xff]
    %v9273 = vld [vmem:[%s9242 + $0xf0] sm:$0xff]
    %v9274 = vld [vmem:[%s9242 + $0xf8] sm:$0xff]
    %v9275 = vld [vmem:[%s9242 + $0x100] sm:$0xff]
    %v9276 = vld [vmem:[%s9242 + $0x108] sm:$0xff]
    %v9277 = vld [vmem:[%s9242 + $0x110] sm:$0xff]
    %v9278 = vld [vmem:[%s9242 + $0x118] sm:$0xff]
    %v9279 = vld [vmem:[%s9242 + $0x120] sm:$0xff]
    %v9280 = vld [vmem:[%s9242 + $0x128] sm:$0xff]
    %v9281 = vld [vmem:[%s9242 + $0x130] sm:$0xff]
    %v9282 = vld [vmem:[%s9242 + $0x138] sm:$0xff]
    %v9283 = vld [vmem:[%s9242 + $0x140] sm:$0xff]
    %v9284 = vld [vmem:[%s9242 + $0x148] sm:$0xff]
    %v9285 = vld [vmem:[%s9242 + $0x150] sm:$0xff]
    %v9286 = vld [vmem:[%s9242 + $0x158] sm:$0xff]
    %v9287 = vld [vmem:[%s9242 + $0x160] sm:$0xff]
    %v9288 = vld [vmem:[%s9242 + $0x168] sm:$0xff]
    %v9289 = vld [vmem:[%s9242 + $0x170] sm:$0xff]
    %v9290 = vld [vmem:[%s9242 + $0x178] sm:$0xff]
    %v9291 = vld [vmem:[%s9242 + $0x180] sm:$0xff]
    %v9292 = vld [vmem:[%s9242 + $0x188] sm:$0xff]
    %v9293 = vld [vmem:[%s9242 + $0x190] sm:$0xff]
    %v9294 = vld [vmem:[%s9242 + $0x198] sm:$0xff]
    %v9295 = vld [vmem:[%s9242 + $0x1a0] sm:$0xff]
    %v9296 = vld [vmem:[%s9242 + $0x1a8] sm:$0xff]
    %v9297 = vld [vmem:[%s9242 + $0x1b0] sm:$0xff]
    %v9298 = vld [vmem:[%s9242 + $0x1b8] sm:$0xff]
    %v9299 = vld [vmem:[%s9242 + $0x1c0] sm:$0xff]
    %v9300 = vld [vmem:[%s9242 + $0x1c8] sm:$0xff]
    %v9301 = vld [vmem:[%s9242 + $0x1d0] sm:$0xff]
    %v9302 = vld [vmem:[%s9242 + $0x1d8] sm:$0xff]
    %v9303 = vld [vmem:[%s9242 + $0x1e0] sm:$0xff]
    %v9304 = vld [vmem:[%s9242 + $0x1e8] sm:$0xff]
    %v9305 = vld [vmem:[%s9242 + $0x1f0] sm:$0xff]
    %v9306 = vld [vmem:[%s9242 + $0x1f8] sm:$0xff]
    %v9307 = vld [vmem:[%s9242 + $0x200] sm:$0xff]
    %v9308 = vld [vmem:[%s9242 + $0x208] sm:$0xff]
    %v9309 = vld [vmem:[%s9242 + $0x210] sm:$0xff]
    %v9310 = vld [vmem:[%s9242 + $0x218] sm:$0xff]
    %v9311 = vld [vmem:[%s9242 + $0x220] sm:$0xff]
    %v9312 = vld [vmem:[%s9242 + $0x228] sm:$0xff]
    %v9313 = vld [vmem:[%s9242 + $0x230] sm:$0xff]
    %v9314 = vld [vmem:[%s9242 + $0x238] sm:$0xff]
    %v9315 = vld [vmem:[%s9242 + $0x240] sm:$0xff]
    %v9316 = vld [vmem:[%s9242 + $0x248] sm:$0xff]
    %v9317 = vld [vmem:[%s9242 + $0x250] sm:$0xff]
    %v9318 = vld [vmem:[%s9242 + $0x258] sm:$0xff]
    %v9319 = vld [vmem:[%s9242 + $0x260] sm:$0xff]
    %v9320 = vld [vmem:[%s9242 + $0x268] sm:$0xff]
    %v9321 = vld [vmem:[%s9242 + $0x270] sm:$0xff]
    %v9322 = vld [vmem:[%s9242 + $0x278] sm:$0xff]
    %v9323 = vld [vmem:[%s9242 + $0x280] sm:$0xff]
    %v9324 = vld [vmem:[%s9242 + $0x288] sm:$0xff]
    %v9325 = vld [vmem:[%s9242 + $0x290] sm:$0xff]
    %v9326 = vld [vmem:[%s9242 + $0x298] sm:$0xff]
    %v9327 = vld [vmem:[%s9242 + $0x2a0] sm:$0xff]
    %v9328 = vld [vmem:[%s9242 + $0x2a8] sm:$0xff]
    %v9329 = vld [vmem:[%s9242 + $0x2b0] sm:$0xff]
    %v9330 = vld [vmem:[%s9242 + $0x2b8] sm:$0xff]
    %v9331 = vld [vmem:[%s9242 + $0x2c0] sm:$0xff]
    %v9332 = vld [vmem:[%s9242 + $0x2c8] sm:$0xff]
    %v9333 = vld [vmem:[%s9242 + $0x2d0] sm:$0xff]
    %v9334 = vld [vmem:[%s9242 + $0x2d8] sm:$0xff]
    %v9335 = vld [vmem:[%s9242 + $0x2e0] sm:$0xff]
    %v9336 = vld [vmem:[%s9242 + $0x2e8] sm:$0xff]
    %v9337 = vld [vmem:[%s9242 + $0x2f0] sm:$0xff]
    %v9338 = vld [vmem:[%s9242 + $0x2f8] sm:$0xff]
    %v9339 = vld [vmem:[%s9242 + $0x300] sm:$0xff]
    %v9340 = vld [vmem:[%s9242 + $0x308] sm:$0xff]
    %v9341 = vld [vmem:[%s9242 + $0x310] sm:$0xff]
    %v9342 = vld [vmem:[%s9242 + $0x318] sm:$0xff]
    %v9343 = vld [vmem:[%s9242 + $0x320] sm:$0xff]
    %v9344 = vld [vmem:[%s9242 + $0x328] sm:$0xff]
    %v9345 = vld [vmem:[%s9242 + $0x330] sm:$0xff]
    %v9346 = vld [vmem:[%s9242 + $0x338] sm:$0xff]
    %v9347 = vld [vmem:[%s9242 + $0x340] sm:$0xff]
    %v9348 = vld [vmem:[%s9242 + $0x348] sm:$0xff]
    %v9349 = vld [vmem:[%s9242 + $0x350] sm:$0xff]
    %v9350 = vld [vmem:[%s9242 + $0x358] sm:$0xff]
    %v9351 = vld [vmem:[%s9242 + $0x360] sm:$0xff]
    %v9352 = vld [vmem:[%s9242 + $0x368] sm:$0xff]
    %v9353 = vld [vmem:[%s9242 + $0x370] sm:$0xff]
    %v9354 = vld [vmem:[%s9242 + $0x378] sm:$0xff]
    %v9355 = vld [vmem:[%s9242 + $0x380] sm:$0xff]
    %v9356 = vld [vmem:[%s9242 + $0x388] sm:$0xff]
    %v9357 = vld [vmem:[%s9242 + $0x390] sm:$0xff]
    %v9358 = vld [vmem:[%s9242 + $0x398] sm:$0xff]
    %v9359 = vld [vmem:[%s9242 + $0x3a0] sm:$0xff]
    %v9360 = vld [vmem:[%s9242 + $0x3a8] sm:$0xff]
    %v9361 = vld [vmem:[%s9242 + $0x3b0] sm:$0xff]
    %v9362 = vld [vmem:[%s9242 + $0x3b8] sm:$0xff]
    %v9363 = vld [vmem:[%s9242 + $0x3c0] sm:$0xff]
    %v9364 = vld [vmem:[%s9242 + $0x3c8] sm:$0xff]
    %v9365 = vld [vmem:[%s9242 + $0x3d0] sm:$0xff]
    %v9366 = vld [vmem:[%s9242 + $0x3d8] sm:$0xff]
    %v9367 = vld [vmem:[%s9242 + $0x3e0] sm:$0xff]
    %v9368 = vld [vmem:[%s9242 + $0x3e8] sm:$0xff]
    %v9369 = vld [vmem:[%s9242 + $0x3f0] sm:$0xff]
    %v9370 = vld [vmem:[%s9242 + $0x3f8] sm:$0xff]
    %s9371 = scalar_lea.vmem [#allocation6], 32
    %v9372 = vld [vmem:[%s9371] sm:$0xf]
    %v9374 = vlaneseq
    %v9375 = vshrl.u32 %v9374, 7
    %v9376 = vsub.s32 0, %v9375
    %v9377 = vrot.slane %v9372, %v9376
    %v9378 = vlaneseq
    %v9379 = vshrl.u32 %v9378, 7
    %v9380 = vsub.s32 1, %v9379
    %v9381 = vrot.slane %v9372, %v9380
    %v9382 = vlaneseq
    %v9383 = vshrl.u32 %v9382, 7
    %v9384 = vsub.s32 2, %v9383
    %v9385 = vrot.slane %v9372, %v9384
    %v9386 = vlaneseq
    %v9387 = vshrl.u32 %v9386, 7
    %v9388 = vsub.s32 3, %v9387
    %v9389 = vrot.slane %v9372, %v9388
    %v9522 = vunpack.c.l.b16 %v9243
    %v9523 = vunpack.c.h.b16 %v9243
    %v9524 = vunpack.c.l.b16 %v9244
    %v9525 = vunpack.c.h.b16 %v9244
    %v9526 = vunpack.c.l.b16 %v9245
    %v9527 = vunpack.c.h.b16 %v9245
    %v9528 = vunpack.c.l.b16 %v9246
    %v9529 = vunpack.c.h.b16 %v9246
    %v9530 = vunpack.c.l.b16 %v9247
    %v9531 = vunpack.c.h.b16 %v9247
    %v9532 = vunpack.c.l.b16 %v9248
    %v9533 = vunpack.c.h.b16 %v9248
    %v9534 = vunpack.c.l.b16 %v9249
    %v9535 = vunpack.c.h.b16 %v9249
    %v9536 = vunpack.c.l.b16 %v9250
    %v9537 = vunpack.c.h.b16 %v9250
    %v9538 = vunpack.c.l.b16 %v9251
    %v9539 = vunpack.c.h.b16 %v9251
    %v9540 = vunpack.c.l.b16 %v9252
    %v9541 = vunpack.c.h.b16 %v9252
    %v9542 = vunpack.c.l.b16 %v9253
    %v9543 = vunpack.c.h.b16 %v9253
    %v9544 = vunpack.c.l.b16 %v9254
    %v9545 = vunpack.c.h.b16 %v9254
    %v9546 = vunpack.c.l.b16 %v9255
    %v9547 = vunpack.c.h.b16 %v9255
    %v9548 = vunpack.c.l.b16 %v9256
    %v9549 = vunpack.c.h.b16 %v9256
    %v9550 = vunpack.c.l.b16 %v9257
    %v9551 = vunpack.c.h.b16 %v9257
    %v9552 = vunpack.c.l.b16 %v9258
    %v9553 = vunpack.c.h.b16 %v9258
    %v9554 = vunpack.c.l.b16 %v9259
    %v9555 = vunpack.c.h.b16 %v9259
    %v9556 = vunpack.c.l.b16 %v9260
    %v9557 = vunpack.c.h.b16 %v9260
    %v9558 = vunpack.c.l.b16 %v9261
    %v9559 = vunpack.c.h.b16 %v9261
    %v9560 = vunpack.c.l.b16 %v9262
    %v9561 = vunpack.c.h.b16 %v9262
    %v9562 = vunpack.c.l.b16 %v9263
    %v9563 = vunpack.c.h.b16 %v9263
    %v9564 = vunpack.c.l.b16 %v9264
    %v9565 = vunpack.c.h.b16 %v9264
    %v9566 = vunpack.c.l.b16 %v9265
    %v9567 = vunpack.c.h.b16 %v9265
    %v9568 = vunpack.c.l.b16 %v9266
    %v9569 = vunpack.c.h.b16 %v9266
    %v9570 = vunpack.c.l.b16 %v9267
    %v9571 = vunpack.c.h.b16 %v9267
    %v9572 = vunpack.c.l.b16 %v9268
    %v9573 = vunpack.c.h.b16 %v9268
    %v9574 = vunpack.c.l.b16 %v9269
    %v9575 = vunpack.c.h.b16 %v9269
    %v9576 = vunpack.c.l.b16 %v9270
    %v9577 = vunpack.c.h.b16 %v9270
    %v9578 = vunpack.c.l.b16 %v9271
    %v9579 = vunpack.c.h.b16 %v9271
    %v9580 = vunpack.c.l.b16 %v9272
    %v9581 = vunpack.c.h.b16 %v9272
    %v9582 = vunpack.c.l.b16 %v9273
    %v9583 = vunpack.c.h.b16 %v9273
    %v9584 = vunpack.c.l.b16 %v9274
    %v9585 = vunpack.c.h.b16 %v9274
    %v9586 = vunpack.c.l.b16 %v9275
    %v9587 = vunpack.c.h.b16 %v9275
    %v9588 = vunpack.c.l.b16 %v9276
    %v9589 = vunpack.c.h.b16 %v9276
    %v9590 = vunpack.c.l.b16 %v9277
    %v9591 = vunpack.c.h.b16 %v9277
    %v9592 = vunpack.c.l.b16 %v9278
    %v9593 = vunpack.c.h.b16 %v9278
    %v9594 = vunpack.c.l.b16 %v9279
    %v9595 = vunpack.c.h.b16 %v9279
    %v9596 = vunpack.c.l.b16 %v9280
    %v9597 = vunpack.c.h.b16 %v9280
    %v9598 = vunpack.c.l.b16 %v9281
    %v9599 = vunpack.c.h.b16 %v9281
    %v9600 = vunpack.c.l.b16 %v9282
    %v9601 = vunpack.c.h.b16 %v9282
    %v9602 = vunpack.c.l.b16 %v9283
    %v9603 = vunpack.c.h.b16 %v9283
    %v9604 = vunpack.c.l.b16 %v9284
    %v9605 = vunpack.c.h.b16 %v9284
    %v9606 = vunpack.c.l.b16 %v9285
    %v9607 = vunpack.c.h.b16 %v9285
    %v9608 = vunpack.c.l.b16 %v9286
    %v9609 = vunpack.c.h.b16 %v9286
    %v9610 = vunpack.c.l.b16 %v9287
    %v9611 = vunpack.c.h.b16 %v9287
    %v9612 = vunpack.c.l.b16 %v9288
    %v9613 = vunpack.c.h.b16 %v9288
    %v9614 = vunpack.c.l.b16 %v9289
    %v9615 = vunpack.c.h.b16 %v9289
    %v9616 = vunpack.c.l.b16 %v9290
    %v9617 = vunpack.c.h.b16 %v9290
    %v9618 = vunpack.c.l.b16 %v9291
    %v9619 = vunpack.c.h.b16 %v9291
    %v9620 = vunpack.c.l.b16 %v9292
    %v9621 = vunpack.c.h.b16 %v9292
    %v9622 = vunpack.c.l.b16 %v9293
    %v9623 = vunpack.c.h.b16 %v9293
    %v9624 = vunpack.c.l.b16 %v9294
    %v9625 = vunpack.c.h.b16 %v9294
    %v9626 = vunpack.c.l.b16 %v9295
    %v9627 = vunpack.c.h.b16 %v9295
    %v9628 = vunpack.c.l.b16 %v9296
    %v9629 = vunpack.c.h.b16 %v9296
    %v9630 = vunpack.c.l.b16 %v9297
    %v9631 = vunpack.c.h.b16 %v9297
    %v9632 = vunpack.c.l.b16 %v9298
    %v9633 = vunpack.c.h.b16 %v9298
    %v9634 = vunpack.c.l.b16 %v9299
    %v9635 = vunpack.c.h.b16 %v9299
    %v9636 = vunpack.c.l.b16 %v9300
    %v9637 = vunpack.c.h.b16 %v9300
    %v9638 = vunpack.c.l.b16 %v9301
    %v9639 = vunpack.c.h.b16 %v9301
    %v9640 = vunpack.c.l.b16 %v9302
    %v9641 = vunpack.c.h.b16 %v9302
    %v9642 = vunpack.c.l.b16 %v9303
    %v9643 = vunpack.c.h.b16 %v9303
    %v9644 = vunpack.c.l.b16 %v9304
    %v9645 = vunpack.c.h.b16 %v9304
    %v9646 = vunpack.c.l.b16 %v9305
    %v9647 = vunpack.c.h.b16 %v9305
    %v9648 = vunpack.c.l.b16 %v9306
    %v9649 = vunpack.c.h.b16 %v9306
    %v9650 = vunpack.c.l.b16 %v9307
    %v9651 = vunpack.c.h.b16 %v9307
    %v9652 = vunpack.c.l.b16 %v9308
    %v9653 = vunpack.c.h.b16 %v9308
    %v9654 = vunpack.c.l.b16 %v9309
    %v9655 = vunpack.c.h.b16 %v9309
    %v9656 = vunpack.c.l.b16 %v9310
    %v9657 = vunpack.c.h.b16 %v9310
    %v9658 = vunpack.c.l.b16 %v9311
    %v9659 = vunpack.c.h.b16 %v9311
    %v9660 = vunpack.c.l.b16 %v9312
    %v9661 = vunpack.c.h.b16 %v9312
    %v9662 = vunpack.c.l.b16 %v9313
    %v9663 = vunpack.c.h.b16 %v9313
    %v9664 = vunpack.c.l.b16 %v9314
    %v9665 = vunpack.c.h.b16 %v9314
    %v9666 = vunpack.c.l.b16 %v9315
    %v9667 = vunpack.c.h.b16 %v9315
    %v9668 = vunpack.c.l.b16 %v9316
    %v9669 = vunpack.c.h.b16 %v9316
    %v9670 = vunpack.c.l.b16 %v9317
    %v9671 = vunpack.c.h.b16 %v9317
    %v9672 = vunpack.c.l.b16 %v9318
    %v9673 = vunpack.c.h.b16 %v9318
    %v9674 = vunpack.c.l.b16 %v9319
    %v9675 = vunpack.c.h.b16 %v9319
    %v9676 = vunpack.c.l.b16 %v9320
    %v9677 = vunpack.c.h.b16 %v9320
    %v9678 = vunpack.c.l.b16 %v9321
    %v9679 = vunpack.c.h.b16 %v9321
    %v9680 = vunpack.c.l.b16 %v9322
    %v9681 = vunpack.c.h.b16 %v9322
    %v9682 = vunpack.c.l.b16 %v9323
    %v9683 = vunpack.c.h.b16 %v9323
    %v9684 = vunpack.c.l.b16 %v9324
    %v9685 = vunpack.c.h.b16 %v9324
    %v9686 = vunpack.c.l.b16 %v9325
    %v9687 = vunpack.c.h.b16 %v9325
    %v9688 = vunpack.c.l.b16 %v9326
    %v9689 = vunpack.c.h.b16 %v9326
    %v9690 = vunpack.c.l.b16 %v9327
    %v9691 = vunpack.c.h.b16 %v9327
    %v9692 = vunpack.c.l.b16 %v9328
    %v9693 = vunpack.c.h.b16 %v9328
    %v9694 = vunpack.c.l.b16 %v9329
    %v9695 = vunpack.c.h.b16 %v9329
    %v9696 = vunpack.c.l.b16 %v9330
    %v9697 = vunpack.c.h.b16 %v9330
    %v9698 = vunpack.c.l.b16 %v9331
    %v9699 = vunpack.c.h.b16 %v9331
    %v9700 = vunpack.c.l.b16 %v9332
    %v9701 = vunpack.c.h.b16 %v9332
    %v9702 = vunpack.c.l.b16 %v9333
    %v9703 = vunpack.c.h.b16 %v9333
    %v9704 = vunpack.c.l.b16 %v9334
    %v9705 = vunpack.c.h.b16 %v9334
    %v9706 = vunpack.c.l.b16 %v9335
    %v9707 = vunpack.c.h.b16 %v9335
    %v9708 = vunpack.c.l.b16 %v9336
    %v9709 = vunpack.c.h.b16 %v9336
    %v9710 = vunpack.c.l.b16 %v9337
    %v9711 = vunpack.c.h.b16 %v9337
    %v9712 = vunpack.c.l.b16 %v9338
    %v9713 = vunpack.c.h.b16 %v9338
    %v9714 = vunpack.c.l.b16 %v9339
    %v9715 = vunpack.c.h.b16 %v9339
    %v9716 = vunpack.c.l.b16 %v9340
    %v9717 = vunpack.c.h.b16 %v9340
    %v9718 = vunpack.c.l.b16 %v9341
    %v9719 = vunpack.c.h.b16 %v9341
    %v9720 = vunpack.c.l.b16 %v9342
    %v9721 = vunpack.c.h.b16 %v9342
    %v9722 = vunpack.c.l.b16 %v9343
    %v9723 = vunpack.c.h.b16 %v9343
    %v9724 = vunpack.c.l.b16 %v9344
    %v9725 = vunpack.c.h.b16 %v9344
    %v9726 = vunpack.c.l.b16 %v9345
    %v9727 = vunpack.c.h.b16 %v9345
    %v9728 = vunpack.c.l.b16 %v9346
    %v9729 = vunpack.c.h.b16 %v9346
    %v9730 = vunpack.c.l.b16 %v9347
    %v9731 = vunpack.c.h.b16 %v9347
    %v9732 = vunpack.c.l.b16 %v9348
    %v9733 = vunpack.c.h.b16 %v9348
    %v9734 = vunpack.c.l.b16 %v9349
    %v9735 = vunpack.c.h.b16 %v9349
    %v9736 = vunpack.c.l.b16 %v9350
    %v9737 = vunpack.c.h.b16 %v9350
    %v9738 = vunpack.c.l.b16 %v9351
    %v9739 = vunpack.c.h.b16 %v9351
    %v9740 = vunpack.c.l.b16 %v9352
    %v9741 = vunpack.c.h.b16 %v9352
    %v9742 = vunpack.c.l.b16 %v9353
    %v9743 = vunpack.c.h.b16 %v9353
    %v9744 = vunpack.c.l.b16 %v9354
    %v9745 = vunpack.c.h.b16 %v9354
    %v9746 = vunpack.c.l.b16 %v9355
    %v9747 = vunpack.c.h.b16 %v9355
    %v9748 = vunpack.c.l.b16 %v9356
    %v9749 = vunpack.c.h.b16 %v9356
    %v9750 = vunpack.c.l.b16 %v9357
    %v9751 = vunpack.c.h.b16 %v9357
    %v9752 = vunpack.c.l.b16 %v9358
    %v9753 = vunpack.c.h.b16 %v9358
    %v9754 = vunpack.c.l.b16 %v9359
    %v9755 = vunpack.c.h.b16 %v9359
    %v9756 = vunpack.c.l.b16 %v9360
    %v9757 = vunpack.c.h.b16 %v9360
    %v9758 = vunpack.c.l.b16 %v9361
    %v9759 = vunpack.c.h.b16 %v9361
    %v9760 = vunpack.c.l.b16 %v9362
    %v9761 = vunpack.c.h.b16 %v9362
    %v9762 = vunpack.c.l.b16 %v9363
    %v9763 = vunpack.c.h.b16 %v9363
    %v9764 = vunpack.c.l.b16 %v9364
    %v9765 = vunpack.c.h.b16 %v9364
    %v9766 = vunpack.c.l.b16 %v9365
    %v9767 = vunpack.c.h.b16 %v9365
    %v9768 = vunpack.c.l.b16 %v9366
    %v9769 = vunpack.c.h.b16 %v9366
    %v9770 = vunpack.c.l.b16 %v9367
    %v9771 = vunpack.c.h.b16 %v9367
    %v9772 = vunpack.c.l.b16 %v9368
    %v9773 = vunpack.c.h.b16 %v9368
    %v9774 = vunpack.c.l.b16 %v9369
    %v9775 = vunpack.c.h.b16 %v9369
    %v9776 = vunpack.c.l.b16 %v9370
    %v9777 = vunpack.c.h.b16 %v9370
    %v9778 = vpack.c.b16 %v9526, %v9522
    %v9779 = vpack.c.b16 %v9527, %v9523
    %v9780 = vpack.c.b16 %v9528, %v9524
    %v9781 = vpack.c.b16 %v9529, %v9525
    %v9782 = vpack.c.b16 %v9534, %v9530
    %v9783 = vpack.c.b16 %v9535, %v9531
    %v9784 = vpack.c.b16 %v9536, %v9532
    %v9785 = vpack.c.b16 %v9537, %v9533
    %v9786 = vpack.c.b16 %v9542, %v9538
    %v9787 = vpack.c.b16 %v9543, %v9539
    %v9788 = vpack.c.b16 %v9544, %v9540
    %v9789 = vpack.c.b16 %v9545, %v9541
    %v9790 = vpack.c.b16 %v9550, %v9546
    %v9791 = vpack.c.b16 %v9551, %v9547
    %v9792 = vpack.c.b16 %v9552, %v9548
    %v9793 = vpack.c.b16 %v9553, %v9549
    %v9794 = vpack.c.b16 %v9558, %v9554
    %v9795 = vpack.c.b16 %v9559, %v9555
    %v9796 = vpack.c.b16 %v9560, %v9556
    %v9797 = vpack.c.b16 %v9561, %v9557
    %v9798 = vpack.c.b16 %v9566, %v9562
    %v9799 = vpack.c.b16 %v9567, %v9563
    %v9800 = vpack.c.b16 %v9568, %v9564
    %v9801 = vpack.c.b16 %v9569, %v9565
    %v9802 = vpack.c.b16 %v9574, %v9570
    %v9803 = vpack.c.b16 %v9575, %v9571
    %v9804 = vpack.c.b16 %v9576, %v9572
    %v9805 = vpack.c.b16 %v9577, %v9573
    %v9806 = vpack.c.b16 %v9582, %v9578
    %v9807 = vpack.c.b16 %v9583, %v9579
    %v9808 = vpack.c.b16 %v9584, %v9580
    %v9809 = vpack.c.b16 %v9585, %v9581
    %v9810 = vpack.c.b16 %v9590, %v9586
    %v9811 = vpack.c.b16 %v9591, %v9587
    %v9812 = vpack.c.b16 %v9592, %v9588
    %v9813 = vpack.c.b16 %v9593, %v9589
    %v9814 = vpack.c.b16 %v9598, %v9594
    %v9815 = vpack.c.b16 %v9599, %v9595
    %v9816 = vpack.c.b16 %v9600, %v9596
    %v9817 = vpack.c.b16 %v9601, %v9597
    %v9818 = vpack.c.b16 %v9606, %v9602
    %v9819 = vpack.c.b16 %v9607, %v9603
    %v9820 = vpack.c.b16 %v9608, %v9604
    %v9821 = vpack.c.b16 %v9609, %v9605
    %v9822 = vpack.c.b16 %v9614, %v9610
    %v9823 = vpack.c.b16 %v9615, %v9611
    %v9824 = vpack.c.b16 %v9616, %v9612
    %v9825 = vpack.c.b16 %v9617, %v9613
    %v9826 = vpack.c.b16 %v9622, %v9618
    %v9827 = vpack.c.b16 %v9623, %v9619
    %v9828 = vpack.c.b16 %v9624, %v9620
    %v9829 = vpack.c.b16 %v9625, %v9621
    %v9830 = vpack.c.b16 %v9630, %v9626
    %v9831 = vpack.c.b16 %v9631, %v9627
    %v9832 = vpack.c.b16 %v9632, %v9628
    %v9833 = vpack.c.b16 %v9633, %v9629
    %v9834 = vpack.c.b16 %v9638, %v9634
    %v9835 = vpack.c.b16 %v9639, %v9635
    %v9836 = vpack.c.b16 %v9640, %v9636
    %v9837 = vpack.c.b16 %v9641, %v9637
    %v9838 = vpack.c.b16 %v9646, %v9642
    %v9839 = vpack.c.b16 %v9647, %v9643
    %v9840 = vpack.c.b16 %v9648, %v9644
    %v9841 = vpack.c.b16 %v9649, %v9645
    %v9842 = vpack.c.b16 %v9654, %v9650
    %v9843 = vpack.c.b16 %v9655, %v9651
    %v9844 = vpack.c.b16 %v9656, %v9652
    %v9845 = vpack.c.b16 %v9657, %v9653
    %v9846 = vpack.c.b16 %v9662, %v9658
    %v9847 = vpack.c.b16 %v9663, %v9659
    %v9848 = vpack.c.b16 %v9664, %v9660
    %v9849 = vpack.c.b16 %v9665, %v9661
    %v9850 = vpack.c.b16 %v9670, %v9666
    %v9851 = vpack.c.b16 %v9671, %v9667
    %v9852 = vpack.c.b16 %v9672, %v9668
    %v9853 = vpack.c.b16 %v9673, %v9669
    %v9854 = vpack.c.b16 %v9678, %v9674
    %v9855 = vpack.c.b16 %v9679, %v9675
    %v9856 = vpack.c.b16 %v9680, %v9676
    %v9857 = vpack.c.b16 %v9681, %v9677
    %v9858 = vpack.c.b16 %v9686, %v9682
    %v9859 = vpack.c.b16 %v9687, %v9683
    %v9860 = vpack.c.b16 %v9688, %v9684
    %v9861 = vpack.c.b16 %v9689, %v9685
    %v9862 = vpack.c.b16 %v9694, %v9690
    %v9863 = vpack.c.b16 %v9695, %v9691
    %v9864 = vpack.c.b16 %v9696, %v9692
    %v9865 = vpack.c.b16 %v9697, %v9693
    %v9866 = vpack.c.b16 %v9702, %v9698
    %v9867 = vpack.c.b16 %v9703, %v9699
    %v9868 = vpack.c.b16 %v9704, %v9700
    %v9869 = vpack.c.b16 %v9705, %v9701
    %v9870 = vpack.c.b16 %v9710, %v9706
    %v9871 = vpack.c.b16 %v9711, %v9707
    %v9872 = vpack.c.b16 %v9712, %v9708
    %v9873 = vpack.c.b16 %v9713, %v9709
    %v9874 = vpack.c.b16 %v9718, %v9714
    %v9875 = vpack.c.b16 %v9719, %v9715
    %v9876 = vpack.c.b16 %v9720, %v9716
    %v9877 = vpack.c.b16 %v9721, %v9717
    %v9878 = vpack.c.b16 %v9726, %v9722
    %v9879 = vpack.c.b16 %v9727, %v9723
    %v9880 = vpack.c.b16 %v9728, %v9724
    %v9881 = vpack.c.b16 %v9729, %v9725
    %v9882 = vpack.c.b16 %v9734, %v9730
    %v9883 = vpack.c.b16 %v9735, %v9731
    %v9884 = vpack.c.b16 %v9736, %v9732
    %v9885 = vpack.c.b16 %v9737, %v9733
    %v9886 = vpack.c.b16 %v9742, %v9738
    %v9887 = vpack.c.b16 %v9743, %v9739
    %v9888 = vpack.c.b16 %v9744, %v9740
    %v9889 = vpack.c.b16 %v9745, %v9741
    %v9890 = vpack.c.b16 %v9750, %v9746
    %v9891 = vpack.c.b16 %v9751, %v9747
    %v9892 = vpack.c.b16 %v9752, %v9748
    %v9893 = vpack.c.b16 %v9753, %v9749
    %v9894 = vpack.c.b16 %v9758, %v9754
    %v9895 = vpack.c.b16 %v9759, %v9755
    %v9896 = vpack.c.b16 %v9760, %v9756
    %v9897 = vpack.c.b16 %v9761, %v9757
    %v9898 = vpack.c.b16 %v9766, %v9762
    %v9899 = vpack.c.b16 %v9767, %v9763
    %v9900 = vpack.c.b16 %v9768, %v9764
    %v9901 = vpack.c.b16 %v9769, %v9765
    %v9902 = vpack.c.b16 %v9774, %v9770
    %v9903 = vpack.c.b16 %v9775, %v9771
    %v9904 = vpack.c.b16 %v9776, %v9772
    %v9905 = vpack.c.b16 %v9777, %v9773
    %10034 = vmatprep.subr.bf16.mxu0 %v9779
    %10035 = vmatpush1.bf16.msra.mxu0 %v9778
    %10036 = vmatprep.subr.bf16.mxu0 %v9783
    %10037 = vmatpush1.bf16.msra.mxu0 %v9782
    %10038 = vmatprep.subr.bf16.mxu0 %v9787
    %10039 = vmatpush1.bf16.msra.mxu0 %v9786
    %10040 = vmatprep.subr.bf16.mxu0 %v9791
    %10041 = vmatpush1.bf16.msra.mxu0 %v9790
    %10042 = vmatprep.subr.bf16.mxu0 %v9795
    %10043 = vmatpush1.bf16.msra.mxu0 %v9794
    %10044 = vmatprep.subr.bf16.mxu0 %v9799
    %10045 = vmatpush1.bf16.msra.mxu0 %v9798
    %10046 = vmatprep.subr.bf16.mxu0 %v9803
    %10047 = vmatpush1.bf16.msra.mxu0 %v9802
    %10048 = vmatprep.subr.bf16.mxu0 %v9807
    %10049 = vmatpush1.bf16.msra.mxu0 %v9806
    %10050 = vmatprep.subr.bf16.mxu0 %v9811
    %10051 = vmatpush1.bf16.msra.mxu0 %v9810
    %10052 = vmatprep.subr.bf16.mxu0 %v9815
    %10053 = vmatpush1.bf16.msra.mxu0 %v9814
    %10054 = vmatprep.subr.bf16.mxu0 %v9819
    %10055 = vmatpush1.bf16.msra.mxu0 %v9818
    %10056 = vmatprep.subr.bf16.mxu0 %v9823
    %10057 = vmatpush1.bf16.msra.mxu0 %v9822
    %10058 = vmatprep.subr.bf16.mxu0 %v9827
    %10059 = vmatpush1.bf16.msra.mxu0 %v9826
    %10060 = vmatprep.subr.bf16.mxu0 %v9831
    %10061 = vmatpush1.bf16.msra.mxu0 %v9830
    %10062 = vmatprep.subr.bf16.mxu0 %v9835
    %10063 = vmatpush1.bf16.msra.mxu0 %v9834
    %10064 = vmatprep.subr.bf16.mxu0 %v9839
    %10065 = vmatpush1.bf16.msra.mxu0 %v9838
    %10066 = vmatprep.mubr.bf16.mxu0 %v9235
    %10067 = vmatmul.mubr.bf16.gmra.mrb[0].mxu0 %v9234
    %v10068 = vpop.f32.mrb[0].mxu0
    %v10069 = vadd.f32 %v9377, %v10068
    %v10070 = vpop.f32.mrb[0].mxu0
    %v10071 = vadd.f32 %v9381, %v10070
    %v10072 = vpop.f32.mrb[0].mxu0
    %v10073 = vadd.f32 %v9377, %v10072
    %v10074 = vpop.f32.mrb[0].mxu0
    %v10075 = vadd.f32 %v9381, %v10074
    %10076 = vmatprep.mubr.bf16.mxu0 %v9239
    %10077 = vmatmul.mubr.bf16.gmra.mrb[0].mxu0 %v9238
    %v10078 = vpop.f32.mrb[0].mxu0
    %v10079 = vadd.f32 %v9377, %v10078
    %v10080 = vpop.f32.mrb[0].mxu0
    %v10081 = vadd.f32 %v9381, %v10080
    %v10082 = vpop.f32.mrb[0].mxu0
    %v10083 = vpop.f32.mrb[0].mxu0
    %10084 = vdwg.mxu0
    %10085 = vmatprep.subr.bf16.mxu0 %v9843
    %10086 = vmatpush1.bf16.msra.mxu0 %v9842
    %10087 = vmatprep.subr.bf16.mxu0 %v9847
    %10088 = vmatpush1.bf16.msra.mxu0 %v9846
    %10089 = vmatprep.subr.bf16.mxu0 %v9851
    %10090 = vmatpush1.bf16.msra.mxu0 %v9850
    %10091 = vmatprep.subr.bf16.mxu0 %v9855
    %10092 = vmatpush1.bf16.msra.mxu0 %v9854
    %10093 = vmatprep.subr.bf16.mxu0 %v9859
    %10094 = vmatpush1.bf16.msra.mxu0 %v9858
    %10095 = vmatprep.subr.bf16.mxu0 %v9863
    %10096 = vmatpush1.bf16.msra.mxu0 %v9862
    %10097 = vmatprep.subr.bf16.mxu0 %v9867
    %10098 = vmatpush1.bf16.msra.mxu0 %v9866
    %10099 = vmatprep.subr.bf16.mxu0 %v9871
    %10100 = vmatpush1.bf16.msra.mxu0 %v9870
    %10101 = vmatprep.subr.bf16.mxu0 %v9875
    %10102 = vmatpush1.bf16.msra.mxu0 %v9874
    %10103 = vmatprep.subr.bf16.mxu0 %v9879
    %10104 = vmatpush1.bf16.msra.mxu0 %v9878
    %10105 = vmatprep.subr.bf16.mxu0 %v9883
    %10106 = vmatpush1.bf16.msra.mxu0 %v9882
    %10107 = vmatprep.subr.bf16.mxu0 %v9887
    %10108 = vmatpush1.bf16.msra.mxu0 %v9886
    %10109 = vmatprep.subr.bf16.mxu0 %v9891
    %10110 = vmatpush1.bf16.msra.mxu0 %v9890
    %10111 = vmatprep.subr.bf16.mxu0 %v9895
    %10112 = vmatpush1.bf16.msra.mxu0 %v9894
    %10113 = vmatprep.subr.bf16.mxu0 %v9899
    %10114 = vmatpush1.bf16.msra.mxu0 %v9898
    %10115 = vmatprep.subr.bf16.mxu0 %v9903
    %10116 = vmatpush1.bf16.msra.mxu0 %v9902
    %10117 = vmatprep.mubr.bf16.mxu0 %v9237
    %10118 = vmatmul.mubr.bf16.gmra.mrb[0].mxu0 %v9236
    %v10119 = vpop.f32.mrb[0].mxu0
    %v10120 = vadd.f32 %v10069, %v10119
    %v10121 = vpop.f32.mrb[0].mxu0
    %v10122 = vadd.f32 %v10071, %v10121
    %v10123 = vpop.f32.mrb[0].mxu0
    %v10124 = vadd.f32 %v10073, %v10123
    %v10125 = vpop.f32.mrb[0].mxu0
    %v10126 = vadd.f32 %v10075, %v10125
    %10127 = vmatprep.mubr.bf16.mxu0 %v9241
    %10128 = vmatmul.mubr.bf16.gmra.mrb[0].mxu0 %v9240
    %v10129 = vpop.f32.mrb[0].mxu0
    %v10130 = vadd.f32 %v10079, %v10129
    %v10131 = vpop.f32.mrb[0].mxu0
    %v10132 = vadd.f32 %v10081, %v10131
    %v10133 = vpop.f32.mrb[0].mxu0
    %v10134 = vpop.f32.mrb[0].mxu0
    %10135 = vdwg.mxu0
    %10136 = vmatprep.subr.bf16.mxu0 %v9781
    %10137 = vmatpush1.bf16.msra.mxu0 %v9780
    %10138 = vmatprep.subr.bf16.mxu0 %v9785
    %10139 = vmatpush1.bf16.msra.mxu0 %v9784
    %10140 = vmatprep.subr.bf16.mxu0 %v9789
    %10141 = vmatpush1.bf16.msra.mxu0 %v9788
    %10142 = vmatprep.subr.bf16.mxu0 %v9793
    %10143 = vmatpush1.bf16.msra.mxu0 %v9792
    %10144 = vmatprep.subr.bf16.mxu0 %v9797
    %10145 = vmatpush1.bf16.msra.mxu0 %v9796
    %10146 = vmatprep.subr.bf16.mxu0 %v9801
    %10147 = vmatpush1.bf16.msra.mxu0 %v9800
    %10148 = vmatprep.subr.bf16.mxu0 %v9805
    %10149 = vmatpush1.bf16.msra.mxu0 %v9804
    %10150 = vmatprep.subr.bf16.mxu0 %v9809
    %10151 = vmatpush1.bf16.msra.mxu0 %v9808
    %10152 = vmatprep.subr.bf16.mxu0 %v9813
    %10153 = vmatpush1.bf16.msra.mxu0 %v9812
    %10154 = vmatprep.subr.bf16.mxu0 %v9817
    %10155 = vmatpush1.bf16.msra.mxu0 %v9816
    %10156 = vmatprep.subr.bf16.mxu0 %v9821
    %10157 = vmatpush1.bf16.msra.mxu0 %v9820
    %10158 = vmatprep.subr.bf16.mxu0 %v9825
    %10159 = vmatpush1.bf16.msra.mxu0 %v9824
    %10160 = vmatprep.subr.bf16.mxu0 %v9829
    %10161 = vmatpush1.bf16.msra.mxu0 %v9828
    %10162 = vmatprep.subr.bf16.mxu0 %v9833
    %10163 = vmatpush1.bf16.msra.mxu0 %v9832
    %10164 = vmatprep.subr.bf16.mxu0 %v9837
    %10165 = vmatpush1.bf16.msra.mxu0 %v9836
    %10166 = vmatprep.subr.bf16.mxu0 %v9841
    %10167 = vmatpush1.bf16.msra.mxu0 %v9840
    %10168 = vmatprep.mubr.bf16.mxu0 %v9235
    %10169 = vmatmul.mubr.bf16.gmra.mrb[0].mxu0 %v9234
    %v10170 = vpop.f32.mrb[0].mxu0
    %v10171 = vadd.f32 %v9385, %v10170
    %v10172 = vpop.f32.mrb[0].mxu0
    %v10173 = vadd.f32 %v9389, %v10172
    %v10174 = vpop.f32.mrb[0].mxu0
    %v10175 = vadd.f32 %v9385, %v10174
    %v10176 = vpop.f32.mrb[0].mxu0
    %v10177 = vadd.f32 %v9389, %v10176
    %10178 = vmatprep.mubr.bf16.mxu0 %v9239
    %10179 = vmatmul.mubr.bf16.gmra.mrb[0].mxu0 %v9238
    %v10180 = vpop.f32.mrb[0].mxu0
    %v10181 = vadd.f32 %v9385, %v10180
    %v10182 = vpop.f32.mrb[0].mxu0
    %v10183 = vadd.f32 %v9389, %v10182
    %v10184 = vpop.f32.mrb[0].mxu0
    %v10185 = vpop.f32.mrb[0].mxu0
    %10186 = vdwg.mxu0
    %10187 = vmatprep.subr.bf16.mxu0 %v9845
    %10188 = vmatpush1.bf16.msra.mxu0 %v9844
    %10189 = vmatprep.subr.bf16.mxu0 %v9849
    %10190 = vmatpush1.bf16.msra.mxu0 %v9848
    %10191 = vmatprep.subr.bf16.mxu0 %v9853
    %10192 = vmatpush1.bf16.msra.mxu0 %v9852
    %10193 = vmatprep.subr.bf16.mxu0 %v9857
    %10194 = vmatpush1.bf16.msra.mxu0 %v9856
    %10195 = vmatprep.subr.bf16.mxu0 %v9861
    %10196 = vmatpush1.bf16.msra.mxu0 %v9860
    %10197 = vmatprep.subr.bf16.mxu0 %v9865
    %10198 = vmatpush1.bf16.msra.mxu0 %v9864
    %10199 = vmatprep.subr.bf16.mxu0 %v9869
    %10200 = vmatpush1.bf16.msra.mxu0 %v9868
    %10201 = vmatprep.subr.bf16.mxu0 %v9873
    %10202 = vmatpush1.bf16.msra.mxu0 %v9872
    %10203 = vmatprep.subr.bf16.mxu0 %v9877
    %10204 = vmatpush1.bf16.msra.mxu0 %v9876
    %10205 = vmatprep.subr.bf16.mxu0 %v9881
    %10206 = vmatpush1.bf16.msra.mxu0 %v9880
    %10207 = vmatprep.subr.bf16.mxu0 %v9885
    %10208 = vmatpush1.bf16.msra.mxu0 %v9884
    %10209 = vmatprep.subr.bf16.mxu0 %v9889
    %10210 = vmatpush1.bf16.msra.mxu0 %v9888
    %10211 = vmatprep.subr.bf16.mxu0 %v9893
    %10212 = vmatpush1.bf16.msra.mxu0 %v9892
    %10213 = vmatprep.subr.bf16.mxu0 %v9897
    %10214 = vmatpush1.bf16.msra.mxu0 %v9896
    %10215 = vmatprep.subr.bf16.mxu0 %v9901
    %10216 = vmatpush1.bf16.msra.mxu0 %v9900
    %10217 = vmatprep.subr.bf16.mxu0 %v9905
    %10218 = vmatpush1.bf16.msra.mxu0 %v9904
    %10219 = vmatprep.mubr.bf16.mxu0 %v9237
    %10220 = vmatmul.mubr.bf16.gmra.mrb[0].mxu0 %v9236
    %v10221 = vpop.f32.mrb[0].mxu0
    %v10222 = vadd.f32 %v10171, %v10221
    %v10223 = vpop.f32.mrb[0].mxu0
    %v10224 = vadd.f32 %v10173, %v10223
    %v10225 = vpop.f32.mrb[0].mxu0
    %v10226 = vadd.f32 %v10175, %v10225
    %v10227 = vpop.f32.mrb[0].mxu0
    %v10228 = vadd.f32 %v10177, %v10227
    %10229 = vmatprep.mubr.bf16.mxu0 %v9241
    %10230 = vmatmul.mubr.bf16.gmra.mrb[0].mxu0 %v9240
    %v10231 = vpop.f32.mrb[0].mxu0
    %v10232 = vadd.f32 %v10181, %v10231
    %v10233 = vpop.f32.mrb[0].mxu0
    %v10234 = vadd.f32 %v10183, %v10233
    %v10235 = vpop.f32.mrb[0].mxu0
    %v10236 = vpop.f32.mrb[0].mxu0
    %10237 = vdwg.mxu0
    %vm10238 = vcmp.ge.f32.partialorder %v10120, 0.0
    %vm10239 = vcmp.ge.f32.partialorder %v10122, 0.0
    %vm10240 = vcmp.ge.f32.partialorder %v10222, 0.0
    %vm10241 = vcmp.ge.f32.partialorder %v10224, 0.0
    %vm10242 = vcmp.ge.f32.partialorder %v10124, 0.0
    %vm10243 = vcmp.ge.f32.partialorder %v10126, 0.0
    %vm10244 = vcmp.ge.f32.partialorder %v10226, 0.0
    %vm10245 = vcmp.ge.f32.partialorder %v10228, 0.0
    %vm10246 = vcmp.ge.f32.partialorder %v10130, 0.0
    %vm10247 = vcmp.ge.f32.partialorder %v10132, 0.0
    %vm10248 = vcmp.ge.f32.partialorder %v10232, 0.0
    %vm10249 = vcmp.ge.f32.partialorder %v10234, 0.0
    %v10250 = vmul.f32 %v10120, 0.2
    %v10251 = vmul.f32 %v10122, 0.2
    %v10252 = vmul.f32 %v10222, 0.2
    %v10253 = vmul.f32 %v10224, 0.2
    %v10254 = vmul.f32 %v10124, 0.2
    %v10255 = vmul.f32 %v10126, 0.2
    %v10256 = vmul.f32 %v10226, 0.2
    %v10257 = vmul.f32 %v10228, 0.2
    %v10258 = vmul.f32 %v10130, 0.2
    %v10259 = vmul.f32 %v10132, 0.2
    %v10260 = vmul.f32 %v10232, 0.2
    %v10261 = vmul.f32 %v10234, 0.2
    %v10262 = vsel %vm10238, %v10120, %v10250
    %v10263 = vsel %vm10239, %v10122, %v10251
    %v10264 = vsel %vm10240, %v10222, %v10252
    %v10265 = vsel %vm10241, %v10224, %v10253
    %v10266 = vsel %vm10242, %v10124, %v10254
    %v10267 = vsel %vm10243, %v10126, %v10255
    %v10268 = vsel %vm10244, %v10226, %v10256
    %v10269 = vsel %vm10245, %v10228, %v10257
    %v10270 = vsel %vm10246, %v10130, %v10258
    %v10271 = vsel %vm10247, %v10132, %v10259
    %v10272 = vsel %vm10248, %v10232, %v10260
    %v10273 = vsel %vm10249, %v10234, %v10261
    %v10274 = vpack.c.bf16 %v10266, %v10262
    %v10275 = vpack.c.bf16 %v10267, %v10263
    %v10276 = vpack.c.bf16 %v10268, %v10264
    %v10277 = vpack.c.bf16 %v10269, %v10265
    %v10278 = vpack.c.bf16 %v10270, %v10270
    %v10279 = vpack.c.bf16 %v10271, %v10271
    %v10280 = vpack.c.bf16 %v10272, %v10272
    %v10281 = vpack.c.bf16 %v10273, %v10273
    %s10282 = scalar_lea.vmem [#allocation4], 9216
    %v10283 = vld [vmem:[%s10282] sm:$0xff]
    %v10284 = vld [vmem:[%s10282 + $0x8] sm:$0xff]
    %v10285 = vld [vmem:[%s10282 + $0x10] sm:$0xff]
    %v10286 = vld [vmem:[%s10282 + $0x18] sm:$0xff]
    %v10287 = vld [vmem:[%s10282 + $0x20] sm:$0xff]
    %v10288 = vld [vmem:[%s10282 + $0x28] sm:$0xff]
    %v10289 = vld [vmem:[%s10282 + $0x30] sm:$0xff]
    %v10290 = vld [vmem:[%s10282 + $0x38] sm:$0xff]
    %v10291 = vld [vmem:[%s10282 + $0x40] sm:$0xff]
    %v10292 = vld [vmem:[%s10282 + $0x48] sm:$0xff]
    %v10293 = vld [vmem:[%s10282 + $0x50] sm:$0xff]
    %v10294 = vld [vmem:[%s10282 + $0x58] sm:$0xff]
    %v10295 = vld [vmem:[%s10282 + $0x60] sm:$0xff]
    %v10296 = vld [vmem:[%s10282 + $0x68] sm:$0xff]
    %v10297 = vld [vmem:[%s10282 + $0x70] sm:$0xff]
    %v10298 = vld [vmem:[%s10282 + $0x78] sm:$0xff]
    %v10299 = vld [vmem:[%s10282 + $0x80] sm:$0xff]
    %v10300 = vld [vmem:[%s10282 + $0x88] sm:$0xff]
    %v10301 = vld [vmem:[%s10282 + $0x90] sm:$0xff]
    %v10302 = vld [vmem:[%s10282 + $0x98] sm:$0xff]
    %v10303 = vld [vmem:[%s10282 + $0xa0] sm:$0xff]
    %v10304 = vld [vmem:[%s10282 + $0xa8] sm:$0xff]
    %v10305 = vld [vmem:[%s10282 + $0xb0] sm:$0xff]
    %v10306 = vld [vmem:[%s10282 + $0xb8] sm:$0xff]
    %v10307 = vld [vmem:[%s10282 + $0xc0] sm:$0xff]
    %v10308 = vld [vmem:[%s10282 + $0xc8] sm:$0xff]
    %v10309 = vld [vmem:[%s10282 + $0xd0] sm:$0xff]
    %v10310 = vld [vmem:[%s10282 + $0xd8] sm:$0xff]
    %v10311 = vld [vmem:[%s10282 + $0xe0] sm:$0xff]
    %v10312 = vld [vmem:[%s10282 + $0xe8] sm:$0xff]
    %v10313 = vld [vmem:[%s10282 + $0xf0] sm:$0xff]
    %v10314 = vld [vmem:[%s10282 + $0xf8] sm:$0xff]
    %v10315 = vld [vmem:[%s10282 + $0x100] sm:$0xff]
    %v10316 = vld [vmem:[%s10282 + $0x108] sm:$0xff]
    %v10317 = vld [vmem:[%s10282 + $0x110] sm:$0xff]
    %v10318 = vld [vmem:[%s10282 + $0x118] sm:$0xff]
    %v10319 = vld [vmem:[%s10282 + $0x120] sm:$0xff]
    %v10320 = vld [vmem:[%s10282 + $0x128] sm:$0xff]
    %v10321 = vld [vmem:[%s10282 + $0x130] sm:$0xff]
    %v10322 = vld [vmem:[%s10282 + $0x138] sm:$0xff]
    %v10323 = vld [vmem:[%s10282 + $0x140] sm:$0xff]
    %v10324 = vld [vmem:[%s10282 + $0x148] sm:$0xff]
    %v10325 = vld [vmem:[%s10282 + $0x150] sm:$0xff]
    %v10326 = vld [vmem:[%s10282 + $0x158] sm:$0xff]
    %v10327 = vld [vmem:[%s10282 + $0x160] sm:$0xff]
    %v10328 = vld [vmem:[%s10282 + $0x168] sm:$0xff]
    %v10329 = vld [vmem:[%s10282 + $0x170] sm:$0xff]
    %v10330 = vld [vmem:[%s10282 + $0x178] sm:$0xff]
    %v10331 = vld [vmem:[%s10282 + $0x180] sm:$0xff]
    %v10332 = vld [vmem:[%s10282 + $0x188] sm:$0xff]
    %v10333 = vld [vmem:[%s10282 + $0x190] sm:$0xff]
    %v10334 = vld [vmem:[%s10282 + $0x198] sm:$0xff]
    %v10335 = vld [vmem:[%s10282 + $0x1a0] sm:$0xff]
    %v10336 = vld [vmem:[%s10282 + $0x1a8] sm:$0xff]
    %v10337 = vld [vmem:[%s10282 + $0x1b0] sm:$0xff]
    %v10338 = vld [vmem:[%s10282 + $0x1b8] sm:$0xff]
    %v10339 = vld [vmem:[%s10282 + $0x1c0] sm:$0xff]
    %v10340 = vld [vmem:[%s10282 + $0x1c8] sm:$0xff]
    %v10341 = vld [vmem:[%s10282 + $0x1d0] sm:$0xff]
    %v10342 = vld [vmem:[%s10282 + $0x1d8] sm:$0xff]
    %v10343 = vld [vmem:[%s10282 + $0x1e0] sm:$0xff]
    %v10344 = vld [vmem:[%s10282 + $0x1e8] sm:$0xff]
    %v10345 = vld [vmem:[%s10282 + $0x1f0] sm:$0xff]
    %v10346 = vld [vmem:[%s10282 + $0x1f8] sm:$0xff]
    %v10347 = vld [vmem:[%s10282 + $0x200] sm:$0xff]
    %v10348 = vld [vmem:[%s10282 + $0x208] sm:$0xff]
    %v10349 = vld [vmem:[%s10282 + $0x210] sm:$0xff]
    %v10350 = vld [vmem:[%s10282 + $0x218] sm:$0xff]
    %v10351 = vld [vmem:[%s10282 + $0x220] sm:$0xff]
    %v10352 = vld [vmem:[%s10282 + $0x228] sm:$0xff]
    %v10353 = vld [vmem:[%s10282 + $0x230] sm:$0xff]
    %v10354 = vld [vmem:[%s10282 + $0x238] sm:$0xff]
    %v10355 = vld [vmem:[%s10282 + $0x240] sm:$0xff]
    %v10356 = vld [vmem:[%s10282 + $0x248] sm:$0xff]
    %v10357 = vld [vmem:[%s10282 + $0x250] sm:$0xff]
    %v10358 = vld [vmem:[%s10282 + $0x258] sm:$0xff]
    %v10359 = vld [vmem:[%s10282 + $0x260] sm:$0xff]
    %v10360 = vld [vmem:[%s10282 + $0x268] sm:$0xff]
    %v10361 = vld [vmem:[%s10282 + $0x270] sm:$0xff]
    %v10362 = vld [vmem:[%s10282 + $0x278] sm:$0xff]
    %v10363 = vld [vmem:[%s10282 + $0x280] sm:$0xff]
    %v10364 = vld [vmem:[%s10282 + $0x288] sm:$0xff]
    %v10365 = vld [vmem:[%s10282 + $0x290] sm:$0xff]
    %v10366 = vld [vmem:[%s10282 + $0x298] sm:$0xff]
    %v10367 = vld [vmem:[%s10282 + $0x2a0] sm:$0xff]
    %v10368 = vld [vmem:[%s10282 + $0x2a8] sm:$0xff]
    %v10369 = vld [vmem:[%s10282 + $0x2b0] sm:$0xff]
    %v10370 = vld [vmem:[%s10282 + $0x2b8] sm:$0xff]
    %v10371 = vld [vmem:[%s10282 + $0x2c0] sm:$0xff]
    %v10372 = vld [vmem:[%s10282 + $0x2c8] sm:$0xff]
    %v10373 = vld [vmem:[%s10282 + $0x2d0] sm:$0xff]
    %v10374 = vld [vmem:[%s10282 + $0x2d8] sm:$0xff]
    %v10375 = vld [vmem:[%s10282 + $0x2e0] sm:$0xff]
    %v10376 = vld [vmem:[%s10282 + $0x2e8] sm:$0xff]
    %v10377 = vld [vmem:[%s10282 + $0x2f0] sm:$0xff]
    %v10378 = vld [vmem:[%s10282 + $0x2f8] sm:$0xff]
    %v10379 = vld [vmem:[%s10282 + $0x300] sm:$0xff]
    %v10380 = vld [vmem:[%s10282 + $0x308] sm:$0xff]
    %v10381 = vld [vmem:[%s10282 + $0x310] sm:$0xff]
    %v10382 = vld [vmem:[%s10282 + $0x318] sm:$0xff]
    %v10383 = vld [vmem:[%s10282 + $0x320] sm:$0xff]
    %v10384 = vld [vmem:[%s10282 + $0x328] sm:$0xff]
    %v10385 = vld [vmem:[%s10282 + $0x330] sm:$0xff]
    %v10386 = vld [vmem:[%s10282 + $0x338] sm:$0xff]
    %v10387 = vld [vmem:[%s10282 + $0x340] sm:$0xff]
    %v10388 = vld [vmem:[%s10282 + $0x348] sm:$0xff]
    %v10389 = vld [vmem:[%s10282 + $0x350] sm:$0xff]
    %v10390 = vld [vmem:[%s10282 + $0x358] sm:$0xff]
    %v10391 = vld [vmem:[%s10282 + $0x360] sm:$0xff]
    %v10392 = vld [vmem:[%s10282 + $0x368] sm:$0xff]
    %v10393 = vld [vmem:[%s10282 + $0x370] sm:$0xff]
    %v10394 = vld [vmem:[%s10282 + $0x378] sm:$0xff]
    %v10395 = vld [vmem:[%s10282 + $0x380] sm:$0xff]
    %v10396 = vld [vmem:[%s10282 + $0x388] sm:$0xff]
    %v10397 = vld [vmem:[%s10282 + $0x390] sm:$0xff]
    %v10398 = vld [vmem:[%s10282 + $0x398] sm:$0xff]
    %v10399 = vld [vmem:[%s10282 + $0x3a0] sm:$0xff]
    %v10400 = vld [vmem:[%s10282 + $0x3a8] sm:$0xff]
    %v10401 = vld [vmem:[%s10282 + $0x3b0] sm:$0xff]
    %v10402 = vld [vmem:[%s10282 + $0x3b8] sm:$0xff]
    %v10403 = vld [vmem:[%s10282 + $0x3c0] sm:$0xff]
    %v10404 = vld [vmem:[%s10282 + $0x3c8] sm:$0xff]
    %v10405 = vld [vmem:[%s10282 + $0x3d0] sm:$0xff]
    %v10406 = vld [vmem:[%s10282 + $0x3d8] sm:$0xff]
    %v10407 = vld [vmem:[%s10282 + $0x3e0] sm:$0xff]
    %v10408 = vld [vmem:[%s10282 + $0x3e8] sm:$0xff]
    %v10409 = vld [vmem:[%s10282 + $0x3f0] sm:$0xff]
    %v10410 = vld [vmem:[%s10282 + $0x3f8] sm:$0xff]
    %s10411 = scalar_lea.vmem [#allocation6], 36
    %v10412 = vld [vmem:[%s10411] sm:$0xf]
    %v10414 = vlaneseq
    %v10415 = vshrl.u32 %v10414, 7
    %v10416 = vsub.s32 0, %v10415
    %v10417 = vrot.slane %v10412, %v10416
    %v10418 = vlaneseq
    %v10419 = vshrl.u32 %v10418, 7
    %v10420 = vsub.s32 1, %v10419
    %v10421 = vrot.slane %v10412, %v10420
    %v10422 = vlaneseq
    %v10423 = vshrl.u32 %v10422, 7
    %v10424 = vsub.s32 2, %v10423
    %v10425 = vrot.slane %v10412, %v10424
    %v10426 = vlaneseq
    %v10427 = vshrl.u32 %v10426, 7
    %v10428 = vsub.s32 3, %v10427
    %v10429 = vrot.slane %v10412, %v10428
    %v10562 = vunpack.c.l.b16 %v10283
    %v10563 = vunpack.c.h.b16 %v10283
    %v10564 = vunpack.c.l.b16 %v10284
    %v10565 = vunpack.c.h.b16 %v10284
    %v10566 = vunpack.c.l.b16 %v10285
    %v10567 = vunpack.c.h.b16 %v10285
    %v10568 = vunpack.c.l.b16 %v10286
    %v10569 = vunpack.c.h.b16 %v10286
    %v10570 = vunpack.c.l.b16 %v10287
    %v10571 = vunpack.c.h.b16 %v10287
    %v10572 = vunpack.c.l.b16 %v10288
    %v10573 = vunpack.c.h.b16 %v10288
    %v10574 = vunpack.c.l.b16 %v10289
    %v10575 = vunpack.c.h.b16 %v10289
    %v10576 = vunpack.c.l.b16 %v10290
    %v10577 = vunpack.c.h.b16 %v10290
    %v10578 = vunpack.c.l.b16 %v10291
    %v10579 = vunpack.c.h.b16 %v10291
    %v10580 = vunpack.c.l.b16 %v10292
    %v10581 = vunpack.c.h.b16 %v10292
    %v10582 = vunpack.c.l.b16 %v10293
    %v10583 = vunpack.c.h.b16 %v10293
    %v10584 = vunpack.c.l.b16 %v10294
    %v10585 = vunpack.c.h.b16 %v10294
    %v10586 = vunpack.c.l.b16 %v10295
    %v10587 = vunpack.c.h.b16 %v10295
    %v10588 = vunpack.c.l.b16 %v10296
    %v10589 = vunpack.c.h.b16 %v10296
    %v10590 = vunpack.c.l.b16 %v10297
    %v10591 = vunpack.c.h.b16 %v10297
    %v10592 = vunpack.c.l.b16 %v10298
    %v10593 = vunpack.c.h.b16 %v10298
    %v10594 = vunpack.c.l.b16 %v10299
    %v10595 = vunpack.c.h.b16 %v10299
    %v10596 = vunpack.c.l.b16 %v10300
    %v10597 = vunpack.c.h.b16 %v10300
    %v10598 = vunpack.c.l.b16 %v10301
    %v10599 = vunpack.c.h.b16 %v10301
    %v10600 = vunpack.c.l.b16 %v10302
    %v10601 = vunpack.c.h.b16 %v10302
    %v10602 = vunpack.c.l.b16 %v10303
    %v10603 = vunpack.c.h.b16 %v10303
    %v10604 = vunpack.c.l.b16 %v10304
    %v10605 = vunpack.c.h.b16 %v10304
    %v10606 = vunpack.c.l.b16 %v10305
    %v10607 = vunpack.c.h.b16 %v10305
    %v10608 = vunpack.c.l.b16 %v10306
    %v10609 = vunpack.c.h.b16 %v10306
    %v10610 = vunpack.c.l.b16 %v10307
    %v10611 = vunpack.c.h.b16 %v10307
    %v10612 = vunpack.c.l.b16 %v10308
    %v10613 = vunpack.c.h.b16 %v10308
    %v10614 = vunpack.c.l.b16 %v10309
    %v10615 = vunpack.c.h.b16 %v10309
    %v10616 = vunpack.c.l.b16 %v10310
    %v10617 = vunpack.c.h.b16 %v10310
    %v10618 = vunpack.c.l.b16 %v10311
    %v10619 = vunpack.c.h.b16 %v10311
    %v10620 = vunpack.c.l.b16 %v10312
    %v10621 = vunpack.c.h.b16 %v10312
    %v10622 = vunpack.c.l.b16 %v10313
    %v10623 = vunpack.c.h.b16 %v10313
    %v10624 = vunpack.c.l.b16 %v10314
    %v10625 = vunpack.c.h.b16 %v10314
    %v10626 = vunpack.c.l.b16 %v10315
    %v10627 = vunpack.c.h.b16 %v10315
    %v10628 = vunpack.c.l.b16 %v10316
    %v10629 = vunpack.c.h.b16 %v10316
    %v10630 = vunpack.c.l.b16 %v10317
    %v10631 = vunpack.c.h.b16 %v10317
    %v10632 = vunpack.c.l.b16 %v10318
    %v10633 = vunpack.c.h.b16 %v10318
    %v10634 = vunpack.c.l.b16 %v10319
    %v10635 = vunpack.c.h.b16 %v10319
    %v10636 = vunpack.c.l.b16 %v10320
    %v10637 = vunpack.c.h.b16 %v10320
    %v10638 = vunpack.c.l.b16 %v10321
    %v10639 = vunpack.c.h.b16 %v10321
    %v10640 = vunpack.c.l.b16 %v10322
    %v10641 = vunpack.c.h.b16 %v10322
    %v10642 = vunpack.c.l.b16 %v10323
    %v10643 = vunpack.c.h.b16 %v10323
    %v10644 = vunpack.c.l.b16 %v10324
    %v10645 = vunpack.c.h.b16 %v10324
    %v10646 = vunpack.c.l.b16 %v10325
    %v10647 = vunpack.c.h.b16 %v10325
    %v10648 = vunpack.c.l.b16 %v10326
    %v10649 = vunpack.c.h.b16 %v10326
    %v10650 = vunpack.c.l.b16 %v10327
    %v10651 = vunpack.c.h.b16 %v10327
    %v10652 = vunpack.c.l.b16 %v10328
    %v10653 = vunpack.c.h.b16 %v10328
    %v10654 = vunpack.c.l.b16 %v10329
    %v10655 = vunpack.c.h.b16 %v10329
    %v10656 = vunpack.c.l.b16 %v10330
    %v10657 = vunpack.c.h.b16 %v10330
    %v10658 = vunpack.c.l.b16 %v10331
    %v10659 = vunpack.c.h.b16 %v10331
    %v10660 = vunpack.c.l.b16 %v10332
    %v10661 = vunpack.c.h.b16 %v10332
    %v10662 = vunpack.c.l.b16 %v10333
    %v10663 = vunpack.c.h.b16 %v10333
    %v10664 = vunpack.c.l.b16 %v10334
    %v10665 = vunpack.c.h.b16 %v10334
    %v10666 = vunpack.c.l.b16 %v10335
    %v10667 = vunpack.c.h.b16 %v10335
    %v10668 = vunpack.c.l.b16 %v10336
    %v10669 = vunpack.c.h.b16 %v10336
    %v10670 = vunpack.c.l.b16 %v10337
    %v10671 = vunpack.c.h.b16 %v10337
    %v10672 = vunpack.c.l.b16 %v10338
    %v10673 = vunpack.c.h.b16 %v10338
    %v10674 = vunpack.c.l.b16 %v10339
    %v10675 = vunpack.c.h.b16 %v10339
    %v10676 = vunpack.c.l.b16 %v10340
    %v10677 = vunpack.c.h.b16 %v10340
    %v10678 = vunpack.c.l.b16 %v10341
    %v10679 = vunpack.c.h.b16 %v10341
    %v10680 = vunpack.c.l.b16 %v10342
    %v10681 = vunpack.c.h.b16 %v10342
    %v10682 = vunpack.c.l.b16 %v10343
    %v10683 = vunpack.c.h.b16 %v10343
    %v10684 = vunpack.c.l.b16 %v10344
    %v10685 = vunpack.c.h.b16 %v10344
    %v10686 = vunpack.c.l.b16 %v10345
    %v10687 = vunpack.c.h.b16 %v10345
    %v10688 = vunpack.c.l.b16 %v10346
    %v10689 = vunpack.c.h.b16 %v10346
    %v10690 = vunpack.c.l.b16 %v10347
    %v10691 = vunpack.c.h.b16 %v10347
    %v10692 = vunpack.c.l.b16 %v10348
    %v10693 = vunpack.c.h.b16 %v10348
    %v10694 = vunpack.c.l.b16 %v10349
    %v10695 = vunpack.c.h.b16 %v10349
    %v10696 = vunpack.c.l.b16 %v10350
    %v10697 = vunpack.c.h.b16 %v10350
    %v10698 = vunpack.c.l.b16 %v10351
    %v10699 = vunpack.c.h.b16 %v10351
    %v10700 = vunpack.c.l.b16 %v10352
    %v10701 = vunpack.c.h.b16 %v10352
    %v10702 = vunpack.c.l.b16 %v10353
    %v10703 = vunpack.c.h.b16 %v10353
    %v10704 = vunpack.c.l.b16 %v10354
    %v10705 = vunpack.c.h.b16 %v10354
    %v10706 = vunpack.c.l.b16 %v10355
    %v10707 = vunpack.c.h.b16 %v10355
    %v10708 = vunpack.c.l.b16 %v10356
    %v10709 = vunpack.c.h.b16 %v10356
    %v10710 = vunpack.c.l.b16 %v10357
    %v10711 = vunpack.c.h.b16 %v10357
    %v10712 = vunpack.c.l.b16 %v10358
    %v10713 = vunpack.c.h.b16 %v10358
    %v10714 = vunpack.c.l.b16 %v10359
    %v10715 = vunpack.c.h.b16 %v10359
    %v10716 = vunpack.c.l.b16 %v10360
    %v10717 = vunpack.c.h.b16 %v10360
    %v10718 = vunpack.c.l.b16 %v10361
    %v10719 = vunpack.c.h.b16 %v10361
    %v10720 = vunpack.c.l.b16 %v10362
    %v10721 = vunpack.c.h.b16 %v10362
    %v10722 = vunpack.c.l.b16 %v10363
    %v10723 = vunpack.c.h.b16 %v10363
    %v10724 = vunpack.c.l.b16 %v10364
    %v10725 = vunpack.c.h.b16 %v10364
    %v10726 = vunpack.c.l.b16 %v10365
    %v10727 = vunpack.c.h.b16 %v10365
    %v10728 = vunpack.c.l.b16 %v10366
    %v10729 = vunpack.c.h.b16 %v10366
    %v10730 = vunpack.c.l.b16 %v10367
    %v10731 = vunpack.c.h.b16 %v10367
    %v10732 = vunpack.c.l.b16 %v10368
    %v10733 = vunpack.c.h.b16 %v10368
    %v10734 = vunpack.c.l.b16 %v10369
    %v10735 = vunpack.c.h.b16 %v10369
    %v10736 = vunpack.c.l.b16 %v10370
    %v10737 = vunpack.c.h.b16 %v10370
    %v10738 = vunpack.c.l.b16 %v10371
    %v10739 = vunpack.c.h.b16 %v10371
    %v10740 = vunpack.c.l.b16 %v10372
    %v10741 = vunpack.c.h.b16 %v10372
    %v10742 = vunpack.c.l.b16 %v10373
    %v10743 = vunpack.c.h.b16 %v10373
    %v10744 = vunpack.c.l.b16 %v10374
    %v10745 = vunpack.c.h.b16 %v10374
    %v10746 = vunpack.c.l.b16 %v10375
    %v10747 = vunpack.c.h.b16 %v10375
    %v10748 = vunpack.c.l.b16 %v10376
    %v10749 = vunpack.c.h.b16 %v10376
    %v10750 = vunpack.c.l.b16 %v10377
    %v10751 = vunpack.c.h.b16 %v10377
    %v10752 = vunpack.c.l.b16 %v10378
    %v10753 = vunpack.c.h.b16 %v10378
    %v10754 = vunpack.c.l.b16 %v10379
    %v10755 = vunpack.c.h.b16 %v10379
    %v10756 = vunpack.c.l.b16 %v10380
    %v10757 = vunpack.c.h.b16 %v10380
    %v10758 = vunpack.c.l.b16 %v10381
    %v10759 = vunpack.c.h.b16 %v10381
    %v10760 = vunpack.c.l.b16 %v10382
    %v10761 = vunpack.c.h.b16 %v10382
    %v10762 = vunpack.c.l.b16 %v10383
    %v10763 = vunpack.c.h.b16 %v10383
    %v10764 = vunpack.c.l.b16 %v10384
    %v10765 = vunpack.c.h.b16 %v10384
    %v10766 = vunpack.c.l.b16 %v10385
    %v10767 = vunpack.c.h.b16 %v10385
    %v10768 = vunpack.c.l.b16 %v10386
    %v10769 = vunpack.c.h.b16 %v10386
    %v10770 = vunpack.c.l.b16 %v10387
    %v10771 = vunpack.c.h.b16 %v10387
    %v10772 = vunpack.c.l.b16 %v10388
    %v10773 = vunpack.c.h.b16 %v10388
    %v10774 = vunpack.c.l.b16 %v10389
    %v10775 = vunpack.c.h.b16 %v10389
    %v10776 = vunpack.c.l.b16 %v10390
    %v10777 = vunpack.c.h.b16 %v10390
    %v10778 = vunpack.c.l.b16 %v10391
    %v10779 = vunpack.c.h.b16 %v10391
    %v10780 = vunpack.c.l.b16 %v10392
    %v10781 = vunpack.c.h.b16 %v10392
    %v10782 = vunpack.c.l.b16 %v10393
    %v10783 = vunpack.c.h.b16 %v10393
    %v10784 = vunpack.c.l.b16 %v10394
    %v10785 = vunpack.c.h.b16 %v10394
    %v10786 = vunpack.c.l.b16 %v10395
    %v10787 = vunpack.c.h.b16 %v10395
    %v10788 = vunpack.c.l.b16 %v10396
    %v10789 = vunpack.c.h.b16 %v10396
    %v10790 = vunpack.c.l.b16 %v10397
    %v10791 = vunpack.c.h.b16 %v10397
    %v10792 = vunpack.c.l.b16 %v10398
    %v10793 = vunpack.c.h.b16 %v10398
    %v10794 = vunpack.c.l.b16 %v10399
    %v10795 = vunpack.c.h.b16 %v10399
    %v10796 = vunpack.c.l.b16 %v10400
    %v10797 = vunpack.c.h.b16 %v10400
    %v10798 = vunpack.c.l.b16 %v10401
    %v10799 = vunpack.c.h.b16 %v10401
    %v10800 = vunpack.c.l.b16 %v10402
    %v10801 = vunpack.c.h.b16 %v10402
    %v10802 = vunpack.c.l.b16 %v10403
    %v10803 = vunpack.c.h.b16 %v10403
    %v10804 = vunpack.c.l.b16 %v10404
    %v10805 = vunpack.c.h.b16 %v10404
    %v10806 = vunpack.c.l.b16 %v10405
    %v10807 = vunpack.c.h.b16 %v10405
    %v10808 = vunpack.c.l.b16 %v10406
    %v10809 = vunpack.c.h.b16 %v10406
    %v10810 = vunpack.c.l.b16 %v10407
    %v10811 = vunpack.c.h.b16 %v10407
    %v10812 = vunpack.c.l.b16 %v10408
    %v10813 = vunpack.c.h.b16 %v10408
    %v10814 = vunpack.c.l.b16 %v10409
    %v10815 = vunpack.c.h.b16 %v10409
    %v10816 = vunpack.c.l.b16 %v10410
    %v10817 = vunpack.c.h.b16 %v10410
    %v10818 = vpack.c.b16 %v10566, %v10562
    %v10819 = vpack.c.b16 %v10567, %v10563
    %v10820 = vpack.c.b16 %v10568, %v10564
    %v10821 = vpack.c.b16 %v10569, %v10565
    %v10822 = vpack.c.b16 %v10574, %v10570
    %v10823 = vpack.c.b16 %v10575, %v10571
    %v10824 = vpack.c.b16 %v10576, %v10572
    %v10825 = vpack.c.b16 %v10577, %v10573
    %v10826 = vpack.c.b16 %v10582, %v10578
    %v10827 = vpack.c.b16 %v10583, %v10579
    %v10828 = vpack.c.b16 %v10584, %v10580
    %v10829 = vpack.c.b16 %v10585, %v10581
    %v10830 = vpack.c.b16 %v10590, %v10586
    %v10831 = vpack.c.b16 %v10591, %v10587
    %v10832 = vpack.c.b16 %v10592, %v10588
    %v10833 = vpack.c.b16 %v10593, %v10589
    %v10834 = vpack.c.b16 %v10598, %v10594
    %v10835 = vpack.c.b16 %v10599, %v10595
    %v10836 = vpack.c.b16 %v10600, %v10596
    %v10837 = vpack.c.b16 %v10601, %v10597
    %v10838 = vpack.c.b16 %v10606, %v10602
    %v10839 = vpack.c.b16 %v10607, %v10603
    %v10840 = vpack.c.b16 %v10608, %v10604
    %v10841 = vpack.c.b16 %v10609, %v10605
    %v10842 = vpack.c.b16 %v10614, %v10610
    %v10843 = vpack.c.b16 %v10615, %v10611
    %v10844 = vpack.c.b16 %v10616, %v10612
    %v10845 = vpack.c.b16 %v10617, %v10613
    %v10846 = vpack.c.b16 %v10622, %v10618
    %v10847 = vpack.c.b16 %v10623, %v10619
    %v10848 = vpack.c.b16 %v10624, %v10620
    %v10849 = vpack.c.b16 %v10625, %v10621
    %v10850 = vpack.c.b16 %v10630, %v10626
    %v10851 = vpack.c.b16 %v10631, %v10627
    %v10852 = vpack.c.b16 %v10632, %v10628
    %v10853 = vpack.c.b16 %v10633, %v10629
    %v10854 = vpack.c.b16 %v10638, %v10634
    %v10855 = vpack.c.b16 %v10639, %v10635
    %v10856 = vpack.c.b16 %v10640, %v10636
    %v10857 = vpack.c.b16 %v10641, %v10637
    %v10858 = vpack.c.b16 %v10646, %v10642
    %v10859 = vpack.c.b16 %v10647, %v10643
    %v10860 = vpack.c.b16 %v10648, %v10644
    %v10861 = vpack.c.b16 %v10649, %v10645
    %v10862 = vpack.c.b16 %v10654, %v10650
    %v10863 = vpack.c.b16 %v10655, %v10651
    %v10864 = vpack.c.b16 %v10656, %v10652
    %v10865 = vpack.c.b16 %v10657, %v10653
    %v10866 = vpack.c.b16 %v10662, %v10658
    %v10867 = vpack.c.b16 %v10663, %v10659
    %v10868 = vpack.c.b16 %v10664, %v10660
    %v10869 = vpack.c.b16 %v10665, %v10661
    %v10870 = vpack.c.b16 %v10670, %v10666
    %v10871 = vpack.c.b16 %v10671, %v10667
    %v10872 = vpack.c.b16 %v10672, %v10668
    %v10873 = vpack.c.b16 %v10673, %v10669
    %v10874 = vpack.c.b16 %v10678, %v10674
    %v10875 = vpack.c.b16 %v10679, %v10675
    %v10876 = vpack.c.b16 %v10680, %v10676
    %v10877 = vpack.c.b16 %v10681, %v10677
    %v10878 = vpack.c.b16 %v10686, %v10682
    %v10879 = vpack.c.b16 %v10687, %v10683
    %v10880 = vpack.c.b16 %v10688, %v10684
    %v10881 = vpack.c.b16 %v10689, %v10685
    %v10882 = vpack.c.b16 %v10694, %v10690
    %v10883 = vpack.c.b16 %v10695, %v10691
    %v10884 = vpack.c.b16 %v10696, %v10692
    %v10885 = vpack.c.b16 %v10697, %v10693
    %v10886 = vpack.c.b16 %v10702, %v10698
    %v10887 = vpack.c.b16 %v10703, %v10699
    %v10888 = vpack.c.b16 %v10704, %v10700
    %v10889 = vpack.c.b16 %v10705, %v10701
    %v10890 = vpack.c.b16 %v10710, %v10706
    %v10891 = vpack.c.b16 %v10711, %v10707
    %v10892 = vpack.c.b16 %v10712, %v10708
    %v10893 = vpack.c.b16 %v10713, %v10709
    %v10894 = vpack.c.b16 %v10718, %v10714
    %v10895 = vpack.c.b16 %v10719, %v10715
    %v10896 = vpack.c.b16 %v10720, %v10716
    %v10897 = vpack.c.b16 %v10721, %v10717
    %v10898 = vpack.c.b16 %v10726, %v10722
    %v10899 = vpack.c.b16 %v10727, %v10723
    %v10900 = vpack.c.b16 %v10728, %v10724
    %v10901 = vpack.c.b16 %v10729, %v10725
    %v10902 = vpack.c.b16 %v10734, %v10730
    %v10903 = vpack.c.b16 %v10735, %v10731
    %v10904 = vpack.c.b16 %v10736, %v10732
    %v10905 = vpack.c.b16 %v10737, %v10733
    %v10906 = vpack.c.b16 %v10742, %v10738
    %v10907 = vpack.c.b16 %v10743, %v10739
    %v10908 = vpack.c.b16 %v10744, %v10740
    %v10909 = vpack.c.b16 %v10745, %v10741
    %v10910 = vpack.c.b16 %v10750, %v10746
    %v10911 = vpack.c.b16 %v10751, %v10747
    %v10912 = vpack.c.b16 %v10752, %v10748
    %v10913 = vpack.c.b16 %v10753, %v10749
    %v10914 = vpack.c.b16 %v10758, %v10754
    %v10915 = vpack.c.b16 %v10759, %v10755
    %v10916 = vpack.c.b16 %v10760, %v10756
    %v10917 = vpack.c.b16 %v10761, %v10757
    %v10918 = vpack.c.b16 %v10766, %v10762
    %v10919 = vpack.c.b16 %v10767, %v10763
    %v10920 = vpack.c.b16 %v10768, %v10764
    %v10921 = vpack.c.b16 %v10769, %v10765
    %v10922 = vpack.c.b16 %v10774, %v10770
    %v10923 = vpack.c.b16 %v10775, %v10771
    %v10924 = vpack.c.b16 %v10776, %v10772
    %v10925 = vpack.c.b16 %v10777, %v10773
    %v10926 = vpack.c.b16 %v10782, %v10778
    %v10927 = vpack.c.b16 %v10783, %v10779
    %v10928 = vpack.c.b16 %v10784, %v10780
    %v10929 = vpack.c.b16 %v10785, %v10781
    %v10930 = vpack.c.b16 %v10790, %v10786
    %v10931 = vpack.c.b16 %v10791, %v10787
    %v10932 = vpack.c.b16 %v10792, %v10788
    %v10933 = vpack.c.b16 %v10793, %v10789
    %v10934 = vpack.c.b16 %v10798, %v10794
    %v10935 = vpack.c.b16 %v10799, %v10795
    %v10936 = vpack.c.b16 %v10800, %v10796
    %v10937 = vpack.c.b16 %v10801, %v10797
    %v10938 = vpack.c.b16 %v10806, %v10802
    %v10939 = vpack.c.b16 %v10807, %v10803
    %v10940 = vpack.c.b16 %v10808, %v10804
    %v10941 = vpack.c.b16 %v10809, %v10805
    %v10942 = vpack.c.b16 %v10814, %v10810
    %v10943 = vpack.c.b16 %v10815, %v10811
    %v10944 = vpack.c.b16 %v10816, %v10812
    %v10945 = vpack.c.b16 %v10817, %v10813
    %11074 = vmatprep.subr.bf16.mxu0 %v10819
    %11075 = vmatpush1.bf16.msra.mxu0 %v10818
    %11076 = vmatprep.subr.bf16.mxu0 %v10823
    %11077 = vmatpush1.bf16.msra.mxu0 %v10822
    %11078 = vmatprep.subr.bf16.mxu0 %v10827
    %11079 = vmatpush1.bf16.msra.mxu0 %v10826
    %11080 = vmatprep.subr.bf16.mxu0 %v10831
    %11081 = vmatpush1.bf16.msra.mxu0 %v10830
    %11082 = vmatprep.subr.bf16.mxu0 %v10835
    %11083 = vmatpush1.bf16.msra.mxu0 %v10834
    %11084 = vmatprep.subr.bf16.mxu0 %v10839
    %11085 = vmatpush1.bf16.msra.mxu0 %v10838
    %11086 = vmatprep.subr.bf16.mxu0 %v10843
    %11087 = vmatpush1.bf16.msra.mxu0 %v10842
    %11088 = vmatprep.subr.bf16.mxu0 %v10847
    %11089 = vmatpush1.bf16.msra.mxu0 %v10846
    %11090 = vmatprep.subr.bf16.mxu0 %v10851
    %11091 = vmatpush1.bf16.msra.mxu0 %v10850
    %11092 = vmatprep.subr.bf16.mxu0 %v10855
    %11093 = vmatpush1.bf16.msra.mxu0 %v10854
    %11094 = vmatprep.subr.bf16.mxu0 %v10859
    %11095 = vmatpush1.bf16.msra.mxu0 %v10858
    %11096 = vmatprep.subr.bf16.mxu0 %v10863
    %11097 = vmatpush1.bf16.msra.mxu0 %v10862
    %11098 = vmatprep.subr.bf16.mxu0 %v10867
    %11099 = vmatpush1.bf16.msra.mxu0 %v10866
    %11100 = vmatprep.subr.bf16.mxu0 %v10871
    %11101 = vmatpush1.bf16.msra.mxu0 %v10870
    %11102 = vmatprep.subr.bf16.mxu0 %v10875
    %11103 = vmatpush1.bf16.msra.mxu0 %v10874
    %11104 = vmatprep.subr.bf16.mxu0 %v10879
    %11105 = vmatpush1.bf16.msra.mxu0 %v10878
    %11106 = vmatprep.mubr.bf16.mxu0 %v10275
    %11107 = vmatmul.mubr.bf16.gmra.mrb[0].mxu0 %v10274
    %v11108 = vpop.f32.mrb[0].mxu0
    %v11109 = vadd.f32 %v10417, %v11108
    %v11110 = vpop.f32.mrb[0].mxu0
    %v11111 = vadd.f32 %v10421, %v11110
    %v11112 = vpop.f32.mrb[0].mxu0
    %v11113 = vadd.f32 %v10417, %v11112
    %v11114 = vpop.f32.mrb[0].mxu0
    %v11115 = vadd.f32 %v10421, %v11114
    %11116 = vmatprep.mubr.bf16.mxu0 %v10279
    %11117 = vmatmul.mubr.bf16.gmra.mrb[0].mxu0 %v10278
    %v11118 = vpop.f32.mrb[0].mxu0
    %v11119 = vadd.f32 %v10417, %v11118
    %v11120 = vpop.f32.mrb[0].mxu0
    %v11121 = vadd.f32 %v10421, %v11120
    %v11122 = vpop.f32.mrb[0].mxu0
    %v11123 = vpop.f32.mrb[0].mxu0
    %11124 = vdwg.mxu0
    %11125 = vmatprep.subr.bf16.mxu0 %v10883
    %11126 = vmatpush1.bf16.msra.mxu0 %v10882
    %11127 = vmatprep.subr.bf16.mxu0 %v10887
    %11128 = vmatpush1.bf16.msra.mxu0 %v10886
    %11129 = vmatprep.subr.bf16.mxu0 %v10891
    %11130 = vmatpush1.bf16.msra.mxu0 %v10890
    %11131 = vmatprep.subr.bf16.mxu0 %v10895
    %11132 = vmatpush1.bf16.msra.mxu0 %v10894
    %11133 = vmatprep.subr.bf16.mxu0 %v10899
    %11134 = vmatpush1.bf16.msra.mxu0 %v10898
    %11135 = vmatprep.subr.bf16.mxu0 %v10903
    %11136 = vmatpush1.bf16.msra.mxu0 %v10902
    %11137 = vmatprep.subr.bf16.mxu0 %v10907
    %11138 = vmatpush1.bf16.msra.mxu0 %v10906
    %11139 = vmatprep.subr.bf16.mxu0 %v10911
    %11140 = vmatpush1.bf16.msra.mxu0 %v10910
    %11141 = vmatprep.subr.bf16.mxu0 %v10915
    %11142 = vmatpush1.bf16.msra.mxu0 %v10914
    %11143 = vmatprep.subr.bf16.mxu0 %v10919
    %11144 = vmatpush1.bf16.msra.mxu0 %v10918
    %11145 = vmatprep.subr.bf16.mxu0 %v10923
    %11146 = vmatpush1.bf16.msra.mxu0 %v10922
    %11147 = vmatprep.subr.bf16.mxu0 %v10927
    %11148 = vmatpush1.bf16.msra.mxu0 %v10926
    %11149 = vmatprep.subr.bf16.mxu0 %v10931
    %11150 = vmatpush1.bf16.msra.mxu0 %v10930
    %11151 = vmatprep.subr.bf16.mxu0 %v10935
    %11152 = vmatpush1.bf16.msra.mxu0 %v10934
    %11153 = vmatprep.subr.bf16.mxu0 %v10939
    %11154 = vmatpush1.bf16.msra.mxu0 %v10938
    %11155 = vmatprep.subr.bf16.mxu0 %v10943
    %11156 = vmatpush1.bf16.msra.mxu0 %v10942
    %11157 = vmatprep.mubr.bf16.mxu0 %v10277
    %11158 = vmatmul.mubr.bf16.gmra.mrb[0].mxu0 %v10276
    %v11159 = vpop.f32.mrb[0].mxu0
    %v11160 = vadd.f32 %v11109, %v11159
    %v11161 = vpop.f32.mrb[0].mxu0
    %v11162 = vadd.f32 %v11111, %v11161
    %v11163 = vpop.f32.mrb[0].mxu0
    %v11164 = vadd.f32 %v11113, %v11163
    %v11165 = vpop.f32.mrb[0].mxu0
    %v11166 = vadd.f32 %v11115, %v11165
    %11167 = vmatprep.mubr.bf16.mxu0 %v10281
    %11168 = vmatmul.mubr.bf16.gmra.mrb[0].mxu0 %v10280
    %v11169 = vpop.f32.mrb[0].mxu0
    %v11170 = vadd.f32 %v11119, %v11169
    %v11171 = vpop.f32.mrb[0].mxu0
    %v11172 = vadd.f32 %v11121, %v11171
    %v11173 = vpop.f32.mrb[0].mxu0
    %v11174 = vpop.f32.mrb[0].mxu0
    %11175 = vdwg.mxu0
    %11176 = vmatprep.subr.bf16.mxu0 %v10821
    %11177 = vmatpush1.bf16.msra.mxu0 %v10820
    %11178 = vmatprep.subr.bf16.mxu0 %v10825
    %11179 = vmatpush1.bf16.msra.mxu0 %v10824
    %11180 = vmatprep.subr.bf16.mxu0 %v10829
    %11181 = vmatpush1.bf16.msra.mxu0 %v10828
    %11182 = vmatprep.subr.bf16.mxu0 %v10833
    %11183 = vmatpush1.bf16.msra.mxu0 %v10832
    %11184 = vmatprep.subr.bf16.mxu0 %v10837
    %11185 = vmatpush1.bf16.msra.mxu0 %v10836
    %11186 = vmatprep.subr.bf16.mxu0 %v10841
    %11187 = vmatpush1.bf16.msra.mxu0 %v10840
    %11188 = vmatprep.subr.bf16.mxu0 %v10845
    %11189 = vmatpush1.bf16.msra.mxu0 %v10844
    %11190 = vmatprep.subr.bf16.mxu0 %v10849
    %11191 = vmatpush1.bf16.msra.mxu0 %v10848
    %11192 = vmatprep.subr.bf16.mxu0 %v10853
    %11193 = vmatpush1.bf16.msra.mxu0 %v10852
    %11194 = vmatprep.subr.bf16.mxu0 %v10857
    %11195 = vmatpush1.bf16.msra.mxu0 %v10856
    %11196 = vmatprep.subr.bf16.mxu0 %v10861
    %11197 = vmatpush1.bf16.msra.mxu0 %v10860
    %11198 = vmatprep.subr.bf16.mxu0 %v10865
    %11199 = vmatpush1.bf16.msra.mxu0 %v10864
    %11200 = vmatprep.subr.bf16.mxu0 %v10869
    %11201 = vmatpush1.bf16.msra.mxu0 %v10868
    %11202 = vmatprep.subr.bf16.mxu0 %v10873
    %11203 = vmatpush1.bf16.msra.mxu0 %v10872
    %11204 = vmatprep.subr.bf16.mxu0 %v10877
    %11205 = vmatpush1.bf16.msra.mxu0 %v10876
    %11206 = vmatprep.subr.bf16.mxu0 %v10881
    %11207 = vmatpush1.bf16.msra.mxu0 %v10880
    %11208 = vmatprep.mubr.bf16.mxu0 %v10275
    %11209 = vmatmul.mubr.bf16.gmra.mrb[0].mxu0 %v10274
    %v11210 = vpop.f32.mrb[0].mxu0
    %v11211 = vadd.f32 %v10425, %v11210
    %v11212 = vpop.f32.mrb[0].mxu0
    %v11213 = vadd.f32 %v10429, %v11212
    %v11214 = vpop.f32.mrb[0].mxu0
    %v11215 = vadd.f32 %v10425, %v11214
    %v11216 = vpop.f32.mrb[0].mxu0
    %v11217 = vadd.f32 %v10429, %v11216
    %11218 = vmatprep.mubr.bf16.mxu0 %v10279
    %11219 = vmatmul.mubr.bf16.gmra.mrb[0].mxu0 %v10278
    %v11220 = vpop.f32.mrb[0].mxu0
    %v11221 = vadd.f32 %v10425, %v11220
    %v11222 = vpop.f32.mrb[0].mxu0
    %v11223 = vadd.f32 %v10429, %v11222
    %v11224 = vpop.f32.mrb[0].mxu0
    %v11225 = vpop.f32.mrb[0].mxu0
    %11226 = vdwg.mxu0
    %11227 = vmatprep.subr.bf16.mxu0 %v10885
    %11228 = vmatpush1.bf16.msra.mxu0 %v10884
    %11229 = vmatprep.subr.bf16.mxu0 %v10889
    %11230 = vmatpush1.bf16.msra.mxu0 %v10888
    %11231 = vmatprep.subr.bf16.mxu0 %v10893
    %11232 = vmatpush1.bf16.msra.mxu0 %v10892
    %11233 = vmatprep.subr.bf16.mxu0 %v10897
    %11234 = vmatpush1.bf16.msra.mxu0 %v10896
    %11235 = vmatprep.subr.bf16.mxu0 %v10901
    %11236 = vmatpush1.bf16.msra.mxu0 %v10900
    %11237 = vmatprep.subr.bf16.mxu0 %v10905
    %11238 = vmatpush1.bf16.msra.mxu0 %v10904
    %11239 = vmatprep.subr.bf16.mxu0 %v10909
    %11240 = vmatpush1.bf16.msra.mxu0 %v10908
    %11241 = vmatprep.subr.bf16.mxu0 %v10913
    %11242 = vmatpush1.bf16.msra.mxu0 %v10912
    %11243 = vmatprep.subr.bf16.mxu0 %v10917
    %11244 = vmatpush1.bf16.msra.mxu0 %v10916
    %11245 = vmatprep.subr.bf16.mxu0 %v10921
    %11246 = vmatpush1.bf16.msra.mxu0 %v10920
    %11247 = vmatprep.subr.bf16.mxu0 %v10925
    %11248 = vmatpush1.bf16.msra.mxu0 %v10924
    %11249 = vmatprep.subr.bf16.mxu0 %v10929
    %11250 = vmatpush1.bf16.msra.mxu0 %v10928
    %11251 = vmatprep.subr.bf16.mxu0 %v10933
    %11252 = vmatpush1.bf16.msra.mxu0 %v10932
    %11253 = vmatprep.subr.bf16.mxu0 %v10937
    %11254 = vmatpush1.bf16.msra.mxu0 %v10936
    %11255 = vmatprep.subr.bf16.mxu0 %v10941
    %11256 = vmatpush1.bf16.msra.mxu0 %v10940
    %11257 = vmatprep.subr.bf16.mxu0 %v10945
    %11258 = vmatpush1.bf16.msra.mxu0 %v10944
    %11259 = vmatprep.mubr.bf16.mxu0 %v10277
    %11260 = vmatmul.mubr.bf16.gmra.mrb[0].mxu0 %v10276
    %v11261 = vpop.f32.mrb[0].mxu0
    %v11262 = vadd.f32 %v11211, %v11261
    %v11263 = vpop.f32.mrb[0].mxu0
    %v11264 = vadd.f32 %v11213, %v11263
    %v11265 = vpop.f32.mrb[0].mxu0
    %v11266 = vadd.f32 %v11215, %v11265
    %v11267 = vpop.f32.mrb[0].mxu0
    %v11268 = vadd.f32 %v11217, %v11267
    %11269 = vmatprep.mubr.bf16.mxu0 %v10281
    %11270 = vmatmul.mubr.bf16.gmra.mrb[0].mxu0 %v10280
    %v11271 = vpop.f32.mrb[0].mxu0
    %v11272 = vadd.f32 %v11221, %v11271
    %v11273 = vpop.f32.mrb[0].mxu0
    %v11274 = vadd.f32 %v11223, %v11273
    %v11275 = vpop.f32.mrb[0].mxu0
    %v11276 = vpop.f32.mrb[0].mxu0
    %11277 = vdwg.mxu0
    %vm11278 = vcmp.ge.f32.partialorder %v11160, 0.0
    %vm11279 = vcmp.ge.f32.partialorder %v11162, 0.0
    %vm11280 = vcmp.ge.f32.partialorder %v11262, 0.0
    %vm11281 = vcmp.ge.f32.partialorder %v11264, 0.0
    %vm11282 = vcmp.ge.f32.partialorder %v11164, 0.0
    %vm11283 = vcmp.ge.f32.partialorder %v11166, 0.0
    %vm11284 = vcmp.ge.f32.partialorder %v11266, 0.0
    %vm11285 = vcmp.ge.f32.partialorder %v11268, 0.0
    %vm11286 = vcmp.ge.f32.partialorder %v11170, 0.0
    %vm11287 = vcmp.ge.f32.partialorder %v11172, 0.0
    %vm11288 = vcmp.ge.f32.partialorder %v11272, 0.0
    %vm11289 = vcmp.ge.f32.partialorder %v11274, 0.0
    %v11290 = vmul.f32 %v11160, 0.2
    %v11291 = vmul.f32 %v11162, 0.2
    %v11292 = vmul.f32 %v11262, 0.2
    %v11293 = vmul.f32 %v11264, 0.2
    %v11294 = vmul.f32 %v11164, 0.2
    %v11295 = vmul.f32 %v11166, 0.2
    %v11296 = vmul.f32 %v11266, 0.2
    %v11297 = vmul.f32 %v11268, 0.2
    %v11298 = vmul.f32 %v11170, 0.2
    %v11299 = vmul.f32 %v11172, 0.2
    %v11300 = vmul.f32 %v11272, 0.2
    %v11301 = vmul.f32 %v11274, 0.2
    %v11302 = vsel %vm11278, %v11160, %v11290
    %v11303 = vsel %vm11279, %v11162, %v11291
    %v11304 = vsel %vm11280, %v11262, %v11292
    %v11305 = vsel %vm11281, %v11264, %v11293
    %v11306 = vsel %vm11282, %v11164, %v11294
    %v11307 = vsel %vm11283, %v11166, %v11295
    %v11308 = vsel %vm11284, %v11266, %v11296
    %v11309 = vsel %vm11285, %v11268, %v11297
    %v11310 = vsel %vm11286, %v11170, %v11298
    %v11311 = vsel %vm11287, %v11172, %v11299
    %v11312 = vsel %vm11288, %v11272, %v11300
    %v11313 = vsel %vm11289, %v11274, %v11301
    %v11314 = vpack.c.bf16 %v11306, %v11302
    %v11315 = vpack.c.bf16 %v11307, %v11303
    %v11316 = vpack.c.bf16 %v11308, %v11304
    %v11317 = vpack.c.bf16 %v11309, %v11305
    %v11318 = vpack.c.bf16 %v11310, %v11310
    %v11319 = vpack.c.bf16 %v11311, %v11311
    %v11320 = vpack.c.bf16 %v11312, %v11312
    %v11321 = vpack.c.bf16 %v11313, %v11313
    %s11322 = scalar_lea.vmem [#allocation4], 10240
    %v11323 = vld [vmem:[%s11322] sm:$0xff]
    %v11324 = vld [vmem:[%s11322 + $0x8] sm:$0xff]
    %v11325 = vld [vmem:[%s11322 + $0x10] sm:$0xff]
    %v11326 = vld [vmem:[%s11322 + $0x18] sm:$0xff]
    %v11327 = vld [vmem:[%s11322 + $0x20] sm:$0xff]
    %v11328 = vld [vmem:[%s11322 + $0x28] sm:$0xff]
    %v11329 = vld [vmem:[%s11322 + $0x30] sm:$0xff]
    %v11330 = vld [vmem:[%s11322 + $0x38] sm:$0xff]
    %v11331 = vld [vmem:[%s11322 + $0x40] sm:$0xff]
    %v11332 = vld [vmem:[%s11322 + $0x48] sm:$0xff]
    %v11333 = vld [vmem:[%s11322 + $0x50] sm:$0xff]
    %v11334 = vld [vmem:[%s11322 + $0x58] sm:$0xff]
    %v11335 = vld [vmem:[%s11322 + $0x60] sm:$0xff]
    %v11336 = vld [vmem:[%s11322 + $0x68] sm:$0xff]
    %v11337 = vld [vmem:[%s11322 + $0x70] sm:$0xff]
    %v11338 = vld [vmem:[%s11322 + $0x78] sm:$0xff]
    %v11339 = vld [vmem:[%s11322 + $0x80] sm:$0xff]
    %v11340 = vld [vmem:[%s11322 + $0x88] sm:$0xff]
    %v11341 = vld [vmem:[%s11322 + $0x90] sm:$0xff]
    %v11342 = vld [vmem:[%s11322 + $0x98] sm:$0xff]
    %v11343 = vld [vmem:[%s11322 + $0xa0] sm:$0xff]
    %v11344 = vld [vmem:[%s11322 + $0xa8] sm:$0xff]
    %v11345 = vld [vmem:[%s11322 + $0xb0] sm:$0xff]
    %v11346 = vld [vmem:[%s11322 + $0xb8] sm:$0xff]
    %v11347 = vld [vmem:[%s11322 + $0xc0] sm:$0xff]
    %v11348 = vld [vmem:[%s11322 + $0xc8] sm:$0xff]
    %v11349 = vld [vmem:[%s11322 + $0xd0] sm:$0xff]
    %v11350 = vld [vmem:[%s11322 + $0xd8] sm:$0xff]
    %v11351 = vld [vmem:[%s11322 + $0xe0] sm:$0xff]
    %v11352 = vld [vmem:[%s11322 + $0xe8] sm:$0xff]
    %v11353 = vld [vmem:[%s11322 + $0xf0] sm:$0xff]
    %v11354 = vld [vmem:[%s11322 + $0xf8] sm:$0xff]
    %v11355 = vld [vmem:[%s11322 + $0x100] sm:$0xff]
    %v11356 = vld [vmem:[%s11322 + $0x108] sm:$0xff]
    %v11357 = vld [vmem:[%s11322 + $0x110] sm:$0xff]
    %v11358 = vld [vmem:[%s11322 + $0x118] sm:$0xff]
    %v11359 = vld [vmem:[%s11322 + $0x120] sm:$0xff]
    %v11360 = vld [vmem:[%s11322 + $0x128] sm:$0xff]
    %v11361 = vld [vmem:[%s11322 + $0x130] sm:$0xff]
    %v11362 = vld [vmem:[%s11322 + $0x138] sm:$0xff]
    %v11363 = vld [vmem:[%s11322 + $0x140] sm:$0xff]
    %v11364 = vld [vmem:[%s11322 + $0x148] sm:$0xff]
    %v11365 = vld [vmem:[%s11322 + $0x150] sm:$0xff]
    %v11366 = vld [vmem:[%s11322 + $0x158] sm:$0xff]
    %v11367 = vld [vmem:[%s11322 + $0x160] sm:$0xff]
    %v11368 = vld [vmem:[%s11322 + $0x168] sm:$0xff]
    %v11369 = vld [vmem:[%s11322 + $0x170] sm:$0xff]
    %v11370 = vld [vmem:[%s11322 + $0x178] sm:$0xff]
    %v11371 = vld [vmem:[%s11322 + $0x180] sm:$0xff]
    %v11372 = vld [vmem:[%s11322 + $0x188] sm:$0xff]
    %v11373 = vld [vmem:[%s11322 + $0x190] sm:$0xff]
    %v11374 = vld [vmem:[%s11322 + $0x198] sm:$0xff]
    %v11375 = vld [vmem:[%s11322 + $0x1a0] sm:$0xff]
    %v11376 = vld [vmem:[%s11322 + $0x1a8] sm:$0xff]
    %v11377 = vld [vmem:[%s11322 + $0x1b0] sm:$0xff]
    %v11378 = vld [vmem:[%s11322 + $0x1b8] sm:$0xff]
    %v11379 = vld [vmem:[%s11322 + $0x1c0] sm:$0xff]
    %v11380 = vld [vmem:[%s11322 + $0x1c8] sm:$0xff]
    %v11381 = vld [vmem:[%s11322 + $0x1d0] sm:$0xff]
    %v11382 = vld [vmem:[%s11322 + $0x1d8] sm:$0xff]
    %v11383 = vld [vmem:[%s11322 + $0x1e0] sm:$0xff]
    %v11384 = vld [vmem:[%s11322 + $0x1e8] sm:$0xff]
    %v11385 = vld [vmem:[%s11322 + $0x1f0] sm:$0xff]
    %v11386 = vld [vmem:[%s11322 + $0x1f8] sm:$0xff]
    %v11387 = vld [vmem:[%s11322 + $0x200] sm:$0xff]
    %v11388 = vld [vmem:[%s11322 + $0x208] sm:$0xff]
    %v11389 = vld [vmem:[%s11322 + $0x210] sm:$0xff]
    %v11390 = vld [vmem:[%s11322 + $0x218] sm:$0xff]
    %v11391 = vld [vmem:[%s11322 + $0x220] sm:$0xff]
    %v11392 = vld [vmem:[%s11322 + $0x228] sm:$0xff]
    %v11393 = vld [vmem:[%s11322 + $0x230] sm:$0xff]
    %v11394 = vld [vmem:[%s11322 + $0x238] sm:$0xff]
    %v11395 = vld [vmem:[%s11322 + $0x240] sm:$0xff]
    %v11396 = vld [vmem:[%s11322 + $0x248] sm:$0xff]
    %v11397 = vld [vmem:[%s11322 + $0x250] sm:$0xff]
    %v11398 = vld [vmem:[%s11322 + $0x258] sm:$0xff]
    %v11399 = vld [vmem:[%s11322 + $0x260] sm:$0xff]
    %v11400 = vld [vmem:[%s11322 + $0x268] sm:$0xff]
    %v11401 = vld [vmem:[%s11322 + $0x270] sm:$0xff]
    %v11402 = vld [vmem:[%s11322 + $0x278] sm:$0xff]
    %v11403 = vld [vmem:[%s11322 + $0x280] sm:$0xff]
    %v11404 = vld [vmem:[%s11322 + $0x288] sm:$0xff]
    %v11405 = vld [vmem:[%s11322 + $0x290] sm:$0xff]
    %v11406 = vld [vmem:[%s11322 + $0x298] sm:$0xff]
    %v11407 = vld [vmem:[%s11322 + $0x2a0] sm:$0xff]
    %v11408 = vld [vmem:[%s11322 + $0x2a8] sm:$0xff]
    %v11409 = vld [vmem:[%s11322 + $0x2b0] sm:$0xff]
    %v11410 = vld [vmem:[%s11322 + $0x2b8] sm:$0xff]
    %v11411 = vld [vmem:[%s11322 + $0x2c0] sm:$0xff]
    %v11412 = vld [vmem:[%s11322 + $0x2c8] sm:$0xff]
    %v11413 = vld [vmem:[%s11322 + $0x2d0] sm:$0xff]
    %v11414 = vld [vmem:[%s11322 + $0x2d8] sm:$0xff]
    %v11415 = vld [vmem:[%s11322 + $0x2e0] sm:$0xff]
    %v11416 = vld [vmem:[%s11322 + $0x2e8] sm:$0xff]
    %v11417 = vld [vmem:[%s11322 + $0x2f0] sm:$0xff]
    %v11418 = vld [vmem:[%s11322 + $0x2f8] sm:$0xff]
    %v11419 = vld [vmem:[%s11322 + $0x300] sm:$0xff]
    %v11420 = vld [vmem:[%s11322 + $0x308] sm:$0xff]
    %v11421 = vld [vmem:[%s11322 + $0x310] sm:$0xff]
    %v11422 = vld [vmem:[%s11322 + $0x318] sm:$0xff]
    %v11423 = vld [vmem:[%s11322 + $0x320] sm:$0xff]
    %v11424 = vld [vmem:[%s11322 + $0x328] sm:$0xff]
    %v11425 = vld [vmem:[%s11322 + $0x330] sm:$0xff]
    %v11426 = vld [vmem:[%s11322 + $0x338] sm:$0xff]
    %v11427 = vld [vmem:[%s11322 + $0x340] sm:$0xff]
    %v11428 = vld [vmem:[%s11322 + $0x348] sm:$0xff]
    %v11429 = vld [vmem:[%s11322 + $0x350] sm:$0xff]
    %v11430 = vld [vmem:[%s11322 + $0x358] sm:$0xff]
    %v11431 = vld [vmem:[%s11322 + $0x360] sm:$0xff]
    %v11432 = vld [vmem:[%s11322 + $0x368] sm:$0xff]
    %v11433 = vld [vmem:[%s11322 + $0x370] sm:$0xff]
    %v11434 = vld [vmem:[%s11322 + $0x378] sm:$0xff]
    %v11435 = vld [vmem:[%s11322 + $0x380] sm:$0xff]
    %v11436 = vld [vmem:[%s11322 + $0x388] sm:$0xff]
    %v11437 = vld [vmem:[%s11322 + $0x390] sm:$0xff]
    %v11438 = vld [vmem:[%s11322 + $0x398] sm:$0xff]
    %v11439 = vld [vmem:[%s11322 + $0x3a0] sm:$0xff]
    %v11440 = vld [vmem:[%s11322 + $0x3a8] sm:$0xff]
    %v11441 = vld [vmem:[%s11322 + $0x3b0] sm:$0xff]
    %v11442 = vld [vmem:[%s11322 + $0x3b8] sm:$0xff]
    %v11443 = vld [vmem:[%s11322 + $0x3c0] sm:$0xff]
    %v11444 = vld [vmem:[%s11322 + $0x3c8] sm:$0xff]
    %v11445 = vld [vmem:[%s11322 + $0x3d0] sm:$0xff]
    %v11446 = vld [vmem:[%s11322 + $0x3d8] sm:$0xff]
    %v11447 = vld [vmem:[%s11322 + $0x3e0] sm:$0xff]
    %v11448 = vld [vmem:[%s11322 + $0x3e8] sm:$0xff]
    %v11449 = vld [vmem:[%s11322 + $0x3f0] sm:$0xff]
    %v11450 = vld [vmem:[%s11322 + $0x3f8] sm:$0xff]
    %s11451 = scalar_lea.vmem [#allocation6], 40
    %v11452 = vld [vmem:[%s11451] sm:$0xf]
    %v11454 = vlaneseq
    %v11455 = vshrl.u32 %v11454, 7
    %v11456 = vsub.s32 0, %v11455
    %v11457 = vrot.slane %v11452, %v11456
    %v11458 = vlaneseq
    %v11459 = vshrl.u32 %v11458, 7
    %v11460 = vsub.s32 1, %v11459
    %v11461 = vrot.slane %v11452, %v11460
    %v11462 = vlaneseq
    %v11463 = vshrl.u32 %v11462, 7
    %v11464 = vsub.s32 2, %v11463
    %v11465 = vrot.slane %v11452, %v11464
    %v11466 = vlaneseq
    %v11467 = vshrl.u32 %v11466, 7
    %v11468 = vsub.s32 3, %v11467
    %v11469 = vrot.slane %v11452, %v11468
    %v11602 = vunpack.c.l.b16 %v11323
    %v11603 = vunpack.c.h.b16 %v11323
    %v11604 = vunpack.c.l.b16 %v11324
    %v11605 = vunpack.c.h.b16 %v11324
    %v11606 = vunpack.c.l.b16 %v11325
    %v11607 = vunpack.c.h.b16 %v11325
    %v11608 = vunpack.c.l.b16 %v11326
    %v11609 = vunpack.c.h.b16 %v11326
    %v11610 = vunpack.c.l.b16 %v11327
    %v11611 = vunpack.c.h.b16 %v11327
    %v11612 = vunpack.c.l.b16 %v11328
    %v11613 = vunpack.c.h.b16 %v11328
    %v11614 = vunpack.c.l.b16 %v11329
    %v11615 = vunpack.c.h.b16 %v11329
    %v11616 = vunpack.c.l.b16 %v11330
    %v11617 = vunpack.c.h.b16 %v11330
    %v11618 = vunpack.c.l.b16 %v11331
    %v11619 = vunpack.c.h.b16 %v11331
    %v11620 = vunpack.c.l.b16 %v11332
    %v11621 = vunpack.c.h.b16 %v11332
    %v11622 = vunpack.c.l.b16 %v11333
    %v11623 = vunpack.c.h.b16 %v11333
    %v11624 = vunpack.c.l.b16 %v11334
    %v11625 = vunpack.c.h.b16 %v11334
    %v11626 = vunpack.c.l.b16 %v11335
    %v11627 = vunpack.c.h.b16 %v11335
    %v11628 = vunpack.c.l.b16 %v11336
    %v11629 = vunpack.c.h.b16 %v11336
    %v11630 = vunpack.c.l.b16 %v11337
    %v11631 = vunpack.c.h.b16 %v11337
    %v11632 = vunpack.c.l.b16 %v11338
    %v11633 = vunpack.c.h.b16 %v11338
    %v11634 = vunpack.c.l.b16 %v11339
    %v11635 = vunpack.c.h.b16 %v11339
    %v11636 = vunpack.c.l.b16 %v11340
    %v11637 = vunpack.c.h.b16 %v11340
    %v11638 = vunpack.c.l.b16 %v11341
    %v11639 = vunpack.c.h.b16 %v11341
    %v11640 = vunpack.c.l.b16 %v11342
    %v11641 = vunpack.c.h.b16 %v11342
    %v11642 = vunpack.c.l.b16 %v11343
    %v11643 = vunpack.c.h.b16 %v11343
    %v11644 = vunpack.c.l.b16 %v11344
    %v11645 = vunpack.c.h.b16 %v11344
    %v11646 = vunpack.c.l.b16 %v11345
    %v11647 = vunpack.c.h.b16 %v11345
    %v11648 = vunpack.c.l.b16 %v11346
    %v11649 = vunpack.c.h.b16 %v11346
    %v11650 = vunpack.c.l.b16 %v11347
    %v11651 = vunpack.c.h.b16 %v11347
    %v11652 = vunpack.c.l.b16 %v11348
    %v11653 = vunpack.c.h.b16 %v11348
    %v11654 = vunpack.c.l.b16 %v11349
    %v11655 = vunpack.c.h.b16 %v11349
    %v11656 = vunpack.c.l.b16 %v11350
    %v11657 = vunpack.c.h.b16 %v11350
    %v11658 = vunpack.c.l.b16 %v11351
    %v11659 = vunpack.c.h.b16 %v11351
    %v11660 = vunpack.c.l.b16 %v11352
    %v11661 = vunpack.c.h.b16 %v11352
    %v11662 = vunpack.c.l.b16 %v11353
    %v11663 = vunpack.c.h.b16 %v11353
    %v11664 = vunpack.c.l.b16 %v11354
    %v11665 = vunpack.c.h.b16 %v11354
    %v11666 = vunpack.c.l.b16 %v11355
    %v11667 = vunpack.c.h.b16 %v11355
    %v11668 = vunpack.c.l.b16 %v11356
    %v11669 = vunpack.c.h.b16 %v11356
    %v11670 = vunpack.c.l.b16 %v11357
    %v11671 = vunpack.c.h.b16 %v11357
    %v11672 = vunpack.c.l.b16 %v11358
    %v11673 = vunpack.c.h.b16 %v11358
    %v11674 = vunpack.c.l.b16 %v11359
    %v11675 = vunpack.c.h.b16 %v11359
    %v11676 = vunpack.c.l.b16 %v11360
    %v11677 = vunpack.c.h.b16 %v11360
    %v11678 = vunpack.c.l.b16 %v11361
    %v11679 = vunpack.c.h.b16 %v11361
    %v11680 = vunpack.c.l.b16 %v11362
    %v11681 = vunpack.c.h.b16 %v11362
    %v11682 = vunpack.c.l.b16 %v11363
    %v11683 = vunpack.c.h.b16 %v11363
    %v11684 = vunpack.c.l.b16 %v11364
    %v11685 = vunpack.c.h.b16 %v11364
    %v11686 = vunpack.c.l.b16 %v11365
    %v11687 = vunpack.c.h.b16 %v11365
    %v11688 = vunpack.c.l.b16 %v11366
    %v11689 = vunpack.c.h.b16 %v11366
    %v11690 = vunpack.c.l.b16 %v11367
    %v11691 = vunpack.c.h.b16 %v11367
    %v11692 = vunpack.c.l.b16 %v11368
    %v11693 = vunpack.c.h.b16 %v11368
    %v11694 = vunpack.c.l.b16 %v11369
    %v11695 = vunpack.c.h.b16 %v11369
    %v11696 = vunpack.c.l.b16 %v11370
    %v11697 = vunpack.c.h.b16 %v11370
    %v11698 = vunpack.c.l.b16 %v11371
    %v11699 = vunpack.c.h.b16 %v11371
    %v11700 = vunpack.c.l.b16 %v11372
    %v11701 = vunpack.c.h.b16 %v11372
    %v11702 = vunpack.c.l.b16 %v11373
    %v11703 = vunpack.c.h.b16 %v11373
    %v11704 = vunpack.c.l.b16 %v11374
    %v11705 = vunpack.c.h.b16 %v11374
    %v11706 = vunpack.c.l.b16 %v11375
    %v11707 = vunpack.c.h.b16 %v11375
    %v11708 = vunpack.c.l.b16 %v11376
    %v11709 = vunpack.c.h.b16 %v11376
    %v11710 = vunpack.c.l.b16 %v11377
    %v11711 = vunpack.c.h.b16 %v11377
    %v11712 = vunpack.c.l.b16 %v11378
    %v11713 = vunpack.c.h.b16 %v11378
    %v11714 = vunpack.c.l.b16 %v11379
    %v11715 = vunpack.c.h.b16 %v11379
    %v11716 = vunpack.c.l.b16 %v11380
    %v11717 = vunpack.c.h.b16 %v11380
    %v11718 = vunpack.c.l.b16 %v11381
    %v11719 = vunpack.c.h.b16 %v11381
    %v11720 = vunpack.c.l.b16 %v11382
    %v11721 = vunpack.c.h.b16 %v11382
    %v11722 = vunpack.c.l.b16 %v11383
    %v11723 = vunpack.c.h.b16 %v11383
    %v11724 = vunpack.c.l.b16 %v11384
    %v11725 = vunpack.c.h.b16 %v11384
    %v11726 = vunpack.c.l.b16 %v11385
    %v11727 = vunpack.c.h.b16 %v11385
    %v11728 = vunpack.c.l.b16 %v11386
    %v11729 = vunpack.c.h.b16 %v11386
    %v11730 = vunpack.c.l.b16 %v11387
    %v11731 = vunpack.c.h.b16 %v11387
    %v11732 = vunpack.c.l.b16 %v11388
    %v11733 = vunpack.c.h.b16 %v11388
    %v11734 = vunpack.c.l.b16 %v11389
    %v11735 = vunpack.c.h.b16 %v11389
    %v11736 = vunpack.c.l.b16 %v11390
    %v11737 = vunpack.c.h.b16 %v11390
    %v11738 = vunpack.c.l.b16 %v11391
    %v11739 = vunpack.c.h.b16 %v11391
    %v11740 = vunpack.c.l.b16 %v11392
    %v11741 = vunpack.c.h.b16 %v11392
    %v11742 = vunpack.c.l.b16 %v11393
    %v11743 = vunpack.c.h.b16 %v11393
    %v11744 = vunpack.c.l.b16 %v11394
    %v11745 = vunpack.c.h.b16 %v11394
    %v11746 = vunpack.c.l.b16 %v11395
    %v11747 = vunpack.c.h.b16 %v11395
    %v11748 = vunpack.c.l.b16 %v11396
    %v11749 = vunpack.c.h.b16 %v11396
    %v11750 = vunpack.c.l.b16 %v11397
    %v11751 = vunpack.c.h.b16 %v11397
    %v11752 = vunpack.c.l.b16 %v11398
    %v11753 = vunpack.c.h.b16 %v11398
    %v11754 = vunpack.c.l.b16 %v11399
    %v11755 = vunpack.c.h.b16 %v11399
    %v11756 = vunpack.c.l.b16 %v11400
    %v11757 = vunpack.c.h.b16 %v11400
    %v11758 = vunpack.c.l.b16 %v11401
    %v11759 = vunpack.c.h.b16 %v11401
    %v11760 = vunpack.c.l.b16 %v11402
    %v11761 = vunpack.c.h.b16 %v11402
    %v11762 = vunpack.c.l.b16 %v11403
    %v11763 = vunpack.c.h.b16 %v11403
    %v11764 = vunpack.c.l.b16 %v11404
    %v11765 = vunpack.c.h.b16 %v11404
    %v11766 = vunpack.c.l.b16 %v11405
    %v11767 = vunpack.c.h.b16 %v11405
    %v11768 = vunpack.c.l.b16 %v11406
    %v11769 = vunpack.c.h.b16 %v11406
    %v11770 = vunpack.c.l.b16 %v11407
    %v11771 = vunpack.c.h.b16 %v11407
    %v11772 = vunpack.c.l.b16 %v11408
    %v11773 = vunpack.c.h.b16 %v11408
    %v11774 = vunpack.c.l.b16 %v11409
    %v11775 = vunpack.c.h.b16 %v11409
    %v11776 = vunpack.c.l.b16 %v11410
    %v11777 = vunpack.c.h.b16 %v11410
    %v11778 = vunpack.c.l.b16 %v11411
    %v11779 = vunpack.c.h.b16 %v11411
    %v11780 = vunpack.c.l.b16 %v11412
    %v11781 = vunpack.c.h.b16 %v11412
    %v11782 = vunpack.c.l.b16 %v11413
    %v11783 = vunpack.c.h.b16 %v11413
    %v11784 = vunpack.c.l.b16 %v11414
    %v11785 = vunpack.c.h.b16 %v11414
    %v11786 = vunpack.c.l.b16 %v11415
    %v11787 = vunpack.c.h.b16 %v11415
    %v11788 = vunpack.c.l.b16 %v11416
    %v11789 = vunpack.c.h.b16 %v11416
    %v11790 = vunpack.c.l.b16 %v11417
    %v11791 = vunpack.c.h.b16 %v11417
    %v11792 = vunpack.c.l.b16 %v11418
    %v11793 = vunpack.c.h.b16 %v11418
    %v11794 = vunpack.c.l.b16 %v11419
    %v11795 = vunpack.c.h.b16 %v11419
    %v11796 = vunpack.c.l.b16 %v11420
    %v11797 = vunpack.c.h.b16 %v11420
    %v11798 = vunpack.c.l.b16 %v11421
    %v11799 = vunpack.c.h.b16 %v11421
    %v11800 = vunpack.c.l.b16 %v11422
    %v11801 = vunpack.c.h.b16 %v11422
    %v11802 = vunpack.c.l.b16 %v11423
    %v11803 = vunpack.c.h.b16 %v11423
    %v11804 = vunpack.c.l.b16 %v11424
    %v11805 = vunpack.c.h.b16 %v11424
    %v11806 = vunpack.c.l.b16 %v11425
    %v11807 = vunpack.c.h.b16 %v11425
    %v11808 = vunpack.c.l.b16 %v11426
    %v11809 = vunpack.c.h.b16 %v11426
    %v11810 = vunpack.c.l.b16 %v11427
    %v11811 = vunpack.c.h.b16 %v11427
    %v11812 = vunpack.c.l.b16 %v11428
    %v11813 = vunpack.c.h.b16 %v11428
    %v11814 = vunpack.c.l.b16 %v11429
    %v11815 = vunpack.c.h.b16 %v11429
    %v11816 = vunpack.c.l.b16 %v11430
    %v11817 = vunpack.c.h.b16 %v11430
    %v11818 = vunpack.c.l.b16 %v11431
    %v11819 = vunpack.c.h.b16 %v11431
    %v11820 = vunpack.c.l.b16 %v11432
    %v11821 = vunpack.c.h.b16 %v11432
    %v11822 = vunpack.c.l.b16 %v11433
    %v11823 = vunpack.c.h.b16 %v11433
    %v11824 = vunpack.c.l.b16 %v11434
    %v11825 = vunpack.c.h.b16 %v11434
    %v11826 = vunpack.c.l.b16 %v11435
    %v11827 = vunpack.c.h.b16 %v11435
    %v11828 = vunpack.c.l.b16 %v11436
    %v11829 = vunpack.c.h.b16 %v11436
    %v11830 = vunpack.c.l.b16 %v11437
    %v11831 = vunpack.c.h.b16 %v11437
    %v11832 = vunpack.c.l.b16 %v11438
    %v11833 = vunpack.c.h.b16 %v11438
    %v11834 = vunpack.c.l.b16 %v11439
    %v11835 = vunpack.c.h.b16 %v11439
    %v11836 = vunpack.c.l.b16 %v11440
    %v11837 = vunpack.c.h.b16 %v11440
    %v11838 = vunpack.c.l.b16 %v11441
    %v11839 = vunpack.c.h.b16 %v11441
    %v11840 = vunpack.c.l.b16 %v11442
    %v11841 = vunpack.c.h.b16 %v11442
    %v11842 = vunpack.c.l.b16 %v11443
    %v11843 = vunpack.c.h.b16 %v11443
    %v11844 = vunpack.c.l.b16 %v11444
    %v11845 = vunpack.c.h.b16 %v11444
    %v11846 = vunpack.c.l.b16 %v11445
    %v11847 = vunpack.c.h.b16 %v11445
    %v11848 = vunpack.c.l.b16 %v11446
    %v11849 = vunpack.c.h.b16 %v11446
    %v11850 = vunpack.c.l.b16 %v11447
    %v11851 = vunpack.c.h.b16 %v11447
    %v11852 = vunpack.c.l.b16 %v11448
    %v11853 = vunpack.c.h.b16 %v11448
    %v11854 = vunpack.c.l.b16 %v11449
    %v11855 = vunpack.c.h.b16 %v11449
    %v11856 = vunpack.c.l.b16 %v11450
    %v11857 = vunpack.c.h.b16 %v11450
    %v11858 = vpack.c.b16 %v11606, %v11602
    %v11859 = vpack.c.b16 %v11607, %v11603
    %v11860 = vpack.c.b16 %v11608, %v11604
    %v11861 = vpack.c.b16 %v11609, %v11605
    %v11862 = vpack.c.b16 %v11614, %v11610
    %v11863 = vpack.c.b16 %v11615, %v11611
    %v11864 = vpack.c.b16 %v11616, %v11612
    %v11865 = vpack.c.b16 %v11617, %v11613
    %v11866 = vpack.c.b16 %v11622, %v11618
    %v11867 = vpack.c.b16 %v11623, %v11619
    %v11868 = vpack.c.b16 %v11624, %v11620
    %v11869 = vpack.c.b16 %v11625, %v11621
    %v11870 = vpack.c.b16 %v11630, %v11626
    %v11871 = vpack.c.b16 %v11631, %v11627
    %v11872 = vpack.c.b16 %v11632, %v11628
    %v11873 = vpack.c.b16 %v11633, %v11629
    %v11874 = vpack.c.b16 %v11638, %v11634
    %v11875 = vpack.c.b16 %v11639, %v11635
    %v11876 = vpack.c.b16 %v11640, %v11636
    %v11877 = vpack.c.b16 %v11641, %v11637
    %v11878 = vpack.c.b16 %v11646, %v11642
    %v11879 = vpack.c.b16 %v11647, %v11643
    %v11880 = vpack.c.b16 %v11648, %v11644
    %v11881 = vpack.c.b16 %v11649, %v11645
    %v11882 = vpack.c.b16 %v11654, %v11650
    %v11883 = vpack.c.b16 %v11655, %v11651
    %v11884 = vpack.c.b16 %v11656, %v11652
    %v11885 = vpack.c.b16 %v11657, %v11653
    %v11886 = vpack.c.b16 %v11662, %v11658
    %v11887 = vpack.c.b16 %v11663, %v11659
    %v11888 = vpack.c.b16 %v11664, %v11660
    %v11889 = vpack.c.b16 %v11665, %v11661
    %v11890 = vpack.c.b16 %v11670, %v11666
    %v11891 = vpack.c.b16 %v11671, %v11667
    %v11892 = vpack.c.b16 %v11672, %v11668
    %v11893 = vpack.c.b16 %v11673, %v11669
    %v11894 = vpack.c.b16 %v11678, %v11674
    %v11895 = vpack.c.b16 %v11679, %v11675
    %v11896 = vpack.c.b16 %v11680, %v11676
    %v11897 = vpack.c.b16 %v11681, %v11677
    %v11898 = vpack.c.b16 %v11686, %v11682
    %v11899 = vpack.c.b16 %v11687, %v11683
    %v11900 = vpack.c.b16 %v11688, %v11684
    %v11901 = vpack.c.b16 %v11689, %v11685
    %v11902 = vpack.c.b16 %v11694, %v11690
    %v11903 = vpack.c.b16 %v11695, %v11691
    %v11904 = vpack.c.b16 %v11696, %v11692
    %v11905 = vpack.c.b16 %v11697, %v11693
    %v11906 = vpack.c.b16 %v11702, %v11698
    %v11907 = vpack.c.b16 %v11703, %v11699
    %v11908 = vpack.c.b16 %v11704, %v11700
    %v11909 = vpack.c.b16 %v11705, %v11701
    %v11910 = vpack.c.b16 %v11710, %v11706
    %v11911 = vpack.c.b16 %v11711, %v11707
    %v11912 = vpack.c.b16 %v11712, %v11708
    %v11913 = vpack.c.b16 %v11713, %v11709
    %v11914 = vpack.c.b16 %v11718, %v11714
    %v11915 = vpack.c.b16 %v11719, %v11715
    %v11916 = vpack.c.b16 %v11720, %v11716
    %v11917 = vpack.c.b16 %v11721, %v11717
    %v11918 = vpack.c.b16 %v11726, %v11722
    %v11919 = vpack.c.b16 %v11727, %v11723
    %v11920 = vpack.c.b16 %v11728, %v11724
    %v11921 = vpack.c.b16 %v11729, %v11725
    %v11922 = vpack.c.b16 %v11734, %v11730
    %v11923 = vpack.c.b16 %v11735, %v11731
    %v11924 = vpack.c.b16 %v11736, %v11732
    %v11925 = vpack.c.b16 %v11737, %v11733
    %v11926 = vpack.c.b16 %v11742, %v11738
    %v11927 = vpack.c.b16 %v11743, %v11739
    %v11928 = vpack.c.b16 %v11744, %v11740
    %v11929 = vpack.c.b16 %v11745, %v11741
    %v11930 = vpack.c.b16 %v11750, %v11746
    %v11931 = vpack.c.b16 %v11751, %v11747
    %v11932 = vpack.c.b16 %v11752, %v11748
    %v11933 = vpack.c.b16 %v11753, %v11749
    %v11934 = vpack.c.b16 %v11758, %v11754
    %v11935 = vpack.c.b16 %v11759, %v11755
    %v11936 = vpack.c.b16 %v11760, %v11756
    %v11937 = vpack.c.b16 %v11761, %v11757
    %v11938 = vpack.c.b16 %v11766, %v11762
    %v11939 = vpack.c.b16 %v11767, %v11763
    %v11940 = vpack.c.b16 %v11768, %v11764
    %v11941 = vpack.c.b16 %v11769, %v11765
    %v11942 = vpack.c.b16 %v11774, %v11770
    %v11943 = vpack.c.b16 %v11775, %v11771
    %v11944 = vpack.c.b16 %v11776, %v11772
    %v11945 = vpack.c.b16 %v11777, %v11773
    %v11946 = vpack.c.b16 %v11782, %v11778
    %v11947 = vpack.c.b16 %v11783, %v11779
    %v11948 = vpack.c.b16 %v11784, %v11780
    %v11949 = vpack.c.b16 %v11785, %v11781
    %v11950 = vpack.c.b16 %v11790, %v11786
    %v11951 = vpack.c.b16 %v11791, %v11787
    %v11952 = vpack.c.b16 %v11792, %v11788
    %v11953 = vpack.c.b16 %v11793, %v11789
    %v11954 = vpack.c.b16 %v11798, %v11794
    %v11955 = vpack.c.b16 %v11799, %v11795
    %v11956 = vpack.c.b16 %v11800, %v11796
    %v11957 = vpack.c.b16 %v11801, %v11797
    %v11958 = vpack.c.b16 %v11806, %v11802
    %v11959 = vpack.c.b16 %v11807, %v11803
    %v11960 = vpack.c.b16 %v11808, %v11804
    %v11961 = vpack.c.b16 %v11809, %v11805
    %v11962 = vpack.c.b16 %v11814, %v11810
    %v11963 = vpack.c.b16 %v11815, %v11811
    %v11964 = vpack.c.b16 %v11816, %v11812
    %v11965 = vpack.c.b16 %v11817, %v11813
    %v11966 = vpack.c.b16 %v11822, %v11818
    %v11967 = vpack.c.b16 %v11823, %v11819
    %v11968 = vpack.c.b16 %v11824, %v11820
    %v11969 = vpack.c.b16 %v11825, %v11821
    %v11970 = vpack.c.b16 %v11830, %v11826
    %v11971 = vpack.c.b16 %v11831, %v11827
    %v11972 = vpack.c.b16 %v11832, %v11828
    %v11973 = vpack.c.b16 %v11833, %v11829
    %v11974 = vpack.c.b16 %v11838, %v11834
    %v11975 = vpack.c.b16 %v11839, %v11835
    %v11976 = vpack.c.b16 %v11840, %v11836
    %v11977 = vpack.c.b16 %v11841, %v11837
    %v11978 = vpack.c.b16 %v11846, %v11842
    %v11979 = vpack.c.b16 %v11847, %v11843
    %v11980 = vpack.c.b16 %v11848, %v11844
    %v11981 = vpack.c.b16 %v11849, %v11845
    %v11982 = vpack.c.b16 %v11854, %v11850
    %v11983 = vpack.c.b16 %v11855, %v11851
    %v11984 = vpack.c.b16 %v11856, %v11852
    %v11985 = vpack.c.b16 %v11857, %v11853
    %12114 = vmatprep.subr.bf16.mxu0 %v11859
    %12115 = vmatpush1.bf16.msra.mxu0 %v11858
    %12116 = vmatprep.subr.bf16.mxu0 %v11863
    %12117 = vmatpush1.bf16.msra.mxu0 %v11862
    %12118 = vmatprep.subr.bf16.mxu0 %v11867
    %12119 = vmatpush1.bf16.msra.mxu0 %v11866
    %12120 = vmatprep.subr.bf16.mxu0 %v11871
    %12121 = vmatpush1.bf16.msra.mxu0 %v11870
    %12122 = vmatprep.subr.bf16.mxu0 %v11875
    %12123 = vmatpush1.bf16.msra.mxu0 %v11874
    %12124 = vmatprep.subr.bf16.mxu0 %v11879
    %12125 = vmatpush1.bf16.msra.mxu0 %v11878
    %12126 = vmatprep.subr.bf16.mxu0 %v11883
    %12127 = vmatpush1.bf16.msra.mxu0 %v11882
    %12128 = vmatprep.subr.bf16.mxu0 %v11887
    %12129 = vmatpush1.bf16.msra.mxu0 %v11886
    %12130 = vmatprep.subr.bf16.mxu0 %v11891
    %12131 = vmatpush1.bf16.msra.mxu0 %v11890
    %12132 = vmatprep.subr.bf16.mxu0 %v11895
    %12133 = vmatpush1.bf16.msra.mxu0 %v11894
    %12134 = vmatprep.subr.bf16.mxu0 %v11899
    %12135 = vmatpush1.bf16.msra.mxu0 %v11898
    %12136 = vmatprep.subr.bf16.mxu0 %v11903
    %12137 = vmatpush1.bf16.msra.mxu0 %v11902
    %12138 = vmatprep.subr.bf16.mxu0 %v11907
    %12139 = vmatpush1.bf16.msra.mxu0 %v11906
    %12140 = vmatprep.subr.bf16.mxu0 %v11911
    %12141 = vmatpush1.bf16.msra.mxu0 %v11910
    %12142 = vmatprep.subr.bf16.mxu0 %v11915
    %12143 = vmatpush1.bf16.msra.mxu0 %v11914
    %12144 = vmatprep.subr.bf16.mxu0 %v11919
    %12145 = vmatpush1.bf16.msra.mxu0 %v11918
    %12146 = vmatprep.mubr.bf16.mxu0 %v11315
    %12147 = vmatmul.mubr.bf16.gmra.mrb[0].mxu0 %v11314
    %v12148 = vpop.f32.mrb[0].mxu0
    %v12149 = vadd.f32 %v11457, %v12148
    %v12150 = vpop.f32.mrb[0].mxu0
    %v12151 = vadd.f32 %v11461, %v12150
    %v12152 = vpop.f32.mrb[0].mxu0
    %v12153 = vadd.f32 %v11457, %v12152
    %v12154 = vpop.f32.mrb[0].mxu0
    %v12155 = vadd.f32 %v11461, %v12154
    %12156 = vmatprep.mubr.bf16.mxu0 %v11319
    %12157 = vmatmul.mubr.bf16.gmra.mrb[0].mxu0 %v11318
    %v12158 = vpop.f32.mrb[0].mxu0
    %v12159 = vadd.f32 %v11457, %v12158
    %v12160 = vpop.f32.mrb[0].mxu0
    %v12161 = vadd.f32 %v11461, %v12160
    %v12162 = vpop.f32.mrb[0].mxu0
    %v12163 = vpop.f32.mrb[0].mxu0
    %12164 = vdwg.mxu0
    %12165 = vmatprep.subr.bf16.mxu0 %v11923
    %12166 = vmatpush1.bf16.msra.mxu0 %v11922
    %12167 = vmatprep.subr.bf16.mxu0 %v11927
    %12168 = vmatpush1.bf16.msra.mxu0 %v11926
    %12169 = vmatprep.subr.bf16.mxu0 %v11931
    %12170 = vmatpush1.bf16.msra.mxu0 %v11930
    %12171 = vmatprep.subr.bf16.mxu0 %v11935
    %12172 = vmatpush1.bf16.msra.mxu0 %v11934
    %12173 = vmatprep.subr.bf16.mxu0 %v11939
    %12174 = vmatpush1.bf16.msra.mxu0 %v11938
    %12175 = vmatprep.subr.bf16.mxu0 %v11943
    %12176 = vmatpush1.bf16.msra.mxu0 %v11942
    %12177 = vmatprep.subr.bf16.mxu0 %v11947
    %12178 = vmatpush1.bf16.msra.mxu0 %v11946
    %12179 = vmatprep.subr.bf16.mxu0 %v11951
    %12180 = vmatpush1.bf16.msra.mxu0 %v11950
    %12181 = vmatprep.subr.bf16.mxu0 %v11955
    %12182 = vmatpush1.bf16.msra.mxu0 %v11954
    %12183 = vmatprep.subr.bf16.mxu0 %v11959
    %12184 = vmatpush1.bf16.msra.mxu0 %v11958
    %12185 = vmatprep.subr.bf16.mxu0 %v11963
    %12186 = vmatpush1.bf16.msra.mxu0 %v11962
    %12187 = vmatprep.subr.bf16.mxu0 %v11967
    %12188 = vmatpush1.bf16.msra.mxu0 %v11966
    %12189 = vmatprep.subr.bf16.mxu0 %v11971
    %12190 = vmatpush1.bf16.msra.mxu0 %v11970
    %12191 = vmatprep.subr.bf16.mxu0 %v11975
    %12192 = vmatpush1.bf16.msra.mxu0 %v11974
    %12193 = vmatprep.subr.bf16.mxu0 %v11979
    %12194 = vmatpush1.bf16.msra.mxu0 %v11978
    %12195 = vmatprep.subr.bf16.mxu0 %v11983
    %12196 = vmatpush1.bf16.msra.mxu0 %v11982
    %12197 = vmatprep.mubr.bf16.mxu0 %v11317
    %12198 = vmatmul.mubr.bf16.gmra.mrb[0].mxu0 %v11316
    %v12199 = vpop.f32.mrb[0].mxu0
    %v12200 = vadd.f32 %v12149, %v12199
    %v12201 = vpop.f32.mrb[0].mxu0
    %v12202 = vadd.f32 %v12151, %v12201
    %v12203 = vpop.f32.mrb[0].mxu0
    %v12204 = vadd.f32 %v12153, %v12203
    %v12205 = vpop.f32.mrb[0].mxu0
    %v12206 = vadd.f32 %v12155, %v12205
    %12207 = vmatprep.mubr.bf16.mxu0 %v11321
    %12208 = vmatmul.mubr.bf16.gmra.mrb[0].mxu0 %v11320
    %v12209 = vpop.f32.mrb[0].mxu0
    %v12210 = vadd.f32 %v12159, %v12209
    %v12211 = vpop.f32.mrb[0].mxu0
    %v12212 = vadd.f32 %v12161, %v12211
    %v12213 = vpop.f32.mrb[0].mxu0
    %v12214 = vpop.f32.mrb[0].mxu0
    %12215 = vdwg.mxu0
    %12216 = vmatprep.subr.bf16.mxu0 %v11861
    %12217 = vmatpush1.bf16.msra.mxu0 %v11860
    %12218 = vmatprep.subr.bf16.mxu0 %v11865
    %12219 = vmatpush1.bf16.msra.mxu0 %v11864
    %12220 = vmatprep.subr.bf16.mxu0 %v11869
    %12221 = vmatpush1.bf16.msra.mxu0 %v11868
    %12222 = vmatprep.subr.bf16.mxu0 %v11873
    %12223 = vmatpush1.bf16.msra.mxu0 %v11872
    %12224 = vmatprep.subr.bf16.mxu0 %v11877
    %12225 = vmatpush1.bf16.msra.mxu0 %v11876
    %12226 = vmatprep.subr.bf16.mxu0 %v11881
    %12227 = vmatpush1.bf16.msra.mxu0 %v11880
    %12228 = vmatprep.subr.bf16.mxu0 %v11885
    %12229 = vmatpush1.bf16.msra.mxu0 %v11884
    %12230 = vmatprep.subr.bf16.mxu0 %v11889
    %12231 = vmatpush1.bf16.msra.mxu0 %v11888
    %12232 = vmatprep.subr.bf16.mxu0 %v11893
    %12233 = vmatpush1.bf16.msra.mxu0 %v11892
    %12234 = vmatprep.subr.bf16.mxu0 %v11897
    %12235 = vmatpush1.bf16.msra.mxu0 %v11896
    %12236 = vmatprep.subr.bf16.mxu0 %v11901
    %12237 = vmatpush1.bf16.msra.mxu0 %v11900
    %12238 = vmatprep.subr.bf16.mxu0 %v11905
    %12239 = vmatpush1.bf16.msra.mxu0 %v11904
    %12240 = vmatprep.subr.bf16.mxu0 %v11909
    %12241 = vmatpush1.bf16.msra.mxu0 %v11908
    %12242 = vmatprep.subr.bf16.mxu0 %v11913
    %12243 = vmatpush1.bf16.msra.mxu0 %v11912
    %12244 = vmatprep.subr.bf16.mxu0 %v11917
    %12245 = vmatpush1.bf16.msra.mxu0 %v11916
    %12246 = vmatprep.subr.bf16.mxu0 %v11921
    %12247 = vmatpush1.bf16.msra.mxu0 %v11920
    %12248 = vmatprep.mubr.bf16.mxu0 %v11315
    %12249 = vmatmul.mubr.bf16.gmra.mrb[0].mxu0 %v11314
    %v12250 = vpop.f32.mrb[0].mxu0
    %v12251 = vadd.f32 %v11465, %v12250
    %v12252 = vpop.f32.mrb[0].mxu0
    %v12253 = vadd.f32 %v11469, %v12252
    %v12254 = vpop.f32.mrb[0].mxu0
    %v12255 = vadd.f32 %v11465, %v12254
    %v12256 = vpop.f32.mrb[0].mxu0
    %v12257 = vadd.f32 %v11469, %v12256
    %12258 = vmatprep.mubr.bf16.mxu0 %v11319
    %12259 = vmatmul.mubr.bf16.gmra.mrb[0].mxu0 %v11318
    %v12260 = vpop.f32.mrb[0].mxu0
    %v12261 = vadd.f32 %v11465, %v12260
    %v12262 = vpop.f32.mrb[0].mxu0
    %v12263 = vadd.f32 %v11469, %v12262
    %v12264 = vpop.f32.mrb[0].mxu0
    %v12265 = vpop.f32.mrb[0].mxu0
    %12266 = vdwg.mxu0
    %12267 = vmatprep.subr.bf16.mxu0 %v11925
    %12268 = vmatpush1.bf16.msra.mxu0 %v11924
    %12269 = vmatprep.subr.bf16.mxu0 %v11929
    %12270 = vmatpush1.bf16.msra.mxu0 %v11928
    %12271 = vmatprep.subr.bf16.mxu0 %v11933
    %12272 = vmatpush1.bf16.msra.mxu0 %v11932
    %12273 = vmatprep.subr.bf16.mxu0 %v11937
    %12274 = vmatpush1.bf16.msra.mxu0 %v11936
    %12275 = vmatprep.subr.bf16.mxu0 %v11941
    %12276 = vmatpush1.bf16.msra.mxu0 %v11940
    %12277 = vmatprep.subr.bf16.mxu0 %v11945
    %12278 = vmatpush1.bf16.msra.mxu0 %v11944
    %12279 = vmatprep.subr.bf16.mxu0 %v11949
    %12280 = vmatpush1.bf16.msra.mxu0 %v11948
    %12281 = vmatprep.subr.bf16.mxu0 %v11953
    %12282 = vmatpush1.bf16.msra.mxu0 %v11952
    %12283 = vmatprep.subr.bf16.mxu0 %v11957
    %12284 = vmatpush1.bf16.msra.mxu0 %v11956
    %12285 = vmatprep.subr.bf16.mxu0 %v11961
    %12286 = vmatpush1.bf16.msra.mxu0 %v11960
    %12287 = vmatprep.subr.bf16.mxu0 %v11965
    %12288 = vmatpush1.bf16.msra.mxu0 %v11964
    %12289 = vmatprep.subr.bf16.mxu0 %v11969
    %12290 = vmatpush1.bf16.msra.mxu0 %v11968
    %12291 = vmatprep.subr.bf16.mxu0 %v11973
    %12292 = vmatpush1.bf16.msra.mxu0 %v11972
    %12293 = vmatprep.subr.bf16.mxu0 %v11977
    %12294 = vmatpush1.bf16.msra.mxu0 %v11976
    %12295 = vmatprep.subr.bf16.mxu0 %v11981
    %12296 = vmatpush1.bf16.msra.mxu0 %v11980
    %12297 = vmatprep.subr.bf16.mxu0 %v11985
    %12298 = vmatpush1.bf16.msra.mxu0 %v11984
    %12299 = vmatprep.mubr.bf16.mxu0 %v11317
    %12300 = vmatmul.mubr.bf16.gmra.mrb[0].mxu0 %v11316
    %v12301 = vpop.f32.mrb[0].mxu0
    %v12302 = vadd.f32 %v12251, %v12301
    %v12303 = vpop.f32.mrb[0].mxu0
    %v12304 = vadd.f32 %v12253, %v12303
    %v12305 = vpop.f32.mrb[0].mxu0
    %v12306 = vadd.f32 %v12255, %v12305
    %v12307 = vpop.f32.mrb[0].mxu0
    %v12308 = vadd.f32 %v12257, %v12307
    %12309 = vmatprep.mubr.bf16.mxu0 %v11321
    %12310 = vmatmul.mubr.bf16.gmra.mrb[0].mxu0 %v11320
    %v12311 = vpop.f32.mrb[0].mxu0
    %v12312 = vadd.f32 %v12261, %v12311
    %v12313 = vpop.f32.mrb[0].mxu0
    %v12314 = vadd.f32 %v12263, %v12313
    %v12315 = vpop.f32.mrb[0].mxu0
    %v12316 = vpop.f32.mrb[0].mxu0
    %12317 = vdwg.mxu0
    %vm12318 = vcmp.ge.f32.partialorder %v12200, 0.0
    %vm12319 = vcmp.ge.f32.partialorder %v12202, 0.0
    %vm12320 = vcmp.ge.f32.partialorder %v12302, 0.0
    %vm12321 = vcmp.ge.f32.partialorder %v12304, 0.0
    %vm12322 = vcmp.ge.f32.partialorder %v12204, 0.0
    %vm12323 = vcmp.ge.f32.partialorder %v12206, 0.0
    %vm12324 = vcmp.ge.f32.partialorder %v12306, 0.0
    %vm12325 = vcmp.ge.f32.partialorder %v12308, 0.0
    %vm12326 = vcmp.ge.f32.partialorder %v12210, 0.0
    %vm12327 = vcmp.ge.f32.partialorder %v12212, 0.0
    %vm12328 = vcmp.ge.f32.partialorder %v12312, 0.0
    %vm12329 = vcmp.ge.f32.partialorder %v12314, 0.0
    %v12330 = vmul.f32 %v12200, 0.2
    %v12331 = vmul.f32 %v12202, 0.2
    %v12332 = vmul.f32 %v12302, 0.2
    %v12333 = vmul.f32 %v12304, 0.2
    %v12334 = vmul.f32 %v12204, 0.2
    %v12335 = vmul.f32 %v12206, 0.2
    %v12336 = vmul.f32 %v12306, 0.2
    %v12337 = vmul.f32 %v12308, 0.2
    %v12338 = vmul.f32 %v12210, 0.2
    %v12339 = vmul.f32 %v12212, 0.2
    %v12340 = vmul.f32 %v12312, 0.2
    %v12341 = vmul.f32 %v12314, 0.2
    %v12342 = vsel %vm12318, %v12200, %v12330
    %v12343 = vsel %vm12319, %v12202, %v12331
    %v12344 = vsel %vm12320, %v12302, %v12332
    %v12345 = vsel %vm12321, %v12304, %v12333
    %v12346 = vsel %vm12322, %v12204, %v12334
    %v12347 = vsel %vm12323, %v12206, %v12335
    %v12348 = vsel %vm12324, %v12306, %v12336
    %v12349 = vsel %vm12325, %v12308, %v12337
    %v12350 = vsel %vm12326, %v12210, %v12338
    %v12351 = vsel %vm12327, %v12212, %v12339
    %v12352 = vsel %vm12328, %v12312, %v12340
    %v12353 = vsel %vm12329, %v12314, %v12341
    %v12354 = vpack.c.bf16 %v12346, %v12342
    %v12355 = vpack.c.bf16 %v12347, %v12343
    %v12356 = vpack.c.bf16 %v12348, %v12344
    %v12357 = vpack.c.bf16 %v12349, %v12345
    %v12358 = vpack.c.bf16 %v12350, %v12350
    %v12359 = vpack.c.bf16 %v12351, %v12351
    %v12360 = vpack.c.bf16 %v12352, %v12352
    %v12361 = vpack.c.bf16 %v12353, %v12353
    %s12362 = scalar_lea.vmem [#allocation4], 11264
    %v12363 = vld [vmem:[%s12362] sm:$0xff]
    %v12364 = vld [vmem:[%s12362 + $0x8] sm:$0xff]
    %v12365 = vld [vmem:[%s12362 + $0x10] sm:$0xff]
    %v12366 = vld [vmem:[%s12362 + $0x18] sm:$0xff]
    %v12367 = vld [vmem:[%s12362 + $0x20] sm:$0xff]
    %v12368 = vld [vmem:[%s12362 + $0x28] sm:$0xff]
    %v12369 = vld [vmem:[%s12362 + $0x30] sm:$0xff]
    %v12370 = vld [vmem:[%s12362 + $0x38] sm:$0xff]
    %v12371 = vld [vmem:[%s12362 + $0x40] sm:$0xff]
    %v12372 = vld [vmem:[%s12362 + $0x48] sm:$0xff]
    %v12373 = vld [vmem:[%s12362 + $0x50] sm:$0xff]
    %v12374 = vld [vmem:[%s12362 + $0x58] sm:$0xff]
    %v12375 = vld [vmem:[%s12362 + $0x60] sm:$0xff]
    %v12376 = vld [vmem:[%s12362 + $0x68] sm:$0xff]
    %v12377 = vld [vmem:[%s12362 + $0x70] sm:$0xff]
    %v12378 = vld [vmem:[%s12362 + $0x78] sm:$0xff]
    %v12379 = vld [vmem:[%s12362 + $0x80] sm:$0xff]
    %v12380 = vld [vmem:[%s12362 + $0x88] sm:$0xff]
    %v12381 = vld [vmem:[%s12362 + $0x90] sm:$0xff]
    %v12382 = vld [vmem:[%s12362 + $0x98] sm:$0xff]
    %v12383 = vld [vmem:[%s12362 + $0xa0] sm:$0xff]
    %v12384 = vld [vmem:[%s12362 + $0xa8] sm:$0xff]
    %v12385 = vld [vmem:[%s12362 + $0xb0] sm:$0xff]
    %v12386 = vld [vmem:[%s12362 + $0xb8] sm:$0xff]
    %v12387 = vld [vmem:[%s12362 + $0xc0] sm:$0xff]
    %v12388 = vld [vmem:[%s12362 + $0xc8] sm:$0xff]
    %v12389 = vld [vmem:[%s12362 + $0xd0] sm:$0xff]
    %v12390 = vld [vmem:[%s12362 + $0xd8] sm:$0xff]
    %v12391 = vld [vmem:[%s12362 + $0xe0] sm:$0xff]
    %v12392 = vld [vmem:[%s12362 + $0xe8] sm:$0xff]
    %v12393 = vld [vmem:[%s12362 + $0xf0] sm:$0xff]
    %v12394 = vld [vmem:[%s12362 + $0xf8] sm:$0xff]
    %v12395 = vld [vmem:[%s12362 + $0x100] sm:$0xff]
    %v12396 = vld [vmem:[%s12362 + $0x108] sm:$0xff]
    %v12397 = vld [vmem:[%s12362 + $0x110] sm:$0xff]
    %v12398 = vld [vmem:[%s12362 + $0x118] sm:$0xff]
    %v12399 = vld [vmem:[%s12362 + $0x120] sm:$0xff]
    %v12400 = vld [vmem:[%s12362 + $0x128] sm:$0xff]
    %v12401 = vld [vmem:[%s12362 + $0x130] sm:$0xff]
    %v12402 = vld [vmem:[%s12362 + $0x138] sm:$0xff]
    %v12403 = vld [vmem:[%s12362 + $0x140] sm:$0xff]
    %v12404 = vld [vmem:[%s12362 + $0x148] sm:$0xff]
    %v12405 = vld [vmem:[%s12362 + $0x150] sm:$0xff]
    %v12406 = vld [vmem:[%s12362 + $0x158] sm:$0xff]
    %v12407 = vld [vmem:[%s12362 + $0x160] sm:$0xff]
    %v12408 = vld [vmem:[%s12362 + $0x168] sm:$0xff]
    %v12409 = vld [vmem:[%s12362 + $0x170] sm:$0xff]
    %v12410 = vld [vmem:[%s12362 + $0x178] sm:$0xff]
    %v12411 = vld [vmem:[%s12362 + $0x180] sm:$0xff]
    %v12412 = vld [vmem:[%s12362 + $0x188] sm:$0xff]
    %v12413 = vld [vmem:[%s12362 + $0x190] sm:$0xff]
    %v12414 = vld [vmem:[%s12362 + $0x198] sm:$0xff]
    %v12415 = vld [vmem:[%s12362 + $0x1a0] sm:$0xff]
    %v12416 = vld [vmem:[%s12362 + $0x1a8] sm:$0xff]
    %v12417 = vld [vmem:[%s12362 + $0x1b0] sm:$0xff]
    %v12418 = vld [vmem:[%s12362 + $0x1b8] sm:$0xff]
    %v12419 = vld [vmem:[%s12362 + $0x1c0] sm:$0xff]
    %v12420 = vld [vmem:[%s12362 + $0x1c8] sm:$0xff]
    %v12421 = vld [vmem:[%s12362 + $0x1d0] sm:$0xff]
    %v12422 = vld [vmem:[%s12362 + $0x1d8] sm:$0xff]
    %v12423 = vld [vmem:[%s12362 + $0x1e0] sm:$0xff]
    %v12424 = vld [vmem:[%s12362 + $0x1e8] sm:$0xff]
    %v12425 = vld [vmem:[%s12362 + $0x1f0] sm:$0xff]
    %v12426 = vld [vmem:[%s12362 + $0x1f8] sm:$0xff]
    %v12427 = vld [vmem:[%s12362 + $0x200] sm:$0xff]
    %v12428 = vld [vmem:[%s12362 + $0x208] sm:$0xff]
    %v12429 = vld [vmem:[%s12362 + $0x210] sm:$0xff]
    %v12430 = vld [vmem:[%s12362 + $0x218] sm:$0xff]
    %v12431 = vld [vmem:[%s12362 + $0x220] sm:$0xff]
    %v12432 = vld [vmem:[%s12362 + $0x228] sm:$0xff]
    %v12433 = vld [vmem:[%s12362 + $0x230] sm:$0xff]
    %v12434 = vld [vmem:[%s12362 + $0x238] sm:$0xff]
    %v12435 = vld [vmem:[%s12362 + $0x240] sm:$0xff]
    %v12436 = vld [vmem:[%s12362 + $0x248] sm:$0xff]
    %v12437 = vld [vmem:[%s12362 + $0x250] sm:$0xff]
    %v12438 = vld [vmem:[%s12362 + $0x258] sm:$0xff]
    %v12439 = vld [vmem:[%s12362 + $0x260] sm:$0xff]
    %v12440 = vld [vmem:[%s12362 + $0x268] sm:$0xff]
    %v12441 = vld [vmem:[%s12362 + $0x270] sm:$0xff]
    %v12442 = vld [vmem:[%s12362 + $0x278] sm:$0xff]
    %v12443 = vld [vmem:[%s12362 + $0x280] sm:$0xff]
    %v12444 = vld [vmem:[%s12362 + $0x288] sm:$0xff]
    %v12445 = vld [vmem:[%s12362 + $0x290] sm:$0xff]
    %v12446 = vld [vmem:[%s12362 + $0x298] sm:$0xff]
    %v12447 = vld [vmem:[%s12362 + $0x2a0] sm:$0xff]
    %v12448 = vld [vmem:[%s12362 + $0x2a8] sm:$0xff]
    %v12449 = vld [vmem:[%s12362 + $0x2b0] sm:$0xff]
    %v12450 = vld [vmem:[%s12362 + $0x2b8] sm:$0xff]
    %v12451 = vld [vmem:[%s12362 + $0x2c0] sm:$0xff]
    %v12452 = vld [vmem:[%s12362 + $0x2c8] sm:$0xff]
    %v12453 = vld [vmem:[%s12362 + $0x2d0] sm:$0xff]
    %v12454 = vld [vmem:[%s12362 + $0x2d8] sm:$0xff]
    %v12455 = vld [vmem:[%s12362 + $0x2e0] sm:$0xff]
    %v12456 = vld [vmem:[%s12362 + $0x2e8] sm:$0xff]
    %v12457 = vld [vmem:[%s12362 + $0x2f0] sm:$0xff]
    %v12458 = vld [vmem:[%s12362 + $0x2f8] sm:$0xff]
    %v12459 = vld [vmem:[%s12362 + $0x300] sm:$0xff]
    %v12460 = vld [vmem:[%s12362 + $0x308] sm:$0xff]
    %v12461 = vld [vmem:[%s12362 + $0x310] sm:$0xff]
    %v12462 = vld [vmem:[%s12362 + $0x318] sm:$0xff]
    %v12463 = vld [vmem:[%s12362 + $0x320] sm:$0xff]
    %v12464 = vld [vmem:[%s12362 + $0x328] sm:$0xff]
    %v12465 = vld [vmem:[%s12362 + $0x330] sm:$0xff]
    %v12466 = vld [vmem:[%s12362 + $0x338] sm:$0xff]
    %v12467 = vld [vmem:[%s12362 + $0x340] sm:$0xff]
    %v12468 = vld [vmem:[%s12362 + $0x348] sm:$0xff]
    %v12469 = vld [vmem:[%s12362 + $0x350] sm:$0xff]
    %v12470 = vld [vmem:[%s12362 + $0x358] sm:$0xff]
    %v12471 = vld [vmem:[%s12362 + $0x360] sm:$0xff]
    %v12472 = vld [vmem:[%s12362 + $0x368] sm:$0xff]
    %v12473 = vld [vmem:[%s12362 + $0x370] sm:$0xff]
    %v12474 = vld [vmem:[%s12362 + $0x378] sm:$0xff]
    %v12475 = vld [vmem:[%s12362 + $0x380] sm:$0xff]
    %v12476 = vld [vmem:[%s12362 + $0x388] sm:$0xff]
    %v12477 = vld [vmem:[%s12362 + $0x390] sm:$0xff]
    %v12478 = vld [vmem:[%s12362 + $0x398] sm:$0xff]
    %v12479 = vld [vmem:[%s12362 + $0x3a0] sm:$0xff]
    %v12480 = vld [vmem:[%s12362 + $0x3a8] sm:$0xff]
    %v12481 = vld [vmem:[%s12362 + $0x3b0] sm:$0xff]
    %v12482 = vld [vmem:[%s12362 + $0x3b8] sm:$0xff]
    %v12483 = vld [vmem:[%s12362 + $0x3c0] sm:$0xff]
    %v12484 = vld [vmem:[%s12362 + $0x3c8] sm:$0xff]
    %v12485 = vld [vmem:[%s12362 + $0x3d0] sm:$0xff]
    %v12486 = vld [vmem:[%s12362 + $0x3d8] sm:$0xff]
    %v12487 = vld [vmem:[%s12362 + $0x3e0] sm:$0xff]
    %v12488 = vld [vmem:[%s12362 + $0x3e8] sm:$0xff]
    %v12489 = vld [vmem:[%s12362 + $0x3f0] sm:$0xff]
    %v12490 = vld [vmem:[%s12362 + $0x3f8] sm:$0xff]
    %s12491 = scalar_lea.vmem [#allocation6], 44
    %v12492 = vld [vmem:[%s12491] sm:$0xf]
    %v12494 = vlaneseq
    %v12495 = vshrl.u32 %v12494, 7
    %v12496 = vsub.s32 0, %v12495
    %v12497 = vrot.slane %v12492, %v12496
    %v12498 = vlaneseq
    %v12499 = vshrl.u32 %v12498, 7
    %v12500 = vsub.s32 1, %v12499
    %v12501 = vrot.slane %v12492, %v12500
    %v12502 = vlaneseq
    %v12503 = vshrl.u32 %v12502, 7
    %v12504 = vsub.s32 2, %v12503
    %v12505 = vrot.slane %v12492, %v12504
    %v12506 = vlaneseq
    %v12507 = vshrl.u32 %v12506, 7
    %v12508 = vsub.s32 3, %v12507
    %v12509 = vrot.slane %v12492, %v12508
    %v12642 = vunpack.c.l.b16 %v12363
    %v12643 = vunpack.c.h.b16 %v12363
    %v12644 = vunpack.c.l.b16 %v12364
    %v12645 = vunpack.c.h.b16 %v12364
    %v12646 = vunpack.c.l.b16 %v12365
    %v12647 = vunpack.c.h.b16 %v12365
    %v12648 = vunpack.c.l.b16 %v12366
    %v12649 = vunpack.c.h.b16 %v12366
    %v12650 = vunpack.c.l.b16 %v12367
    %v12651 = vunpack.c.h.b16 %v12367
    %v12652 = vunpack.c.l.b16 %v12368
    %v12653 = vunpack.c.h.b16 %v12368
    %v12654 = vunpack.c.l.b16 %v12369
    %v12655 = vunpack.c.h.b16 %v12369
    %v12656 = vunpack.c.l.b16 %v12370
    %v12657 = vunpack.c.h.b16 %v12370
    %v12658 = vunpack.c.l.b16 %v12371
    %v12659 = vunpack.c.h.b16 %v12371
    %v12660 = vunpack.c.l.b16 %v12372
    %v12661 = vunpack.c.h.b16 %v12372
    %v12662 = vunpack.c.l.b16 %v12373
    %v12663 = vunpack.c.h.b16 %v12373
    %v12664 = vunpack.c.l.b16 %v12374
    %v12665 = vunpack.c.h.b16 %v12374
    %v12666 = vunpack.c.l.b16 %v12375
    %v12667 = vunpack.c.h.b16 %v12375
    %v12668 = vunpack.c.l.b16 %v12376
    %v12669 = vunpack.c.h.b16 %v12376
    %v12670 = vunpack.c.l.b16 %v12377
    %v12671 = vunpack.c.h.b16 %v12377
    %v12672 = vunpack.c.l.b16 %v12378
    %v12673 = vunpack.c.h.b16 %v12378
    %v12674 = vunpack.c.l.b16 %v12379
    %v12675 = vunpack.c.h.b16 %v12379
    %v12676 = vunpack.c.l.b16 %v12380
    %v12677 = vunpack.c.h.b16 %v12380
    %v12678 = vunpack.c.l.b16 %v12381
    %v12679 = vunpack.c.h.b16 %v12381
    %v12680 = vunpack.c.l.b16 %v12382
    %v12681 = vunpack.c.h.b16 %v12382
    %v12682 = vunpack.c.l.b16 %v12383
    %v12683 = vunpack.c.h.b16 %v12383
    %v12684 = vunpack.c.l.b16 %v12384
    %v12685 = vunpack.c.h.b16 %v12384
    %v12686 = vunpack.c.l.b16 %v12385
    %v12687 = vunpack.c.h.b16 %v12385
    %v12688 = vunpack.c.l.b16 %v12386
    %v12689 = vunpack.c.h.b16 %v12386
    %v12690 = vunpack.c.l.b16 %v12387
    %v12691 = vunpack.c.h.b16 %v12387
    %v12692 = vunpack.c.l.b16 %v12388
    %v12693 = vunpack.c.h.b16 %v12388
    %v12694 = vunpack.c.l.b16 %v12389
    %v12695 = vunpack.c.h.b16 %v12389
    %v12696 = vunpack.c.l.b16 %v12390
    %v12697 = vunpack.c.h.b16 %v12390
    %v12698 = vunpack.c.l.b16 %v12391
    %v12699 = vunpack.c.h.b16 %v12391
    %v12700 = vunpack.c.l.b16 %v12392
    %v12701 = vunpack.c.h.b16 %v12392
    %v12702 = vunpack.c.l.b16 %v12393
    %v12703 = vunpack.c.h.b16 %v12393
    %v12704 = vunpack.c.l.b16 %v12394
    %v12705 = vunpack.c.h.b16 %v12394
    %v12706 = vunpack.c.l.b16 %v12395
    %v12707 = vunpack.c.h.b16 %v12395
    %v12708 = vunpack.c.l.b16 %v12396
    %v12709 = vunpack.c.h.b16 %v12396
    %v12710 = vunpack.c.l.b16 %v12397
    %v12711 = vunpack.c.h.b16 %v12397
    %v12712 = vunpack.c.l.b16 %v12398
    %v12713 = vunpack.c.h.b16 %v12398
    %v12714 = vunpack.c.l.b16 %v12399
    %v12715 = vunpack.c.h.b16 %v12399
    %v12716 = vunpack.c.l.b16 %v12400
    %v12717 = vunpack.c.h.b16 %v12400
    %v12718 = vunpack.c.l.b16 %v12401
    %v12719 = vunpack.c.h.b16 %v12401
    %v12720 = vunpack.c.l.b16 %v12402
    %v12721 = vunpack.c.h.b16 %v12402
    %v12722 = vunpack.c.l.b16 %v12403
    %v12723 = vunpack.c.h.b16 %v12403
    %v12724 = vunpack.c.l.b16 %v12404
    %v12725 = vunpack.c.h.b16 %v12404
    %v12726 = vunpack.c.l.b16 %v12405
    %v12727 = vunpack.c.h.b16 %v12405
    %v12728 = vunpack.c.l.b16 %v12406
    %v12729 = vunpack.c.h.b16 %v12406
    %v12730 = vunpack.c.l.b16 %v12407
    %v12731 = vunpack.c.h.b16 %v12407
    %v12732 = vunpack.c.l.b16 %v12408
    %v12733 = vunpack.c.h.b16 %v12408
    %v12734 = vunpack.c.l.b16 %v12409
    %v12735 = vunpack.c.h.b16 %v12409
    %v12736 = vunpack.c.l.b16 %v12410
    %v12737 = vunpack.c.h.b16 %v12410
    %v12738 = vunpack.c.l.b16 %v12411
    %v12739 = vunpack.c.h.b16 %v12411
    %v12740 = vunpack.c.l.b16 %v12412
    %v12741 = vunpack.c.h.b16 %v12412
    %v12742 = vunpack.c.l.b16 %v12413
    %v12743 = vunpack.c.h.b16 %v12413
    %v12744 = vunpack.c.l.b16 %v12414
    %v12745 = vunpack.c.h.b16 %v12414
    %v12746 = vunpack.c.l.b16 %v12415
    %v12747 = vunpack.c.h.b16 %v12415
    %v12748 = vunpack.c.l.b16 %v12416
    %v12749 = vunpack.c.h.b16 %v12416
    %v12750 = vunpack.c.l.b16 %v12417
    %v12751 = vunpack.c.h.b16 %v12417
    %v12752 = vunpack.c.l.b16 %v12418
    %v12753 = vunpack.c.h.b16 %v12418
    %v12754 = vunpack.c.l.b16 %v12419
    %v12755 = vunpack.c.h.b16 %v12419
    %v12756 = vunpack.c.l.b16 %v12420
    %v12757 = vunpack.c.h.b16 %v12420
    %v12758 = vunpack.c.l.b16 %v12421
    %v12759 = vunpack.c.h.b16 %v12421
    %v12760 = vunpack.c.l.b16 %v12422
    %v12761 = vunpack.c.h.b16 %v12422
    %v12762 = vunpack.c.l.b16 %v12423
    %v12763 = vunpack.c.h.b16 %v12423
    %v12764 = vunpack.c.l.b16 %v12424
    %v12765 = vunpack.c.h.b16 %v12424
    %v12766 = vunpack.c.l.b16 %v12425
    %v12767 = vunpack.c.h.b16 %v12425
    %v12768 = vunpack.c.l.b16 %v12426
    %v12769 = vunpack.c.h.b16 %v12426
    %v12770 = vunpack.c.l.b16 %v12427
    %v12771 = vunpack.c.h.b16 %v12427
    %v12772 = vunpack.c.l.b16 %v12428
    %v12773 = vunpack.c.h.b16 %v12428
    %v12774 = vunpack.c.l.b16 %v12429
    %v12775 = vunpack.c.h.b16 %v12429
    %v12776 = vunpack.c.l.b16 %v12430
    %v12777 = vunpack.c.h.b16 %v12430
    %v12778 = vunpack.c.l.b16 %v12431
    %v12779 = vunpack.c.h.b16 %v12431
    %v12780 = vunpack.c.l.b16 %v12432
    %v12781 = vunpack.c.h.b16 %v12432
    %v12782 = vunpack.c.l.b16 %v12433
    %v12783 = vunpack.c.h.b16 %v12433
    %v12784 = vunpack.c.l.b16 %v12434
    %v12785 = vunpack.c.h.b16 %v12434
    %v12786 = vunpack.c.l.b16 %v12435
    %v12787 = vunpack.c.h.b16 %v12435
    %v12788 = vunpack.c.l.b16 %v12436
    %v12789 = vunpack.c.h.b16 %v12436
    %v12790 = vunpack.c.l.b16 %v12437
    %v12791 = vunpack.c.h.b16 %v12437
    %v12792 = vunpack.c.l.b16 %v12438
    %v12793 = vunpack.c.h.b16 %v12438
    %v12794 = vunpack.c.l.b16 %v12439
    %v12795 = vunpack.c.h.b16 %v12439
    %v12796 = vunpack.c.l.b16 %v12440
    %v12797 = vunpack.c.h.b16 %v12440
    %v12798 = vunpack.c.l.b16 %v12441
    %v12799 = vunpack.c.h.b16 %v12441
    %v12800 = vunpack.c.l.b16 %v12442
    %v12801 = vunpack.c.h.b16 %v12442
    %v12802 = vunpack.c.l.b16 %v12443
    %v12803 = vunpack.c.h.b16 %v12443
    %v12804 = vunpack.c.l.b16 %v12444
    %v12805 = vunpack.c.h.b16 %v12444
    %v12806 = vunpack.c.l.b16 %v12445
    %v12807 = vunpack.c.h.b16 %v12445
    %v12808 = vunpack.c.l.b16 %v12446
    %v12809 = vunpack.c.h.b16 %v12446
    %v12810 = vunpack.c.l.b16 %v12447
    %v12811 = vunpack.c.h.b16 %v12447
    %v12812 = vunpack.c.l.b16 %v12448
    %v12813 = vunpack.c.h.b16 %v12448
    %v12814 = vunpack.c.l.b16 %v12449
    %v12815 = vunpack.c.h.b16 %v12449
    %v12816 = vunpack.c.l.b16 %v12450
    %v12817 = vunpack.c.h.b16 %v12450
    %v12818 = vunpack.c.l.b16 %v12451
    %v12819 = vunpack.c.h.b16 %v12451
    %v12820 = vunpack.c.l.b16 %v12452
    %v12821 = vunpack.c.h.b16 %v12452
    %v12822 = vunpack.c.l.b16 %v12453
    %v12823 = vunpack.c.h.b16 %v12453
    %v12824 = vunpack.c.l.b16 %v12454
    %v12825 = vunpack.c.h.b16 %v12454
    %v12826 = vunpack.c.l.b16 %v12455
    %v12827 = vunpack.c.h.b16 %v12455
    %v12828 = vunpack.c.l.b16 %v12456
    %v12829 = vunpack.c.h.b16 %v12456
    %v12830 = vunpack.c.l.b16 %v12457
    %v12831 = vunpack.c.h.b16 %v12457
    %v12832 = vunpack.c.l.b16 %v12458
    %v12833 = vunpack.c.h.b16 %v12458
    %v12834 = vunpack.c.l.b16 %v12459
    %v12835 = vunpack.c.h.b16 %v12459
    %v12836 = vunpack.c.l.b16 %v12460
    %v12837 = vunpack.c.h.b16 %v12460
    %v12838 = vunpack.c.l.b16 %v12461
    %v12839 = vunpack.c.h.b16 %v12461
    %v12840 = vunpack.c.l.b16 %v12462
    %v12841 = vunpack.c.h.b16 %v12462
    %v12842 = vunpack.c.l.b16 %v12463
    %v12843 = vunpack.c.h.b16 %v12463
    %v12844 = vunpack.c.l.b16 %v12464
    %v12845 = vunpack.c.h.b16 %v12464
    %v12846 = vunpack.c.l.b16 %v12465
    %v12847 = vunpack.c.h.b16 %v12465
    %v12848 = vunpack.c.l.b16 %v12466
    %v12849 = vunpack.c.h.b16 %v12466
    %v12850 = vunpack.c.l.b16 %v12467
    %v12851 = vunpack.c.h.b16 %v12467
    %v12852 = vunpack.c.l.b16 %v12468
    %v12853 = vunpack.c.h.b16 %v12468
    %v12854 = vunpack.c.l.b16 %v12469
    %v12855 = vunpack.c.h.b16 %v12469
    %v12856 = vunpack.c.l.b16 %v12470
    %v12857 = vunpack.c.h.b16 %v12470
    %v12858 = vunpack.c.l.b16 %v12471
    %v12859 = vunpack.c.h.b16 %v12471
    %v12860 = vunpack.c.l.b16 %v12472
    %v12861 = vunpack.c.h.b16 %v12472
    %v12862 = vunpack.c.l.b16 %v12473
    %v12863 = vunpack.c.h.b16 %v12473
    %v12864 = vunpack.c.l.b16 %v12474
    %v12865 = vunpack.c.h.b16 %v12474
    %v12866 = vunpack.c.l.b16 %v12475
    %v12867 = vunpack.c.h.b16 %v12475
    %v12868 = vunpack.c.l.b16 %v12476
    %v12869 = vunpack.c.h.b16 %v12476
    %v12870 = vunpack.c.l.b16 %v12477
    %v12871 = vunpack.c.h.b16 %v12477
    %v12872 = vunpack.c.l.b16 %v12478
    %v12873 = vunpack.c.h.b16 %v12478
    %v12874 = vunpack.c.l.b16 %v12479
    %v12875 = vunpack.c.h.b16 %v12479
    %v12876 = vunpack.c.l.b16 %v12480
    %v12877 = vunpack.c.h.b16 %v12480
    %v12878 = vunpack.c.l.b16 %v12481
    %v12879 = vunpack.c.h.b16 %v12481
    %v12880 = vunpack.c.l.b16 %v12482
    %v12881 = vunpack.c.h.b16 %v12482
    %v12882 = vunpack.c.l.b16 %v12483
    %v12883 = vunpack.c.h.b16 %v12483
    %v12884 = vunpack.c.l.b16 %v12484
    %v12885 = vunpack.c.h.b16 %v12484
    %v12886 = vunpack.c.l.b16 %v12485
    %v12887 = vunpack.c.h.b16 %v12485
    %v12888 = vunpack.c.l.b16 %v12486
    %v12889 = vunpack.c.h.b16 %v12486
    %v12890 = vunpack.c.l.b16 %v12487
    %v12891 = vunpack.c.h.b16 %v12487
    %v12892 = vunpack.c.l.b16 %v12488
    %v12893 = vunpack.c.h.b16 %v12488
    %v12894 = vunpack.c.l.b16 %v12489
    %v12895 = vunpack.c.h.b16 %v12489
    %v12896 = vunpack.c.l.b16 %v12490
    %v12897 = vunpack.c.h.b16 %v12490
    %v12898 = vpack.c.b16 %v12646, %v12642
    %v12899 = vpack.c.b16 %v12647, %v12643
    %v12900 = vpack.c.b16 %v12648, %v12644
    %v12901 = vpack.c.b16 %v12649, %v12645
    %v12902 = vpack.c.b16 %v12654, %v12650
    %v12903 = vpack.c.b16 %v12655, %v12651
    %v12904 = vpack.c.b16 %v12656, %v12652
    %v12905 = vpack.c.b16 %v12657, %v12653
    %v12906 = vpack.c.b16 %v12662, %v12658
    %v12907 = vpack.c.b16 %v12663, %v12659
    %v12908 = vpack.c.b16 %v12664, %v12660
    %v12909 = vpack.c.b16 %v12665, %v12661
    %v12910 = vpack.c.b16 %v12670, %v12666
    %v12911 = vpack.c.b16 %v12671, %v12667
    %v12912 = vpack.c.b16 %v12672, %v12668
    %v12913 = vpack.c.b16 %v12673, %v12669
    %v12914 = vpack.c.b16 %v12678, %v12674
    %v12915 = vpack.c.b16 %v12679, %v12675
    %v12916 = vpack.c.b16 %v12680, %v12676
    %v12917 = vpack.c.b16 %v12681, %v12677
    %v12918 = vpack.c.b16 %v12686, %v12682
    %v12919 = vpack.c.b16 %v12687, %v12683
    %v12920 = vpack.c.b16 %v12688, %v12684
    %v12921 = vpack.c.b16 %v12689, %v12685
    %v12922 = vpack.c.b16 %v12694, %v12690
    %v12923 = vpack.c.b16 %v12695, %v12691
    %v12924 = vpack.c.b16 %v12696, %v12692
    %v12925 = vpack.c.b16 %v12697, %v12693
    %v12926 = vpack.c.b16 %v12702, %v12698
    %v12927 = vpack.c.b16 %v12703, %v12699
    %v12928 = vpack.c.b16 %v12704, %v12700
    %v12929 = vpack.c.b16 %v12705, %v12701
    %v12930 = vpack.c.b16 %v12710, %v12706
    %v12931 = vpack.c.b16 %v12711, %v12707
    %v12932 = vpack.c.b16 %v12712, %v12708
    %v12933 = vpack.c.b16 %v12713, %v12709
    %v12934 = vpack.c.b16 %v12718, %v12714
    %v12935 = vpack.c.b16 %v12719, %v12715
    %v12936 = vpack.c.b16 %v12720, %v12716
    %v12937 = vpack.c.b16 %v12721, %v12717
    %v12938 = vpack.c.b16 %v12726, %v12722
    %v12939 = vpack.c.b16 %v12727, %v12723
    %v12940 = vpack.c.b16 %v12728, %v12724
    %v12941 = vpack.c.b16 %v12729, %v12725
    %v12942 = vpack.c.b16 %v12734, %v12730
    %v12943 = vpack.c.b16 %v12735, %v12731
    %v12944 = vpack.c.b16 %v12736, %v12732
    %v12945 = vpack.c.b16 %v12737, %v12733
    %v12946 = vpack.c.b16 %v12742, %v12738
    %v12947 = vpack.c.b16 %v12743, %v12739
    %v12948 = vpack.c.b16 %v12744, %v12740
    %v12949 = vpack.c.b16 %v12745, %v12741
    %v12950 = vpack.c.b16 %v12750, %v12746
    %v12951 = vpack.c.b16 %v12751, %v12747
    %v12952 = vpack.c.b16 %v12752, %v12748
    %v12953 = vpack.c.b16 %v12753, %v12749
    %v12954 = vpack.c.b16 %v12758, %v12754
    %v12955 = vpack.c.b16 %v12759, %v12755
    %v12956 = vpack.c.b16 %v12760, %v12756
    %v12957 = vpack.c.b16 %v12761, %v12757
    %v12958 = vpack.c.b16 %v12766, %v12762
    %v12959 = vpack.c.b16 %v12767, %v12763
    %v12960 = vpack.c.b16 %v12768, %v12764
    %v12961 = vpack.c.b16 %v12769, %v12765
    %v12962 = vpack.c.b16 %v12774, %v12770
    %v12963 = vpack.c.b16 %v12775, %v12771
    %v12964 = vpack.c.b16 %v12776, %v12772
    %v12965 = vpack.c.b16 %v12777, %v12773
    %v12966 = vpack.c.b16 %v12782, %v12778
    %v12967 = vpack.c.b16 %v12783, %v12779
    %v12968 = vpack.c.b16 %v12784, %v12780
    %v12969 = vpack.c.b16 %v12785, %v12781
    %v12970 = vpack.c.b16 %v12790, %v12786
    %v12971 = vpack.c.b16 %v12791, %v12787
    %v12972 = vpack.c.b16 %v12792, %v12788
    %v12973 = vpack.c.b16 %v12793, %v12789
    %v12974 = vpack.c.b16 %v12798, %v12794
    %v12975 = vpack.c.b16 %v12799, %v12795
    %v12976 = vpack.c.b16 %v12800, %v12796
    %v12977 = vpack.c.b16 %v12801, %v12797
    %v12978 = vpack.c.b16 %v12806, %v12802
    %v12979 = vpack.c.b16 %v12807, %v12803
    %v12980 = vpack.c.b16 %v12808, %v12804
    %v12981 = vpack.c.b16 %v12809, %v12805
    %v12982 = vpack.c.b16 %v12814, %v12810
    %v12983 = vpack.c.b16 %v12815, %v12811
    %v12984 = vpack.c.b16 %v12816, %v12812
    %v12985 = vpack.c.b16 %v12817, %v12813
    %v12986 = vpack.c.b16 %v12822, %v12818
    %v12987 = vpack.c.b16 %v12823, %v12819
    %v12988 = vpack.c.b16 %v12824, %v12820
    %v12989 = vpack.c.b16 %v12825, %v12821
    %v12990 = vpack.c.b16 %v12830, %v12826
    %v12991 = vpack.c.b16 %v12831, %v12827
    %v12992 = vpack.c.b16 %v12832, %v12828
    %v12993 = vpack.c.b16 %v12833, %v12829
    %v12994 = vpack.c.b16 %v12838, %v12834
    %v12995 = vpack.c.b16 %v12839, %v12835
    %v12996 = vpack.c.b16 %v12840, %v12836
    %v12997 = vpack.c.b16 %v12841, %v12837
    %v12998 = vpack.c.b16 %v12846, %v12842
    %v12999 = vpack.c.b16 %v12847, %v12843
    %v13000 = vpack.c.b16 %v12848, %v12844
    %v13001 = vpack.c.b16 %v12849, %v12845
    %v13002 = vpack.c.b16 %v12854, %v12850
    %v13003 = vpack.c.b16 %v12855, %v12851
    %v13004 = vpack.c.b16 %v12856, %v12852
    %v13005 = vpack.c.b16 %v12857, %v12853
    %v13006 = vpack.c.b16 %v12862, %v12858
    %v13007 = vpack.c.b16 %v12863, %v12859
    %v13008 = vpack.c.b16 %v12864, %v12860
    %v13009 = vpack.c.b16 %v12865, %v12861
    %v13010 = vpack.c.b16 %v12870, %v12866
    %v13011 = vpack.c.b16 %v12871, %v12867
    %v13012 = vpack.c.b16 %v12872, %v12868
    %v13013 = vpack.c.b16 %v12873, %v12869
    %v13014 = vpack.c.b16 %v12878, %v12874
    %v13015 = vpack.c.b16 %v12879, %v12875
    %v13016 = vpack.c.b16 %v12880, %v12876
    %v13017 = vpack.c.b16 %v12881, %v12877
    %v13018 = vpack.c.b16 %v12886, %v12882
    %v13019 = vpack.c.b16 %v12887, %v12883
    %v13020 = vpack.c.b16 %v12888, %v12884
    %v13021 = vpack.c.b16 %v12889, %v12885
    %v13022 = vpack.c.b16 %v12894, %v12890
    %v13023 = vpack.c.b16 %v12895, %v12891
    %v13024 = vpack.c.b16 %v12896, %v12892
    %v13025 = vpack.c.b16 %v12897, %v12893
    %13154 = vmatprep.subr.bf16.mxu0 %v12899
    %13155 = vmatpush1.bf16.msra.mxu0 %v12898
    %13156 = vmatprep.subr.bf16.mxu0 %v12903
    %13157 = vmatpush1.bf16.msra.mxu0 %v12902
    %13158 = vmatprep.subr.bf16.mxu0 %v12907
    %13159 = vmatpush1.bf16.msra.mxu0 %v12906
    %13160 = vmatprep.subr.bf16.mxu0 %v12911
    %13161 = vmatpush1.bf16.msra.mxu0 %v12910
    %13162 = vmatprep.subr.bf16.mxu0 %v12915
    %13163 = vmatpush1.bf16.msra.mxu0 %v12914
    %13164 = vmatprep.subr.bf16.mxu0 %v12919
    %13165 = vmatpush1.bf16.msra.mxu0 %v12918
    %13166 = vmatprep.subr.bf16.mxu0 %v12923
    %13167 = vmatpush1.bf16.msra.mxu0 %v12922
    %13168 = vmatprep.subr.bf16.mxu0 %v12927
    %13169 = vmatpush1.bf16.msra.mxu0 %v12926
    %13170 = vmatprep.subr.bf16.mxu0 %v12931
    %13171 = vmatpush1.bf16.msra.mxu0 %v12930
    %13172 = vmatprep.subr.bf16.mxu0 %v12935
    %13173 = vmatpush1.bf16.msra.mxu0 %v12934
    %13174 = vmatprep.subr.bf16.mxu0 %v12939
    %13175 = vmatpush1.bf16.msra.mxu0 %v12938
    %13176 = vmatprep.subr.bf16.mxu0 %v12943
    %13177 = vmatpush1.bf16.msra.mxu0 %v12942
    %13178 = vmatprep.subr.bf16.mxu0 %v12947
    %13179 = vmatpush1.bf16.msra.mxu0 %v12946
    %13180 = vmatprep.subr.bf16.mxu0 %v12951
    %13181 = vmatpush1.bf16.msra.mxu0 %v12950
    %13182 = vmatprep.subr.bf16.mxu0 %v12955
    %13183 = vmatpush1.bf16.msra.mxu0 %v12954
    %13184 = vmatprep.subr.bf16.mxu0 %v12959
    %13185 = vmatpush1.bf16.msra.mxu0 %v12958
    %13186 = vmatprep.mubr.bf16.mxu0 %v12355
    %13187 = vmatmul.mubr.bf16.gmra.mrb[0].mxu0 %v12354
    %v13188 = vpop.f32.mrb[0].mxu0
    %v13189 = vadd.f32 %v12497, %v13188
    %v13190 = vpop.f32.mrb[0].mxu0
    %v13191 = vadd.f32 %v12501, %v13190
    %v13192 = vpop.f32.mrb[0].mxu0
    %v13193 = vadd.f32 %v12497, %v13192
    %v13194 = vpop.f32.mrb[0].mxu0
    %v13195 = vadd.f32 %v12501, %v13194
    %13196 = vmatprep.mubr.bf16.mxu0 %v12359
    %13197 = vmatmul.mubr.bf16.gmra.mrb[0].mxu0 %v12358
    %v13198 = vpop.f32.mrb[0].mxu0
    %v13199 = vadd.f32 %v12497, %v13198
    %v13200 = vpop.f32.mrb[0].mxu0
    %v13201 = vadd.f32 %v12501, %v13200
    %v13202 = vpop.f32.mrb[0].mxu0
    %v13203 = vpop.f32.mrb[0].mxu0
    %13204 = vdwg.mxu0
    %13205 = vmatprep.subr.bf16.mxu0 %v12963
    %13206 = vmatpush1.bf16.msra.mxu0 %v12962
    %13207 = vmatprep.subr.bf16.mxu0 %v12967
    %13208 = vmatpush1.bf16.msra.mxu0 %v12966
    %13209 = vmatprep.subr.bf16.mxu0 %v12971
    %13210 = vmatpush1.bf16.msra.mxu0 %v12970
    %13211 = vmatprep.subr.bf16.mxu0 %v12975
    %13212 = vmatpush1.bf16.msra.mxu0 %v12974
    %13213 = vmatprep.subr.bf16.mxu0 %v12979
    %13214 = vmatpush1.bf16.msra.mxu0 %v12978
    %13215 = vmatprep.subr.bf16.mxu0 %v12983
    %13216 = vmatpush1.bf16.msra.mxu0 %v12982
    %13217 = vmatprep.subr.bf16.mxu0 %v12987
    %13218 = vmatpush1.bf16.msra.mxu0 %v12986
    %13219 = vmatprep.subr.bf16.mxu0 %v12991
    %13220 = vmatpush1.bf16.msra.mxu0 %v12990
    %13221 = vmatprep.subr.bf16.mxu0 %v12995
    %13222 = vmatpush1.bf16.msra.mxu0 %v12994
    %13223 = vmatprep.subr.bf16.mxu0 %v12999
    %13224 = vmatpush1.bf16.msra.mxu0 %v12998
    %13225 = vmatprep.subr.bf16.mxu0 %v13003
    %13226 = vmatpush1.bf16.msra.mxu0 %v13002
    %13227 = vmatprep.subr.bf16.mxu0 %v13007
    %13228 = vmatpush1.bf16.msra.mxu0 %v13006
    %13229 = vmatprep.subr.bf16.mxu0 %v13011
    %13230 = vmatpush1.bf16.msra.mxu0 %v13010
    %13231 = vmatprep.subr.bf16.mxu0 %v13015
    %13232 = vmatpush1.bf16.msra.mxu0 %v13014
    %13233 = vmatprep.subr.bf16.mxu0 %v13019
    %13234 = vmatpush1.bf16.msra.mxu0 %v13018
    %13235 = vmatprep.subr.bf16.mxu0 %v13023
    %13236 = vmatpush1.bf16.msra.mxu0 %v13022
    %13237 = vmatprep.mubr.bf16.mxu0 %v12357
    %13238 = vmatmul.mubr.bf16.gmra.mrb[0].mxu0 %v12356
    %v13239 = vpop.f32.mrb[0].mxu0
    %v13240 = vadd.f32 %v13189, %v13239
    %v13241 = vpop.f32.mrb[0].mxu0
    %v13242 = vadd.f32 %v13191, %v13241
    %v13243 = vpop.f32.mrb[0].mxu0
    %v13244 = vadd.f32 %v13193, %v13243
    %v13245 = vpop.f32.mrb[0].mxu0
    %v13246 = vadd.f32 %v13195, %v13245
    %13247 = vmatprep.mubr.bf16.mxu0 %v12361
    %13248 = vmatmul.mubr.bf16.gmra.mrb[0].mxu0 %v12360
    %v13249 = vpop.f32.mrb[0].mxu0
    %v13250 = vadd.f32 %v13199, %v13249
    %v13251 = vpop.f32.mrb[0].mxu0
    %v13252 = vadd.f32 %v13201, %v13251
    %v13253 = vpop.f32.mrb[0].mxu0
    %v13254 = vpop.f32.mrb[0].mxu0
    %13255 = vdwg.mxu0
    %13256 = vmatprep.subr.bf16.mxu0 %v12901
    %13257 = vmatpush1.bf16.msra.mxu0 %v12900
    %13258 = vmatprep.subr.bf16.mxu0 %v12905
    %13259 = vmatpush1.bf16.msra.mxu0 %v12904
    %13260 = vmatprep.subr.bf16.mxu0 %v12909
    %13261 = vmatpush1.bf16.msra.mxu0 %v12908
    %13262 = vmatprep.subr.bf16.mxu0 %v12913
    %13263 = vmatpush1.bf16.msra.mxu0 %v12912
    %13264 = vmatprep.subr.bf16.mxu0 %v12917
    %13265 = vmatpush1.bf16.msra.mxu0 %v12916
    %13266 = vmatprep.subr.bf16.mxu0 %v12921
    %13267 = vmatpush1.bf16.msra.mxu0 %v12920
    %13268 = vmatprep.subr.bf16.mxu0 %v12925
    %13269 = vmatpush1.bf16.msra.mxu0 %v12924
    %13270 = vmatprep.subr.bf16.mxu0 %v12929
    %13271 = vmatpush1.bf16.msra.mxu0 %v12928
    %13272 = vmatprep.subr.bf16.mxu0 %v12933
    %13273 = vmatpush1.bf16.msra.mxu0 %v12932
    %13274 = vmatprep.subr.bf16.mxu0 %v12937
    %13275 = vmatpush1.bf16.msra.mxu0 %v12936
    %13276 = vmatprep.subr.bf16.mxu0 %v12941
    %13277 = vmatpush1.bf16.msra.mxu0 %v12940
    %13278 = vmatprep.subr.bf16.mxu0 %v12945
    %13279 = vmatpush1.bf16.msra.mxu0 %v12944
    %13280 = vmatprep.subr.bf16.mxu0 %v12949
    %13281 = vmatpush1.bf16.msra.mxu0 %v12948
    %13282 = vmatprep.subr.bf16.mxu0 %v12953
    %13283 = vmatpush1.bf16.msra.mxu0 %v12952
    %13284 = vmatprep.subr.bf16.mxu0 %v12957
    %13285 = vmatpush1.bf16.msra.mxu0 %v12956
    %13286 = vmatprep.subr.bf16.mxu0 %v12961
    %13287 = vmatpush1.bf16.msra.mxu0 %v12960
    %13288 = vmatprep.mubr.bf16.mxu0 %v12355
    %13289 = vmatmul.mubr.bf16.gmra.mrb[0].mxu0 %v12354
    %v13290 = vpop.f32.mrb[0].mxu0
    %v13291 = vadd.f32 %v12505, %v13290
    %v13292 = vpop.f32.mrb[0].mxu0
    %v13293 = vadd.f32 %v12509, %v13292
    %v13294 = vpop.f32.mrb[0].mxu0
    %v13295 = vadd.f32 %v12505, %v13294
    %v13296 = vpop.f32.mrb[0].mxu0
    %v13297 = vadd.f32 %v12509, %v13296
    %13298 = vmatprep.mubr.bf16.mxu0 %v12359
    %13299 = vmatmul.mubr.bf16.gmra.mrb[0].mxu0 %v12358
    %v13300 = vpop.f32.mrb[0].mxu0
    %v13301 = vadd.f32 %v12505, %v13300
    %v13302 = vpop.f32.mrb[0].mxu0
    %v13303 = vadd.f32 %v12509, %v13302
    %v13304 = vpop.f32.mrb[0].mxu0
    %v13305 = vpop.f32.mrb[0].mxu0
    %13306 = vdwg.mxu0
    %13307 = vmatprep.subr.bf16.mxu0 %v12965
    %13308 = vmatpush1.bf16.msra.mxu0 %v12964
    %13309 = vmatprep.subr.bf16.mxu0 %v12969
    %13310 = vmatpush1.bf16.msra.mxu0 %v12968
    %13311 = vmatprep.subr.bf16.mxu0 %v12973
    %13312 = vmatpush1.bf16.msra.mxu0 %v12972
    %13313 = vmatprep.subr.bf16.mxu0 %v12977
    %13314 = vmatpush1.bf16.msra.mxu0 %v12976
    %13315 = vmatprep.subr.bf16.mxu0 %v12981
    %13316 = vmatpush1.bf16.msra.mxu0 %v12980
    %13317 = vmatprep.subr.bf16.mxu0 %v12985
    %13318 = vmatpush1.bf16.msra.mxu0 %v12984
    %13319 = vmatprep.subr.bf16.mxu0 %v12989
    %13320 = vmatpush1.bf16.msra.mxu0 %v12988
    %13321 = vmatprep.subr.bf16.mxu0 %v12993
    %13322 = vmatpush1.bf16.msra.mxu0 %v12992
    %13323 = vmatprep.subr.bf16.mxu0 %v12997
    %13324 = vmatpush1.bf16.msra.mxu0 %v12996
    %13325 = vmatprep.subr.bf16.mxu0 %v13001
    %13326 = vmatpush1.bf16.msra.mxu0 %v13000
    %13327 = vmatprep.subr.bf16.mxu0 %v13005
    %13328 = vmatpush1.bf16.msra.mxu0 %v13004
    %13329 = vmatprep.subr.bf16.mxu0 %v13009
    %13330 = vmatpush1.bf16.msra.mxu0 %v13008
    %13331 = vmatprep.subr.bf16.mxu0 %v13013
    %13332 = vmatpush1.bf16.msra.mxu0 %v13012
    %13333 = vmatprep.subr.bf16.mxu0 %v13017
    %13334 = vmatpush1.bf16.msra.mxu0 %v13016
    %13335 = vmatprep.subr.bf16.mxu0 %v13021
    %13336 = vmatpush1.bf16.msra.mxu0 %v13020
    %13337 = vmatprep.subr.bf16.mxu0 %v13025
    %13338 = vmatpush1.bf16.msra.mxu0 %v13024
    %13339 = vmatprep.mubr.bf16.mxu0 %v12357
    %13340 = vmatmul.mubr.bf16.gmra.mrb[0].mxu0 %v12356
    %v13341 = vpop.f32.mrb[0].mxu0
    %v13342 = vadd.f32 %v13291, %v13341
    %v13343 = vpop.f32.mrb[0].mxu0
    %v13344 = vadd.f32 %v13293, %v13343
    %v13345 = vpop.f32.mrb[0].mxu0
    %v13346 = vadd.f32 %v13295, %v13345
    %v13347 = vpop.f32.mrb[0].mxu0
    %v13348 = vadd.f32 %v13297, %v13347
    %13349 = vmatprep.mubr.bf16.mxu0 %v12361
    %13350 = vmatmul.mubr.bf16.gmra.mrb[0].mxu0 %v12360
    %v13351 = vpop.f32.mrb[0].mxu0
    %v13352 = vadd.f32 %v13301, %v13351
    %v13353 = vpop.f32.mrb[0].mxu0
    %v13354 = vadd.f32 %v13303, %v13353
    %v13355 = vpop.f32.mrb[0].mxu0
    %v13356 = vpop.f32.mrb[0].mxu0
    %13357 = vdwg.mxu0
    %vm13358 = vcmp.ge.f32.partialorder %v13240, 0.0
    %vm13359 = vcmp.ge.f32.partialorder %v13242, 0.0
    %vm13360 = vcmp.ge.f32.partialorder %v13342, 0.0
    %vm13361 = vcmp.ge.f32.partialorder %v13344, 0.0
    %vm13362 = vcmp.ge.f32.partialorder %v13244, 0.0
    %vm13363 = vcmp.ge.f32.partialorder %v13246, 0.0
    %vm13364 = vcmp.ge.f32.partialorder %v13346, 0.0
    %vm13365 = vcmp.ge.f32.partialorder %v13348, 0.0
    %vm13366 = vcmp.ge.f32.partialorder %v13250, 0.0
    %vm13367 = vcmp.ge.f32.partialorder %v13252, 0.0
    %vm13368 = vcmp.ge.f32.partialorder %v13352, 0.0
    %vm13369 = vcmp.ge.f32.partialorder %v13354, 0.0
    %v13370 = vmul.f32 %v13240, 0.2
    %v13371 = vmul.f32 %v13242, 0.2
    %v13372 = vmul.f32 %v13342, 0.2
    %v13373 = vmul.f32 %v13344, 0.2
    %v13374 = vmul.f32 %v13244, 0.2
    %v13375 = vmul.f32 %v13246, 0.2
    %v13376 = vmul.f32 %v13346, 0.2
    %v13377 = vmul.f32 %v13348, 0.2
    %v13378 = vmul.f32 %v13250, 0.2
    %v13379 = vmul.f32 %v13252, 0.2
    %v13380 = vmul.f32 %v13352, 0.2
    %v13381 = vmul.f32 %v13354, 0.2
    %v13382 = vsel %vm13358, %v13240, %v13370
    %v13383 = vsel %vm13359, %v13242, %v13371
    %v13384 = vsel %vm13360, %v13342, %v13372
    %v13385 = vsel %vm13361, %v13344, %v13373
    %v13386 = vsel %vm13362, %v13244, %v13374
    %v13387 = vsel %vm13363, %v13246, %v13375
    %v13388 = vsel %vm13364, %v13346, %v13376
    %v13389 = vsel %vm13365, %v13348, %v13377
    %v13390 = vsel %vm13366, %v13250, %v13378
    %v13391 = vsel %vm13367, %v13252, %v13379
    %v13392 = vsel %vm13368, %v13352, %v13380
    %v13393 = vsel %vm13369, %v13354, %v13381
    %v13394 = vmul.f32 %v13382, 1.4142135
    %v13395 = vmul.f32 %v13383, 1.4142135
    %v13396 = vmul.f32 %v13384, 1.4142135
    %v13397 = vmul.f32 %v13385, 1.4142135
    %v13398 = vmul.f32 %v13386, 1.4142135
    %v13399 = vmul.f32 %v13387, 1.4142135
    %v13400 = vmul.f32 %v13388, 1.4142135
    %v13401 = vmul.f32 %v13389, 1.4142135
    %v13402 = vmul.f32 %v13390, 1.4142135
    %v13403 = vmul.f32 %v13391, 1.4142135
    %v13404 = vmul.f32 %v13392, 1.4142135
    %v13405 = vmul.f32 %v13393, 1.4142135
    %v13418 = vcombine.low %v13394, %v13395
    %v13419 = vcombine.high %v13394, %v13395
    %v13420 = vcombine.low %v13396, %v13397
    %v13421 = vcombine.high %v13396, %v13397
    %v13423 = vunpack.c.l.s4 1983009808
    %v13424 = vunpack.c.0.s8 %v13423
    %v13425 = vlaneseq
    %v13426 = vshrl.u32 %v13425, 7
    %v13427 = vsub.s32 %v13424, %v13426
    %v13428 = vrot.slane %v13418, %v13427
    %v13430 = vunpack.c.l.s4 1983009808
    %v13431 = vunpack.c.0.s8 %v13430
    %v13432 = vlaneseq
    %v13433 = vshrl.u32 %v13432, 7
    %v13434 = vsub.s32 %v13431, %v13433
    %v13435 = vrot.slane %v13419, %v13434
    %v13437 = vunpack.c.l.s4 1983009808
    %v13438 = vunpack.c.0.s8 %v13437
    %v13439 = vlaneseq
    %v13440 = vshrl.u32 %v13439, 7
    %v13441 = vsub.s32 %v13438, %v13440
    %v13442 = vrot.slane %v13420, %v13441
    %v13444 = vunpack.c.l.s4 1983009808
    %v13445 = vunpack.c.0.s8 %v13444
    %v13446 = vlaneseq
    %v13447 = vshrl.u32 %v13446, 7
    %v13448 = vsub.s32 %v13445, %v13447
    %v13449 = vrot.slane %v13421, %v13448
    %v13450 = vcombine.low %v13428, %v13442
    %v13451 = vcombine.high %v13428, %v13442
    %v13452 = vcombine.low %v13435, %v13449
    %v13453 = vcombine.high %v13435, %v13449
    %v13454 = vcombine.low %v13398, %v13399
    %v13455 = vcombine.high %v13398, %v13399
    %v13456 = vcombine.low %v13400, %v13401
    %v13457 = vcombine.high %v13400, %v13401
    %v13459 = vunpack.c.l.s4 1983009808
    %v13460 = vunpack.c.0.s8 %v13459
    %v13461 = vlaneseq
    %v13462 = vshrl.u32 %v13461, 7
    %v13463 = vsub.s32 %v13460, %v13462
    %v13464 = vrot.slane %v13454, %v13463
    %v13466 = vunpack.c.l.s4 1983009808
    %v13467 = vunpack.c.0.s8 %v13466
    %v13468 = vlaneseq
    %v13469 = vshrl.u32 %v13468, 7
    %v13470 = vsub.s32 %v13467, %v13469
    %v13471 = vrot.slane %v13455, %v13470
    %v13473 = vunpack.c.l.s4 1983009808
    %v13474 = vunpack.c.0.s8 %v13473
    %v13475 = vlaneseq
    %v13476 = vshrl.u32 %v13475, 7
    %v13477 = vsub.s32 %v13474, %v13476
    %v13478 = vrot.slane %v13456, %v13477
    %v13480 = vunpack.c.l.s4 1983009808
    %v13481 = vunpack.c.0.s8 %v13480
    %v13482 = vlaneseq
    %v13483 = vshrl.u32 %v13482, 7
    %v13484 = vsub.s32 %v13481, %v13483
    %v13485 = vrot.slane %v13457, %v13484
    %v13486 = vcombine.low %v13464, %v13478
    %v13487 = vcombine.high %v13464, %v13478
    %v13488 = vcombine.low %v13471, %v13485
    %v13489 = vcombine.high %v13471, %v13485
    %v13490 = vcombine.low %v13402, %v13403
    %v13491 = vcombine.low %v13404, %v13405
    %v13493 = vunpack.c.l.s4 1983009808
    %v13494 = vunpack.c.0.s8 %v13493
    %v13495 = vlaneseq
    %v13496 = vshrl.u32 %v13495, 7
    %v13497 = vsub.s32 %v13494, %v13496
    %v13498 = vrot.slane %v13490, %v13497
    %v13500 = vunpack.c.l.s4 1983009808
    %v13501 = vunpack.c.0.s8 %v13500
    %v13502 = vlaneseq
    %v13503 = vshrl.u32 %v13502, 7
    %v13504 = vsub.s32 %v13501, %v13503
    %v13505 = vrot.slane %v13491, %v13504
    %v13506 = vcombine.low %v13498, %v13505
    %v13507 = vcombine.high %v13498, %v13505
    %s13518 = scalar_lea.vmem [#allocation3], 64
    %13519 = vst [vmem:[%s13518] sm:$0xff] %v13450
    %13520 = vst [vmem:[%s13518 + $0x8] sm:$0xff] %v13451
    %13521 = vst [vmem:[%s13518 + $0x10] sm:$0xff] %v13452
    %13522 = vst [vmem:[%s13518 + $0x18] sm:$0xff] %v13453
    %13523 = vst [vmem:[%s13518 + $0x20] sm:$0xff] %v13486
    %13524 = vst [vmem:[%s13518 + $0x28] sm:$0xff] %v13487
    %13525 = vst [vmem:[%s13518 + $0x30] sm:$0xff] %v13488
    %13526 = vst [vmem:[%s13518 + $0x38] sm:$0xff] %v13489
    %13527 = vst [vmem:[%s13518 + $0x40] sm:$0xff] %v13506
    %13528 = vst [vmem:[%s13518 + $0x48] sm:$0xff] %v13507
    %v13529 = vld [vmem:[#allocation3] sm:$0xff]
    %v13530 = vld [vmem:[#allocation3 + $0x8] sm:$0xff]
    %v13531 = vld [vmem:[#allocation3 + $0x10] sm:$0xff]
    %v13532 = vld [vmem:[#allocation3 + $0x18] sm:$0xff]
    %v13533 = vld [vmem:[#allocation3 + $0x20] sm:$0xff]
    %v13534 = vld [vmem:[#allocation3 + $0x28] sm:$0xff]
    %v13535 = vld [vmem:[#allocation3 + $0x30] sm:$0xff]
    %v13536 = vld [vmem:[#allocation3 + $0x38] sm:$0xff]
    %v13537 = vld [vmem:[#allocation3 + $0x40] sm:$0xff]
    %v13538 = vld [vmem:[#allocation3 + $0x48] sm:$0xff]
    %v13539 = vld [vmem:[#allocation3 + $0x50] sm:$0xff]
    %v13540 = vld [vmem:[#allocation3 + $0x58] sm:$0xff]
    %v13541 = vld [vmem:[#allocation3 + $0x60] sm:$0xff]
    %v13542 = vld [vmem:[#allocation3 + $0x68] sm:$0xff]
    %v13543 = vld [vmem:[#allocation3 + $0x70] sm:$0xff]
    %v13544 = vld [vmem:[#allocation3 + $0x78] sm:$0xff]
    %v13545 = vld [vmem:[#allocation3 + $0x80] sm:$0xff]
    %v13546 = vld [vmem:[#allocation3 + $0x88] sm:$0xff]
    %v13547 = vcombine.low %v13529, %v13530
    %v13548 = vcombine.high %v13529, %v13530
    %v13550 = vunpack.c.l.s4 1934713408
    %v13551 = vunpack.c.0.s8 %v13550
    %v13552 = vlaneseq
    %v13553 = vshrl.u32 %v13552, 7
    %v13554 = vsub.s32 %v13551, %v13553
    %v13555 = vrot.slane %v13547, %v13554
    %v13557 = vunpack.c.l.s4 1934713408
    %v13558 = vunpack.c.0.s8 %v13557
    %v13559 = vlaneseq
    %v13560 = vshrl.u32 %v13559, 7
    %v13561 = vsub.s32 %v13558, %v13560
    %v13562 = vrot.slane %v13548, %v13561
    %v13563 = vcombine.low %v13555, %v13562
    %v13564 = vcombine.high %v13555, %v13562
    %v13565 = vcombine.low %v13531, %v13532
    %v13566 = vcombine.high %v13531, %v13532
    %v13568 = vunpack.c.l.s4 1934713408
    %v13569 = vunpack.c.0.s8 %v13568
    %v13570 = vlaneseq
    %v13571 = vshrl.u32 %v13570, 7
    %v13572 = vsub.s32 %v13569, %v13571
    %v13573 = vrot.slane %v13565, %v13572
    %v13575 = vunpack.c.l.s4 1934713408
    %v13576 = vunpack.c.0.s8 %v13575
    %v13577 = vlaneseq
    %v13578 = vshrl.u32 %v13577, 7
    %v13579 = vsub.s32 %v13576, %v13578
    %v13580 = vrot.slane %v13566, %v13579
    %v13581 = vcombine.low %v13573, %v13580
    %v13582 = vcombine.high %v13573, %v13580
    %v13583 = vcombine.low %v13533, %v13534
    %v13584 = vcombine.high %v13533, %v13534
    %v13586 = vunpack.c.l.s4 1934713408
    %v13587 = vunpack.c.0.s8 %v13586
    %v13588 = vlaneseq
    %v13589 = vshrl.u32 %v13588, 7
    %v13590 = vsub.s32 %v13587, %v13589
    %v13591 = vrot.slane %v13583, %v13590
    %v13593 = vunpack.c.l.s4 1934713408
    %v13594 = vunpack.c.0.s8 %v13593
    %v13595 = vlaneseq
    %v13596 = vshrl.u32 %v13595, 7
    %v13597 = vsub.s32 %v13594, %v13596
    %v13598 = vrot.slane %v13584, %v13597
    %v13599 = vcombine.low %v13591, %v13598
    %v13600 = vcombine.high %v13591, %v13598
    %v13601 = vcombine.low %v13535, %v13536
    %v13602 = vcombine.high %v13535, %v13536
    %v13604 = vunpack.c.l.s4 1934713408
    %v13605 = vunpack.c.0.s8 %v13604
    %v13606 = vlaneseq
    %v13607 = vshrl.u32 %v13606, 7
    %v13608 = vsub.s32 %v13605, %v13607
    %v13609 = vrot.slane %v13601, %v13608
    %v13611 = vunpack.c.l.s4 1934713408
    %v13612 = vunpack.c.0.s8 %v13611
    %v13613 = vlaneseq
    %v13614 = vshrl.u32 %v13613, 7
    %v13615 = vsub.s32 %v13612, %v13614
    %v13616 = vrot.slane %v13602, %v13615
    %v13617 = vcombine.low %v13609, %v13616
    %v13618 = vcombine.high %v13609, %v13616
    %v13619 = vcombine.low %v13537, %v13538
    %v13620 = vcombine.high %v13537, %v13538
    %v13622 = vunpack.c.l.s4 1934713408
    %v13623 = vunpack.c.0.s8 %v13622
    %v13624 = vlaneseq
    %v13625 = vshrl.u32 %v13624, 7
    %v13626 = vsub.s32 %v13623, %v13625
    %v13627 = vrot.slane %v13619, %v13626
    %v13629 = vunpack.c.l.s4 1934713408
    %v13630 = vunpack.c.0.s8 %v13629
    %v13631 = vlaneseq
    %v13632 = vshrl.u32 %v13631, 7
    %v13633 = vsub.s32 %v13630, %v13632
    %v13634 = vrot.slane %v13620, %v13633
    %v13635 = vcombine.low %v13627, %v13634
    %v13636 = vcombine.high %v13627, %v13634
    %v13637 = vcombine.low %v13539, %v13540
    %v13638 = vcombine.high %v13539, %v13540
    %v13640 = vunpack.c.l.s4 1934713408
    %v13641 = vunpack.c.0.s8 %v13640
    %v13642 = vlaneseq
    %v13643 = vshrl.u32 %v13642, 7
    %v13644 = vsub.s32 %v13641, %v13643
    %v13645 = vrot.slane %v13637, %v13644
    %v13647 = vunpack.c.l.s4 1934713408
    %v13648 = vunpack.c.0.s8 %v13647
    %v13649 = vlaneseq
    %v13650 = vshrl.u32 %v13649, 7
    %v13651 = vsub.s32 %v13648, %v13650
    %v13652 = vrot.slane %v13638, %v13651
    %v13653 = vcombine.low %v13645, %v13652
    %v13654 = vcombine.high %v13645, %v13652
    %v13655 = vcombine.low %v13541, %v13542
    %v13656 = vcombine.high %v13541, %v13542
    %v13658 = vunpack.c.l.s4 1934713408
    %v13659 = vunpack.c.0.s8 %v13658
    %v13660 = vlaneseq
    %v13661 = vshrl.u32 %v13660, 7
    %v13662 = vsub.s32 %v13659, %v13661
    %v13663 = vrot.slane %v13655, %v13662
    %v13665 = vunpack.c.l.s4 1934713408
    %v13666 = vunpack.c.0.s8 %v13665
    %v13667 = vlaneseq
    %v13668 = vshrl.u32 %v13667, 7
    %v13669 = vsub.s32 %v13666, %v13668
    %v13670 = vrot.slane %v13656, %v13669
    %v13671 = vcombine.low %v13663, %v13670
    %v13672 = vcombine.high %v13663, %v13670
    %v13673 = vcombine.low %v13543, %v13544
    %v13674 = vcombine.high %v13543, %v13544
    %v13676 = vunpack.c.l.s4 1934713408
    %v13677 = vunpack.c.0.s8 %v13676
    %v13678 = vlaneseq
    %v13679 = vshrl.u32 %v13678, 7
    %v13680 = vsub.s32 %v13677, %v13679
    %v13681 = vrot.slane %v13673, %v13680
    %v13683 = vunpack.c.l.s4 1934713408
    %v13684 = vunpack.c.0.s8 %v13683
    %v13685 = vlaneseq
    %v13686 = vshrl.u32 %v13685, 7
    %v13687 = vsub.s32 %v13684, %v13686
    %v13688 = vrot.slane %v13674, %v13687
    %v13689 = vcombine.low %v13681, %v13688
    %v13690 = vcombine.high %v13681, %v13688
    %v13691 = vcombine.low %v13545, %v13546
    %v13692 = vcombine.high %v13545, %v13546
    %v13694 = vunpack.c.l.s4 1934713408
    %v13695 = vunpack.c.0.s8 %v13694
    %v13696 = vlaneseq
    %v13697 = vshrl.u32 %v13696, 7
    %v13698 = vsub.s32 %v13695, %v13697
    %v13699 = vrot.slane %v13691, %v13698
    %v13701 = vunpack.c.l.s4 1934713408
    %v13702 = vunpack.c.0.s8 %v13701
    %v13703 = vlaneseq
    %v13704 = vshrl.u32 %v13703, 7
    %v13705 = vsub.s32 %v13702, %v13704
    %v13706 = vrot.slane %v13692, %v13705
    %v13707 = vcombine.low %v13699, %v13706
    %v13708 = vcombine.high %v13699, %v13706
    %v13727 = vcombine.low %v13563, %v13581
    %v13728 = vcombine.high %v13563, %v13581
    %v13729 = vcombine.low %v13599, %v13617
    %v13730 = vcombine.high %v13599, %v13617
    %v13732 = vunpack.c.l.s4 1983009808
    %v13733 = vunpack.c.0.s8 %v13732
    %v13734 = vlaneseq
    %v13735 = vshrl.u32 %v13734, 7
    %v13736 = vsub.s32 %v13733, %v13735
    %v13737 = vrot.slane %v13727, %v13736
    %v13739 = vunpack.c.l.s4 1983009808
    %v13740 = vunpack.c.0.s8 %v13739
    %v13741 = vlaneseq
    %v13742 = vshrl.u32 %v13741, 7
    %v13743 = vsub.s32 %v13740, %v13742
    %v13744 = vrot.slane %v13728, %v13743
    %v13746 = vunpack.c.l.s4 1983009808
    %v13747 = vunpack.c.0.s8 %v13746
    %v13748 = vlaneseq
    %v13749 = vshrl.u32 %v13748, 7
    %v13750 = vsub.s32 %v13747, %v13749
    %v13751 = vrot.slane %v13729, %v13750
    %v13753 = vunpack.c.l.s4 1983009808
    %v13754 = vunpack.c.0.s8 %v13753
    %v13755 = vlaneseq
    %v13756 = vshrl.u32 %v13755, 7
    %v13757 = vsub.s32 %v13754, %v13756
    %v13758 = vrot.slane %v13730, %v13757
    %v13759 = vcombine.low %v13737, %v13751
    %v13760 = vcombine.high %v13737, %v13751
    %v13761 = vcombine.low %v13744, %v13758
    %v13762 = vcombine.high %v13744, %v13758
    %v13763 = vcombine.low %v13635, %v13653
    %v13764 = vcombine.high %v13635, %v13653
    %v13765 = vcombine.low %v13671, %v13689
    %v13766 = vcombine.high %v13671, %v13689
    %v13768 = vunpack.c.l.s4 1983009808
    %v13769 = vunpack.c.0.s8 %v13768
    %v13770 = vlaneseq
    %v13771 = vshrl.u32 %v13770, 7
    %v13772 = vsub.s32 %v13769, %v13771
    %v13773 = vrot.slane %v13763, %v13772
    %v13775 = vunpack.c.l.s4 1983009808
    %v13776 = vunpack.c.0.s8 %v13775
    %v13777 = vlaneseq
    %v13778 = vshrl.u32 %v13777, 7
    %v13779 = vsub.s32 %v13776, %v13778
    %v13780 = vrot.slane %v13764, %v13779
    %v13782 = vunpack.c.l.s4 1983009808
    %v13783 = vunpack.c.0.s8 %v13782
    %v13784 = vlaneseq
    %v13785 = vshrl.u32 %v13784, 7
    %v13786 = vsub.s32 %v13783, %v13785
    %v13787 = vrot.slane %v13765, %v13786
    %v13789 = vunpack.c.l.s4 1983009808
    %v13790 = vunpack.c.0.s8 %v13789
    %v13791 = vlaneseq
    %v13792 = vshrl.u32 %v13791, 7
    %v13793 = vsub.s32 %v13790, %v13792
    %v13794 = vrot.slane %v13766, %v13793
    %v13795 = vcombine.low %v13773, %v13787
    %v13796 = vcombine.high %v13773, %v13787
    %v13797 = vcombine.low %v13780, %v13794
    %v13798 = vcombine.high %v13780, %v13794
    %v13799 = vcombine.high %v13707, %v13707
    %v13801 = vunpack.c.l.s4 1983009808
    %v13802 = vunpack.c.0.s8 %v13801
    %v13803 = vlaneseq
    %v13804 = vshrl.u32 %v13803, 7
    %v13805 = vsub.s32 %v13802, %v13804
    %v13806 = vrot.slane %v13707, %v13805
    %v13808 = vunpack.c.l.s4 1983009808
    %v13809 = vunpack.c.0.s8 %v13808
    %v13810 = vlaneseq
    %v13811 = vshrl.u32 %v13810, 7
    %v13812 = vsub.s32 %v13809, %v13811
    %v13813 = vrot.slane %v13799, %v13812
    %v13814 = vcombine.high %v13806, %v13806
    %v13815 = vcombine.high %v13813, %v13813
    %v13816 = vcombine.low %v13564, %v13582
    %v13817 = vcombine.high %v13564, %v13582
    %v13818 = vcombine.low %v13600, %v13618
    %v13819 = vcombine.high %v13600, %v13618
    %v13821 = vunpack.c.l.s4 1983009808
    %v13822 = vunpack.c.0.s8 %v13821
    %v13823 = vlaneseq
    %v13824 = vshrl.u32 %v13823, 7
    %v13825 = vsub.s32 %v13822, %v13824
    %v13826 = vrot.slane %v13816, %v13825
    %v13828 = vunpack.c.l.s4 1983009808
    %v13829 = vunpack.c.0.s8 %v13828
    %v13830 = vlaneseq
    %v13831 = vshrl.u32 %v13830, 7
    %v13832 = vsub.s32 %v13829, %v13831
    %v13833 = vrot.slane %v13817, %v13832
    %v13835 = vunpack.c.l.s4 1983009808
    %v13836 = vunpack.c.0.s8 %v13835
    %v13837 = vlaneseq
    %v13838 = vshrl.u32 %v13837, 7
    %v13839 = vsub.s32 %v13836, %v13838
    %v13840 = vrot.slane %v13818, %v13839
    %v13842 = vunpack.c.l.s4 1983009808
    %v13843 = vunpack.c.0.s8 %v13842
    %v13844 = vlaneseq
    %v13845 = vshrl.u32 %v13844, 7
    %v13846 = vsub.s32 %v13843, %v13845
    %v13847 = vrot.slane %v13819, %v13846
    %v13848 = vcombine.low %v13826, %v13840
    %v13849 = vcombine.high %v13826, %v13840
    %v13850 = vcombine.low %v13833, %v13847
    %v13851 = vcombine.high %v13833, %v13847
    %v13852 = vcombine.low %v13636, %v13654
    %v13853 = vcombine.high %v13636, %v13654
    %v13854 = vcombine.low %v13672, %v13690
    %v13855 = vcombine.high %v13672, %v13690
    %v13857 = vunpack.c.l.s4 1983009808
    %v13858 = vunpack.c.0.s8 %v13857
    %v13859 = vlaneseq
    %v13860 = vshrl.u32 %v13859, 7
    %v13861 = vsub.s32 %v13858, %v13860
    %v13862 = vrot.slane %v13852, %v13861
    %v13864 = vunpack.c.l.s4 1983009808
    %v13865 = vunpack.c.0.s8 %v13864
    %v13866 = vlaneseq
    %v13867 = vshrl.u32 %v13866, 7
    %v13868 = vsub.s32 %v13865, %v13867
    %v13869 = vrot.slane %v13853, %v13868
    %v13871 = vunpack.c.l.s4 1983009808
    %v13872 = vunpack.c.0.s8 %v13871
    %v13873 = vlaneseq
    %v13874 = vshrl.u32 %v13873, 7
    %v13875 = vsub.s32 %v13872, %v13874
    %v13876 = vrot.slane %v13854, %v13875
    %v13878 = vunpack.c.l.s4 1983009808
    %v13879 = vunpack.c.0.s8 %v13878
    %v13880 = vlaneseq
    %v13881 = vshrl.u32 %v13880, 7
    %v13882 = vsub.s32 %v13879, %v13881
    %v13883 = vrot.slane %v13855, %v13882
    %v13884 = vcombine.low %v13862, %v13876
    %v13885 = vcombine.high %v13862, %v13876
    %v13886 = vcombine.low %v13869, %v13883
    %v13887 = vcombine.high %v13869, %v13883
    %v13888 = vcombine.high %v13708, %v13708
    %v13890 = vunpack.c.l.s4 1983009808
    %v13891 = vunpack.c.0.s8 %v13890
    %v13892 = vlaneseq
    %v13893 = vshrl.u32 %v13892, 7
    %v13894 = vsub.s32 %v13891, %v13893
    %v13895 = vrot.slane %v13708, %v13894
    %v13897 = vunpack.c.l.s4 1983009808
    %v13898 = vunpack.c.0.s8 %v13897
    %v13899 = vlaneseq
    %v13900 = vshrl.u32 %v13899, 7
    %v13901 = vsub.s32 %v13898, %v13900
    %v13902 = vrot.slane %v13888, %v13901
    %v13903 = vcombine.high %v13895, %v13895
    %v13904 = vcombine.high %v13902, %v13902
    %13929 = vst [vmem:[%s3] sm:$0xff] %v13759
    %13930 = vst [vmem:[%s3 + $0x8] sm:$0xff] %v13760
    %13931 = vst [vmem:[%s3 + $0x10] sm:$0xff] %v13761
    %13932 = vst [vmem:[%s3 + $0x18] sm:$0xff] %v13762
    %13933 = vst [vmem:[%s3 + $0x20] sm:$0xff] %v13795
    %13934 = vst [vmem:[%s3 + $0x28] sm:$0xff] %v13796
    %13935 = vst [vmem:[%s3 + $0x30] sm:$0xff] %v13797
    %13936 = vst [vmem:[%s3 + $0x38] sm:$0xff] %v13798
    %13937 = vst [vmem:[%s3 + $0x40] sm:$0x3] %v13806
    %13938 = vst [vmem:[%s3 + $0x48] sm:$0x3] %v13814
    %13939 = vst [vmem:[%s3 + $0x50] sm:$0x3] %v13813
    %13940 = vst [vmem:[%s3 + $0x58] sm:$0x3] %v13815
    %13941 = vst [vmem:[%s3 + $0x60] sm:$0xff] %v13848
    %13942 = vst [vmem:[%s3 + $0x68] sm:$0xff] %v13849
    %13943 = vst [vmem:[%s3 + $0x70] sm:$0xff] %v13850
    %13944 = vst [vmem:[%s3 + $0x78] sm:$0xff] %v13851
    %13945 = vst [vmem:[%s3 + $0x80] sm:$0xff] %v13884
    %13946 = vst [vmem:[%s3 + $0x88] sm:$0xff] %v13885
    %13947 = vst [vmem:[%s3 + $0x90] sm:$0xff] %v13886
    %13948 = vst [vmem:[%s3 + $0x98] sm:$0xff] %v13887
    %13949 = vst [vmem:[%s3 + $0xa0] sm:$0x3] %v13895
    %13950 = vst [vmem:[%s3 + $0xa8] sm:$0x3] %v13903
    %13951 = vst [vmem:[%s3 + $0xb0] sm:$0x3] %v13902
    %13952 = vst [vmem:[%s3 + $0xb8] sm:$0x3] %v13904
    // Predicated region
    $region22: #{tpu_custom_call.1} parent=1 // pred_check
      _
    $region23: #{tpu_custom_call.1} parent=1 // pred_check_branch
      %13954 = sbr.rel (0) target = $region25
    $region24: #{tpu_custom_call.1} parent=1 // pred_region
      _
    $region25: #{tpu_custom_call.1} parent=1 // pred_fallthru
      _
    // Predicated region
    $region26: #{tpu_custom_call.1} parent=1 // pred_check
      _
    $region27: #{tpu_custom_call.1} parent=1 // pred_check_branch
      %13956 = sbr.rel (0) target = $region29
    $region28: #{tpu_custom_call.1} parent=1 // pred_region
      _
    $region29: #{tpu_custom_call.1} parent=1 // pred_fallthru
      _
    %13957 = vsyncpa [#allocation5], 1
    %13958 = vsyncpa [#allocation7], 1

</llo_original>
